<compile_context>
chip_gen: v7x
topology: tpu7x:2x2x1
jax: 0.10.0
libtpu: 0.0.40
codegen_flags: <defaults>
</compile_context>

<pallas_src>
import functools

import jax
import jax.numpy as jnp
from jax import lax
from jax.experimental import pallas as pl


def decoder_block_kernel(xT_ref, mask_ref, cwT_ref, cb_ref,
                         ln1g_ref, ln1b_ref, qwT_ref, kvwT_ref, pwT_ref, pb_ref,
                         ln2g_ref, ln2b_ref, f1wT_ref, f1b_ref, dww_ref, dwb_ref,
                         f2wT_ref, f2b_ref, oT_ref,
                         *, B, H, W, dim, num_heads, hidden):
    N = H * W
    BN = B * N
    hd = dim // num_heads
    scale = float(hd) ** -0.5
    bf16 = jnp.bfloat16

    def mm(w, a):  # channel-major matmul: (out,in) @ (in,BN) -> (out,BN), f32 accum
        return jnp.dot(w.astype(bf16), a.astype(bf16),
                       preferred_element_type=jnp.float32)

    def ln_ch(t, g, b, eps=1e-5):  # LayerNorm over the channel (sublane) axis
        mu = jnp.mean(t, axis=0, keepdims=True)
        tc = t - mu
        var = jnp.mean(tc * tc, axis=0, keepdims=True)
        return tc * lax.rsqrt(var + eps) * g + b

    # concat_linear: (dim, 2*dim) @ (2*dim, BN) + (dim, 1)
    xT = mm(cwT_ref[...], xT_ref[...]) + cb_ref[...]

    for blk in range(2):  # layer_former_1, layer_former_2 (unrolled)
        # ----------------------------- attention -----------------------------
        xnT = ln_ch(xT, ln1g_ref[blk], ln1b_ref[blk])                  # (dim, BN)
        qT = mm(qwT_ref[blk], xnT) * scale                             # scale folded into q
        kvT = mm(kvwT_ref[blk], xnT)                                   # (2*dim, BN)
        kT = kvT[:dim, :]
        vT = kvT[dim:, :]
        # head split = sublane-tile regroup (hd == 8): no cross-lane shuffling
        q3 = qT.reshape(num_heads, hd, BN)
        k3 = kT.reshape(num_heads, hd, BN)
        v3 = vT.reshape(num_heads, hd, BN)
        q3m = jnp.swapaxes(q3, 1, 2)                                   # (h, BN, hd)
        s = jnp.einsum('hqd,hdk->hqk', q3m.astype(bf16), k3.astype(bf16),
                       preferred_element_type=jnp.float32)             # (h, BN, BN)
        # DropKey (+ cross-batch -1e30 block mask) precomputed outside the kernel
        s = s + mask_ref[blk]
        s = s - jnp.max(s, axis=-1, keepdims=True)
        p = jnp.exp(s)
        p = p / jnp.sum(p, axis=-1, keepdims=True)
        ctxT = jnp.einsum('hdk,hqk->hdq', v3.astype(bf16), p.astype(bf16),
                          preferred_element_type=jnp.float32)          # (h, hd, BN)
        ctxT = ctxT.reshape(dim, BN)      # head concat == free sublane-tile merge
        xT = xT + mm(pwT_ref[blk], ctxT) + pb_ref[blk]

        # ---------------- MLP: fc1 -> dwconv 3x3 -> GELU -> fc2 ---------------
        xnT = ln_ch(xT, ln2g_ref[blk], ln2b_ref[blk])
        h1T = mm(f1wT_ref[blk], xnT) + f1b_ref[blk]                    # (hidden, BN)
        h1 = h1T.T.reshape(B, H, W, hidden)        # spatial, channels on the lanes
        # zero-pad H and W by 1 (two concats) + nine static-slice taps
        zw = jnp.zeros((B, H, 1, hidden), jnp.float32)
        hp = jnp.concatenate([zw, h1, zw], axis=2)                     # (B, H, W+2, hid)
        zh = jnp.zeros((B, 1, W + 2, hidden), jnp.float32)
        hp = jnp.concatenate([zh, hp, zh], axis=1)                     # (B, H+2, W+2, hid)
        dw = dww_ref[blk]                                              # (9, hidden)
        acc = jnp.zeros((B, H, W, hidden), jnp.float32)
        for ky in range(3):
            for kx in range(3):
                t = ky * 3 + kx
                acc = acc + hp[:, ky:ky + H, kx:kx + W, :] * dw[t:t + 1, :]
        acc = acc + dwb_ref[blk]
        # TODO(synk): PyTorch nn.GELU() is exact erf; tanh approximation used here
        # (routes through the EUP transcendental slot instead of a long VPU erf poly).
        h2 = jax.nn.gelu(acc, approximate=True).reshape(BN, hidden)
        xT = xT + mm(f2wT_ref[blk], h2.T) + f2b_ref[blk]

    oT_ref[...] = xT


def make_params(key, dim, hidden):
    ks = jax.random.split(key, 7)
    std = 0.02  # trunc_normal_(std=0.02) ~ normal*0.02 at these magnitudes
    p = {}
    p["cw"] = jax.random.normal(ks[0], (2 * dim, dim), jnp.float32) * std
    p["cb"] = jnp.zeros((dim,), jnp.float32)
    p["ln1g"] = jnp.ones((2, dim), jnp.float32)
    p["ln1b"] = jnp.zeros((2, dim), jnp.float32)
    p["qw"] = jax.random.normal(ks[1], (2, dim, dim), jnp.float32) * std
    p["kvw"] = jax.random.normal(ks[2], (2, dim, 2 * dim), jnp.float32) * std
    p["pw"] = jax.random.normal(ks[3], (2, dim, dim), jnp.float32) * std
    p["pb"] = jnp.zeros((2, dim), jnp.float32)
    p["ln2g"] = jnp.ones((2, dim), jnp.float32)
    p["ln2b"] = jnp.zeros((2, dim), jnp.float32)
    p["f1w"] = jax.random.normal(ks[4], (2, dim, hidden), jnp.float32) * std
    p["f1b"] = jnp.zeros((2, hidden), jnp.float32)
    # depthwise conv init: normal(0, sqrt(2/fan_out)), fan_out = 3*3*hidden/hidden = 9
    p["dww"] = jax.random.normal(ks[5], (2, 9, hidden), jnp.float32) * (2.0 / 9.0) ** 0.5
    p["dwb"] = jnp.zeros((2, hidden), jnp.float32)
    p["f2w"] = jax.random.normal(ks[6], (2, hidden, dim), jnp.float32) * std
    p["f2b"] = jnp.zeros((2, dim), jnp.float32)
    return p


def decoder_block(x_nchw, params, *, dim, num_heads, dropkey_rate=0.1, seed=1234):
    B, C2, H, W = x_nchw.shape
    assert C2 == 2 * dim
    hidden = params["f1w"].shape[-1]
    N = H * W
    BN = B * N

    # NCHW -> channel-major stacked tokens: xT[c, b*N + (h*W + w)] = x[b, c, h, w]
    xT = jnp.transpose(x_nchw.reshape(B, C2, N), (1, 0, 2)).reshape(C2, BN)

    # DropKey additive mask (torch: attn += bernoulli(rate) * -1e12), drawn once for
    # both blocks / all heads / all batch elements, plus a -1e30 block-diagonal mask
    # that keeps attention within each batch element of the stacked token matrix.
    kdrop = jax.random.PRNGKey(seed)
    drop = jax.random.bernoulli(kdrop, dropkey_rate, (2, num_heads, BN, BN))
    bid = jnp.repeat(jnp.arange(B), N)
    cross = jnp.where(bid[:, None] == bid[None, :], 0.0, -1e30).astype(jnp.float32)
    mask = drop.astype(jnp.float32) * jnp.float32(-1e12) + cross

    t2 = lambda w: jnp.swapaxes(w, -1, -2)   # math (in,out) -> channel-major (out,in)
    col = lambda v: v[..., None]             # bias / LN vector -> (..., C, 1) column
    args = [
        xT, mask,
        t2(params["cw"]), col(params["cb"]),
        col(params["ln1g"]), col(params["ln1b"]),
        t2(params["qw"]), t2(params["kvw"]), t2(params["pw"]), col(params["pb"]),
        col(params["ln2g"]), col(params["ln2b"]),
        t2(params["f1w"]), col(params["f1b"]),
        params["dww"], params["dwb"][:, None, :],
        t2(params["f2w"]), col(params["f2b"]),
    ]

    kern = functools.partial(decoder_block_kernel, B=B, H=H, W=W, dim=dim,
                             num_heads=num_heads, hidden=hidden)

    # Whole problem fits in VMEM at these sizes -> single invocation, no grid,
    # whole arrays as blocks (default BlockSpecs).
    # TODO(synk): tile N with a flash-style inner loop (and shard the batch across
    # TensorCores on v7x) before scaling H, W; re-derive tiles for 64 MiB VMEM.
    oT = pl.pallas_call(
        kern,
        out_shape=jax.ShapeDtypeStruct((dim, BN), jnp.float32),
    )(*args)

    # channel-major tokens -> NCHW (matches unflatten(1,(h,w)).permute(0,3,1,2))
    return jnp.transpose(oT.reshape(dim, B, H, W), (1, 0, 2, 3))


if __name__ == "__main__":
    dim, num_heads = 32, 4
    B, H, W = 2, 8, 8
    hidden = int(dim * 4.0)  # mlp_ratio = 4.0

    key = jax.random.PRNGKey(0)
    kx, kp = jax.random.split(key)
    params = make_params(kp, dim, hidden)
    # DecoderBlock input is NCHW with C = 2*dim (it starts with concat_linear 2*dim->dim)
    x = jax.random.normal(kx, (B, 2 * dim, H, W), jnp.float32)

    out = decoder_block(x, params, dim=dim, num_heads=num_heads)
    out = jax.block_until_ready(out)
    assert out.shape == (B, dim, H, W)
    assert bool(jnp.all(jnp.isfinite(out)))
    print("KERNEL_OK")
</pallas_src>

<mosaic_0001>
module attributes {stable_mosaic.version = 11 : i64} {
  func.func @decoder_block_kernel(%arg0: memref<64x128xf32, #tpu.memory_space<vmem>>, %arg1: memref<2x4x128x128xf32, #tpu.memory_space<vmem>>, %arg2: memref<32x64xf32, #tpu.memory_space<vmem>>, %arg3: memref<32x1xf32, #tpu.memory_space<vmem>>, %arg4: memref<2x32x1xf32, #tpu.memory_space<vmem>>, %arg5: memref<2x32x1xf32, #tpu.memory_space<vmem>>, %arg6: memref<2x32x32xf32, #tpu.memory_space<vmem>>, %arg7: memref<2x64x32xf32, #tpu.memory_space<vmem>>, %arg8: memref<2x32x32xf32, #tpu.memory_space<vmem>>, %arg9: memref<2x32x1xf32, #tpu.memory_space<vmem>>, %arg10: memref<2x32x1xf32, #tpu.memory_space<vmem>>, %arg11: memref<2x32x1xf32, #tpu.memory_space<vmem>>, %arg12: memref<2x128x32xf32, #tpu.memory_space<vmem>>, %arg13: memref<2x128x1xf32, #tpu.memory_space<vmem>>, %arg14: memref<2x9x128xf32, #tpu.memory_space<vmem>>, %arg15: memref<2x1x128xf32, #tpu.memory_space<vmem>>, %arg16: memref<2x32x128xf32, #tpu.memory_space<vmem>>, %arg17: memref<2x32x1xf32, #tpu.memory_space<vmem>>, %arg18: memref<32x128xf32, #tpu.memory_space<vmem>>) attributes {dimension_semantics = [], scalar_prefetch = 0 : i64, scratch_operands = 0 : i64, tpu.core_type = #tpu.core_type<tc>} {
    %c0 = arith.constant 0 : index
    %c0_0 = arith.constant 0 : index
    %0 = vector.load %arg2[%c0, %c0_0] : memref<32x64xf32, #tpu.memory_space<vmem>>, vector<32x64xf32>
    %c0_1 = arith.constant 0 : index
    %c0_2 = arith.constant 0 : index
    %1 = vector.load %arg0[%c0_1, %c0_2] : memref<64x128xf32, #tpu.memory_space<vmem>>, vector<64x128xf32>
    %2 = arith.truncf %0 : vector<32x64xf32> to vector<32x64xbf16>
    %3 = arith.truncf %1 : vector<64x128xf32> to vector<64x128xbf16>
    %cst = arith.constant dense<0.000000e+00> : vector<32x128xf32>
    %4 = tpu.matmul %2, %3, %cst {dimension_numbers = #tpu.dot_dimension_numbers<[1], [0], [0], [1], [0, 0, 1, 1], [], []>} : vector<32x64xbf16>, vector<64x128xbf16>, vector<32x128xf32> -> vector<32x128xf32>
    %c0_3 = arith.constant 0 : index
    %c0_4 = arith.constant 0 : index
    %5 = vector.load %arg3[%c0_3, %c0_4] : memref<32x1xf32, #tpu.memory_space<vmem>>, vector<32x1xf32>
    %6 = vector.broadcast %5 : vector<32x1xf32> to vector<32x128xf32>
    %7 = arith.addf %4, %6 : vector<32x128xf32>
    %c0_5 = arith.constant 0 : index
    %c0_6 = arith.constant 0 : index
    %c0_7 = arith.constant 0 : index
    %8 = vector.load %arg4[%c0_5, %c0_6, %c0_7] : memref<2x32x1xf32, #tpu.memory_space<vmem>>, vector<1x32x1xf32>
    %9 = vector.shape_cast %8 : vector<1x32x1xf32> to vector<32x1xf32>
    %c0_8 = arith.constant 0 : index
    %c0_9 = arith.constant 0 : index
    %c0_10 = arith.constant 0 : index
    %10 = vector.load %arg5[%c0_8, %c0_9, %c0_10] : memref<2x32x1xf32, #tpu.memory_space<vmem>>, vector<1x32x1xf32>
    %11 = vector.shape_cast %10 : vector<1x32x1xf32> to vector<32x1xf32>
    %cst_11 = arith.constant dense<0.000000e+00> : vector<128xf32>
    %12 = vector.multi_reduction <add>, %7, %cst_11 [0] : vector<32x128xf32> to vector<128xf32>
    %13 = vector.shape_cast %12 : vector<128xf32> to vector<1x128xf32>
    %cst_12 = arith.constant 3.200000e+01 : f32
    %14 = vector.broadcast %cst_12 : f32 to vector<1x128xf32>
    %15 = arith.divf %13, %14 : vector<1x128xf32>
    %16 = vector.broadcast %15 : vector<1x128xf32> to vector<32x128xf32>
    %17 = arith.subf %7, %16 : vector<32x128xf32>
    %18 = arith.mulf %17, %17 : vector<32x128xf32>
    %cst_13 = arith.constant dense<0.000000e+00> : vector<128xf32>
    %19 = vector.multi_reduction <add>, %18, %cst_13 [0] : vector<32x128xf32> to vector<128xf32>
    %20 = vector.shape_cast %19 : vector<128xf32> to vector<1x128xf32>
    %cst_14 = arith.constant 3.200000e+01 : f32
    %21 = vector.broadcast %cst_14 : f32 to vector<1x128xf32>
    %22 = arith.divf %20, %21 : vector<1x128xf32>
    %cst_15 = arith.constant 9.99999974E-6 : f32
    %23 = vector.broadcast %cst_15 : f32 to vector<1x128xf32>
    %24 = arith.addf %22, %23 : vector<1x128xf32>
    %25 = math.rsqrt %24 : vector<1x128xf32>
    %26 = vector.broadcast %25 : vector<1x128xf32> to vector<32x128xf32>
    %27 = arith.mulf %17, %26 : vector<32x128xf32>
    %28 = vector.broadcast %9 : vector<32x1xf32> to vector<32x128xf32>
    %29 = arith.mulf %27, %28 : vector<32x128xf32>
    %30 = vector.broadcast %11 : vector<32x1xf32> to vector<32x128xf32>
    %31 = arith.addf %29, %30 : vector<32x128xf32>
    %c0_16 = arith.constant 0 : index
    %c0_17 = arith.constant 0 : index
    %c0_18 = arith.constant 0 : index
    %32 = vector.load %arg6[%c0_16, %c0_17, %c0_18] : memref<2x32x32xf32, #tpu.memory_space<vmem>>, vector<1x32x32xf32>
    %33 = vector.shape_cast %32 : vector<1x32x32xf32> to vector<32x32xf32>
    %34 = arith.truncf %33 : vector<32x32xf32> to vector<32x32xbf16>
    %35 = arith.truncf %31 : vector<32x128xf32> to vector<32x128xbf16>
    %cst_19 = arith.constant dense<0.000000e+00> : vector<32x128xf32>
    %36 = tpu.matmul %34, %35, %cst_19 {dimension_numbers = #tpu.dot_dimension_numbers<[1], [0], [0], [1], [0, 0, 1, 1], [], []>} : vector<32x32xbf16>, vector<32x128xbf16>, vector<32x128xf32> -> vector<32x128xf32>
    %cst_20 = arith.constant 0.353553385 : f32
    %37 = vector.broadcast %cst_20 : f32 to vector<32x128xf32>
    %38 = arith.mulf %36, %37 : vector<32x128xf32>
    %c0_21 = arith.constant 0 : index
    %c0_22 = arith.constant 0 : index
    %c0_23 = arith.constant 0 : index
    %39 = vector.load %arg7[%c0_21, %c0_22, %c0_23] : memref<2x64x32xf32, #tpu.memory_space<vmem>>, vector<1x64x32xf32>
    %40 = vector.shape_cast %39 : vector<1x64x32xf32> to vector<64x32xf32>
    %41 = arith.truncf %40 : vector<64x32xf32> to vector<64x32xbf16>
    %42 = arith.truncf %31 : vector<32x128xf32> to vector<32x128xbf16>
    %cst_24 = arith.constant dense<0.000000e+00> : vector<64x128xf32>
    %43 = tpu.matmul %41, %42, %cst_24 {dimension_numbers = #tpu.dot_dimension_numbers<[1], [0], [0], [1], [0, 0, 1, 1], [], []>} : vector<64x32xbf16>, vector<32x128xbf16>, vector<64x128xf32> -> vector<64x128xf32>
    %44 = vector.extract_strided_slice %43 {offsets = [0, 0], sizes = [32, 128], strides = [1, 1]} : vector<64x128xf32> to vector<32x128xf32>
    %45 = vector.extract_strided_slice %43 {offsets = [32, 0], sizes = [32, 128], strides = [1, 1]} : vector<64x128xf32> to vector<32x128xf32>
    %46 = vector.shape_cast %38 : vector<32x128xf32> to vector<4x8x128xf32>
    %47 = vector.shape_cast %44 : vector<32x128xf32> to vector<4x8x128xf32>
    %48 = vector.shape_cast %45 : vector<32x128xf32> to vector<4x8x128xf32>
    %49 = tpu.transpose %46, [0, 2, 1] : vector<4x8x128xf32> -> vector<4x128x8xf32>
    %50 = arith.truncf %49 : vector<4x128x8xf32> to vector<4x128x8xbf16>
    %51 = arith.truncf %47 : vector<4x8x128xf32> to vector<4x8x128xbf16>
    "tpu.trace_start"() <{level = 10 : i32, message = "hqd,hdk->hqk"}> : () -> ()
    %cst_25 = arith.constant dense<0.000000e+00> : vector<4x128x128xf32>
    %52 = tpu.matmul %50, %51, %cst_25 {dimension_numbers = #tpu.dot_dimension_numbers<[2], [1], [1], [2], [0, 0, 0, 1, 1, 2], [0], [0]>} : vector<4x128x8xbf16>, vector<4x8x128xbf16>, vector<4x128x128xf32> -> vector<4x128x128xf32>
    "tpu.trace_stop"() : () -> ()
    %c0_26 = arith.constant 0 : index
    %c0_27 = arith.constant 0 : index
    %c0_28 = arith.constant 0 : index
    %c0_29 = arith.constant 0 : index
    %53 = vector.load %arg1[%c0_26, %c0_27, %c0_28, %c0_29] : memref<2x4x128x128xf32, #tpu.memory_space<vmem>>, vector<1x4x128x128xf32>
    %54 = vector.shape_cast %53 : vector<1x4x128x128xf32> to vector<4x128x128xf32>
    %55 = arith.addf %52, %54 : vector<4x128x128xf32>
    %cst_30 = arith.constant dense<0xFF800000> : vector<4x128xf32>
    %56 = vector.multi_reduction <maximumf>, %55, %cst_30 [2] : vector<4x128x128xf32> to vector<4x128xf32>
    %57 = vector.shape_cast %56 : vector<4x128xf32> to vector<4x128x1xf32>
    %58 = vector.broadcast %57 : vector<4x128x1xf32> to vector<4x128x128xf32>
    %59 = arith.subf %55, %58 : vector<4x128x128xf32>
    %60 = math.exp %59 : vector<4x128x128xf32>
    %cst_31 = arith.constant dense<0.000000e+00> : vector<4x128xf32>
    %61 = vector.multi_reduction <add>, %60, %cst_31 [2] : vector<4x128x128xf32> to vector<4x128xf32>
    %62 = vector.shape_cast %61 : vector<4x128xf32> to vector<4x128x1xf32>
    %63 = vector.broadcast %62 : vector<4x128x1xf32> to vector<4x128x128xf32>
    %64 = arith.divf %60, %63 : vector<4x128x128xf32>
    %65 = arith.truncf %48 : vector<4x8x128xf32> to vector<4x8x128xbf16>
    %66 = arith.truncf %64 : vector<4x128x128xf32> to vector<4x128x128xbf16>
    "tpu.trace_start"() <{level = 10 : i32, message = "hdk,hqk->hdq"}> : () -> ()
    %cst_32 = arith.constant dense<0.000000e+00> : vector<4x8x128xf32>
    %67 = tpu.matmul %65, %66, %cst_32 {dimension_numbers = #tpu.dot_dimension_numbers<[2], [2], [1], [1], [0, 0, 0, 1, 1, 1], [0], [0]>} : vector<4x8x128xbf16>, vector<4x128x128xbf16>, vector<4x8x128xf32> -> vector<4x8x128xf32>
    "tpu.trace_stop"() : () -> ()
    %68 = vector.shape_cast %67 : vector<4x8x128xf32> to vector<32x128xf32>
    %c0_33 = arith.constant 0 : index
    %c0_34 = arith.constant 0 : index
    %c0_35 = arith.constant 0 : index
    %69 = vector.load %arg8[%c0_33, %c0_34, %c0_35] : memref<2x32x32xf32, #tpu.memory_space<vmem>>, vector<1x32x32xf32>
    %70 = vector.shape_cast %69 : vector<1x32x32xf32> to vector<32x32xf32>
    %71 = arith.truncf %70 : vector<32x32xf32> to vector<32x32xbf16>
    %72 = arith.truncf %68 : vector<32x128xf32> to vector<32x128xbf16>
    %cst_36 = arith.constant dense<0.000000e+00> : vector<32x128xf32>
    %73 = tpu.matmul %71, %72, %cst_36 {dimension_numbers = #tpu.dot_dimension_numbers<[1], [0], [0], [1], [0, 0, 1, 1], [], []>} : vector<32x32xbf16>, vector<32x128xbf16>, vector<32x128xf32> -> vector<32x128xf32>
    %74 = arith.addf %7, %73 : vector<32x128xf32>
    %c0_37 = arith.constant 0 : index
    %c0_38 = arith.constant 0 : index
    %c0_39 = arith.constant 0 : index
    %75 = vector.load %arg9[%c0_37, %c0_38, %c0_39] : memref<2x32x1xf32, #tpu.memory_space<vmem>>, vector<1x32x1xf32>
    %76 = vector.shape_cast %75 : vector<1x32x1xf32> to vector<32x1xf32>
    %77 = vector.broadcast %76 : vector<32x1xf32> to vector<32x128xf32>
    %78 = arith.addf %74, %77 : vector<32x128xf32>
    %c0_40 = arith.constant 0 : index
    %c0_41 = arith.constant 0 : index
    %c0_42 = arith.constant 0 : index
    %79 = vector.load %arg10[%c0_40, %c0_41, %c0_42] : memref<2x32x1xf32, #tpu.memory_space<vmem>>, vector<1x32x1xf32>
    %80 = vector.shape_cast %79 : vector<1x32x1xf32> to vector<32x1xf32>
    %c0_43 = arith.constant 0 : index
    %c0_44 = arith.constant 0 : index
    %c0_45 = arith.constant 0 : index
    %81 = vector.load %arg11[%c0_43, %c0_44, %c0_45] : memref<2x32x1xf32, #tpu.memory_space<vmem>>, vector<1x32x1xf32>
    %82 = vector.shape_cast %81 : vector<1x32x1xf32> to vector<32x1xf32>
    %cst_46 = arith.constant dense<0.000000e+00> : vector<128xf32>
    %83 = vector.multi_reduction <add>, %78, %cst_46 [0] : vector<32x128xf32> to vector<128xf32>
    %84 = vector.shape_cast %83 : vector<128xf32> to vector<1x128xf32>
    %cst_47 = arith.constant 3.200000e+01 : f32
    %85 = vector.broadcast %cst_47 : f32 to vector<1x128xf32>
    %86 = arith.divf %84, %85 : vector<1x128xf32>
    %87 = vector.broadcast %86 : vector<1x128xf32> to vector<32x128xf32>
    %88 = arith.subf %78, %87 : vector<32x128xf32>
    %89 = arith.mulf %88, %88 : vector<32x128xf32>
    %cst_48 = arith.constant dense<0.000000e+00> : vector<128xf32>
    %90 = vector.multi_reduction <add>, %89, %cst_48 [0] : vector<32x128xf32> to vector<128xf32>
    %91 = vector.shape_cast %90 : vector<128xf32> to vector<1x128xf32>
    %cst_49 = arith.constant 3.200000e+01 : f32
    %92 = vector.broadcast %cst_49 : f32 to vector<1x128xf32>
    %93 = arith.divf %91, %92 : vector<1x128xf32>
    %cst_50 = arith.constant 9.99999974E-6 : f32
    %94 = vector.broadcast %cst_50 : f32 to vector<1x128xf32>
    %95 = arith.addf %93, %94 : vector<1x128xf32>
    %96 = math.rsqrt %95 : vector<1x128xf32>
    %97 = vector.broadcast %96 : vector<1x128xf32> to vector<32x128xf32>
    %98 = arith.mulf %88, %97 : vector<32x128xf32>
    %99 = vector.broadcast %80 : vector<32x1xf32> to vector<32x128xf32>
    %100 = arith.mulf %98, %99 : vector<32x128xf32>
    %101 = vector.broadcast %82 : vector<32x1xf32> to vector<32x128xf32>
    %102 = arith.addf %100, %101 : vector<32x128xf32>
    %c0_51 = arith.constant 0 : index
    %c0_52 = arith.constant 0 : index
    %c0_53 = arith.constant 0 : index
    %103 = vector.load %arg12[%c0_51, %c0_52, %c0_53] : memref<2x128x32xf32, #tpu.memory_space<vmem>>, vector<1x128x32xf32>
    %104 = vector.shape_cast %103 : vector<1x128x32xf32> to vector<128x32xf32>
    %105 = arith.truncf %104 : vector<128x32xf32> to vector<128x32xbf16>
    %106 = arith.truncf %102 : vector<32x128xf32> to vector<32x128xbf16>
    %cst_54 = arith.constant dense<0.000000e+00> : vector<128x128xf32>
    %107 = tpu.matmul %105, %106, %cst_54 {dimension_numbers = #tpu.dot_dimension_numbers<[1], [0], [0], [1], [0, 0, 1, 1], [], []>} : vector<128x32xbf16>, vector<32x128xbf16>, vector<128x128xf32> -> vector<128x128xf32>
    %c0_55 = arith.constant 0 : index
    %c0_56 = arith.constant 0 : index
    %c0_57 = arith.constant 0 : index
    %108 = vector.load %arg13[%c0_55, %c0_56, %c0_57] : memref<2x128x1xf32, #tpu.memory_space<vmem>>, vector<1x128x1xf32>
    %109 = vector.shape_cast %108 : vector<1x128x1xf32> to vector<128x1xf32>
    %110 = vector.broadcast %109 : vector<128x1xf32> to vector<128x128xf32>
    %111 = arith.addf %107, %110 : vector<128x128xf32>
    %112 = tpu.transpose %111, [1, 0] : vector<128x128xf32> -> vector<128x128xf32>
    %113 = vector.shape_cast %112 : vector<128x128xf32> to vector<2x8x8x128xf32>
    %cst_58 = arith.constant 0.000000e+00 : f32
    %114 = vector.broadcast %cst_58 : f32 to vector<2x8x1x128xf32>
    %115 = tpu.concatenate %114, %113, %114 in 2 : vector<2x8x1x128xf32>, vector<2x8x8x128xf32>, vector<2x8x1x128xf32> -> vector<2x8x10x128xf32>
    %cst_59 = arith.constant 0.000000e+00 : f32
    %116 = vector.broadcast %cst_59 : f32 to vector<2x1x10x128xf32>
    %117 = tpu.concatenate %116, %115, %116 in 1 : vector<2x1x10x128xf32>, vector<2x8x10x128xf32>, vector<2x1x10x128xf32> -> vector<2x10x10x128xf32>
    %c0_60 = arith.constant 0 : index
    %c0_61 = arith.constant 0 : index
    %c0_62 = arith.constant 0 : index
    %118 = vector.load %arg14[%c0_60, %c0_61, %c0_62] : memref<2x9x128xf32, #tpu.memory_space<vmem>>, vector<1x9x128xf32>
    %119 = vector.shape_cast %118 : vector<1x9x128xf32> to vector<9x128xf32>
    %cst_63 = arith.constant 0.000000e+00 : f32
    %120 = vector.broadcast %cst_63 : f32 to vector<2x8x8x128xf32>
    %121 = vector.extract_strided_slice %117 {offsets = [0, 0, 0, 0], sizes = [2, 8, 8, 128], strides = [1, 1, 1, 1]} : vector<2x10x10x128xf32> to vector<2x8x8x128xf32>
    %122 = vector.extract_strided_slice %119 {offsets = [0, 0], sizes = [1, 128], strides = [1, 1]} : vector<9x128xf32> to vector<1x128xf32>
    %123 = vector.shape_cast %122 : vector<1x128xf32> to vector<1x1x1x128xf32>
    %124 = vector.broadcast %123 : vector<1x1x1x128xf32> to vector<2x8x8x128xf32>
    %125 = arith.mulf %121, %124 : vector<2x8x8x128xf32>
    %126 = arith.addf %120, %125 : vector<2x8x8x128xf32>
    %127 = vector.extract_strided_slice %117 {offsets = [0, 0, 1, 0], sizes = [2, 8, 8, 128], strides = [1, 1, 1, 1]} : vector<2x10x10x128xf32> to vector<2x8x8x128xf32>
    %128 = vector.extract_strided_slice %119 {offsets = [1, 0], sizes = [1, 128], strides = [1, 1]} : vector<9x128xf32> to vector<1x128xf32>
    %129 = vector.shape_cast %128 : vector<1x128xf32> to vector<1x1x1x128xf32>
    %130 = vector.broadcast %129 : vector<1x1x1x128xf32> to vector<2x8x8x128xf32>
    %131 = arith.mulf %127, %130 : vector<2x8x8x128xf32>
    %132 = arith.addf %126, %131 : vector<2x8x8x128xf32>
    %133 = vector.extract_strided_slice %117 {offsets = [0, 0, 2, 0], sizes = [2, 8, 8, 128], strides = [1, 1, 1, 1]} : vector<2x10x10x128xf32> to vector<2x8x8x128xf32>
    %134 = vector.extract_strided_slice %119 {offsets = [2, 0], sizes = [1, 128], strides = [1, 1]} : vector<9x128xf32> to vector<1x128xf32>
    %135 = vector.shape_cast %134 : vector<1x128xf32> to vector<1x1x1x128xf32>
    %136 = vector.broadcast %135 : vector<1x1x1x128xf32> to vector<2x8x8x128xf32>
    %137 = arith.mulf %133, %136 : vector<2x8x8x128xf32>
    %138 = arith.addf %132, %137 : vector<2x8x8x128xf32>
    %139 = vector.extract_strided_slice %117 {offsets = [0, 1, 0, 0], sizes = [2, 8, 8, 128], strides = [1, 1, 1, 1]} : vector<2x10x10x128xf32> to vector<2x8x8x128xf32>
    %140 = vector.extract_strided_slice %119 {offsets = [3, 0], sizes = [1, 128], strides = [1, 1]} : vector<9x128xf32> to vector<1x128xf32>
    %141 = vector.shape_cast %140 : vector<1x128xf32> to vector<1x1x1x128xf32>
    %142 = vector.broadcast %141 : vector<1x1x1x128xf32> to vector<2x8x8x128xf32>
    %143 = arith.mulf %139, %142 : vector<2x8x8x128xf32>
    %144 = arith.addf %138, %143 : vector<2x8x8x128xf32>
    %145 = vector.extract_strided_slice %117 {offsets = [0, 1, 1, 0], sizes = [2, 8, 8, 128], strides = [1, 1, 1, 1]} : vector<2x10x10x128xf32> to vector<2x8x8x128xf32>
    %146 = vector.extract_strided_slice %119 {offsets = [4, 0], sizes = [1, 128], strides = [1, 1]} : vector<9x128xf32> to vector<1x128xf32>
    %147 = vector.shape_cast %146 : vector<1x128xf32> to vector<1x1x1x128xf32>
    %148 = vector.broadcast %147 : vector<1x1x1x128xf32> to vector<2x8x8x128xf32>
    %149 = arith.mulf %145, %148 : vector<2x8x8x128xf32>
    %150 = arith.addf %144, %149 : vector<2x8x8x128xf32>
    %151 = vector.extract_strided_slice %117 {offsets = [0, 1, 2, 0], sizes = [2, 8, 8, 128], strides = [1, 1, 1, 1]} : vector<2x10x10x128xf32> to vector<2x8x8x128xf32>
    %152 = vector.extract_strided_slice %119 {offsets = [5, 0], sizes = [1, 128], strides = [1, 1]} : vector<9x128xf32> to vector<1x128xf32>
    %153 = vector.shape_cast %152 : vector<1x128xf32> to vector<1x1x1x128xf32>
    %154 = vector.broadcast %153 : vector<1x1x1x128xf32> to vector<2x8x8x128xf32>
    %155 = arith.mulf %151, %154 : vector<2x8x8x128xf32>
    %156 = arith.addf %150, %155 : vector<2x8x8x128xf32>
    %157 = vector.extract_strided_slice %117 {offsets = [0, 2, 0, 0], sizes = [2, 8, 8, 128], strides = [1, 1, 1, 1]} : vector<2x10x10x128xf32> to vector<2x8x8x128xf32>
    %158 = vector.extract_strided_slice %119 {offsets = [6, 0], sizes = [1, 128], strides = [1, 1]} : vector<9x128xf32> to vector<1x128xf32>
    %159 = vector.shape_cast %158 : vector<1x128xf32> to vector<1x1x1x128xf32>
    %160 = vector.broadcast %159 : vector<1x1x1x128xf32> to vector<2x8x8x128xf32>
    %161 = arith.mulf %157, %160 : vector<2x8x8x128xf32>
    %162 = arith.addf %156, %161 : vector<2x8x8x128xf32>
    %163 = vector.extract_strided_slice %117 {offsets = [0, 2, 1, 0], sizes = [2, 8, 8, 128], strides = [1, 1, 1, 1]} : vector<2x10x10x128xf32> to vector<2x8x8x128xf32>
    %164 = vector.extract_strided_slice %119 {offsets = [7, 0], sizes = [1, 128], strides = [1, 1]} : vector<9x128xf32> to vector<1x128xf32>
    %165 = vector.shape_cast %164 : vector<1x128xf32> to vector<1x1x1x128xf32>
    %166 = vector.broadcast %165 : vector<1x1x1x128xf32> to vector<2x8x8x128xf32>
    %167 = arith.mulf %163, %166 : vector<2x8x8x128xf32>
    %168 = arith.addf %162, %167 : vector<2x8x8x128xf32>
    %169 = vector.extract_strided_slice %117 {offsets = [0, 2, 2, 0], sizes = [2, 8, 8, 128], strides = [1, 1, 1, 1]} : vector<2x10x10x128xf32> to vector<2x8x8x128xf32>
    %170 = vector.extract_strided_slice %119 {offsets = [8, 0], sizes = [1, 128], strides = [1, 1]} : vector<9x128xf32> to vector<1x128xf32>
    %171 = vector.shape_cast %170 : vector<1x128xf32> to vector<1x1x1x128xf32>
    %172 = vector.broadcast %171 : vector<1x1x1x128xf32> to vector<2x8x8x128xf32>
    %173 = arith.mulf %169, %172 : vector<2x8x8x128xf32>
    %174 = arith.addf %168, %173 : vector<2x8x8x128xf32>
    %c0_64 = arith.constant 0 : index
    %c0_65 = arith.constant 0 : index
    %c0_66 = arith.constant 0 : index
    %175 = vector.load %arg15[%c0_64, %c0_65, %c0_66] : memref<2x1x128xf32, #tpu.memory_space<vmem>>, vector<1x1x128xf32>
    %176 = vector.shape_cast %175 : vector<1x1x128xf32> to vector<1x128xf32>
    %177 = vector.shape_cast %176 : vector<1x128xf32> to vector<1x1x1x128xf32>
    %178 = vector.broadcast %177 : vector<1x1x1x128xf32> to vector<2x8x8x128xf32>
    %179 = arith.addf %174, %178 : vector<2x8x8x128xf32>
    %180 = arith.mulf %179, %179 : vector<2x8x8x128xf32>
    %181 = arith.mulf %179, %180 : vector<2x8x8x128xf32>
    %cst_67 = arith.constant 4.471500e-02 : f32
    %182 = vector.broadcast %cst_67 : f32 to vector<2x8x8x128xf32>
    %183 = arith.mulf %182, %181 : vector<2x8x8x128xf32>
    %184 = arith.addf %179, %183 : vector<2x8x8x128xf32>
    %cst_68 = arith.constant 0.797884583 : f32
    %185 = vector.broadcast %cst_68 : f32 to vector<2x8x8x128xf32>
    %186 = arith.mulf %185, %184 : vector<2x8x8x128xf32>
    %187 = math.tanh %186 : vector<2x8x8x128xf32>
    %cst_69 = arith.constant 1.000000e+00 : f32
    %188 = vector.broadcast %cst_69 : f32 to vector<2x8x8x128xf32>
    %189 = arith.addf %188, %187 : vector<2x8x8x128xf32>
    %cst_70 = arith.constant 5.000000e-01 : f32
    %190 = vector.broadcast %cst_70 : f32 to vector<2x8x8x128xf32>
    %191 = arith.mulf %190, %189 : vector<2x8x8x128xf32>
    %192 = arith.mulf %179, %191 : vector<2x8x8x128xf32>
    %193 = vector.shape_cast %192 : vector<2x8x8x128xf32> to vector<128x128xf32>
    %c0_71 = arith.constant 0 : index
    %c0_72 = arith.constant 0 : index
    %c0_73 = arith.constant 0 : index
    %194 = vector.load %arg16[%c0_71, %c0_72, %c0_73] : memref<2x32x128xf32, #tpu.memory_space<vmem>>, vector<1x32x128xf32>
    %195 = vector.shape_cast %194 : vector<1x32x128xf32> to vector<32x128xf32>
    %196 = tpu.transpose %193, [1, 0] : vector<128x128xf32> -> vector<128x128xf32>
    %197 = arith.truncf %195 : vector<32x128xf32> to vector<32x128xbf16>
    %198 = arith.truncf %196 : vector<128x128xf32> to vector<128x128xbf16>
    %cst_74 = arith.constant dense<0.000000e+00> : vector<32x128xf32>
    %199 = tpu.matmul %197, %198, %cst_74 {dimension_numbers = #tpu.dot_dimension_numbers<[1], [0], [0], [1], [0, 0, 1, 1], [], []>} : vector<32x128xbf16>, vector<128x128xbf16>, vector<32x128xf32> -> vector<32x128xf32>
    %200 = arith.addf %78, %199 : vector<32x128xf32>
    %c0_75 = arith.constant 0 : index
    %c0_76 = arith.constant 0 : index
    %c0_77 = arith.constant 0 : index
    %201 = vector.load %arg17[%c0_75, %c0_76, %c0_77] : memref<2x32x1xf32, #tpu.memory_space<vmem>>, vector<1x32x1xf32>
    %202 = vector.shape_cast %201 : vector<1x32x1xf32> to vector<32x1xf32>
    %203 = vector.broadcast %202 : vector<32x1xf32> to vector<32x128xf32>
    %204 = arith.addf %200, %203 : vector<32x128xf32>
    %c1 = arith.constant 1 : index
    %c0_78 = arith.constant 0 : index
    %c0_79 = arith.constant 0 : index
    %205 = vector.load %arg4[%c1, %c0_78, %c0_79] : memref<2x32x1xf32, #tpu.memory_space<vmem>>, vector<1x32x1xf32>
    %206 = vector.shape_cast %205 : vector<1x32x1xf32> to vector<32x1xf32>
    %c1_80 = arith.constant 1 : index
    %c0_81 = arith.constant 0 : index
    %c0_82 = arith.constant 0 : index
    %207 = vector.load %arg5[%c1_80, %c0_81, %c0_82] : memref<2x32x1xf32, #tpu.memory_space<vmem>>, vector<1x32x1xf32>
    %208 = vector.shape_cast %207 : vector<1x32x1xf32> to vector<32x1xf32>
    %cst_83 = arith.constant dense<0.000000e+00> : vector<128xf32>
    %209 = vector.multi_reduction <add>, %204, %cst_83 [0] : vector<32x128xf32> to vector<128xf32>
    %210 = vector.shape_cast %209 : vector<128xf32> to vector<1x128xf32>
    %cst_84 = arith.constant 3.200000e+01 : f32
    %211 = vector.broadcast %cst_84 : f32 to vector<1x128xf32>
    %212 = arith.divf %210, %211 : vector<1x128xf32>
    %213 = vector.broadcast %212 : vector<1x128xf32> to vector<32x128xf32>
    %214 = arith.subf %204, %213 : vector<32x128xf32>
    %215 = arith.mulf %214, %214 : vector<32x128xf32>
    %cst_85 = arith.constant dense<0.000000e+00> : vector<128xf32>
    %216 = vector.multi_reduction <add>, %215, %cst_85 [0] : vector<32x128xf32> to vector<128xf32>
    %217 = vector.shape_cast %216 : vector<128xf32> to vector<1x128xf32>
    %cst_86 = arith.constant 3.200000e+01 : f32
    %218 = vector.broadcast %cst_86 : f32 to vector<1x128xf32>
    %219 = arith.divf %217, %218 : vector<1x128xf32>
    %cst_87 = arith.constant 9.99999974E-6 : f32
    %220 = vector.broadcast %cst_87 : f32 to vector<1x128xf32>
    %221 = arith.addf %219, %220 : vector<1x128xf32>
    %222 = math.rsqrt %221 : vector<1x128xf32>
    %223 = vector.broadcast %222 : vector<1x128xf32> to vector<32x128xf32>
    %224 = arith.mulf %214, %223 : vector<32x128xf32>
    %225 = vector.broadcast %206 : vector<32x1xf32> to vector<32x128xf32>
    %226 = arith.mulf %224, %225 : vector<32x128xf32>
    %227 = vector.broadcast %208 : vector<32x1xf32> to vector<32x128xf32>
    %228 = arith.addf %226, %227 : vector<32x128xf32>
    %c1_88 = arith.constant 1 : index
    %c0_89 = arith.constant 0 : index
    %c0_90 = arith.constant 0 : index
    %229 = vector.load %arg6[%c1_88, %c0_89, %c0_90] : memref<2x32x32xf32, #tpu.memory_space<vmem>>, vector<1x32x32xf32>
    %230 = vector.shape_cast %229 : vector<1x32x32xf32> to vector<32x32xf32>
    %231 = arith.truncf %230 : vector<32x32xf32> to vector<32x32xbf16>
    %232 = arith.truncf %228 : vector<32x128xf32> to vector<32x128xbf16>
    %cst_91 = arith.constant dense<0.000000e+00> : vector<32x128xf32>
    %233 = tpu.matmul %231, %232, %cst_91 {dimension_numbers = #tpu.dot_dimension_numbers<[1], [0], [0], [1], [0, 0, 1, 1], [], []>} : vector<32x32xbf16>, vector<32x128xbf16>, vector<32x128xf32> -> vector<32x128xf32>
    %cst_92 = arith.constant 0.353553385 : f32
    %234 = vector.broadcast %cst_92 : f32 to vector<32x128xf32>
    %235 = arith.mulf %233, %234 : vector<32x128xf32>
    %c1_93 = arith.constant 1 : index
    %c0_94 = arith.constant 0 : index
    %c0_95 = arith.constant 0 : index
    %236 = vector.load %arg7[%c1_93, %c0_94, %c0_95] : memref<2x64x32xf32, #tpu.memory_space<vmem>>, vector<1x64x32xf32>
    %237 = vector.shape_cast %236 : vector<1x64x32xf32> to vector<64x32xf32>
    %238 = arith.truncf %237 : vector<64x32xf32> to vector<64x32xbf16>
    %239 = arith.truncf %228 : vector<32x128xf32> to vector<32x128xbf16>
    %cst_96 = arith.constant dense<0.000000e+00> : vector<64x128xf32>
    %240 = tpu.matmul %238, %239, %cst_96 {dimension_numbers = #tpu.dot_dimension_numbers<[1], [0], [0], [1], [0, 0, 1, 1], [], []>} : vector<64x32xbf16>, vector<32x128xbf16>, vector<64x128xf32> -> vector<64x128xf32>
    %241 = vector.extract_strided_slice %240 {offsets = [0, 0], sizes = [32, 128], strides = [1, 1]} : vector<64x128xf32> to vector<32x128xf32>
    %242 = vector.extract_strided_slice %240 {offsets = [32, 0], sizes = [32, 128], strides = [1, 1]} : vector<64x128xf32> to vector<32x128xf32>
    %243 = vector.shape_cast %235 : vector<32x128xf32> to vector<4x8x128xf32>
    %244 = vector.shape_cast %241 : vector<32x128xf32> to vector<4x8x128xf32>
    %245 = vector.shape_cast %242 : vector<32x128xf32> to vector<4x8x128xf32>
    %246 = tpu.transpose %243, [0, 2, 1] : vector<4x8x128xf32> -> vector<4x128x8xf32>
    %247 = arith.truncf %246 : vector<4x128x8xf32> to vector<4x128x8xbf16>
    %248 = arith.truncf %244 : vector<4x8x128xf32> to vector<4x8x128xbf16>
    "tpu.trace_start"() <{level = 10 : i32, message = "hqd,hdk->hqk"}> : () -> ()
    %cst_97 = arith.constant dense<0.000000e+00> : vector<4x128x128xf32>
    %249 = tpu.matmul %247, %248, %cst_97 {dimension_numbers = #tpu.dot_dimension_numbers<[2], [1], [1], [2], [0, 0, 0, 1, 1, 2], [0], [0]>} : vector<4x128x8xbf16>, vector<4x8x128xbf16>, vector<4x128x128xf32> -> vector<4x128x128xf32>
    "tpu.trace_stop"() : () -> ()
    %c1_98 = arith.constant 1 : index
    %c0_99 = arith.constant 0 : index
    %c0_100 = arith.constant 0 : index
    %c0_101 = arith.constant 0 : index
    %250 = vector.load %arg1[%c1_98, %c0_99, %c0_100, %c0_101] : memref<2x4x128x128xf32, #tpu.memory_space<vmem>>, vector<1x4x128x128xf32>
    %251 = vector.shape_cast %250 : vector<1x4x128x128xf32> to vector<4x128x128xf32>
    %252 = arith.addf %249, %251 : vector<4x128x128xf32>
    %cst_102 = arith.constant dense<0xFF800000> : vector<4x128xf32>
    %253 = vector.multi_reduction <maximumf>, %252, %cst_102 [2] : vector<4x128x128xf32> to vector<4x128xf32>
    %254 = vector.shape_cast %253 : vector<4x128xf32> to vector<4x128x1xf32>
    %255 = vector.broadcast %254 : vector<4x128x1xf32> to vector<4x128x128xf32>
    %256 = arith.subf %252, %255 : vector<4x128x128xf32>
    %257 = math.exp %256 : vector<4x128x128xf32>
    %cst_103 = arith.constant dense<0.000000e+00> : vector<4x128xf32>
    %258 = vector.multi_reduction <add>, %257, %cst_103 [2] : vector<4x128x128xf32> to vector<4x128xf32>
    %259 = vector.shape_cast %258 : vector<4x128xf32> to vector<4x128x1xf32>
    %260 = vector.broadcast %259 : vector<4x128x1xf32> to vector<4x128x128xf32>
    %261 = arith.divf %257, %260 : vector<4x128x128xf32>
    %262 = arith.truncf %245 : vector<4x8x128xf32> to vector<4x8x128xbf16>
    %263 = arith.truncf %261 : vector<4x128x128xf32> to vector<4x128x128xbf16>
    "tpu.trace_start"() <{level = 10 : i32, message = "hdk,hqk->hdq"}> : () -> ()
    %cst_104 = arith.constant dense<0.000000e+00> : vector<4x8x128xf32>
    %264 = tpu.matmul %262, %263, %cst_104 {dimension_numbers = #tpu.dot_dimension_numbers<[2], [2], [1], [1], [0, 0, 0, 1, 1, 1], [0], [0]>} : vector<4x8x128xbf16>, vector<4x128x128xbf16>, vector<4x8x128xf32> -> vector<4x8x128xf32>
    "tpu.trace_stop"() : () -> ()
    %265 = vector.shape_cast %264 : vector<4x8x128xf32> to vector<32x128xf32>
    %c1_105 = arith.constant 1 : index
    %c0_106 = arith.constant 0 : index
    %c0_107 = arith.constant 0 : index
    %266 = vector.load %arg8[%c1_105, %c0_106, %c0_107] : memref<2x32x32xf32, #tpu.memory_space<vmem>>, vector<1x32x32xf32>
    %267 = vector.shape_cast %266 : vector<1x32x32xf32> to vector<32x32xf32>
    %268 = arith.truncf %267 : vector<32x32xf32> to vector<32x32xbf16>
    %269 = arith.truncf %265 : vector<32x128xf32> to vector<32x128xbf16>
    %cst_108 = arith.constant dense<0.000000e+00> : vector<32x128xf32>
    %270 = tpu.matmul %268, %269, %cst_108 {dimension_numbers = #tpu.dot_dimension_numbers<[1], [0], [0], [1], [0, 0, 1, 1], [], []>} : vector<32x32xbf16>, vector<32x128xbf16>, vector<32x128xf32> -> vector<32x128xf32>
    %271 = arith.addf %204, %270 : vector<32x128xf32>
    %c1_109 = arith.constant 1 : index
    %c0_110 = arith.constant 0 : index
    %c0_111 = arith.constant 0 : index
    %272 = vector.load %arg9[%c1_109, %c0_110, %c0_111] : memref<2x32x1xf32, #tpu.memory_space<vmem>>, vector<1x32x1xf32>
    %273 = vector.shape_cast %272 : vector<1x32x1xf32> to vector<32x1xf32>
    %274 = vector.broadcast %273 : vector<32x1xf32> to vector<32x128xf32>
    %275 = arith.addf %271, %274 : vector<32x128xf32>
    %c1_112 = arith.constant 1 : index
    %c0_113 = arith.constant 0 : index
    %c0_114 = arith.constant 0 : index
    %276 = vector.load %arg10[%c1_112, %c0_113, %c0_114] : memref<2x32x1xf32, #tpu.memory_space<vmem>>, vector<1x32x1xf32>
    %277 = vector.shape_cast %276 : vector<1x32x1xf32> to vector<32x1xf32>
    %c1_115 = arith.constant 1 : index
    %c0_116 = arith.constant 0 : index
    %c0_117 = arith.constant 0 : index
    %278 = vector.load %arg11[%c1_115, %c0_116, %c0_117] : memref<2x32x1xf32, #tpu.memory_space<vmem>>, vector<1x32x1xf32>
    %279 = vector.shape_cast %278 : vector<1x32x1xf32> to vector<32x1xf32>
    %cst_118 = arith.constant dense<0.000000e+00> : vector<128xf32>
    %280 = vector.multi_reduction <add>, %275, %cst_118 [0] : vector<32x128xf32> to vector<128xf32>
    %281 = vector.shape_cast %280 : vector<128xf32> to vector<1x128xf32>
    %cst_119 = arith.constant 3.200000e+01 : f32
    %282 = vector.broadcast %cst_119 : f32 to vector<1x128xf32>
    %283 = arith.divf %281, %282 : vector<1x128xf32>
    %284 = vector.broadcast %283 : vector<1x128xf32> to vector<32x128xf32>
    %285 = arith.subf %275, %284 : vector<32x128xf32>
    %286 = arith.mulf %285, %285 : vector<32x128xf32>
    %cst_120 = arith.constant dense<0.000000e+00> : vector<128xf32>
    %287 = vector.multi_reduction <add>, %286, %cst_120 [0] : vector<32x128xf32> to vector<128xf32>
    %288 = vector.shape_cast %287 : vector<128xf32> to vector<1x128xf32>
    %cst_121 = arith.constant 3.200000e+01 : f32
    %289 = vector.broadcast %cst_121 : f32 to vector<1x128xf32>
    %290 = arith.divf %288, %289 : vector<1x128xf32>
    %cst_122 = arith.constant 9.99999974E-6 : f32
    %291 = vector.broadcast %cst_122 : f32 to vector<1x128xf32>
    %292 = arith.addf %290, %291 : vector<1x128xf32>
    %293 = math.rsqrt %292 : vector<1x128xf32>
    %294 = vector.broadcast %293 : vector<1x128xf32> to vector<32x128xf32>
    %295 = arith.mulf %285, %294 : vector<32x128xf32>
    %296 = vector.broadcast %277 : vector<32x1xf32> to vector<32x128xf32>
    %297 = arith.mulf %295, %296 : vector<32x128xf32>
    %298 = vector.broadcast %279 : vector<32x1xf32> to vector<32x128xf32>
    %299 = arith.addf %297, %298 : vector<32x128xf32>
    %c1_123 = arith.constant 1 : index
    %c0_124 = arith.constant 0 : index
    %c0_125 = arith.constant 0 : index
    %300 = vector.load %arg12[%c1_123, %c0_124, %c0_125] : memref<2x128x32xf32, #tpu.memory_space<vmem>>, vector<1x128x32xf32>
    %301 = vector.shape_cast %300 : vector<1x128x32xf32> to vector<128x32xf32>
    %302 = arith.truncf %301 : vector<128x32xf32> to vector<128x32xbf16>
    %303 = arith.truncf %299 : vector<32x128xf32> to vector<32x128xbf16>
    %cst_126 = arith.constant dense<0.000000e+00> : vector<128x128xf32>
    %304 = tpu.matmul %302, %303, %cst_126 {dimension_numbers = #tpu.dot_dimension_numbers<[1], [0], [0], [1], [0, 0, 1, 1], [], []>} : vector<128x32xbf16>, vector<32x128xbf16>, vector<128x128xf32> -> vector<128x128xf32>
    %c1_127 = arith.constant 1 : index
    %c0_128 = arith.constant 0 : index
    %c0_129 = arith.constant 0 : index
    %305 = vector.load %arg13[%c1_127, %c0_128, %c0_129] : memref<2x128x1xf32, #tpu.memory_space<vmem>>, vector<1x128x1xf32>
    %306 = vector.shape_cast %305 : vector<1x128x1xf32> to vector<128x1xf32>
    %307 = vector.broadcast %306 : vector<128x1xf32> to vector<128x128xf32>
    %308 = arith.addf %304, %307 : vector<128x128xf32>
    %309 = tpu.transpose %308, [1, 0] : vector<128x128xf32> -> vector<128x128xf32>
    %310 = vector.shape_cast %309 : vector<128x128xf32> to vector<2x8x8x128xf32>
    %cst_130 = arith.constant 0.000000e+00 : f32
    %311 = vector.broadcast %cst_130 : f32 to vector<2x8x1x128xf32>
    %312 = tpu.concatenate %311, %310, %311 in 2 : vector<2x8x1x128xf32>, vector<2x8x8x128xf32>, vector<2x8x1x128xf32> -> vector<2x8x10x128xf32>
    %cst_131 = arith.constant 0.000000e+00 : f32
    %313 = vector.broadcast %cst_131 : f32 to vector<2x1x10x128xf32>
    %314 = tpu.concatenate %313, %312, %313 in 1 : vector<2x1x10x128xf32>, vector<2x8x10x128xf32>, vector<2x1x10x128xf32> -> vector<2x10x10x128xf32>
    %c1_132 = arith.constant 1 : index
    %c0_133 = arith.constant 0 : index
    %c0_134 = arith.constant 0 : index
    %315 = vector.load %arg14[%c1_132, %c0_133, %c0_134] : memref<2x9x128xf32, #tpu.memory_space<vmem>>, vector<1x9x128xf32>
    %316 = vector.shape_cast %315 : vector<1x9x128xf32> to vector<9x128xf32>
    %cst_135 = arith.constant 0.000000e+00 : f32
    %317 = vector.broadcast %cst_135 : f32 to vector<2x8x8x128xf32>
    %318 = vector.extract_strided_slice %314 {offsets = [0, 0, 0, 0], sizes = [2, 8, 8, 128], strides = [1, 1, 1, 1]} : vector<2x10x10x128xf32> to vector<2x8x8x128xf32>
    %319 = vector.extract_strided_slice %316 {offsets = [0, 0], sizes = [1, 128], strides = [1, 1]} : vector<9x128xf32> to vector<1x128xf32>
    %320 = vector.shape_cast %319 : vector<1x128xf32> to vector<1x1x1x128xf32>
    %321 = vector.broadcast %320 : vector<1x1x1x128xf32> to vector<2x8x8x128xf32>
    %322 = arith.mulf %318, %321 : vector<2x8x8x128xf32>
    %323 = arith.addf %317, %322 : vector<2x8x8x128xf32>
    %324 = vector.extract_strided_slice %314 {offsets = [0, 0, 1, 0], sizes = [2, 8, 8, 128], strides = [1, 1, 1, 1]} : vector<2x10x10x128xf32> to vector<2x8x8x128xf32>
    %325 = vector.extract_strided_slice %316 {offsets = [1, 0], sizes = [1, 128], strides = [1, 1]} : vector<9x128xf32> to vector<1x128xf32>
    %326 = vector.shape_cast %325 : vector<1x128xf32> to vector<1x1x1x128xf32>
    %327 = vector.broadcast %326 : vector<1x1x1x128xf32> to vector<2x8x8x128xf32>
    %328 = arith.mulf %324, %327 : vector<2x8x8x128xf32>
    %329 = arith.addf %323, %328 : vector<2x8x8x128xf32>
    %330 = vector.extract_strided_slice %314 {offsets = [0, 0, 2, 0], sizes = [2, 8, 8, 128], strides = [1, 1, 1, 1]} : vector<2x10x10x128xf32> to vector<2x8x8x128xf32>
    %331 = vector.extract_strided_slice %316 {offsets = [2, 0], sizes = [1, 128], strides = [1, 1]} : vector<9x128xf32> to vector<1x128xf32>
    %332 = vector.shape_cast %331 : vector<1x128xf32> to vector<1x1x1x128xf32>
    %333 = vector.broadcast %332 : vector<1x1x1x128xf32> to vector<2x8x8x128xf32>
    %334 = arith.mulf %330, %333 : vector<2x8x8x128xf32>
    %335 = arith.addf %329, %334 : vector<2x8x8x128xf32>
    %336 = vector.extract_strided_slice %314 {offsets = [0, 1, 0, 0], sizes = [2, 8, 8, 128], strides = [1, 1, 1, 1]} : vector<2x10x10x128xf32> to vector<2x8x8x128xf32>
    %337 = vector.extract_strided_slice %316 {offsets = [3, 0], sizes = [1, 128], strides = [1, 1]} : vector<9x128xf32> to vector<1x128xf32>
    %338 = vector.shape_cast %337 : vector<1x128xf32> to vector<1x1x1x128xf32>
    %339 = vector.broadcast %338 : vector<1x1x1x128xf32> to vector<2x8x8x128xf32>
    %340 = arith.mulf %336, %339 : vector<2x8x8x128xf32>
    %341 = arith.addf %335, %340 : vector<2x8x8x128xf32>
    %342 = vector.extract_strided_slice %314 {offsets = [0, 1, 1, 0], sizes = [2, 8, 8, 128], strides = [1, 1, 1, 1]} : vector<2x10x10x128xf32> to vector<2x8x8x128xf32>
    %343 = vector.extract_strided_slice %316 {offsets = [4, 0], sizes = [1, 128], strides = [1, 1]} : vector<9x128xf32> to vector<1x128xf32>
    %344 = vector.shape_cast %343 : vector<1x128xf32> to vector<1x1x1x128xf32>
    %345 = vector.broadcast %344 : vector<1x1x1x128xf32> to vector<2x8x8x128xf32>
    %346 = arith.mulf %342, %345 : vector<2x8x8x128xf32>
    %347 = arith.addf %341, %346 : vector<2x8x8x128xf32>
    %348 = vector.extract_strided_slice %314 {offsets = [0, 1, 2, 0], sizes = [2, 8, 8, 128], strides = [1, 1, 1, 1]} : vector<2x10x10x128xf32> to vector<2x8x8x128xf32>
    %349 = vector.extract_strided_slice %316 {offsets = [5, 0], sizes = [1, 128], strides = [1, 1]} : vector<9x128xf32> to vector<1x128xf32>
    %350 = vector.shape_cast %349 : vector<1x128xf32> to vector<1x1x1x128xf32>
    %351 = vector.broadcast %350 : vector<1x1x1x128xf32> to vector<2x8x8x128xf32>
    %352 = arith.mulf %348, %351 : vector<2x8x8x128xf32>
    %353 = arith.addf %347, %352 : vector<2x8x8x128xf32>
    %354 = vector.extract_strided_slice %314 {offsets = [0, 2, 0, 0], sizes = [2, 8, 8, 128], strides = [1, 1, 1, 1]} : vector<2x10x10x128xf32> to vector<2x8x8x128xf32>
    %355 = vector.extract_strided_slice %316 {offsets = [6, 0], sizes = [1, 128], strides = [1, 1]} : vector<9x128xf32> to vector<1x128xf32>
    %356 = vector.shape_cast %355 : vector<1x128xf32> to vector<1x1x1x128xf32>
    %357 = vector.broadcast %356 : vector<1x1x1x128xf32> to vector<2x8x8x128xf32>
    %358 = arith.mulf %354, %357 : vector<2x8x8x128xf32>
    %359 = arith.addf %353, %358 : vector<2x8x8x128xf32>
    %360 = vector.extract_strided_slice %314 {offsets = [0, 2, 1, 0], sizes = [2, 8, 8, 128], strides = [1, 1, 1, 1]} : vector<2x10x10x128xf32> to vector<2x8x8x128xf32>
    %361 = vector.extract_strided_slice %316 {offsets = [7, 0], sizes = [1, 128], strides = [1, 1]} : vector<9x128xf32> to vector<1x128xf32>
    %362 = vector.shape_cast %361 : vector<1x128xf32> to vector<1x1x1x128xf32>
    %363 = vector.broadcast %362 : vector<1x1x1x128xf32> to vector<2x8x8x128xf32>
    %364 = arith.mulf %360, %363 : vector<2x8x8x128xf32>
    %365 = arith.addf %359, %364 : vector<2x8x8x128xf32>
    %366 = vector.extract_strided_slice %314 {offsets = [0, 2, 2, 0], sizes = [2, 8, 8, 128], strides = [1, 1, 1, 1]} : vector<2x10x10x128xf32> to vector<2x8x8x128xf32>
    %367 = vector.extract_strided_slice %316 {offsets = [8, 0], sizes = [1, 128], strides = [1, 1]} : vector<9x128xf32> to vector<1x128xf32>
    %368 = vector.shape_cast %367 : vector<1x128xf32> to vector<1x1x1x128xf32>
    %369 = vector.broadcast %368 : vector<1x1x1x128xf32> to vector<2x8x8x128xf32>
    %370 = arith.mulf %366, %369 : vector<2x8x8x128xf32>
    %371 = arith.addf %365, %370 : vector<2x8x8x128xf32>
    %c1_136 = arith.constant 1 : index
    %c0_137 = arith.constant 0 : index
    %c0_138 = arith.constant 0 : index
    %372 = vector.load %arg15[%c1_136, %c0_137, %c0_138] : memref<2x1x128xf32, #tpu.memory_space<vmem>>, vector<1x1x128xf32>
    %373 = vector.shape_cast %372 : vector<1x1x128xf32> to vector<1x128xf32>
    %374 = vector.shape_cast %373 : vector<1x128xf32> to vector<1x1x1x128xf32>
    %375 = vector.broadcast %374 : vector<1x1x1x128xf32> to vector<2x8x8x128xf32>
    %376 = arith.addf %371, %375 : vector<2x8x8x128xf32>
    %377 = arith.mulf %376, %376 : vector<2x8x8x128xf32>
    %378 = arith.mulf %376, %377 : vector<2x8x8x128xf32>
    %cst_139 = arith.constant 4.471500e-02 : f32
    %379 = vector.broadcast %cst_139 : f32 to vector<2x8x8x128xf32>
    %380 = arith.mulf %379, %378 : vector<2x8x8x128xf32>
    %381 = arith.addf %376, %380 : vector<2x8x8x128xf32>
    %cst_140 = arith.constant 0.797884583 : f32
    %382 = vector.broadcast %cst_140 : f32 to vector<2x8x8x128xf32>
    %383 = arith.mulf %382, %381 : vector<2x8x8x128xf32>
    %384 = math.tanh %383 : vector<2x8x8x128xf32>
    %cst_141 = arith.constant 1.000000e+00 : f32
    %385 = vector.broadcast %cst_141 : f32 to vector<2x8x8x128xf32>
    %386 = arith.addf %385, %384 : vector<2x8x8x128xf32>
    %cst_142 = arith.constant 5.000000e-01 : f32
    %387 = vector.broadcast %cst_142 : f32 to vector<2x8x8x128xf32>
    %388 = arith.mulf %387, %386 : vector<2x8x8x128xf32>
    %389 = arith.mulf %376, %388 : vector<2x8x8x128xf32>
    %390 = vector.shape_cast %389 : vector<2x8x8x128xf32> to vector<128x128xf32>
    %c1_143 = arith.constant 1 : index
    %c0_144 = arith.constant 0 : index
    %c0_145 = arith.constant 0 : index
    %391 = vector.load %arg16[%c1_143, %c0_144, %c0_145] : memref<2x32x128xf32, #tpu.memory_space<vmem>>, vector<1x32x128xf32>
    %392 = vector.shape_cast %391 : vector<1x32x128xf32> to vector<32x128xf32>
    %393 = tpu.transpose %390, [1, 0] : vector<128x128xf32> -> vector<128x128xf32>
    %394 = arith.truncf %392 : vector<32x128xf32> to vector<32x128xbf16>
    %395 = arith.truncf %393 : vector<128x128xf32> to vector<128x128xbf16>
    %cst_146 = arith.constant dense<0.000000e+00> : vector<32x128xf32>
    %396 = tpu.matmul %394, %395, %cst_146 {dimension_numbers = #tpu.dot_dimension_numbers<[1], [0], [0], [1], [0, 0, 1, 1], [], []>} : vector<32x128xbf16>, vector<128x128xbf16>, vector<32x128xf32> -> vector<32x128xf32>
    %397 = arith.addf %275, %396 : vector<32x128xf32>
    %c1_147 = arith.constant 1 : index
    %c0_148 = arith.constant 0 : index
    %c0_149 = arith.constant 0 : index
    %398 = vector.load %arg17[%c1_147, %c0_148, %c0_149] : memref<2x32x1xf32, #tpu.memory_space<vmem>>, vector<1x32x1xf32>
    %399 = vector.shape_cast %398 : vector<1x32x1xf32> to vector<32x1xf32>
    %400 = vector.broadcast %399 : vector<32x1xf32> to vector<32x128xf32>
    %401 = arith.addf %397, %400 : vector<32x128xf32>
    %c0_150 = arith.constant 0 : index
    %c0_151 = arith.constant 0 : index
    %402 = vector.load %arg18[%c0_150, %c0_151] : memref<32x128xf32, #tpu.memory_space<vmem>>, vector<32x128xf32>
    tpu.vector_store %arg18[%c0_150, %c0_151], %401 {strides = array<i32>} : memref<32x128xf32, #tpu.memory_space<vmem>>, vector<32x128xf32>,
    return
  }
}

</mosaic_0001>

<llo_original>
// kernel: tpu_custom_call.1
$region0: #{tpu_custom_call.1}
  #allocation0 [shape = 'u32[]', space=smem, size = 0x4, offset = 0x4, fixed_abs, tag = 'smem constant byte address 0x4 - core index']
  #allocation1 [shape = 'u32[144,128]{1,0:T(1,128)}', space=vmem, size = 0x12000, scoped, tag = 'internal scratch']
  %s0 = inlined_call_operand.vmem [shape: f32[64,128], index: 0, kind: input, shape index: {}]
  %s1 = inlined_call_operand.vmem [shape: f32[2,4,128,128], index: 1, kind: input, shape index: {}]
  %s2 = inlined_call_operand.hbm [shape: f32[32,64], index: 2, kind: input, shape index: {}]
  %s3 = inlined_call_operand.vmem [shape: f32[32,1], index: 3, kind: input, shape index: {}]
  %s4 = inlined_call_operand.vmem [shape: f32[2,32,1], index: 4, kind: input, shape index: {}]
  %s5 = inlined_call_operand.vmem [shape: f32[2,32,1], index: 5, kind: input, shape index: {}]
  %s6 = inlined_call_operand.hbm [shape: f32[2,32,32], index: 6, kind: input, shape index: {}]
  %s7 = inlined_call_operand.vmem [shape: f32[2,64,32], index: 7, kind: input, shape index: {}]
  %s8 = inlined_call_operand.hbm [shape: f32[2,32,32], index: 8, kind: input, shape index: {}]
  %s9 = inlined_call_operand.vmem [shape: f32[2,32,1], index: 9, kind: input, shape index: {}]
  %s10 = inlined_call_operand.vmem [shape: f32[2,32,1], index: 10, kind: input, shape index: {}]
  %s11 = inlined_call_operand.vmem [shape: f32[2,32,1], index: 11, kind: input, shape index: {}]
  %s12 = inlined_call_operand.vmem [shape: f32[2,128,32], index: 12, kind: input, shape index: {}]
  %s13 = inlined_call_operand.vmem [shape: f32[2,128,1], index: 13, kind: input, shape index: {}]
  %s14 = inlined_call_operand.vmem [shape: f32[2,9,128], index: 14, kind: input, shape index: {}]
  %s15 = inlined_call_operand.hbm [shape: f32[2,1,128], index: 15, kind: input, shape index: {}]
  %s16 = inlined_call_operand.vmem [shape: f32[2,32,128], index: 16, kind: input, shape index: {}]
  %s17 = inlined_call_operand.vmem [shape: f32[2,32,1], index: 17, kind: input, shape index: {}]
  %s18 = inlined_call_operand.hbm [shape: f32[32,128], index: 18, kind: output, shape index: {}]
  %s19 = sld [smem:[#allocation0]]
  $region98: #{tpu_custom_call.1} parent=0
    _
  %s21 = ssub.s32 1, %s19
  %s22 = scalar_select 0, %s21, %s19
  $region1: #{tpu_custom_call.1} parent=0
    #allocation2 [shape = 'u8[16384]{0}', space=vmem, size = 0x4000, scoped, tag = 'input window, operand 2, single buffered']
    #allocation3 [shape = 's32[1]{0}', space=sflag, size = 0x4, scoped, tag = 'scoped memory for tpu_custom_call.1']
    #allocation4 [shape = 's32[1]{0}', space=sflag, size = 0x4, scoped, tag = 'scoped memory for tpu_custom_call.1']
    #allocation5 [shape = 'u8[32768]{0}', space=vmem, size = 0x8000, scoped, tag = 'input window, operand 6, single buffered']
    #allocation6 [shape = 's32[1]{0}', space=sflag, size = 0x4, scoped, tag = 'scoped memory for tpu_custom_call.1']
    #allocation7 [shape = 'u8[32768]{0}', space=vmem, size = 0x8000, scoped, tag = 'input window, operand 8, single buffered']
    #allocation8 [shape = 'u8[1024]{0}', space=vmem, size = 0x400, scoped, tag = 'input window, operand 15, single buffered']
    #allocation9 [shape = 's32[1]{0}', space=sflag, size = 0x4, scoped, tag = 'scoped memory for tpu_custom_call.1']
    #allocation10 [shape = 'u8[16384]{0}', space=vmem, size = 0x4000, scoped, tag = 'output window, operand 0, single buffered']
    %23 = vsyncpa [#allocation3], 0
    %24 = vsyncpa [#allocation6], 0
    %25 = vsyncpa [#allocation9], 0
    %26 = vsyncpa [#allocation4], 0
    // Predicated region
    $region2: #{tpu_custom_call.1} parent=1 // pred_check
      _
    $region3: #{tpu_custom_call.1} parent=1 // pred_check_branch
      %28 = sbr.rel (0) target = $region5
    $region4: #{tpu_custom_call.1} parent=1 // pred_region
      _
    $region5: #{tpu_custom_call.1} parent=1 // pred_fallthru
      _
    // Predicated region
    $region6: #{tpu_custom_call.1} parent=1 // pred_check
      _
    $region7: #{tpu_custom_call.1} parent=1 // pred_check_branch
      %30 = sbr.rel (0) target = $region9
    $region8: #{tpu_custom_call.1} parent=1 // pred_region
      _
    $region9: #{tpu_custom_call.1} parent=1 // pred_fallthru
      _
    // Predicated region
    $region10: #{tpu_custom_call.1} parent=1 // pred_check
      _
    $region11: #{tpu_custom_call.1} parent=1 // pred_check_branch
      %32 = sbr.rel (0) target = $region13
    $region12: #{tpu_custom_call.1} parent=1 // pred_region
      %s34 = ssub.s32 512, 512
      %35 = vsyncadd [#allocation3], %s34
      %s36 = sshll.u32 [#allocation2], 4
      %s37 = int_to_ptr.vmem [resolvable:$true] %s36
      %42 = dma.hbm_to_vmem [thread:$0]  %s2, 512, %s37, [#allocation3], 128, 128, 8
    $region13: #{tpu_custom_call.1} parent=1 // pred_fallthru
      _
    // Predicated region
    $region14: #{tpu_custom_call.1} parent=1 // pred_check
      _
    $region15: #{tpu_custom_call.1} parent=1 // pred_check_branch
      %44 = sbr.rel (0) target = $region17
    $region16: #{tpu_custom_call.1} parent=1 // pred_region
      _
    $region17: #{tpu_custom_call.1} parent=1 // pred_fallthru
      _
    // Predicated region
    $region18: #{tpu_custom_call.1} parent=1 // pred_check
      _
    $region19: #{tpu_custom_call.1} parent=1 // pred_check_branch
      %46 = sbr.rel (0) target = $region21
    $region20: #{tpu_custom_call.1} parent=1 // pred_region
      _
    $region21: #{tpu_custom_call.1} parent=1 // pred_fallthru
      _
    // Predicated region
    $region22: #{tpu_custom_call.1} parent=1 // pred_check
      _
    $region23: #{tpu_custom_call.1} parent=1 // pred_check_branch
      %48 = sbr.rel (0) target = $region25
    $region24: #{tpu_custom_call.1} parent=1 // pred_region
      _
    $region25: #{tpu_custom_call.1} parent=1 // pred_fallthru
      _
    // Predicated region
    $region26: #{tpu_custom_call.1} parent=1 // pred_check
      _
    $region27: #{tpu_custom_call.1} parent=1 // pred_check_branch
      %50 = sbr.rel (0) target = $region29
    $region28: #{tpu_custom_call.1} parent=1 // pred_region
      %s52 = ssub.s32 1024, 1024
      %53 = vsyncadd [#allocation6], %s52
      %s54 = sshll.u32 [#allocation5], 4
      %s55 = int_to_ptr.vmem [resolvable:$true] %s54
      %60 = dma.hbm_to_vmem [thread:$0]  %s6, 1024, %s55, [#allocation6], 128, 128, 8
    $region29: #{tpu_custom_call.1} parent=1 // pred_fallthru
      _
    // Predicated region
    $region30: #{tpu_custom_call.1} parent=1 // pred_check
      _
    $region31: #{tpu_custom_call.1} parent=1 // pred_check_branch
      %62 = sbr.rel (0) target = $region33
    $region32: #{tpu_custom_call.1} parent=1 // pred_region
      _
    $region33: #{tpu_custom_call.1} parent=1 // pred_fallthru
      _
    // Predicated region
    $region34: #{tpu_custom_call.1} parent=1 // pred_check
      _
    $region35: #{tpu_custom_call.1} parent=1 // pred_check_branch
      %64 = sbr.rel (0) target = $region37
    $region36: #{tpu_custom_call.1} parent=1 // pred_region
      %s66 = ssub.s32 1024, 1024
      %67 = vsyncadd [#allocation6], %s66
      %s68 = sshll.u32 [#allocation7], 4
      %s69 = int_to_ptr.vmem [resolvable:$true] %s68
      %74 = dma.hbm_to_vmem [thread:$0]  %s8, 1024, %s69, [#allocation6], 128, 128, 8
    $region37: #{tpu_custom_call.1} parent=1 // pred_fallthru
      _
    // Predicated region
    $region38: #{tpu_custom_call.1} parent=1 // pred_check
      _
    $region39: #{tpu_custom_call.1} parent=1 // pred_check_branch
      %76 = sbr.rel (0) target = $region41
    $region40: #{tpu_custom_call.1} parent=1 // pred_region
      _
    $region41: #{tpu_custom_call.1} parent=1 // pred_fallthru
      _
    // Predicated region
    $region42: #{tpu_custom_call.1} parent=1 // pred_check
      _
    $region43: #{tpu_custom_call.1} parent=1 // pred_check_branch
      %78 = sbr.rel (0) target = $region45
    $region44: #{tpu_custom_call.1} parent=1 // pred_region
      _
    $region45: #{tpu_custom_call.1} parent=1 // pred_fallthru
      _
    // Predicated region
    $region46: #{tpu_custom_call.1} parent=1 // pred_check
      _
    $region47: #{tpu_custom_call.1} parent=1 // pred_check_branch
      %80 = sbr.rel (0) target = $region49
    $region48: #{tpu_custom_call.1} parent=1 // pred_region
      _
    $region49: #{tpu_custom_call.1} parent=1 // pred_fallthru
      _
    // Predicated region
    $region50: #{tpu_custom_call.1} parent=1 // pred_check
      _
    $region51: #{tpu_custom_call.1} parent=1 // pred_check_branch
      %82 = sbr.rel (0) target = $region53
    $region52: #{tpu_custom_call.1} parent=1 // pred_region
      _
    $region53: #{tpu_custom_call.1} parent=1 // pred_fallthru
      _
    // Predicated region
    $region54: #{tpu_custom_call.1} parent=1 // pred_check
      _
    $region55: #{tpu_custom_call.1} parent=1 // pred_check_branch
      %84 = sbr.rel (0) target = $region57
    $region56: #{tpu_custom_call.1} parent=1 // pred_region
      _
    $region57: #{tpu_custom_call.1} parent=1 // pred_fallthru
      _
    // Predicated region
    $region58: #{tpu_custom_call.1} parent=1 // pred_check
      _
    $region59: #{tpu_custom_call.1} parent=1 // pred_check_branch
      %86 = sbr.rel (0) target = $region61
    $region60: #{tpu_custom_call.1} parent=1 // pred_region
      _
    $region61: #{tpu_custom_call.1} parent=1 // pred_fallthru
      _
    // Predicated region
    $region62: #{tpu_custom_call.1} parent=1 // pred_check
      _
    $region63: #{tpu_custom_call.1} parent=1 // pred_check_branch
      %88 = sbr.rel (0) target = $region65
    $region64: #{tpu_custom_call.1} parent=1 // pred_region
      %s90 = ssub.s32 32, 32
      %91 = vsyncadd [#allocation9], %s90
      %s92 = sshll.u32 [#allocation8], 4
      %s93 = int_to_ptr.vmem [resolvable:$true] %s92
      %98 = dma.hbm_to_vmem [thread:$0]  %s15, 32, %s93, [#allocation9], 16, 16, 1
    $region65: #{tpu_custom_call.1} parent=1 // pred_fallthru
      _
    // Predicated region
    $region66: #{tpu_custom_call.1} parent=1 // pred_check
      _
    $region67: #{tpu_custom_call.1} parent=1 // pred_check_branch
      %100 = sbr.rel (0) target = $region69
    $region68: #{tpu_custom_call.1} parent=1 // pred_region
      _
    $region69: #{tpu_custom_call.1} parent=1 // pred_fallthru
      _
    // Predicated region
    $region70: #{tpu_custom_call.1} parent=1 // pred_check
      _
    $region71: #{tpu_custom_call.1} parent=1 // pred_check_branch
      %102 = sbr.rel (0) target = $region73
    $region72: #{tpu_custom_call.1} parent=1 // pred_region
      _
    $region73: #{tpu_custom_call.1} parent=1 // pred_fallthru
      _
    // Predicated region
    $region74: #{tpu_custom_call.1} parent=1 // pred_check
      _
    $region75: #{tpu_custom_call.1} parent=1 // pred_check_branch
      %104 = sbr.rel (0) target = $region77
    $region76: #{tpu_custom_call.1} parent=1 // pred_region
      %105 = dma.done [#allocation3], 512
    $region77: #{tpu_custom_call.1} parent=1 // pred_fallthru
      _
    // Predicated region
    $region78: #{tpu_custom_call.1} parent=1 // pred_check
      _
    $region79: #{tpu_custom_call.1} parent=1 // pred_check_branch
      %107 = sbr.rel (0) target = $region81
    $region80: #{tpu_custom_call.1} parent=1 // pred_region
      %108 = dma.done [#allocation6], 1024
    $region81: #{tpu_custom_call.1} parent=1 // pred_fallthru
      _
    // Predicated region
    $region82: #{tpu_custom_call.1} parent=1 // pred_check
      _
    $region83: #{tpu_custom_call.1} parent=1 // pred_check_branch
      %110 = sbr.rel (0) target = $region85
    $region84: #{tpu_custom_call.1} parent=1 // pred_region
      %111 = dma.done [#allocation6], 1024
    $region85: #{tpu_custom_call.1} parent=1 // pred_fallthru
      _
    // Predicated region
    $region86: #{tpu_custom_call.1} parent=1 // pred_check
      _
    $region87: #{tpu_custom_call.1} parent=1 // pred_check_branch
      %113 = sbr.rel (0) target = $region89
    $region88: #{tpu_custom_call.1} parent=1 // pred_region
      %114 = dma.done [#allocation9], 32
    $region89: #{tpu_custom_call.1} parent=1 // pred_fallthru
      _
    %v116 = vld [vmem:[#allocation2] sm:$0xff]
    %v117 = vld [vmem:[#allocation2 + $0x8] sm:$0xff]
    %v118 = vld [vmem:[#allocation2 + $0x10] sm:$0xff]
    %v119 = vld [vmem:[#allocation2 + $0x18] sm:$0xff]
    %v120 = vld [vmem:[%s0] sm:$0xff]
    %v121 = vld [vmem:[%s0 + $0x8] sm:$0xff]
    %v122 = vld [vmem:[%s0 + $0x10] sm:$0xff]
    %v123 = vld [vmem:[%s0 + $0x18] sm:$0xff]
    %v124 = vld [vmem:[%s0 + $0x20] sm:$0xff]
    %v125 = vld [vmem:[%s0 + $0x28] sm:$0xff]
    %v126 = vld [vmem:[%s0 + $0x30] sm:$0xff]
    %v127 = vld [vmem:[%s0 + $0x38] sm:$0xff]
    %v128 = vpack.c.bf16 %v117, %v116
    %v129 = vpack.c.bf16 %v119, %v118
    %v130 = vpack.c.bf16 %v121, %v120
    %v131 = vpack.c.bf16 %v123, %v122
    %v132 = vpack.c.bf16 %v125, %v124
    %v133 = vpack.c.bf16 %v127, %v126
    %v134 = vld [vmem:[%s3] sm:$0xff]
    %v135 = vld [vmem:[%s3 + $0x8] sm:$0xff]
    %v136 = vld [vmem:[%s3 + $0x10] sm:$0xff]
    %v137 = vld [vmem:[%s3 + $0x18] sm:$0xff]
    %139 = vset.pattern.permute.xlu0 0
    %140 = vperm.xlu0 %139, %v134
    %v141 = vpop.permute.xlu0 %140
    %144 = vset.pattern.permute.xlu0 0
    %145 = vperm.xlu0 %144, %v135
    %v146 = vpop.permute.xlu0 %145
    %149 = vset.pattern.permute.xlu0 0
    %150 = vperm.xlu0 %149, %v136
    %v151 = vpop.permute.xlu0 %150
    %154 = vset.pattern.permute.xlu0 0
    %155 = vperm.xlu0 %154, %v137
    %v156 = vpop.permute.xlu0 %155
    %vm158 = vcmask 523264
    %v160 = vsel %vm158, %v128, 0
    %v163 = vsel %vm158, %v129, 0
    %165 = vmatprep.subr.bf16.mxu0 0
    %166 = vmatpush1.bf16.msra.mxu0 %v130
    %167 = vmatprep.subr.bf16.mxu0 0
    %168 = vmatpush1.bf16.msra.mxu0 %v131
    %169 = vmatprep.subr.bf16.mxu0 0
    %170 = vmatpush1.bf16.msra.mxu0 %v132
    %171 = vmatprep.subr.bf16.mxu0 0
    %172 = vmatpush1.bf16.msra.mxu0 %v133
    %173 = vmatprep.subr.bf16.mxu0 0
    %174 = vmatpush1.bf16.msra.mxu0 0
    %175 = vmatprep.subr.bf16.mxu0 0
    %176 = vmatpush1.bf16.msra.mxu0 0
    %177 = vmatprep.subr.bf16.mxu0 0
    %178 = vmatpush1.bf16.msra.mxu0 0
    %179 = vmatprep.subr.bf16.mxu0 0
    %180 = vmatpush1.bf16.msra.mxu0 0
    %181 = vmatprep.subr.bf16.mxu0 0
    %182 = vmatpush1.bf16.msra.mxu0 0
    %183 = vmatprep.subr.bf16.mxu0 0
    %184 = vmatpush1.bf16.msra.mxu0 0
    %185 = vmatprep.subr.bf16.mxu0 0
    %186 = vmatpush1.bf16.msra.mxu0 0
    %187 = vmatprep.subr.bf16.mxu0 0
    %188 = vmatpush1.bf16.msra.mxu0 0
    %189 = vmatprep.subr.bf16.mxu0 0
    %190 = vmatpush1.bf16.msra.mxu0 0
    %191 = vmatprep.subr.bf16.mxu0 0
    %192 = vmatpush1.bf16.msra.mxu0 0
    %193 = vmatprep.subr.bf16.mxu0 0
    %194 = vmatpush1.bf16.msra.mxu0 0
    %195 = vmatprep.subr.bf16.mxu0 0
    %196 = vmatpush1.bf16.msra.mxu0 0
    %197 = vmatprep.mubr.bf16.mxu0 0
    %198 = vmatmul.mubr.bf16.gmra.mrb[0].mxu0 %v160
    %v199 = vpop.f32.mrb[0].mxu0
    %v200 = vadd.f32 %v141, %v199
    %v201 = vpop.f32.mrb[0].mxu0
    %v202 = vpop.f32.mrb[0].mxu0
    %v203 = vadd.f32 %v146, %v202
    %v204 = vpop.f32.mrb[0].mxu0
    %205 = vmatprep.mubr.bf16.mxu0 0
    %206 = vmatmul.mubr.bf16.gmra.mrb[0].mxu0 %v163
    %v207 = vpop.f32.mrb[0].mxu0
    %v208 = vadd.f32 %v151, %v207
    %v209 = vpop.f32.mrb[0].mxu0
    %v210 = vpop.f32.mrb[0].mxu0
    %v211 = vadd.f32 %v156, %v210
    %v212 = vpop.f32.mrb[0].mxu0
    %213 = vdwg.mxu0
    %v214 = vld [vmem:[%s4] sm:$0xff]
    %v215 = vld [vmem:[%s4 + $0x8] sm:$0xff]
    %v216 = vld [vmem:[%s4 + $0x10] sm:$0xff]
    %v217 = vld [vmem:[%s4 + $0x18] sm:$0xff]
    %v218 = vld [vmem:[%s5] sm:$0xff]
    %v219 = vld [vmem:[%s5 + $0x8] sm:$0xff]
    %v220 = vld [vmem:[%s5 + $0x10] sm:$0xff]
    %v221 = vld [vmem:[%s5 + $0x18] sm:$0xff]
    %v222 = vadd.f32 %v200, %v203
    %v223 = vadd.f32 %v222, %v208
    %v224 = vadd.f32 %v223, %v211
    %v225 = vrot.slane %v224, 4
    %v226 = vadd.f32 %v224, %v225
    %v227 = vrot.slane %v226, 2
    %v228 = vadd.f32 %v226, %v227
    %v229 = vrot.slane %v228, 1
    %v230 = vadd.f32 %v228, %v229
    %v231 = vrcp.pop 32.0
    %v232 = vmul.f32 %v230, %v231
    %v233 = vsub.f32 %v200, %v232
    %v234 = vsub.f32 %v203, %v232
    %v235 = vsub.f32 %v208, %v232
    %v236 = vsub.f32 %v211, %v232
    %v237 = vmul.f32 %v233, %v233
    %v238 = vmul.f32 %v234, %v234
    %v239 = vmul.f32 %v235, %v235
    %v240 = vmul.f32 %v236, %v236
    %v241 = vadd.f32 %v237, %v238
    %v242 = vadd.f32 %v241, %v239
    %v243 = vadd.f32 %v242, %v240
    %v244 = vrot.slane %v243, 4
    %v245 = vadd.f32 %v243, %v244
    %v246 = vrot.slane %v245, 2
    %v247 = vadd.f32 %v245, %v246
    %v248 = vrot.slane %v247, 1
    %v249 = vadd.f32 %v247, %v248
    %v250 = vmul.f32 %v249, %v231
    %v251 = vadd.f32 %v250, 1e-05
    %v252 = vrsqrt.pop %v251
    %v253 = vmul.f32 %v233, %v252
    %v254 = vmul.f32 %v234, %v252
    %v255 = vmul.f32 %v235, %v252
    %v256 = vmul.f32 %v236, %v252
    %258 = vset.pattern.permute.xlu0 0
    %259 = vperm.xlu0 %258, %v214
    %v260 = vpop.permute.xlu0 %259
    %263 = vset.pattern.permute.xlu0 0
    %264 = vperm.xlu0 %263, %v215
    %v265 = vpop.permute.xlu0 %264
    %268 = vset.pattern.permute.xlu0 0
    %269 = vperm.xlu0 %268, %v216
    %v270 = vpop.permute.xlu0 %269
    %273 = vset.pattern.permute.xlu0 0
    %274 = vperm.xlu0 %273, %v217
    %v275 = vpop.permute.xlu0 %274
    %v277 = vmul.f32 %v253, %v260
    %v278 = vmul.f32 %v254, %v265
    %v279 = vmul.f32 %v255, %v270
    %v280 = vmul.f32 %v256, %v275
    %282 = vset.pattern.permute.xlu0 0
    %283 = vperm.xlu0 %282, %v218
    %v284 = vpop.permute.xlu0 %283
    %287 = vset.pattern.permute.xlu0 0
    %288 = vperm.xlu0 %287, %v219
    %v289 = vpop.permute.xlu0 %288
    %292 = vset.pattern.permute.xlu0 0
    %293 = vperm.xlu0 %292, %v220
    %v294 = vpop.permute.xlu0 %293
    %297 = vset.pattern.permute.xlu0 0
    %298 = vperm.xlu0 %297, %v221
    %v299 = vpop.permute.xlu0 %298
    %v301 = vadd.f32 %v277, %v284
    %v302 = vadd.f32 %v278, %v289
    %v303 = vadd.f32 %v279, %v294
    %v304 = vadd.f32 %v280, %v299
    %v305 = vld [vmem:[#allocation5] sm:$0xff]
    %v306 = vld [vmem:[#allocation5 + $0x8] sm:$0xff]
    %v307 = vld [vmem:[#allocation5 + $0x10] sm:$0xff]
    %v308 = vld [vmem:[#allocation5 + $0x18] sm:$0xff]
    %v309 = vpack.c.bf16 %v306, %v305
    %v310 = vpack.c.bf16 %v308, %v307
    %v311 = vpack.c.bf16 %v302, %v301
    %v312 = vpack.c.bf16 %v304, %v303
    %vm313 = vcmask 261120
    %v315 = vsel %vm313, %v309, 0
    %v318 = vsel %vm313, %v310, 0
    %320 = vmatprep.subr.bf16.mxu0 0
    %321 = vmatpush1.bf16.msra.mxu0 %v311
    %322 = vmatprep.subr.bf16.mxu0 0
    %323 = vmatpush1.bf16.msra.mxu0 %v312
    %324 = vmatprep.subr.bf16.mxu0 0
    %325 = vmatpush1.bf16.msra.mxu0 0
    %326 = vmatprep.subr.bf16.mxu0 0
    %327 = vmatpush1.bf16.msra.mxu0 0
    %328 = vmatprep.subr.bf16.mxu0 0
    %329 = vmatpush1.bf16.msra.mxu0 0
    %330 = vmatprep.subr.bf16.mxu0 0
    %331 = vmatpush1.bf16.msra.mxu0 0
    %332 = vmatprep.subr.bf16.mxu0 0
    %333 = vmatpush1.bf16.msra.mxu0 0
    %334 = vmatprep.subr.bf16.mxu0 0
    %335 = vmatpush1.bf16.msra.mxu0 0
    %336 = vmatprep.subr.bf16.mxu0 0
    %337 = vmatpush1.bf16.msra.mxu0 0
    %338 = vmatprep.subr.bf16.mxu0 0
    %339 = vmatpush1.bf16.msra.mxu0 0
    %340 = vmatprep.subr.bf16.mxu0 0
    %341 = vmatpush1.bf16.msra.mxu0 0
    %342 = vmatprep.subr.bf16.mxu0 0
    %343 = vmatpush1.bf16.msra.mxu0 0
    %344 = vmatprep.subr.bf16.mxu0 0
    %345 = vmatpush1.bf16.msra.mxu0 0
    %346 = vmatprep.subr.bf16.mxu0 0
    %347 = vmatpush1.bf16.msra.mxu0 0
    %348 = vmatprep.subr.bf16.mxu0 0
    %349 = vmatpush1.bf16.msra.mxu0 0
    %350 = vmatprep.subr.bf16.mxu0 0
    %351 = vmatpush1.bf16.msra.mxu0 0
    %352 = vmatprep.mubr.bf16.mxu0 0
    %353 = vmatmul.mubr.bf16.gmra.mrb[0].mxu0 %v315
    %v354 = vpop.f32.mrb[0].mxu0
    %v355 = vadd.f32 0.0, %v354
    %v356 = vpop.f32.mrb[0].mxu0
    %v357 = vpop.f32.mrb[0].mxu0
    %v358 = vadd.f32 0.0, %v357
    %v359 = vpop.f32.mrb[0].mxu0
    %360 = vmatprep.mubr.bf16.mxu0 0
    %361 = vmatmul.mubr.bf16.gmra.mrb[0].mxu0 %v318
    %v362 = vpop.f32.mrb[0].mxu0
    %v363 = vadd.f32 0.0, %v362
    %v364 = vpop.f32.mrb[0].mxu0
    %v365 = vpop.f32.mrb[0].mxu0
    %v366 = vadd.f32 0.0, %v365
    %v367 = vpop.f32.mrb[0].mxu0
    %368 = vdwg.mxu0
    %v369 = vmul.f32 %v355, 0.35355338
    %v370 = vmul.f32 %v358, 0.35355338
    %v371 = vmul.f32 %v363, 0.35355338
    %v372 = vmul.f32 %v366, 0.35355338
    %v373 = vld [vmem:[%s7] sm:$0xff]
    %v374 = vld [vmem:[%s7 + $0x8] sm:$0xff]
    %v375 = vld [vmem:[%s7 + $0x10] sm:$0xff]
    %v376 = vld [vmem:[%s7 + $0x18] sm:$0xff]
    %v377 = vld [vmem:[%s7 + $0x20] sm:$0xff]
    %v378 = vld [vmem:[%s7 + $0x28] sm:$0xff]
    %v379 = vld [vmem:[%s7 + $0x30] sm:$0xff]
    %v380 = vld [vmem:[%s7 + $0x38] sm:$0xff]
    %v381 = vpack.c.bf16 %v374, %v373
    %v382 = vpack.c.bf16 %v376, %v375
    %v383 = vpack.c.bf16 %v378, %v377
    %v384 = vpack.c.bf16 %v380, %v379
    %v386 = vsel %vm313, %v381, 0
    %v389 = vsel %vm313, %v382, 0
    %v392 = vsel %vm313, %v383, 0
    %v395 = vsel %vm313, %v384, 0
    %397 = vmatprep.subr.bf16.mxu0 0
    %398 = vmatpush1.bf16.msra.mxu0 %v311
    %399 = vmatprep.subr.bf16.mxu0 0
    %400 = vmatpush1.bf16.msra.mxu0 %v312
    %401 = vmatprep.subr.bf16.mxu0 0
    %402 = vmatpush1.bf16.msra.mxu0 0
    %403 = vmatprep.subr.bf16.mxu0 0
    %404 = vmatpush1.bf16.msra.mxu0 0
    %405 = vmatprep.subr.bf16.mxu0 0
    %406 = vmatpush1.bf16.msra.mxu0 0
    %407 = vmatprep.subr.bf16.mxu0 0
    %408 = vmatpush1.bf16.msra.mxu0 0
    %409 = vmatprep.subr.bf16.mxu0 0
    %410 = vmatpush1.bf16.msra.mxu0 0
    %411 = vmatprep.subr.bf16.mxu0 0
    %412 = vmatpush1.bf16.msra.mxu0 0
    %413 = vmatprep.subr.bf16.mxu0 0
    %414 = vmatpush1.bf16.msra.mxu0 0
    %415 = vmatprep.subr.bf16.mxu0 0
    %416 = vmatpush1.bf16.msra.mxu0 0
    %417 = vmatprep.subr.bf16.mxu0 0
    %418 = vmatpush1.bf16.msra.mxu0 0
    %419 = vmatprep.subr.bf16.mxu0 0
    %420 = vmatpush1.bf16.msra.mxu0 0
    %421 = vmatprep.subr.bf16.mxu0 0
    %422 = vmatpush1.bf16.msra.mxu0 0
    %423 = vmatprep.subr.bf16.mxu0 0
    %424 = vmatpush1.bf16.msra.mxu0 0
    %425 = vmatprep.subr.bf16.mxu0 0
    %426 = vmatpush1.bf16.msra.mxu0 0
    %427 = vmatprep.subr.bf16.mxu0 0
    %428 = vmatpush1.bf16.msra.mxu0 0
    %429 = vmatprep.mubr.bf16.mxu0 0
    %430 = vmatmul.mubr.bf16.gmra.mrb[0].mxu0 %v386
    %v431 = vpop.f32.mrb[0].mxu0
    %v432 = vadd.f32 0.0, %v431
    %v433 = vpop.f32.mrb[0].mxu0
    %v434 = vpop.f32.mrb[0].mxu0
    %v435 = vadd.f32 0.0, %v434
    %v436 = vpop.f32.mrb[0].mxu0
    %437 = vmatprep.mubr.bf16.mxu0 0
    %438 = vmatmul.mubr.bf16.gmra.mrb[0].mxu0 %v389
    %v439 = vpop.f32.mrb[0].mxu0
    %v440 = vadd.f32 0.0, %v439
    %v441 = vpop.f32.mrb[0].mxu0
    %v442 = vpop.f32.mrb[0].mxu0
    %v443 = vadd.f32 0.0, %v442
    %v444 = vpop.f32.mrb[0].mxu0
    %445 = vmatprep.mubr.bf16.mxu0 0
    %446 = vmatmul.mubr.bf16.gmra.mrb[0].mxu0 %v392
    %v447 = vpop.f32.mrb[0].mxu0
    %v448 = vadd.f32 0.0, %v447
    %v449 = vpop.f32.mrb[0].mxu0
    %v450 = vpop.f32.mrb[0].mxu0
    %v451 = vadd.f32 0.0, %v450
    %v452 = vpop.f32.mrb[0].mxu0
    %453 = vmatprep.mubr.bf16.mxu0 0
    %454 = vmatmul.mubr.bf16.gmra.mrb[0].mxu0 %v395
    %v455 = vpop.f32.mrb[0].mxu0
    %v456 = vadd.f32 0.0, %v455
    %v457 = vpop.f32.mrb[0].mxu0
    %v458 = vpop.f32.mrb[0].mxu0
    %v459 = vadd.f32 0.0, %v458
    %v460 = vpop.f32.mrb[0].mxu0
    %461 = vdwg.mxu0
    %462 = vxpose.xlu0.b32.start [1/16] %v369, 128
    %463 = vxpose.xlu0.b32.cont [2/16] 0.0, 128
    %464 = vxpose.xlu0.b32.cont [3/16] 0.0, 128
    %465 = vxpose.xlu0.b32.cont [4/16] 0.0, 128
    %466 = vxpose.xlu0.b32.cont [5/16] 0.0, 128
    %467 = vxpose.xlu0.b32.cont [6/16] 0.0, 128
    %468 = vxpose.xlu0.b32.cont [7/16] 0.0, 128
    %469 = vxpose.xlu0.b32.cont [8/16] 0.0, 128
    %470 = vxpose.xlu0.b32.cont [9/16] 0.0, 128
    %471 = vxpose.xlu0.b32.cont [10/16] 0.0, 128
    %472 = vxpose.xlu0.b32.cont [11/16] 0.0, 128
    %473 = vxpose.xlu0.b32.cont [12/16] 0.0, 128
    %474 = vxpose.xlu0.b32.cont [13/16] 0.0, 128
    %475 = vxpose.xlu0.b32.cont [14/16] 0.0, 128
    %476 = vxpose.xlu0.b32.cont [15/16] 0.0, 128
    %477 = vxpose.xlu0.b32.end [16/16] 0.0, 128
    %v478 = vpop.trf.xlu0
    %v479 = vpop.trf.xlu0
    %v480 = vpop.trf.xlu0
    %v481 = vpop.trf.xlu0
    %v482 = vpop.trf.xlu0
    %v483 = vpop.trf.xlu0
    %v484 = vpop.trf.xlu0
    %v485 = vpop.trf.xlu0
    %v486 = vpop.trf.xlu0
    %v487 = vpop.trf.xlu0
    %v488 = vpop.trf.xlu0
    %v489 = vpop.trf.xlu0
    %v490 = vpop.trf.xlu0
    %v491 = vpop.trf.xlu0
    %v492 = vpop.trf.xlu0
    %v493 = vpop.trf.xlu0
    %494 = vxpose.xlu0.b32.start [1/16] %v370, 128
    %495 = vxpose.xlu0.b32.cont [2/16] 0.0, 128
    %496 = vxpose.xlu0.b32.cont [3/16] 0.0, 128
    %497 = vxpose.xlu0.b32.cont [4/16] 0.0, 128
    %498 = vxpose.xlu0.b32.cont [5/16] 0.0, 128
    %499 = vxpose.xlu0.b32.cont [6/16] 0.0, 128
    %500 = vxpose.xlu0.b32.cont [7/16] 0.0, 128
    %501 = vxpose.xlu0.b32.cont [8/16] 0.0, 128
    %502 = vxpose.xlu0.b32.cont [9/16] 0.0, 128
    %503 = vxpose.xlu0.b32.cont [10/16] 0.0, 128
    %504 = vxpose.xlu0.b32.cont [11/16] 0.0, 128
    %505 = vxpose.xlu0.b32.cont [12/16] 0.0, 128
    %506 = vxpose.xlu0.b32.cont [13/16] 0.0, 128
    %507 = vxpose.xlu0.b32.cont [14/16] 0.0, 128
    %508 = vxpose.xlu0.b32.cont [15/16] 0.0, 128
    %509 = vxpose.xlu0.b32.end [16/16] 0.0, 128
    %v510 = vpop.trf.xlu0
    %v511 = vpop.trf.xlu0
    %v512 = vpop.trf.xlu0
    %v513 = vpop.trf.xlu0
    %v514 = vpop.trf.xlu0
    %v515 = vpop.trf.xlu0
    %v516 = vpop.trf.xlu0
    %v517 = vpop.trf.xlu0
    %v518 = vpop.trf.xlu0
    %v519 = vpop.trf.xlu0
    %v520 = vpop.trf.xlu0
    %v521 = vpop.trf.xlu0
    %v522 = vpop.trf.xlu0
    %v523 = vpop.trf.xlu0
    %v524 = vpop.trf.xlu0
    %v525 = vpop.trf.xlu0
    %526 = vxpose.xlu0.b32.start [1/16] %v371, 128
    %527 = vxpose.xlu0.b32.cont [2/16] 0.0, 128
    %528 = vxpose.xlu0.b32.cont [3/16] 0.0, 128
    %529 = vxpose.xlu0.b32.cont [4/16] 0.0, 128
    %530 = vxpose.xlu0.b32.cont [5/16] 0.0, 128
    %531 = vxpose.xlu0.b32.cont [6/16] 0.0, 128
    %532 = vxpose.xlu0.b32.cont [7/16] 0.0, 128
    %533 = vxpose.xlu0.b32.cont [8/16] 0.0, 128
    %534 = vxpose.xlu0.b32.cont [9/16] 0.0, 128
    %535 = vxpose.xlu0.b32.cont [10/16] 0.0, 128
    %536 = vxpose.xlu0.b32.cont [11/16] 0.0, 128
    %537 = vxpose.xlu0.b32.cont [12/16] 0.0, 128
    %538 = vxpose.xlu0.b32.cont [13/16] 0.0, 128
    %539 = vxpose.xlu0.b32.cont [14/16] 0.0, 128
    %540 = vxpose.xlu0.b32.cont [15/16] 0.0, 128
    %541 = vxpose.xlu0.b32.end [16/16] 0.0, 128
    %v542 = vpop.trf.xlu0
    %v543 = vpop.trf.xlu0
    %v544 = vpop.trf.xlu0
    %v545 = vpop.trf.xlu0
    %v546 = vpop.trf.xlu0
    %v547 = vpop.trf.xlu0
    %v548 = vpop.trf.xlu0
    %v549 = vpop.trf.xlu0
    %v550 = vpop.trf.xlu0
    %v551 = vpop.trf.xlu0
    %v552 = vpop.trf.xlu0
    %v553 = vpop.trf.xlu0
    %v554 = vpop.trf.xlu0
    %v555 = vpop.trf.xlu0
    %v556 = vpop.trf.xlu0
    %v557 = vpop.trf.xlu0
    %558 = vxpose.xlu0.b32.start [1/16] %v372, 128
    %559 = vxpose.xlu0.b32.cont [2/16] 0.0, 128
    %560 = vxpose.xlu0.b32.cont [3/16] 0.0, 128
    %561 = vxpose.xlu0.b32.cont [4/16] 0.0, 128
    %562 = vxpose.xlu0.b32.cont [5/16] 0.0, 128
    %563 = vxpose.xlu0.b32.cont [6/16] 0.0, 128
    %564 = vxpose.xlu0.b32.cont [7/16] 0.0, 128
    %565 = vxpose.xlu0.b32.cont [8/16] 0.0, 128
    %566 = vxpose.xlu0.b32.cont [9/16] 0.0, 128
    %567 = vxpose.xlu0.b32.cont [10/16] 0.0, 128
    %568 = vxpose.xlu0.b32.cont [11/16] 0.0, 128
    %569 = vxpose.xlu0.b32.cont [12/16] 0.0, 128
    %570 = vxpose.xlu0.b32.cont [13/16] 0.0, 128
    %571 = vxpose.xlu0.b32.cont [14/16] 0.0, 128
    %572 = vxpose.xlu0.b32.cont [15/16] 0.0, 128
    %573 = vxpose.xlu0.b32.end [16/16] 0.0, 128
    %v574 = vpop.trf.xlu0
    %v575 = vpop.trf.xlu0
    %v576 = vpop.trf.xlu0
    %v577 = vpop.trf.xlu0
    %v578 = vpop.trf.xlu0
    %v579 = vpop.trf.xlu0
    %v580 = vpop.trf.xlu0
    %v581 = vpop.trf.xlu0
    %v582 = vpop.trf.xlu0
    %v583 = vpop.trf.xlu0
    %v584 = vpop.trf.xlu0
    %v585 = vpop.trf.xlu0
    %v586 = vpop.trf.xlu0
    %v587 = vpop.trf.xlu0
    %v588 = vpop.trf.xlu0
    %v589 = vpop.trf.xlu0
    %v590 = vpack.c.bf16 %v479, %v478
    %v591 = vpack.c.bf16 %v481, %v480
    %v592 = vpack.c.bf16 %v483, %v482
    %v593 = vpack.c.bf16 %v485, %v484
    %v594 = vpack.c.bf16 %v487, %v486
    %v595 = vpack.c.bf16 %v489, %v488
    %v596 = vpack.c.bf16 %v491, %v490
    %v597 = vpack.c.bf16 %v493, %v492
    %v598 = vpack.c.bf16 %v511, %v510
    %v599 = vpack.c.bf16 %v513, %v512
    %v600 = vpack.c.bf16 %v515, %v514
    %v601 = vpack.c.bf16 %v517, %v516
    %v602 = vpack.c.bf16 %v519, %v518
    %v603 = vpack.c.bf16 %v521, %v520
    %v604 = vpack.c.bf16 %v523, %v522
    %v605 = vpack.c.bf16 %v525, %v524
    %v606 = vpack.c.bf16 %v543, %v542
    %v607 = vpack.c.bf16 %v545, %v544
    %v608 = vpack.c.bf16 %v547, %v546
    %v609 = vpack.c.bf16 %v549, %v548
    %v610 = vpack.c.bf16 %v551, %v550
    %v611 = vpack.c.bf16 %v553, %v552
    %v612 = vpack.c.bf16 %v555, %v554
    %v613 = vpack.c.bf16 %v557, %v556
    %v614 = vpack.c.bf16 %v575, %v574
    %v615 = vpack.c.bf16 %v577, %v576
    %v616 = vpack.c.bf16 %v579, %v578
    %v617 = vpack.c.bf16 %v581, %v580
    %v618 = vpack.c.bf16 %v583, %v582
    %v619 = vpack.c.bf16 %v585, %v584
    %v620 = vpack.c.bf16 %v587, %v586
    %v621 = vpack.c.bf16 %v589, %v588
    %v622 = vpack.c.bf16 %v432, %v432
    %v623 = vpack.c.bf16 %v435, %v435
    %v624 = vpack.c.bf16 %v440, %v440
    %v625 = vpack.c.bf16 %v443, %v443
    %v626 = vld [vmem:[%s1] sm:$0xff]
    %v627 = vld [vmem:[%s1 + $0x8] sm:$0xff]
    %v628 = vld [vmem:[%s1 + $0x10] sm:$0xff]
    %v629 = vld [vmem:[%s1 + $0x18] sm:$0xff]
    %v630 = vld [vmem:[%s1 + $0x20] sm:$0xff]
    %v631 = vld [vmem:[%s1 + $0x28] sm:$0xff]
    %v632 = vld [vmem:[%s1 + $0x30] sm:$0xff]
    %v633 = vld [vmem:[%s1 + $0x38] sm:$0xff]
    %v634 = vld [vmem:[%s1 + $0x40] sm:$0xff]
    %v635 = vld [vmem:[%s1 + $0x48] sm:$0xff]
    %v636 = vld [vmem:[%s1 + $0x50] sm:$0xff]
    %v637 = vld [vmem:[%s1 + $0x58] sm:$0xff]
    %v638 = vld [vmem:[%s1 + $0x60] sm:$0xff]
    %v639 = vld [vmem:[%s1 + $0x68] sm:$0xff]
    %v640 = vld [vmem:[%s1 + $0x70] sm:$0xff]
    %v641 = vld [vmem:[%s1 + $0x78] sm:$0xff]
    %v642 = vld [vmem:[%s1 + $0x80] sm:$0xff]
    %v643 = vld [vmem:[%s1 + $0x88] sm:$0xff]
    %v644 = vld [vmem:[%s1 + $0x90] sm:$0xff]
    %v645 = vld [vmem:[%s1 + $0x98] sm:$0xff]
    %v646 = vld [vmem:[%s1 + $0xa0] sm:$0xff]
    %v647 = vld [vmem:[%s1 + $0xa8] sm:$0xff]
    %v648 = vld [vmem:[%s1 + $0xb0] sm:$0xff]
    %v649 = vld [vmem:[%s1 + $0xb8] sm:$0xff]
    %v650 = vld [vmem:[%s1 + $0xc0] sm:$0xff]
    %v651 = vld [vmem:[%s1 + $0xc8] sm:$0xff]
    %v652 = vld [vmem:[%s1 + $0xd0] sm:$0xff]
    %v653 = vld [vmem:[%s1 + $0xd8] sm:$0xff]
    %v654 = vld [vmem:[%s1 + $0xe0] sm:$0xff]
    %v655 = vld [vmem:[%s1 + $0xe8] sm:$0xff]
    %v656 = vld [vmem:[%s1 + $0xf0] sm:$0xff]
    %v657 = vld [vmem:[%s1 + $0xf8] sm:$0xff]
    %v658 = vld [vmem:[%s1 + $0x100] sm:$0xff]
    %v659 = vld [vmem:[%s1 + $0x108] sm:$0xff]
    %v660 = vld [vmem:[%s1 + $0x110] sm:$0xff]
    %v661 = vld [vmem:[%s1 + $0x118] sm:$0xff]
    %v662 = vld [vmem:[%s1 + $0x120] sm:$0xff]
    %v663 = vld [vmem:[%s1 + $0x128] sm:$0xff]
    %v664 = vld [vmem:[%s1 + $0x130] sm:$0xff]
    %v665 = vld [vmem:[%s1 + $0x138] sm:$0xff]
    %v666 = vld [vmem:[%s1 + $0x140] sm:$0xff]
    %v667 = vld [vmem:[%s1 + $0x148] sm:$0xff]
    %v668 = vld [vmem:[%s1 + $0x150] sm:$0xff]
    %v669 = vld [vmem:[%s1 + $0x158] sm:$0xff]
    %v670 = vld [vmem:[%s1 + $0x160] sm:$0xff]
    %v671 = vld [vmem:[%s1 + $0x168] sm:$0xff]
    %v672 = vld [vmem:[%s1 + $0x170] sm:$0xff]
    %v673 = vld [vmem:[%s1 + $0x178] sm:$0xff]
    %v674 = vld [vmem:[%s1 + $0x180] sm:$0xff]
    %v675 = vld [vmem:[%s1 + $0x188] sm:$0xff]
    %v676 = vld [vmem:[%s1 + $0x190] sm:$0xff]
    %v677 = vld [vmem:[%s1 + $0x198] sm:$0xff]
    %v678 = vld [vmem:[%s1 + $0x1a0] sm:$0xff]
    %v679 = vld [vmem:[%s1 + $0x1a8] sm:$0xff]
    %v680 = vld [vmem:[%s1 + $0x1b0] sm:$0xff]
    %v681 = vld [vmem:[%s1 + $0x1b8] sm:$0xff]
    %v682 = vld [vmem:[%s1 + $0x1c0] sm:$0xff]
    %v683 = vld [vmem:[%s1 + $0x1c8] sm:$0xff]
    %v684 = vld [vmem:[%s1 + $0x1d0] sm:$0xff]
    %v685 = vld [vmem:[%s1 + $0x1d8] sm:$0xff]
    %v686 = vld [vmem:[%s1 + $0x1e0] sm:$0xff]
    %v687 = vld [vmem:[%s1 + $0x1e8] sm:$0xff]
    %v688 = vld [vmem:[%s1 + $0x1f0] sm:$0xff]
    %v689 = vld [vmem:[%s1 + $0x1f8] sm:$0xff]
    %vm690 = vcmask 64512
    %v692 = vsel %vm690, %v590, 0
    %v695 = vsel %vm690, %v591, 0
    %v698 = vsel %vm690, %v592, 0
    %v701 = vsel %vm690, %v593, 0
    %v704 = vsel %vm690, %v594, 0
    %v707 = vsel %vm690, %v595, 0
    %v710 = vsel %vm690, %v596, 0
    %v713 = vsel %vm690, %v597, 0
    %vm715 = vcmask 1043456
    %v717 = vsel %vm715, %v622, 0
    %719 = vmatprep.subr.bf16.mxu0 0
    %720 = vmatpush1.bf16.msra.mxu0 %v717
    %721 = vmatprep.subr.bf16.mxu0 0
    %722 = vmatpush1.bf16.msra.mxu0 0
    %723 = vmatprep.subr.bf16.mxu0 0
    %724 = vmatpush1.bf16.msra.mxu0 0
    %725 = vmatprep.subr.bf16.mxu0 0
    %726 = vmatpush1.bf16.msra.mxu0 0
    %727 = vmatprep.subr.bf16.mxu0 0
    %728 = vmatpush1.bf16.msra.mxu0 0
    %729 = vmatprep.subr.bf16.mxu0 0
    %730 = vmatpush1.bf16.msra.mxu0 0
    %731 = vmatprep.subr.bf16.mxu0 0
    %732 = vmatpush1.bf16.msra.mxu0 0
    %733 = vmatprep.subr.bf16.mxu0 0
    %734 = vmatpush1.bf16.msra.mxu0 0
    %735 = vmatprep.subr.bf16.mxu0 0
    %736 = vmatpush1.bf16.msra.mxu0 0
    %737 = vmatprep.subr.bf16.mxu0 0
    %738 = vmatpush1.bf16.msra.mxu0 0
    %739 = vmatprep.subr.bf16.mxu0 0
    %740 = vmatpush1.bf16.msra.mxu0 0
    %741 = vmatprep.subr.bf16.mxu0 0
    %742 = vmatpush1.bf16.msra.mxu0 0
    %743 = vmatprep.subr.bf16.mxu0 0
    %744 = vmatpush1.bf16.msra.mxu0 0
    %745 = vmatprep.subr.bf16.mxu0 0
    %746 = vmatpush1.bf16.msra.mxu0 0
    %747 = vmatprep.subr.bf16.mxu0 0
    %748 = vmatpush1.bf16.msra.mxu0 0
    %749 = vmatprep.subr.bf16.mxu0 0
    %750 = vmatpush1.bf16.msra.mxu0 0
    %751 = vmatprep.mubr.bf16.mxu0 0
    %752 = vmatmul.mubr.bf16.gmra.mrb[0].mxu0 %v692
    %v753 = vpop.f32.mrb[0].mxu0
    %v754 = vadd.f32 %v626, %v753
    %v755 = vpop.f32.mrb[0].mxu0
    %v756 = vpop.f32.mrb[0].mxu0
    %v757 = vadd.f32 %v627, %v756
    %v758 = vpop.f32.mrb[0].mxu0
    %759 = vmatprep.mubr.bf16.mxu0 0
    %760 = vmatmul.mubr.bf16.gmra.mrb[0].mxu0 %v695
    %v761 = vpop.f32.mrb[0].mxu0
    %v762 = vadd.f32 %v628, %v761
    %v763 = vpop.f32.mrb[0].mxu0
    %v764 = vpop.f32.mrb[0].mxu0
    %v765 = vadd.f32 %v629, %v764
    %v766 = vpop.f32.mrb[0].mxu0
    %767 = vmatprep.mubr.bf16.mxu0 0
    %768 = vmatmul.mubr.bf16.gmra.mrb[0].mxu0 %v698
    %v769 = vpop.f32.mrb[0].mxu0
    %v770 = vadd.f32 %v630, %v769
    %v771 = vpop.f32.mrb[0].mxu0
    %v772 = vpop.f32.mrb[0].mxu0
    %v773 = vadd.f32 %v631, %v772
    %v774 = vpop.f32.mrb[0].mxu0
    %775 = vmatprep.mubr.bf16.mxu0 0
    %776 = vmatmul.mubr.bf16.gmra.mrb[0].mxu0 %v701
    %v777 = vpop.f32.mrb[0].mxu0
    %v778 = vadd.f32 %v632, %v777
    %v779 = vpop.f32.mrb[0].mxu0
    %v780 = vpop.f32.mrb[0].mxu0
    %v781 = vadd.f32 %v633, %v780
    %v782 = vpop.f32.mrb[0].mxu0
    %783 = vmatprep.mubr.bf16.mxu0 0
    %784 = vmatmul.mubr.bf16.gmra.mrb[0].mxu0 %v704
    %v785 = vpop.f32.mrb[0].mxu0
    %v786 = vadd.f32 %v634, %v785
    %v787 = vpop.f32.mrb[0].mxu0
    %v788 = vpop.f32.mrb[0].mxu0
    %v789 = vadd.f32 %v635, %v788
    %v790 = vpop.f32.mrb[0].mxu0
    %791 = vmatprep.mubr.bf16.mxu0 0
    %792 = vmatmul.mubr.bf16.gmra.mrb[0].mxu0 %v707
    %v793 = vpop.f32.mrb[0].mxu0
    %v794 = vadd.f32 %v636, %v793
    %v795 = vpop.f32.mrb[0].mxu0
    %v796 = vpop.f32.mrb[0].mxu0
    %v797 = vadd.f32 %v637, %v796
    %v798 = vpop.f32.mrb[0].mxu0
    %799 = vmatprep.mubr.bf16.mxu0 0
    %800 = vmatmul.mubr.bf16.gmra.mrb[0].mxu0 %v710
    %v801 = vpop.f32.mrb[0].mxu0
    %v802 = vadd.f32 %v638, %v801
    %v803 = vpop.f32.mrb[0].mxu0
    %v804 = vpop.f32.mrb[0].mxu0
    %v805 = vadd.f32 %v639, %v804
    %v806 = vpop.f32.mrb[0].mxu0
    %807 = vmatprep.mubr.bf16.mxu0 0
    %808 = vmatmul.mubr.bf16.gmra.mrb[0].mxu0 %v713
    %v809 = vpop.f32.mrb[0].mxu0
    %v810 = vadd.f32 %v640, %v809
    %v811 = vpop.f32.mrb[0].mxu0
    %v812 = vpop.f32.mrb[0].mxu0
    %v813 = vadd.f32 %v641, %v812
    %v814 = vpop.f32.mrb[0].mxu0
    %815 = vdwg.mxu0
    %v817 = vsel %vm690, %v598, 0
    %v820 = vsel %vm690, %v599, 0
    %v823 = vsel %vm690, %v600, 0
    %v826 = vsel %vm690, %v601, 0
    %v829 = vsel %vm690, %v602, 0
    %v832 = vsel %vm690, %v603, 0
    %v835 = vsel %vm690, %v604, 0
    %v838 = vsel %vm690, %v605, 0
    %v841 = vsel %vm715, %v623, 0
    %843 = vmatprep.subr.bf16.mxu0 0
    %844 = vmatpush1.bf16.msra.mxu0 %v841
    %845 = vmatprep.subr.bf16.mxu0 0
    %846 = vmatpush1.bf16.msra.mxu0 0
    %847 = vmatprep.subr.bf16.mxu0 0
    %848 = vmatpush1.bf16.msra.mxu0 0
    %849 = vmatprep.subr.bf16.mxu0 0
    %850 = vmatpush1.bf16.msra.mxu0 0
    %851 = vmatprep.subr.bf16.mxu0 0
    %852 = vmatpush1.bf16.msra.mxu0 0
    %853 = vmatprep.subr.bf16.mxu0 0
    %854 = vmatpush1.bf16.msra.mxu0 0
    %855 = vmatprep.subr.bf16.mxu0 0
    %856 = vmatpush1.bf16.msra.mxu0 0
    %857 = vmatprep.subr.bf16.mxu0 0
    %858 = vmatpush1.bf16.msra.mxu0 0
    %859 = vmatprep.subr.bf16.mxu0 0
    %860 = vmatpush1.bf16.msra.mxu0 0
    %861 = vmatprep.subr.bf16.mxu0 0
    %862 = vmatpush1.bf16.msra.mxu0 0
    %863 = vmatprep.subr.bf16.mxu0 0
    %864 = vmatpush1.bf16.msra.mxu0 0
    %865 = vmatprep.subr.bf16.mxu0 0
    %866 = vmatpush1.bf16.msra.mxu0 0
    %867 = vmatprep.subr.bf16.mxu0 0
    %868 = vmatpush1.bf16.msra.mxu0 0
    %869 = vmatprep.subr.bf16.mxu0 0
    %870 = vmatpush1.bf16.msra.mxu0 0
    %871 = vmatprep.subr.bf16.mxu0 0
    %872 = vmatpush1.bf16.msra.mxu0 0
    %873 = vmatprep.subr.bf16.mxu0 0
    %874 = vmatpush1.bf16.msra.mxu0 0
    %875 = vmatprep.mubr.bf16.mxu0 0
    %876 = vmatmul.mubr.bf16.gmra.mrb[0].mxu0 %v817
    %v877 = vpop.f32.mrb[0].mxu0
    %v878 = vadd.f32 %v642, %v877
    %v879 = vpop.f32.mrb[0].mxu0
    %v880 = vpop.f32.mrb[0].mxu0
    %v881 = vadd.f32 %v643, %v880
    %v882 = vpop.f32.mrb[0].mxu0
    %883 = vmatprep.mubr.bf16.mxu0 0
    %884 = vmatmul.mubr.bf16.gmra.mrb[0].mxu0 %v820
    %v885 = vpop.f32.mrb[0].mxu0
    %v886 = vadd.f32 %v644, %v885
    %v887 = vpop.f32.mrb[0].mxu0
    %v888 = vpop.f32.mrb[0].mxu0
    %v889 = vadd.f32 %v645, %v888
    %v890 = vpop.f32.mrb[0].mxu0
    %891 = vmatprep.mubr.bf16.mxu0 0
    %892 = vmatmul.mubr.bf16.gmra.mrb[0].mxu0 %v823
    %v893 = vpop.f32.mrb[0].mxu0
    %v894 = vadd.f32 %v646, %v893
    %v895 = vpop.f32.mrb[0].mxu0
    %v896 = vpop.f32.mrb[0].mxu0
    %v897 = vadd.f32 %v647, %v896
    %v898 = vpop.f32.mrb[0].mxu0
    %899 = vmatprep.mubr.bf16.mxu0 0
    %900 = vmatmul.mubr.bf16.gmra.mrb[0].mxu0 %v826
    %v901 = vpop.f32.mrb[0].mxu0
    %v902 = vadd.f32 %v648, %v901
    %v903 = vpop.f32.mrb[0].mxu0
    %v904 = vpop.f32.mrb[0].mxu0
    %v905 = vadd.f32 %v649, %v904
    %v906 = vpop.f32.mrb[0].mxu0
    %907 = vmatprep.mubr.bf16.mxu0 0
    %908 = vmatmul.mubr.bf16.gmra.mrb[0].mxu0 %v829
    %v909 = vpop.f32.mrb[0].mxu0
    %v910 = vadd.f32 %v650, %v909
    %v911 = vpop.f32.mrb[0].mxu0
    %v912 = vpop.f32.mrb[0].mxu0
    %v913 = vadd.f32 %v651, %v912
    %v914 = vpop.f32.mrb[0].mxu0
    %915 = vmatprep.mubr.bf16.mxu0 0
    %916 = vmatmul.mubr.bf16.gmra.mrb[0].mxu0 %v832
    %v917 = vpop.f32.mrb[0].mxu0
    %v918 = vadd.f32 %v652, %v917
    %v919 = vpop.f32.mrb[0].mxu0
    %v920 = vpop.f32.mrb[0].mxu0
    %v921 = vadd.f32 %v653, %v920
    %v922 = vpop.f32.mrb[0].mxu0
    %923 = vmatprep.mubr.bf16.mxu0 0
    %924 = vmatmul.mubr.bf16.gmra.mrb[0].mxu0 %v835
    %v925 = vpop.f32.mrb[0].mxu0
    %v926 = vadd.f32 %v654, %v925
    %v927 = vpop.f32.mrb[0].mxu0
    %v928 = vpop.f32.mrb[0].mxu0
    %v929 = vadd.f32 %v655, %v928
    %v930 = vpop.f32.mrb[0].mxu0
    %931 = vmatprep.mubr.bf16.mxu0 0
    %932 = vmatmul.mubr.bf16.gmra.mrb[0].mxu0 %v838
    %v933 = vpop.f32.mrb[0].mxu0
    %v934 = vadd.f32 %v656, %v933
    %v935 = vpop.f32.mrb[0].mxu0
    %v936 = vpop.f32.mrb[0].mxu0
    %v937 = vadd.f32 %v657, %v936
    %v938 = vpop.f32.mrb[0].mxu0
    %939 = vdwg.mxu0
    %v941 = vsel %vm690, %v606, 0
    %v944 = vsel %vm690, %v607, 0
    %v947 = vsel %vm690, %v608, 0
    %v950 = vsel %vm690, %v609, 0
    %v953 = vsel %vm690, %v610, 0
    %v956 = vsel %vm690, %v611, 0
    %v959 = vsel %vm690, %v612, 0
    %v962 = vsel %vm690, %v613, 0
    %v965 = vsel %vm715, %v624, 0
    %967 = vmatprep.subr.bf16.mxu0 0
    %968 = vmatpush1.bf16.msra.mxu0 %v965
    %969 = vmatprep.subr.bf16.mxu0 0
    %970 = vmatpush1.bf16.msra.mxu0 0
    %971 = vmatprep.subr.bf16.mxu0 0
    %972 = vmatpush1.bf16.msra.mxu0 0
    %973 = vmatprep.subr.bf16.mxu0 0
    %974 = vmatpush1.bf16.msra.mxu0 0
    %975 = vmatprep.subr.bf16.mxu0 0
    %976 = vmatpush1.bf16.msra.mxu0 0
    %977 = vmatprep.subr.bf16.mxu0 0
    %978 = vmatpush1.bf16.msra.mxu0 0
    %979 = vmatprep.subr.bf16.mxu0 0
    %980 = vmatpush1.bf16.msra.mxu0 0
    %981 = vmatprep.subr.bf16.mxu0 0
    %982 = vmatpush1.bf16.msra.mxu0 0
    %983 = vmatprep.subr.bf16.mxu0 0
    %984 = vmatpush1.bf16.msra.mxu0 0
    %985 = vmatprep.subr.bf16.mxu0 0
    %986 = vmatpush1.bf16.msra.mxu0 0
    %987 = vmatprep.subr.bf16.mxu0 0
    %988 = vmatpush1.bf16.msra.mxu0 0
    %989 = vmatprep.subr.bf16.mxu0 0
    %990 = vmatpush1.bf16.msra.mxu0 0
    %991 = vmatprep.subr.bf16.mxu0 0
    %992 = vmatpush1.bf16.msra.mxu0 0
    %993 = vmatprep.subr.bf16.mxu0 0
    %994 = vmatpush1.bf16.msra.mxu0 0
    %995 = vmatprep.subr.bf16.mxu0 0
    %996 = vmatpush1.bf16.msra.mxu0 0
    %997 = vmatprep.subr.bf16.mxu0 0
    %998 = vmatpush1.bf16.msra.mxu0 0
    %999 = vmatprep.mubr.bf16.mxu0 0
    %1000 = vmatmul.mubr.bf16.gmra.mrb[0].mxu0 %v941
    %v1001 = vpop.f32.mrb[0].mxu0
    %v1002 = vadd.f32 %v658, %v1001
    %v1003 = vpop.f32.mrb[0].mxu0
    %v1004 = vpop.f32.mrb[0].mxu0
    %v1005 = vadd.f32 %v659, %v1004
    %v1006 = vpop.f32.mrb[0].mxu0
    %1007 = vmatprep.mubr.bf16.mxu0 0
    %1008 = vmatmul.mubr.bf16.gmra.mrb[0].mxu0 %v944
    %v1009 = vpop.f32.mrb[0].mxu0
    %v1010 = vadd.f32 %v660, %v1009
    %v1011 = vpop.f32.mrb[0].mxu0
    %v1012 = vpop.f32.mrb[0].mxu0
    %v1013 = vadd.f32 %v661, %v1012
    %v1014 = vpop.f32.mrb[0].mxu0
    %1015 = vmatprep.mubr.bf16.mxu0 0
    %1016 = vmatmul.mubr.bf16.gmra.mrb[0].mxu0 %v947
    %v1017 = vpop.f32.mrb[0].mxu0
    %v1018 = vadd.f32 %v662, %v1017
    %v1019 = vpop.f32.mrb[0].mxu0
    %v1020 = vpop.f32.mrb[0].mxu0
    %v1021 = vadd.f32 %v663, %v1020
    %v1022 = vpop.f32.mrb[0].mxu0
    %1023 = vmatprep.mubr.bf16.mxu0 0
    %1024 = vmatmul.mubr.bf16.gmra.mrb[0].mxu0 %v950
    %v1025 = vpop.f32.mrb[0].mxu0
    %v1026 = vadd.f32 %v664, %v1025
    %v1027 = vpop.f32.mrb[0].mxu0
    %v1028 = vpop.f32.mrb[0].mxu0
    %v1029 = vadd.f32 %v665, %v1028
    %v1030 = vpop.f32.mrb[0].mxu0
    %1031 = vmatprep.mubr.bf16.mxu0 0
    %1032 = vmatmul.mubr.bf16.gmra.mrb[0].mxu0 %v953
    %v1033 = vpop.f32.mrb[0].mxu0
    %v1034 = vadd.f32 %v666, %v1033
    %v1035 = vpop.f32.mrb[0].mxu0
    %v1036 = vpop.f32.mrb[0].mxu0
    %v1037 = vadd.f32 %v667, %v1036
    %v1038 = vpop.f32.mrb[0].mxu0
    %1039 = vmatprep.mubr.bf16.mxu0 0
    %1040 = vmatmul.mubr.bf16.gmra.mrb[0].mxu0 %v956
    %v1041 = vpop.f32.mrb[0].mxu0
    %v1042 = vadd.f32 %v668, %v1041
    %v1043 = vpop.f32.mrb[0].mxu0
    %v1044 = vpop.f32.mrb[0].mxu0
    %v1045 = vadd.f32 %v669, %v1044
    %v1046 = vpop.f32.mrb[0].mxu0
    %1047 = vmatprep.mubr.bf16.mxu0 0
    %1048 = vmatmul.mubr.bf16.gmra.mrb[0].mxu0 %v959
    %v1049 = vpop.f32.mrb[0].mxu0
    %v1050 = vadd.f32 %v670, %v1049
    %v1051 = vpop.f32.mrb[0].mxu0
    %v1052 = vpop.f32.mrb[0].mxu0
    %v1053 = vadd.f32 %v671, %v1052
    %v1054 = vpop.f32.mrb[0].mxu0
    %1055 = vmatprep.mubr.bf16.mxu0 0
    %1056 = vmatmul.mubr.bf16.gmra.mrb[0].mxu0 %v962
    %v1057 = vpop.f32.mrb[0].mxu0
    %v1058 = vadd.f32 %v672, %v1057
    %v1059 = vpop.f32.mrb[0].mxu0
    %v1060 = vpop.f32.mrb[0].mxu0
    %v1061 = vadd.f32 %v673, %v1060
    %v1062 = vpop.f32.mrb[0].mxu0
    %1063 = vdwg.mxu0
    %v1065 = vsel %vm690, %v614, 0
    %v1068 = vsel %vm690, %v615, 0
    %v1071 = vsel %vm690, %v616, 0
    %v1074 = vsel %vm690, %v617, 0
    %v1077 = vsel %vm690, %v618, 0
    %v1080 = vsel %vm690, %v619, 0
    %v1083 = vsel %vm690, %v620, 0
    %v1086 = vsel %vm690, %v621, 0
    %v1089 = vsel %vm715, %v625, 0
    %1091 = vmatprep.subr.bf16.mxu0 0
    %1092 = vmatpush1.bf16.msra.mxu0 %v1089
    %1093 = vmatprep.subr.bf16.mxu0 0
    %1094 = vmatpush1.bf16.msra.mxu0 0
    %1095 = vmatprep.subr.bf16.mxu0 0
    %1096 = vmatpush1.bf16.msra.mxu0 0
    %1097 = vmatprep.subr.bf16.mxu0 0
    %1098 = vmatpush1.bf16.msra.mxu0 0
    %1099 = vmatprep.subr.bf16.mxu0 0
    %1100 = vmatpush1.bf16.msra.mxu0 0
    %1101 = vmatprep.subr.bf16.mxu0 0
    %1102 = vmatpush1.bf16.msra.mxu0 0
    %1103 = vmatprep.subr.bf16.mxu0 0
    %1104 = vmatpush1.bf16.msra.mxu0 0
    %1105 = vmatprep.subr.bf16.mxu0 0
    %1106 = vmatpush1.bf16.msra.mxu0 0
    %1107 = vmatprep.subr.bf16.mxu0 0
    %1108 = vmatpush1.bf16.msra.mxu0 0
    %1109 = vmatprep.subr.bf16.mxu0 0
    %1110 = vmatpush1.bf16.msra.mxu0 0
    %1111 = vmatprep.subr.bf16.mxu0 0
    %1112 = vmatpush1.bf16.msra.mxu0 0
    %1113 = vmatprep.subr.bf16.mxu0 0
    %1114 = vmatpush1.bf16.msra.mxu0 0
    %1115 = vmatprep.subr.bf16.mxu0 0
    %1116 = vmatpush1.bf16.msra.mxu0 0
    %1117 = vmatprep.subr.bf16.mxu0 0
    %1118 = vmatpush1.bf16.msra.mxu0 0
    %1119 = vmatprep.subr.bf16.mxu0 0
    %1120 = vmatpush1.bf16.msra.mxu0 0
    %1121 = vmatprep.subr.bf16.mxu0 0
    %1122 = vmatpush1.bf16.msra.mxu0 0
    %1123 = vmatprep.mubr.bf16.mxu0 0
    %1124 = vmatmul.mubr.bf16.gmra.mrb[0].mxu0 %v1065
    %v1125 = vpop.f32.mrb[0].mxu0
    %v1126 = vadd.f32 %v674, %v1125
    %v1127 = vpop.f32.mrb[0].mxu0
    %v1128 = vpop.f32.mrb[0].mxu0
    %v1129 = vadd.f32 %v675, %v1128
    %v1130 = vpop.f32.mrb[0].mxu0
    %1131 = vmatprep.mubr.bf16.mxu0 0
    %1132 = vmatmul.mubr.bf16.gmra.mrb[0].mxu0 %v1068
    %v1133 = vpop.f32.mrb[0].mxu0
    %v1134 = vadd.f32 %v676, %v1133
    %v1135 = vpop.f32.mrb[0].mxu0
    %v1136 = vpop.f32.mrb[0].mxu0
    %v1137 = vadd.f32 %v677, %v1136
    %v1138 = vpop.f32.mrb[0].mxu0
    %1139 = vmatprep.mubr.bf16.mxu0 0
    %1140 = vmatmul.mubr.bf16.gmra.mrb[0].mxu0 %v1071
    %v1141 = vpop.f32.mrb[0].mxu0
    %v1142 = vadd.f32 %v678, %v1141
    %v1143 = vpop.f32.mrb[0].mxu0
    %v1144 = vpop.f32.mrb[0].mxu0
    %v1145 = vadd.f32 %v679, %v1144
    %v1146 = vpop.f32.mrb[0].mxu0
    %1147 = vmatprep.mubr.bf16.mxu0 0
    %1148 = vmatmul.mubr.bf16.gmra.mrb[0].mxu0 %v1074
    %v1149 = vpop.f32.mrb[0].mxu0
    %v1150 = vadd.f32 %v680, %v1149
    %v1151 = vpop.f32.mrb[0].mxu0
    %v1152 = vpop.f32.mrb[0].mxu0
    %v1153 = vadd.f32 %v681, %v1152
    %v1154 = vpop.f32.mrb[0].mxu0
    %1155 = vmatprep.mubr.bf16.mxu0 0
    %1156 = vmatmul.mubr.bf16.gmra.mrb[0].mxu0 %v1077
    %v1157 = vpop.f32.mrb[0].mxu0
    %v1158 = vadd.f32 %v682, %v1157
    %v1159 = vpop.f32.mrb[0].mxu0
    %v1160 = vpop.f32.mrb[0].mxu0
    %v1161 = vadd.f32 %v683, %v1160
    %v1162 = vpop.f32.mrb[0].mxu0
    %1163 = vmatprep.mubr.bf16.mxu0 0
    %1164 = vmatmul.mubr.bf16.gmra.mrb[0].mxu0 %v1080
    %v1165 = vpop.f32.mrb[0].mxu0
    %v1166 = vadd.f32 %v684, %v1165
    %v1167 = vpop.f32.mrb[0].mxu0
    %v1168 = vpop.f32.mrb[0].mxu0
    %v1169 = vadd.f32 %v685, %v1168
    %v1170 = vpop.f32.mrb[0].mxu0
    %1171 = vmatprep.mubr.bf16.mxu0 0
    %1172 = vmatmul.mubr.bf16.gmra.mrb[0].mxu0 %v1083
    %v1173 = vpop.f32.mrb[0].mxu0
    %v1174 = vadd.f32 %v686, %v1173
    %v1175 = vpop.f32.mrb[0].mxu0
    %v1176 = vpop.f32.mrb[0].mxu0
    %v1177 = vadd.f32 %v687, %v1176
    %v1178 = vpop.f32.mrb[0].mxu0
    %1179 = vmatprep.mubr.bf16.mxu0 0
    %1180 = vmatmul.mubr.bf16.gmra.mrb[0].mxu0 %v1086
    %v1181 = vpop.f32.mrb[0].mxu0
    %v1182 = vadd.f32 %v688, %v1181
    %v1183 = vpop.f32.mrb[0].mxu0
    %v1184 = vpop.f32.mrb[0].mxu0
    %v1185 = vadd.f32 %v689, %v1184
    %v1186 = vpop.f32.mrb[0].mxu0
    %1187 = vdwg.mxu0
    %1188 = vmax.xlane.f32.xlu0 %v754
    %v1189 = vpop.xlane.xlu0 %1188
    %1190 = vmax.xlane.f32.xlu0 %v757
    %v1191 = vpop.xlane.xlu0 %1190
    %1192 = vmax.xlane.f32.xlu0 %v762
    %v1193 = vpop.xlane.xlu0 %1192
    %1194 = vmax.xlane.f32.xlu0 %v765
    %v1195 = vpop.xlane.xlu0 %1194
    %1196 = vmax.xlane.f32.xlu0 %v770
    %v1197 = vpop.xlane.xlu0 %1196
    %1198 = vmax.xlane.f32.xlu0 %v773
    %v1199 = vpop.xlane.xlu0 %1198
    %1200 = vmax.xlane.f32.xlu0 %v778
    %v1201 = vpop.xlane.xlu0 %1200
    %1202 = vmax.xlane.f32.xlu0 %v781
    %v1203 = vpop.xlane.xlu0 %1202
    %1204 = vmax.xlane.f32.xlu0 %v786
    %v1205 = vpop.xlane.xlu0 %1204
    %1206 = vmax.xlane.f32.xlu0 %v789
    %v1207 = vpop.xlane.xlu0 %1206
    %1208 = vmax.xlane.f32.xlu0 %v794
    %v1209 = vpop.xlane.xlu0 %1208
    %1210 = vmax.xlane.f32.xlu0 %v797
    %v1211 = vpop.xlane.xlu0 %1210
    %1212 = vmax.xlane.f32.xlu0 %v802
    %v1213 = vpop.xlane.xlu0 %1212
    %1214 = vmax.xlane.f32.xlu0 %v805
    %v1215 = vpop.xlane.xlu0 %1214
    %1216 = vmax.xlane.f32.xlu0 %v810
    %v1217 = vpop.xlane.xlu0 %1216
    %1218 = vmax.xlane.f32.xlu0 %v813
    %v1219 = vpop.xlane.xlu0 %1218
    %1220 = vmax.xlane.f32.xlu0 %v878
    %v1221 = vpop.xlane.xlu0 %1220
    %1222 = vmax.xlane.f32.xlu0 %v881
    %v1223 = vpop.xlane.xlu0 %1222
    %1224 = vmax.xlane.f32.xlu0 %v886
    %v1225 = vpop.xlane.xlu0 %1224
    %1226 = vmax.xlane.f32.xlu0 %v889
    %v1227 = vpop.xlane.xlu0 %1226
    %1228 = vmax.xlane.f32.xlu0 %v894
    %v1229 = vpop.xlane.xlu0 %1228
    %1230 = vmax.xlane.f32.xlu0 %v897
    %v1231 = vpop.xlane.xlu0 %1230
    %1232 = vmax.xlane.f32.xlu0 %v902
    %v1233 = vpop.xlane.xlu0 %1232
    %1234 = vmax.xlane.f32.xlu0 %v905
    %v1235 = vpop.xlane.xlu0 %1234
    %1236 = vmax.xlane.f32.xlu0 %v910
    %v1237 = vpop.xlane.xlu0 %1236
    %1238 = vmax.xlane.f32.xlu0 %v913
    %v1239 = vpop.xlane.xlu0 %1238
    %1240 = vmax.xlane.f32.xlu0 %v918
    %v1241 = vpop.xlane.xlu0 %1240
    %1242 = vmax.xlane.f32.xlu0 %v921
    %v1243 = vpop.xlane.xlu0 %1242
    %1244 = vmax.xlane.f32.xlu0 %v926
    %v1245 = vpop.xlane.xlu0 %1244
    %1246 = vmax.xlane.f32.xlu0 %v929
    %v1247 = vpop.xlane.xlu0 %1246
    %1248 = vmax.xlane.f32.xlu0 %v934
    %v1249 = vpop.xlane.xlu0 %1248
    %1250 = vmax.xlane.f32.xlu0 %v937
    %v1251 = vpop.xlane.xlu0 %1250
    %1252 = vmax.xlane.f32.xlu0 %v1002
    %v1253 = vpop.xlane.xlu0 %1252
    %1254 = vmax.xlane.f32.xlu0 %v1005
    %v1255 = vpop.xlane.xlu0 %1254
    %1256 = vmax.xlane.f32.xlu0 %v1010
    %v1257 = vpop.xlane.xlu0 %1256
    %1258 = vmax.xlane.f32.xlu0 %v1013
    %v1259 = vpop.xlane.xlu0 %1258
    %1260 = vmax.xlane.f32.xlu0 %v1018
    %v1261 = vpop.xlane.xlu0 %1260
    %1262 = vmax.xlane.f32.xlu0 %v1021
    %v1263 = vpop.xlane.xlu0 %1262
    %1264 = vmax.xlane.f32.xlu0 %v1026
    %v1265 = vpop.xlane.xlu0 %1264
    %1266 = vmax.xlane.f32.xlu0 %v1029
    %v1267 = vpop.xlane.xlu0 %1266
    %1268 = vmax.xlane.f32.xlu0 %v1034
    %v1269 = vpop.xlane.xlu0 %1268
    %1270 = vmax.xlane.f32.xlu0 %v1037
    %v1271 = vpop.xlane.xlu0 %1270
    %1272 = vmax.xlane.f32.xlu0 %v1042
    %v1273 = vpop.xlane.xlu0 %1272
    %1274 = vmax.xlane.f32.xlu0 %v1045
    %v1275 = vpop.xlane.xlu0 %1274
    %1276 = vmax.xlane.f32.xlu0 %v1050
    %v1277 = vpop.xlane.xlu0 %1276
    %1278 = vmax.xlane.f32.xlu0 %v1053
    %v1279 = vpop.xlane.xlu0 %1278
    %1280 = vmax.xlane.f32.xlu0 %v1058
    %v1281 = vpop.xlane.xlu0 %1280
    %1282 = vmax.xlane.f32.xlu0 %v1061
    %v1283 = vpop.xlane.xlu0 %1282
    %1284 = vmax.xlane.f32.xlu0 %v1126
    %v1285 = vpop.xlane.xlu0 %1284
    %1286 = vmax.xlane.f32.xlu0 %v1129
    %v1287 = vpop.xlane.xlu0 %1286
    %1288 = vmax.xlane.f32.xlu0 %v1134
    %v1289 = vpop.xlane.xlu0 %1288
    %1290 = vmax.xlane.f32.xlu0 %v1137
    %v1291 = vpop.xlane.xlu0 %1290
    %1292 = vmax.xlane.f32.xlu0 %v1142
    %v1293 = vpop.xlane.xlu0 %1292
    %1294 = vmax.xlane.f32.xlu0 %v1145
    %v1295 = vpop.xlane.xlu0 %1294
    %1296 = vmax.xlane.f32.xlu0 %v1150
    %v1297 = vpop.xlane.xlu0 %1296
    %1298 = vmax.xlane.f32.xlu0 %v1153
    %v1299 = vpop.xlane.xlu0 %1298
    %1300 = vmax.xlane.f32.xlu0 %v1158
    %v1301 = vpop.xlane.xlu0 %1300
    %1302 = vmax.xlane.f32.xlu0 %v1161
    %v1303 = vpop.xlane.xlu0 %1302
    %1304 = vmax.xlane.f32.xlu0 %v1166
    %v1305 = vpop.xlane.xlu0 %1304
    %1306 = vmax.xlane.f32.xlu0 %v1169
    %v1307 = vpop.xlane.xlu0 %1306
    %1308 = vmax.xlane.f32.xlu0 %v1174
    %v1309 = vpop.xlane.xlu0 %1308
    %1310 = vmax.xlane.f32.xlu0 %v1177
    %v1311 = vpop.xlane.xlu0 %1310
    %1312 = vmax.xlane.f32.xlu0 %v1182
    %v1313 = vpop.xlane.xlu0 %1312
    %1314 = vmax.xlane.f32.xlu0 %v1185
    %v1315 = vpop.xlane.xlu0 %1314
    %v1316 = vsub.f32 %v754, %v1189
    %v1317 = vsub.f32 %v757, %v1191
    %v1318 = vsub.f32 %v762, %v1193
    %v1319 = vsub.f32 %v765, %v1195
    %v1320 = vsub.f32 %v770, %v1197
    %v1321 = vsub.f32 %v773, %v1199
    %v1322 = vsub.f32 %v778, %v1201
    %v1323 = vsub.f32 %v781, %v1203
    %v1324 = vsub.f32 %v786, %v1205
    %v1325 = vsub.f32 %v789, %v1207
    %v1326 = vsub.f32 %v794, %v1209
    %v1327 = vsub.f32 %v797, %v1211
    %v1328 = vsub.f32 %v802, %v1213
    %v1329 = vsub.f32 %v805, %v1215
    %v1330 = vsub.f32 %v810, %v1217
    %v1331 = vsub.f32 %v813, %v1219
    %v1332 = vsub.f32 %v878, %v1221
    %v1333 = vsub.f32 %v881, %v1223
    %v1334 = vsub.f32 %v886, %v1225
    %v1335 = vsub.f32 %v889, %v1227
    %v1336 = vsub.f32 %v894, %v1229
    %v1337 = vsub.f32 %v897, %v1231
    %v1338 = vsub.f32 %v902, %v1233
    %v1339 = vsub.f32 %v905, %v1235
    %v1340 = vsub.f32 %v910, %v1237
    %v1341 = vsub.f32 %v913, %v1239
    %v1342 = vsub.f32 %v918, %v1241
    %v1343 = vsub.f32 %v921, %v1243
    %v1344 = vsub.f32 %v926, %v1245
    %v1345 = vsub.f32 %v929, %v1247
    %v1346 = vsub.f32 %v934, %v1249
    %v1347 = vsub.f32 %v937, %v1251
    %v1348 = vsub.f32 %v1002, %v1253
    %v1349 = vsub.f32 %v1005, %v1255
    %v1350 = vsub.f32 %v1010, %v1257
    %v1351 = vsub.f32 %v1013, %v1259
    %v1352 = vsub.f32 %v1018, %v1261
    %v1353 = vsub.f32 %v1021, %v1263
    %v1354 = vsub.f32 %v1026, %v1265
    %v1355 = vsub.f32 %v1029, %v1267
    %v1356 = vsub.f32 %v1034, %v1269
    %v1357 = vsub.f32 %v1037, %v1271
    %v1358 = vsub.f32 %v1042, %v1273
    %v1359 = vsub.f32 %v1045, %v1275
    %v1360 = vsub.f32 %v1050, %v1277
    %v1361 = vsub.f32 %v1053, %v1279
    %v1362 = vsub.f32 %v1058, %v1281
    %v1363 = vsub.f32 %v1061, %v1283
    %v1364 = vsub.f32 %v1126, %v1285
    %v1365 = vsub.f32 %v1129, %v1287
    %v1366 = vsub.f32 %v1134, %v1289
    %v1367 = vsub.f32 %v1137, %v1291
    %v1368 = vsub.f32 %v1142, %v1293
    %v1369 = vsub.f32 %v1145, %v1295
    %v1370 = vsub.f32 %v1150, %v1297
    %v1371 = vsub.f32 %v1153, %v1299
    %v1372 = vsub.f32 %v1158, %v1301
    %v1373 = vsub.f32 %v1161, %v1303
    %v1374 = vsub.f32 %v1166, %v1305
    %v1375 = vsub.f32 %v1169, %v1307
    %v1376 = vsub.f32 %v1174, %v1309
    %v1377 = vsub.f32 %v1177, %v1311
    %v1378 = vsub.f32 %v1182, %v1313
    %v1379 = vsub.f32 %v1185, %v1315
    %v1380 = vmul.f32 %v1316, 1.442695
    %v1381 = vpow.pop %v1380
    %v1382 = vmul.f32 %v1317, 1.442695
    %v1383 = vpow.pop %v1382
    %v1384 = vmul.f32 %v1318, 1.442695
    %v1385 = vpow.pop %v1384
    %v1386 = vmul.f32 %v1319, 1.442695
    %v1387 = vpow.pop %v1386
    %v1388 = vmul.f32 %v1320, 1.442695
    %v1389 = vpow.pop %v1388
    %v1390 = vmul.f32 %v1321, 1.442695
    %v1391 = vpow.pop %v1390
    %v1392 = vmul.f32 %v1322, 1.442695
    %v1393 = vpow.pop %v1392
    %v1394 = vmul.f32 %v1323, 1.442695
    %v1395 = vpow.pop %v1394
    %v1396 = vmul.f32 %v1324, 1.442695
    %v1397 = vpow.pop %v1396
    %v1398 = vmul.f32 %v1325, 1.442695
    %v1399 = vpow.pop %v1398
    %v1400 = vmul.f32 %v1326, 1.442695
    %v1401 = vpow.pop %v1400
    %v1402 = vmul.f32 %v1327, 1.442695
    %v1403 = vpow.pop %v1402
    %v1404 = vmul.f32 %v1328, 1.442695
    %v1405 = vpow.pop %v1404
    %v1406 = vmul.f32 %v1329, 1.442695
    %v1407 = vpow.pop %v1406
    %v1408 = vmul.f32 %v1330, 1.442695
    %v1409 = vpow.pop %v1408
    %v1410 = vmul.f32 %v1331, 1.442695
    %v1411 = vpow.pop %v1410
    %v1412 = vmul.f32 %v1332, 1.442695
    %v1413 = vpow.pop %v1412
    %v1414 = vmul.f32 %v1333, 1.442695
    %v1415 = vpow.pop %v1414
    %v1416 = vmul.f32 %v1334, 1.442695
    %v1417 = vpow.pop %v1416
    %v1418 = vmul.f32 %v1335, 1.442695
    %v1419 = vpow.pop %v1418
    %v1420 = vmul.f32 %v1336, 1.442695
    %v1421 = vpow.pop %v1420
    %v1422 = vmul.f32 %v1337, 1.442695
    %v1423 = vpow.pop %v1422
    %v1424 = vmul.f32 %v1338, 1.442695
    %v1425 = vpow.pop %v1424
    %v1426 = vmul.f32 %v1339, 1.442695
    %v1427 = vpow.pop %v1426
    %v1428 = vmul.f32 %v1340, 1.442695
    %v1429 = vpow.pop %v1428
    %v1430 = vmul.f32 %v1341, 1.442695
    %v1431 = vpow.pop %v1430
    %v1432 = vmul.f32 %v1342, 1.442695
    %v1433 = vpow.pop %v1432
    %v1434 = vmul.f32 %v1343, 1.442695
    %v1435 = vpow.pop %v1434
    %v1436 = vmul.f32 %v1344, 1.442695
    %v1437 = vpow.pop %v1436
    %v1438 = vmul.f32 %v1345, 1.442695
    %v1439 = vpow.pop %v1438
    %v1440 = vmul.f32 %v1346, 1.442695
    %v1441 = vpow.pop %v1440
    %v1442 = vmul.f32 %v1347, 1.442695
    %v1443 = vpow.pop %v1442
    %v1444 = vmul.f32 %v1348, 1.442695
    %v1445 = vpow.pop %v1444
    %v1446 = vmul.f32 %v1349, 1.442695
    %v1447 = vpow.pop %v1446
    %v1448 = vmul.f32 %v1350, 1.442695
    %v1449 = vpow.pop %v1448
    %v1450 = vmul.f32 %v1351, 1.442695
    %v1451 = vpow.pop %v1450
    %v1452 = vmul.f32 %v1352, 1.442695
    %v1453 = vpow.pop %v1452
    %v1454 = vmul.f32 %v1353, 1.442695
    %v1455 = vpow.pop %v1454
    %v1456 = vmul.f32 %v1354, 1.442695
    %v1457 = vpow.pop %v1456
    %v1458 = vmul.f32 %v1355, 1.442695
    %v1459 = vpow.pop %v1458
    %v1460 = vmul.f32 %v1356, 1.442695
    %v1461 = vpow.pop %v1460
    %v1462 = vmul.f32 %v1357, 1.442695
    %v1463 = vpow.pop %v1462
    %v1464 = vmul.f32 %v1358, 1.442695
    %v1465 = vpow.pop %v1464
    %v1466 = vmul.f32 %v1359, 1.442695
    %v1467 = vpow.pop %v1466
    %v1468 = vmul.f32 %v1360, 1.442695
    %v1469 = vpow.pop %v1468
    %v1470 = vmul.f32 %v1361, 1.442695
    %v1471 = vpow.pop %v1470
    %v1472 = vmul.f32 %v1362, 1.442695
    %v1473 = vpow.pop %v1472
    %v1474 = vmul.f32 %v1363, 1.442695
    %v1475 = vpow.pop %v1474
    %v1476 = vmul.f32 %v1364, 1.442695
    %v1477 = vpow.pop %v1476
    %v1478 = vmul.f32 %v1365, 1.442695
    %v1479 = vpow.pop %v1478
    %v1480 = vmul.f32 %v1366, 1.442695
    %v1481 = vpow.pop %v1480
    %v1482 = vmul.f32 %v1367, 1.442695
    %v1483 = vpow.pop %v1482
    %v1484 = vmul.f32 %v1368, 1.442695
    %v1485 = vpow.pop %v1484
    %v1486 = vmul.f32 %v1369, 1.442695
    %v1487 = vpow.pop %v1486
    %v1488 = vmul.f32 %v1370, 1.442695
    %v1489 = vpow.pop %v1488
    %v1490 = vmul.f32 %v1371, 1.442695
    %v1491 = vpow.pop %v1490
    %v1492 = vmul.f32 %v1372, 1.442695
    %v1493 = vpow.pop %v1492
    %v1494 = vmul.f32 %v1373, 1.442695
    %v1495 = vpow.pop %v1494
    %v1496 = vmul.f32 %v1374, 1.442695
    %v1497 = vpow.pop %v1496
    %v1498 = vmul.f32 %v1375, 1.442695
    %v1499 = vpow.pop %v1498
    %v1500 = vmul.f32 %v1376, 1.442695
    %v1501 = vpow.pop %v1500
    %v1502 = vmul.f32 %v1377, 1.442695
    %v1503 = vpow.pop %v1502
    %v1504 = vmul.f32 %v1378, 1.442695
    %v1505 = vpow.pop %v1504
    %v1506 = vmul.f32 %v1379, 1.442695
    %v1507 = vpow.pop %v1506
    %1508 = vadd.xlane.f32.xlu0 %v1381
    %v1509 = vpop.xlane.xlu0 %1508
    %1510 = vadd.xlane.f32.xlu0 %v1383
    %v1511 = vpop.xlane.xlu0 %1510
    %1512 = vadd.xlane.f32.xlu0 %v1385
    %v1513 = vpop.xlane.xlu0 %1512
    %1514 = vadd.xlane.f32.xlu0 %v1387
    %v1515 = vpop.xlane.xlu0 %1514
    %1516 = vadd.xlane.f32.xlu0 %v1389
    %v1517 = vpop.xlane.xlu0 %1516
    %1518 = vadd.xlane.f32.xlu0 %v1391
    %v1519 = vpop.xlane.xlu0 %1518
    %1520 = vadd.xlane.f32.xlu0 %v1393
    %v1521 = vpop.xlane.xlu0 %1520
    %1522 = vadd.xlane.f32.xlu0 %v1395
    %v1523 = vpop.xlane.xlu0 %1522
    %1524 = vadd.xlane.f32.xlu0 %v1397
    %v1525 = vpop.xlane.xlu0 %1524
    %1526 = vadd.xlane.f32.xlu0 %v1399
    %v1527 = vpop.xlane.xlu0 %1526
    %1528 = vadd.xlane.f32.xlu0 %v1401
    %v1529 = vpop.xlane.xlu0 %1528
    %1530 = vadd.xlane.f32.xlu0 %v1403
    %v1531 = vpop.xlane.xlu0 %1530
    %1532 = vadd.xlane.f32.xlu0 %v1405
    %v1533 = vpop.xlane.xlu0 %1532
    %1534 = vadd.xlane.f32.xlu0 %v1407
    %v1535 = vpop.xlane.xlu0 %1534
    %1536 = vadd.xlane.f32.xlu0 %v1409
    %v1537 = vpop.xlane.xlu0 %1536
    %1538 = vadd.xlane.f32.xlu0 %v1411
    %v1539 = vpop.xlane.xlu0 %1538
    %1540 = vadd.xlane.f32.xlu0 %v1413
    %v1541 = vpop.xlane.xlu0 %1540
    %1542 = vadd.xlane.f32.xlu0 %v1415
    %v1543 = vpop.xlane.xlu0 %1542
    %1544 = vadd.xlane.f32.xlu0 %v1417
    %v1545 = vpop.xlane.xlu0 %1544
    %1546 = vadd.xlane.f32.xlu0 %v1419
    %v1547 = vpop.xlane.xlu0 %1546
    %1548 = vadd.xlane.f32.xlu0 %v1421
    %v1549 = vpop.xlane.xlu0 %1548
    %1550 = vadd.xlane.f32.xlu0 %v1423
    %v1551 = vpop.xlane.xlu0 %1550
    %1552 = vadd.xlane.f32.xlu0 %v1425
    %v1553 = vpop.xlane.xlu0 %1552
    %1554 = vadd.xlane.f32.xlu0 %v1427
    %v1555 = vpop.xlane.xlu0 %1554
    %1556 = vadd.xlane.f32.xlu0 %v1429
    %v1557 = vpop.xlane.xlu0 %1556
    %1558 = vadd.xlane.f32.xlu0 %v1431
    %v1559 = vpop.xlane.xlu0 %1558
    %1560 = vadd.xlane.f32.xlu0 %v1433
    %v1561 = vpop.xlane.xlu0 %1560
    %1562 = vadd.xlane.f32.xlu0 %v1435
    %v1563 = vpop.xlane.xlu0 %1562
    %1564 = vadd.xlane.f32.xlu0 %v1437
    %v1565 = vpop.xlane.xlu0 %1564
    %1566 = vadd.xlane.f32.xlu0 %v1439
    %v1567 = vpop.xlane.xlu0 %1566
    %1568 = vadd.xlane.f32.xlu0 %v1441
    %v1569 = vpop.xlane.xlu0 %1568
    %1570 = vadd.xlane.f32.xlu0 %v1443
    %v1571 = vpop.xlane.xlu0 %1570
    %1572 = vadd.xlane.f32.xlu0 %v1445
    %v1573 = vpop.xlane.xlu0 %1572
    %1574 = vadd.xlane.f32.xlu0 %v1447
    %v1575 = vpop.xlane.xlu0 %1574
    %1576 = vadd.xlane.f32.xlu0 %v1449
    %v1577 = vpop.xlane.xlu0 %1576
    %1578 = vadd.xlane.f32.xlu0 %v1451
    %v1579 = vpop.xlane.xlu0 %1578
    %1580 = vadd.xlane.f32.xlu0 %v1453
    %v1581 = vpop.xlane.xlu0 %1580
    %1582 = vadd.xlane.f32.xlu0 %v1455
    %v1583 = vpop.xlane.xlu0 %1582
    %1584 = vadd.xlane.f32.xlu0 %v1457
    %v1585 = vpop.xlane.xlu0 %1584
    %1586 = vadd.xlane.f32.xlu0 %v1459
    %v1587 = vpop.xlane.xlu0 %1586
    %1588 = vadd.xlane.f32.xlu0 %v1461
    %v1589 = vpop.xlane.xlu0 %1588
    %1590 = vadd.xlane.f32.xlu0 %v1463
    %v1591 = vpop.xlane.xlu0 %1590
    %1592 = vadd.xlane.f32.xlu0 %v1465
    %v1593 = vpop.xlane.xlu0 %1592
    %1594 = vadd.xlane.f32.xlu0 %v1467
    %v1595 = vpop.xlane.xlu0 %1594
    %1596 = vadd.xlane.f32.xlu0 %v1469
    %v1597 = vpop.xlane.xlu0 %1596
    %1598 = vadd.xlane.f32.xlu0 %v1471
    %v1599 = vpop.xlane.xlu0 %1598
    %1600 = vadd.xlane.f32.xlu0 %v1473
    %v1601 = vpop.xlane.xlu0 %1600
    %1602 = vadd.xlane.f32.xlu0 %v1475
    %v1603 = vpop.xlane.xlu0 %1602
    %1604 = vadd.xlane.f32.xlu0 %v1477
    %v1605 = vpop.xlane.xlu0 %1604
    %1606 = vadd.xlane.f32.xlu0 %v1479
    %v1607 = vpop.xlane.xlu0 %1606
    %1608 = vadd.xlane.f32.xlu0 %v1481
    %v1609 = vpop.xlane.xlu0 %1608
    %1610 = vadd.xlane.f32.xlu0 %v1483
    %v1611 = vpop.xlane.xlu0 %1610
    %1612 = vadd.xlane.f32.xlu0 %v1485
    %v1613 = vpop.xlane.xlu0 %1612
    %1614 = vadd.xlane.f32.xlu0 %v1487
    %v1615 = vpop.xlane.xlu0 %1614
    %1616 = vadd.xlane.f32.xlu0 %v1489
    %v1617 = vpop.xlane.xlu0 %1616
    %1618 = vadd.xlane.f32.xlu0 %v1491
    %v1619 = vpop.xlane.xlu0 %1618
    %1620 = vadd.xlane.f32.xlu0 %v1493
    %v1621 = vpop.xlane.xlu0 %1620
    %1622 = vadd.xlane.f32.xlu0 %v1495
    %v1623 = vpop.xlane.xlu0 %1622
    %1624 = vadd.xlane.f32.xlu0 %v1497
    %v1625 = vpop.xlane.xlu0 %1624
    %1626 = vadd.xlane.f32.xlu0 %v1499
    %v1627 = vpop.xlane.xlu0 %1626
    %1628 = vadd.xlane.f32.xlu0 %v1501
    %v1629 = vpop.xlane.xlu0 %1628
    %1630 = vadd.xlane.f32.xlu0 %v1503
    %v1631 = vpop.xlane.xlu0 %1630
    %1632 = vadd.xlane.f32.xlu0 %v1505
    %v1633 = vpop.xlane.xlu0 %1632
    %1634 = vadd.xlane.f32.xlu0 %v1507
    %v1635 = vpop.xlane.xlu0 %1634
    %v1636 = vrcp.pop %v1509
    %v1637 = vmul.f32 %v1381, %v1636
    %v1638 = vrcp.pop %v1511
    %v1639 = vmul.f32 %v1383, %v1638
    %v1640 = vrcp.pop %v1513
    %v1641 = vmul.f32 %v1385, %v1640
    %v1642 = vrcp.pop %v1515
    %v1643 = vmul.f32 %v1387, %v1642
    %v1644 = vrcp.pop %v1517
    %v1645 = vmul.f32 %v1389, %v1644
    %v1646 = vrcp.pop %v1519
    %v1647 = vmul.f32 %v1391, %v1646
    %v1648 = vrcp.pop %v1521
    %v1649 = vmul.f32 %v1393, %v1648
    %v1650 = vrcp.pop %v1523
    %v1651 = vmul.f32 %v1395, %v1650
    %v1652 = vrcp.pop %v1525
    %v1653 = vmul.f32 %v1397, %v1652
    %v1654 = vrcp.pop %v1527
    %v1655 = vmul.f32 %v1399, %v1654
    %v1656 = vrcp.pop %v1529
    %v1657 = vmul.f32 %v1401, %v1656
    %v1658 = vrcp.pop %v1531
    %v1659 = vmul.f32 %v1403, %v1658
    %v1660 = vrcp.pop %v1533
    %v1661 = vmul.f32 %v1405, %v1660
    %v1662 = vrcp.pop %v1535
    %v1663 = vmul.f32 %v1407, %v1662
    %v1664 = vrcp.pop %v1537
    %v1665 = vmul.f32 %v1409, %v1664
    %v1666 = vrcp.pop %v1539
    %v1667 = vmul.f32 %v1411, %v1666
    %v1668 = vrcp.pop %v1541
    %v1669 = vmul.f32 %v1413, %v1668
    %v1670 = vrcp.pop %v1543
    %v1671 = vmul.f32 %v1415, %v1670
    %v1672 = vrcp.pop %v1545
    %v1673 = vmul.f32 %v1417, %v1672
    %v1674 = vrcp.pop %v1547
    %v1675 = vmul.f32 %v1419, %v1674
    %v1676 = vrcp.pop %v1549
    %v1677 = vmul.f32 %v1421, %v1676
    %v1678 = vrcp.pop %v1551
    %v1679 = vmul.f32 %v1423, %v1678
    %v1680 = vrcp.pop %v1553
    %v1681 = vmul.f32 %v1425, %v1680
    %v1682 = vrcp.pop %v1555
    %v1683 = vmul.f32 %v1427, %v1682
    %v1684 = vrcp.pop %v1557
    %v1685 = vmul.f32 %v1429, %v1684
    %v1686 = vrcp.pop %v1559
    %v1687 = vmul.f32 %v1431, %v1686
    %v1688 = vrcp.pop %v1561
    %v1689 = vmul.f32 %v1433, %v1688
    %v1690 = vrcp.pop %v1563
    %v1691 = vmul.f32 %v1435, %v1690
    %v1692 = vrcp.pop %v1565
    %v1693 = vmul.f32 %v1437, %v1692
    %v1694 = vrcp.pop %v1567
    %v1695 = vmul.f32 %v1439, %v1694
    %v1696 = vrcp.pop %v1569
    %v1697 = vmul.f32 %v1441, %v1696
    %v1698 = vrcp.pop %v1571
    %v1699 = vmul.f32 %v1443, %v1698
    %v1700 = vrcp.pop %v1573
    %v1701 = vmul.f32 %v1445, %v1700
    %v1702 = vrcp.pop %v1575
    %v1703 = vmul.f32 %v1447, %v1702
    %v1704 = vrcp.pop %v1577
    %v1705 = vmul.f32 %v1449, %v1704
    %v1706 = vrcp.pop %v1579
    %v1707 = vmul.f32 %v1451, %v1706
    %v1708 = vrcp.pop %v1581
    %v1709 = vmul.f32 %v1453, %v1708
    %v1710 = vrcp.pop %v1583
    %v1711 = vmul.f32 %v1455, %v1710
    %v1712 = vrcp.pop %v1585
    %v1713 = vmul.f32 %v1457, %v1712
    %v1714 = vrcp.pop %v1587
    %v1715 = vmul.f32 %v1459, %v1714
    %v1716 = vrcp.pop %v1589
    %v1717 = vmul.f32 %v1461, %v1716
    %v1718 = vrcp.pop %v1591
    %v1719 = vmul.f32 %v1463, %v1718
    %v1720 = vrcp.pop %v1593
    %v1721 = vmul.f32 %v1465, %v1720
    %v1722 = vrcp.pop %v1595
    %v1723 = vmul.f32 %v1467, %v1722
    %v1724 = vrcp.pop %v1597
    %v1725 = vmul.f32 %v1469, %v1724
    %v1726 = vrcp.pop %v1599
    %v1727 = vmul.f32 %v1471, %v1726
    %v1728 = vrcp.pop %v1601
    %v1729 = vmul.f32 %v1473, %v1728
    %v1730 = vrcp.pop %v1603
    %v1731 = vmul.f32 %v1475, %v1730
    %v1732 = vrcp.pop %v1605
    %v1733 = vmul.f32 %v1477, %v1732
    %v1734 = vrcp.pop %v1607
    %v1735 = vmul.f32 %v1479, %v1734
    %v1736 = vrcp.pop %v1609
    %v1737 = vmul.f32 %v1481, %v1736
    %v1738 = vrcp.pop %v1611
    %v1739 = vmul.f32 %v1483, %v1738
    %v1740 = vrcp.pop %v1613
    %v1741 = vmul.f32 %v1485, %v1740
    %v1742 = vrcp.pop %v1615
    %v1743 = vmul.f32 %v1487, %v1742
    %v1744 = vrcp.pop %v1617
    %v1745 = vmul.f32 %v1489, %v1744
    %v1746 = vrcp.pop %v1619
    %v1747 = vmul.f32 %v1491, %v1746
    %v1748 = vrcp.pop %v1621
    %v1749 = vmul.f32 %v1493, %v1748
    %v1750 = vrcp.pop %v1623
    %v1751 = vmul.f32 %v1495, %v1750
    %v1752 = vrcp.pop %v1625
    %v1753 = vmul.f32 %v1497, %v1752
    %v1754 = vrcp.pop %v1627
    %v1755 = vmul.f32 %v1499, %v1754
    %v1756 = vrcp.pop %v1629
    %v1757 = vmul.f32 %v1501, %v1756
    %v1758 = vrcp.pop %v1631
    %v1759 = vmul.f32 %v1503, %v1758
    %v1760 = vrcp.pop %v1633
    %v1761 = vmul.f32 %v1505, %v1760
    %v1762 = vrcp.pop %v1635
    %v1763 = vmul.f32 %v1507, %v1762
    %v1764 = vpack.c.bf16 %v448, %v448
    %v1765 = vpack.c.bf16 %v451, %v451
    %v1766 = vpack.c.bf16 %v456, %v456
    %v1767 = vpack.c.bf16 %v459, %v459
    %v1768 = vpack.c.bf16 %v1639, %v1637
    %v1769 = vpack.c.bf16 %v1643, %v1641
    %v1770 = vpack.c.bf16 %v1647, %v1645
    %v1771 = vpack.c.bf16 %v1651, %v1649
    %v1772 = vpack.c.bf16 %v1655, %v1653
    %v1773 = vpack.c.bf16 %v1659, %v1657
    %v1774 = vpack.c.bf16 %v1663, %v1661
    %v1775 = vpack.c.bf16 %v1667, %v1665
    %v1776 = vpack.c.bf16 %v1671, %v1669
    %v1777 = vpack.c.bf16 %v1675, %v1673
    %v1778 = vpack.c.bf16 %v1679, %v1677
    %v1779 = vpack.c.bf16 %v1683, %v1681
    %v1780 = vpack.c.bf16 %v1687, %v1685
    %v1781 = vpack.c.bf16 %v1691, %v1689
    %v1782 = vpack.c.bf16 %v1695, %v1693
    %v1783 = vpack.c.bf16 %v1699, %v1697
    %v1784 = vpack.c.bf16 %v1703, %v1701
    %v1785 = vpack.c.bf16 %v1707, %v1705
    %v1786 = vpack.c.bf16 %v1711, %v1709
    %v1787 = vpack.c.bf16 %v1715, %v1713
    %v1788 = vpack.c.bf16 %v1719, %v1717
    %v1789 = vpack.c.bf16 %v1723, %v1721
    %v1790 = vpack.c.bf16 %v1727, %v1725
    %v1791 = vpack.c.bf16 %v1731, %v1729
    %v1792 = vpack.c.bf16 %v1735, %v1733
    %v1793 = vpack.c.bf16 %v1739, %v1737
    %v1794 = vpack.c.bf16 %v1743, %v1741
    %v1795 = vpack.c.bf16 %v1747, %v1745
    %v1796 = vpack.c.bf16 %v1751, %v1749
    %v1797 = vpack.c.bf16 %v1755, %v1753
    %v1798 = vpack.c.bf16 %v1759, %v1757
    %v1799 = vpack.c.bf16 %v1763, %v1761
    %1800 = vmatprep.subr.bf16.mxu0 0
    %1801 = vmatpush1.bf16.xpose.msra.mxu0 %v1768
    %1802 = vmatprep.subr.bf16.mxu0 0
    %1803 = vmatpush1.bf16.xpose.msra.mxu0 %v1769
    %1804 = vmatprep.subr.bf16.mxu0 0
    %1805 = vmatpush1.bf16.xpose.msra.mxu0 %v1770
    %1806 = vmatprep.subr.bf16.mxu0 0
    %1807 = vmatpush1.bf16.xpose.msra.mxu0 %v1771
    %1808 = vmatprep.subr.bf16.mxu0 0
    %1809 = vmatpush1.bf16.xpose.msra.mxu0 %v1772
    %1810 = vmatprep.subr.bf16.mxu0 0
    %1811 = vmatpush1.bf16.xpose.msra.mxu0 %v1773
    %1812 = vmatprep.subr.bf16.mxu0 0
    %1813 = vmatpush1.bf16.xpose.msra.mxu0 %v1774
    %1814 = vmatprep.subr.bf16.mxu0 0
    %1815 = vmatpush1.bf16.xpose.msra.mxu0 %v1775
    %1816 = vmatprep.subr.bf16.mxu0 0
    %1817 = vmatpush1.bf16.xpose.msra.mxu0 0
    %1818 = vmatprep.subr.bf16.mxu0 0
    %1819 = vmatpush1.bf16.xpose.msra.mxu0 0
    %1820 = vmatprep.subr.bf16.mxu0 0
    %1821 = vmatpush1.bf16.xpose.msra.mxu0 0
    %1822 = vmatprep.subr.bf16.mxu0 0
    %1823 = vmatpush1.bf16.xpose.msra.mxu0 0
    %1824 = vmatprep.subr.bf16.mxu0 0
    %1825 = vmatpush1.bf16.xpose.msra.mxu0 0
    %1826 = vmatprep.subr.bf16.mxu0 0
    %1827 = vmatpush1.bf16.xpose.msra.mxu0 0
    %1828 = vmatprep.subr.bf16.mxu0 0
    %1829 = vmatpush1.bf16.xpose.msra.mxu0 0
    %1830 = vmatprep.subr.bf16.mxu0 0
    %1831 = vmatpush1.bf16.xpose.msra.mxu0 0
    %1832 = vmatprep.mubr.bf16.mxu0 0
    %1833 = vmatmul.mubr.bf16.gmra.mrb[0].mxu0 %v1764
    %v1834 = vpop.f32.mrb[0].mxu0
    %v1835 = vadd.f32 0.0, %v1834
    %v1836 = vpop.f32.mrb[0].mxu0
    %v1837 = vpop.f32.mrb[0].mxu0
    %v1838 = vpop.f32.mrb[0].mxu0
    %1839 = vdwg.mxu0
    %1840 = vmatprep.subr.bf16.mxu0 0
    %1841 = vmatpush1.bf16.xpose.msra.mxu0 %v1776
    %1842 = vmatprep.subr.bf16.mxu0 0
    %1843 = vmatpush1.bf16.xpose.msra.mxu0 %v1777
    %1844 = vmatprep.subr.bf16.mxu0 0
    %1845 = vmatpush1.bf16.xpose.msra.mxu0 %v1778
    %1846 = vmatprep.subr.bf16.mxu0 0
    %1847 = vmatpush1.bf16.xpose.msra.mxu0 %v1779
    %1848 = vmatprep.subr.bf16.mxu0 0
    %1849 = vmatpush1.bf16.xpose.msra.mxu0 %v1780
    %1850 = vmatprep.subr.bf16.mxu0 0
    %1851 = vmatpush1.bf16.xpose.msra.mxu0 %v1781
    %1852 = vmatprep.subr.bf16.mxu0 0
    %1853 = vmatpush1.bf16.xpose.msra.mxu0 %v1782
    %1854 = vmatprep.subr.bf16.mxu0 0
    %1855 = vmatpush1.bf16.xpose.msra.mxu0 %v1783
    %1856 = vmatprep.subr.bf16.mxu0 0
    %1857 = vmatpush1.bf16.xpose.msra.mxu0 0
    %1858 = vmatprep.subr.bf16.mxu0 0
    %1859 = vmatpush1.bf16.xpose.msra.mxu0 0
    %1860 = vmatprep.subr.bf16.mxu0 0
    %1861 = vmatpush1.bf16.xpose.msra.mxu0 0
    %1862 = vmatprep.subr.bf16.mxu0 0
    %1863 = vmatpush1.bf16.xpose.msra.mxu0 0
    %1864 = vmatprep.subr.bf16.mxu0 0
    %1865 = vmatpush1.bf16.xpose.msra.mxu0 0
    %1866 = vmatprep.subr.bf16.mxu0 0
    %1867 = vmatpush1.bf16.xpose.msra.mxu0 0
    %1868 = vmatprep.subr.bf16.mxu0 0
    %1869 = vmatpush1.bf16.xpose.msra.mxu0 0
    %1870 = vmatprep.subr.bf16.mxu0 0
    %1871 = vmatpush1.bf16.xpose.msra.mxu0 0
    %1872 = vmatprep.mubr.bf16.mxu0 0
    %1873 = vmatmul.mubr.bf16.gmra.mrb[0].mxu0 %v1765
    %v1874 = vpop.f32.mrb[0].mxu0
    %v1875 = vadd.f32 0.0, %v1874
    %v1876 = vpop.f32.mrb[0].mxu0
    %v1877 = vpop.f32.mrb[0].mxu0
    %v1878 = vpop.f32.mrb[0].mxu0
    %1879 = vdwg.mxu0
    %1880 = vmatprep.subr.bf16.mxu0 0
    %1881 = vmatpush1.bf16.xpose.msra.mxu0 %v1784
    %1882 = vmatprep.subr.bf16.mxu0 0
    %1883 = vmatpush1.bf16.xpose.msra.mxu0 %v1785
    %1884 = vmatprep.subr.bf16.mxu0 0
    %1885 = vmatpush1.bf16.xpose.msra.mxu0 %v1786
    %1886 = vmatprep.subr.bf16.mxu0 0
    %1887 = vmatpush1.bf16.xpose.msra.mxu0 %v1787
    %1888 = vmatprep.subr.bf16.mxu0 0
    %1889 = vmatpush1.bf16.xpose.msra.mxu0 %v1788
    %1890 = vmatprep.subr.bf16.mxu0 0
    %1891 = vmatpush1.bf16.xpose.msra.mxu0 %v1789
    %1892 = vmatprep.subr.bf16.mxu0 0
    %1893 = vmatpush1.bf16.xpose.msra.mxu0 %v1790
    %1894 = vmatprep.subr.bf16.mxu0 0
    %1895 = vmatpush1.bf16.xpose.msra.mxu0 %v1791
    %1896 = vmatprep.subr.bf16.mxu0 0
    %1897 = vmatpush1.bf16.xpose.msra.mxu0 0
    %1898 = vmatprep.subr.bf16.mxu0 0
    %1899 = vmatpush1.bf16.xpose.msra.mxu0 0
    %1900 = vmatprep.subr.bf16.mxu0 0
    %1901 = vmatpush1.bf16.xpose.msra.mxu0 0
    %1902 = vmatprep.subr.bf16.mxu0 0
    %1903 = vmatpush1.bf16.xpose.msra.mxu0 0
    %1904 = vmatprep.subr.bf16.mxu0 0
    %1905 = vmatpush1.bf16.xpose.msra.mxu0 0
    %1906 = vmatprep.subr.bf16.mxu0 0
    %1907 = vmatpush1.bf16.xpose.msra.mxu0 0
    %1908 = vmatprep.subr.bf16.mxu0 0
    %1909 = vmatpush1.bf16.xpose.msra.mxu0 0
    %1910 = vmatprep.subr.bf16.mxu0 0
    %1911 = vmatpush1.bf16.xpose.msra.mxu0 0
    %1912 = vmatprep.mubr.bf16.mxu0 0
    %1913 = vmatmul.mubr.bf16.gmra.mrb[0].mxu0 %v1766
    %v1914 = vpop.f32.mrb[0].mxu0
    %v1915 = vadd.f32 0.0, %v1914
    %v1916 = vpop.f32.mrb[0].mxu0
    %v1917 = vpop.f32.mrb[0].mxu0
    %v1918 = vpop.f32.mrb[0].mxu0
    %1919 = vdwg.mxu0
    %1920 = vmatprep.subr.bf16.mxu0 0
    %1921 = vmatpush1.bf16.xpose.msra.mxu0 %v1792
    %1922 = vmatprep.subr.bf16.mxu0 0
    %1923 = vmatpush1.bf16.xpose.msra.mxu0 %v1793
    %1924 = vmatprep.subr.bf16.mxu0 0
    %1925 = vmatpush1.bf16.xpose.msra.mxu0 %v1794
    %1926 = vmatprep.subr.bf16.mxu0 0
    %1927 = vmatpush1.bf16.xpose.msra.mxu0 %v1795
    %1928 = vmatprep.subr.bf16.mxu0 0
    %1929 = vmatpush1.bf16.xpose.msra.mxu0 %v1796
    %1930 = vmatprep.subr.bf16.mxu0 0
    %1931 = vmatpush1.bf16.xpose.msra.mxu0 %v1797
    %1932 = vmatprep.subr.bf16.mxu0 0
    %1933 = vmatpush1.bf16.xpose.msra.mxu0 %v1798
    %1934 = vmatprep.subr.bf16.mxu0 0
    %1935 = vmatpush1.bf16.xpose.msra.mxu0 %v1799
    %1936 = vmatprep.subr.bf16.mxu0 0
    %1937 = vmatpush1.bf16.xpose.msra.mxu0 0
    %1938 = vmatprep.subr.bf16.mxu0 0
    %1939 = vmatpush1.bf16.xpose.msra.mxu0 0
    %1940 = vmatprep.subr.bf16.mxu0 0
    %1941 = vmatpush1.bf16.xpose.msra.mxu0 0
    %1942 = vmatprep.subr.bf16.mxu0 0
    %1943 = vmatpush1.bf16.xpose.msra.mxu0 0
    %1944 = vmatprep.subr.bf16.mxu0 0
    %1945 = vmatpush1.bf16.xpose.msra.mxu0 0
    %1946 = vmatprep.subr.bf16.mxu0 0
    %1947 = vmatpush1.bf16.xpose.msra.mxu0 0
    %1948 = vmatprep.subr.bf16.mxu0 0
    %1949 = vmatpush1.bf16.xpose.msra.mxu0 0
    %1950 = vmatprep.subr.bf16.mxu0 0
    %1951 = vmatpush1.bf16.xpose.msra.mxu0 0
    %1952 = vmatprep.mubr.bf16.mxu0 0
    %1953 = vmatmul.mubr.bf16.gmra.mrb[0].mxu0 %v1767
    %v1954 = vpop.f32.mrb[0].mxu0
    %v1955 = vadd.f32 0.0, %v1954
    %v1956 = vpop.f32.mrb[0].mxu0
    %v1957 = vpop.f32.mrb[0].mxu0
    %v1958 = vpop.f32.mrb[0].mxu0
    %1959 = vdwg.mxu0
    %v1960 = vld [vmem:[#allocation7] sm:$0xff]
    %v1961 = vld [vmem:[#allocation7 + $0x8] sm:$0xff]
    %v1962 = vld [vmem:[#allocation7 + $0x10] sm:$0xff]
    %v1963 = vld [vmem:[#allocation7 + $0x18] sm:$0xff]
    %v1964 = vpack.c.bf16 %v1961, %v1960
    %v1965 = vpack.c.bf16 %v1963, %v1962
    %v1966 = vpack.c.bf16 %v1875, %v1835
    %v1967 = vpack.c.bf16 %v1955, %v1915
    %v1969 = vsel %vm313, %v1964, 0
    %v1972 = vsel %vm313, %v1965, 0
    %1974 = vmatprep.subr.bf16.mxu0 0
    %1975 = vmatpush1.bf16.msra.mxu0 %v1966
    %1976 = vmatprep.subr.bf16.mxu0 0
    %1977 = vmatpush1.bf16.msra.mxu0 %v1967
    %1978 = vmatprep.subr.bf16.mxu0 0
    %1979 = vmatpush1.bf16.msra.mxu0 0
    %1980 = vmatprep.subr.bf16.mxu0 0
    %1981 = vmatpush1.bf16.msra.mxu0 0
    %1982 = vmatprep.subr.bf16.mxu0 0
    %1983 = vmatpush1.bf16.msra.mxu0 0
    %1984 = vmatprep.subr.bf16.mxu0 0
    %1985 = vmatpush1.bf16.msra.mxu0 0
    %1986 = vmatprep.subr.bf16.mxu0 0
    %1987 = vmatpush1.bf16.msra.mxu0 0
    %1988 = vmatprep.subr.bf16.mxu0 0
    %1989 = vmatpush1.bf16.msra.mxu0 0
    %1990 = vmatprep.subr.bf16.mxu0 0
    %1991 = vmatpush1.bf16.msra.mxu0 0
    %1992 = vmatprep.subr.bf16.mxu0 0
    %1993 = vmatpush1.bf16.msra.mxu0 0
    %1994 = vmatprep.subr.bf16.mxu0 0
    %1995 = vmatpush1.bf16.msra.mxu0 0
    %1996 = vmatprep.subr.bf16.mxu0 0
    %1997 = vmatpush1.bf16.msra.mxu0 0
    %1998 = vmatprep.subr.bf16.mxu0 0
    %1999 = vmatpush1.bf16.msra.mxu0 0
    %2000 = vmatprep.subr.bf16.mxu0 0
    %2001 = vmatpush1.bf16.msra.mxu0 0
    %2002 = vmatprep.subr.bf16.mxu0 0
    %2003 = vmatpush1.bf16.msra.mxu0 0
    %2004 = vmatprep.subr.bf16.mxu0 0
    %2005 = vmatpush1.bf16.msra.mxu0 0
    %2006 = vmatprep.mubr.bf16.mxu0 0
    %2007 = vmatmul.mubr.bf16.gmra.mrb[0].mxu0 %v1969
    %v2008 = vpop.f32.mrb[0].mxu0
    %v2009 = vadd.f32 0.0, %v2008
    %v2010 = vpop.f32.mrb[0].mxu0
    %v2011 = vpop.f32.mrb[0].mxu0
    %v2012 = vadd.f32 0.0, %v2011
    %v2013 = vpop.f32.mrb[0].mxu0
    %2014 = vmatprep.mubr.bf16.mxu0 0
    %2015 = vmatmul.mubr.bf16.gmra.mrb[0].mxu0 %v1972
    %v2016 = vpop.f32.mrb[0].mxu0
    %v2017 = vadd.f32 0.0, %v2016
    %v2018 = vpop.f32.mrb[0].mxu0
    %v2019 = vpop.f32.mrb[0].mxu0
    %v2020 = vadd.f32 0.0, %v2019
    %v2021 = vpop.f32.mrb[0].mxu0
    %2022 = vdwg.mxu0
    %v2023 = vadd.f32 %v200, %v2009
    %v2024 = vadd.f32 %v203, %v2012
    %v2025 = vadd.f32 %v208, %v2017
    %v2026 = vadd.f32 %v211, %v2020
    %v2027 = vld [vmem:[%s9] sm:$0xff]
    %v2028 = vld [vmem:[%s9 + $0x8] sm:$0xff]
    %v2029 = vld [vmem:[%s9 + $0x10] sm:$0xff]
    %v2030 = vld [vmem:[%s9 + $0x18] sm:$0xff]
    %2032 = vset.pattern.permute.xlu0 0
    %2033 = vperm.xlu0 %2032, %v2027
    %v2034 = vpop.permute.xlu0 %2033
    %2037 = vset.pattern.permute.xlu0 0
    %2038 = vperm.xlu0 %2037, %v2028
    %v2039 = vpop.permute.xlu0 %2038
    %2042 = vset.pattern.permute.xlu0 0
    %2043 = vperm.xlu0 %2042, %v2029
    %v2044 = vpop.permute.xlu0 %2043
    %2047 = vset.pattern.permute.xlu0 0
    %2048 = vperm.xlu0 %2047, %v2030
    %v2049 = vpop.permute.xlu0 %2048
    %v2051 = vadd.f32 %v2023, %v2034
    %v2052 = vadd.f32 %v2024, %v2039
    %v2053 = vadd.f32 %v2025, %v2044
    %v2054 = vadd.f32 %v2026, %v2049
    %v2055 = vld [vmem:[%s10] sm:$0xff]
    %v2056 = vld [vmem:[%s10 + $0x8] sm:$0xff]
    %v2057 = vld [vmem:[%s10 + $0x10] sm:$0xff]
    %v2058 = vld [vmem:[%s10 + $0x18] sm:$0xff]
    %v2059 = vld [vmem:[%s11] sm:$0xff]
    %v2060 = vld [vmem:[%s11 + $0x8] sm:$0xff]
    %v2061 = vld [vmem:[%s11 + $0x10] sm:$0xff]
    %v2062 = vld [vmem:[%s11 + $0x18] sm:$0xff]
    %v2063 = vadd.f32 %v2051, %v2052
    %v2064 = vadd.f32 %v2063, %v2053
    %v2065 = vadd.f32 %v2064, %v2054
    %v2066 = vrot.slane %v2065, 4
    %v2067 = vadd.f32 %v2065, %v2066
    %v2068 = vrot.slane %v2067, 2
    %v2069 = vadd.f32 %v2067, %v2068
    %v2070 = vrot.slane %v2069, 1
    %v2071 = vadd.f32 %v2069, %v2070
    %v2072 = vmul.f32 %v2071, %v231
    %v2073 = vsub.f32 %v2051, %v2072
    %v2074 = vsub.f32 %v2052, %v2072
    %v2075 = vsub.f32 %v2053, %v2072
    %v2076 = vsub.f32 %v2054, %v2072
    %v2077 = vmul.f32 %v2073, %v2073
    %v2078 = vmul.f32 %v2074, %v2074
    %v2079 = vmul.f32 %v2075, %v2075
    %v2080 = vmul.f32 %v2076, %v2076
    %v2081 = vadd.f32 %v2077, %v2078
    %v2082 = vadd.f32 %v2081, %v2079
    %v2083 = vadd.f32 %v2082, %v2080
    %v2084 = vrot.slane %v2083, 4
    %v2085 = vadd.f32 %v2083, %v2084
    %v2086 = vrot.slane %v2085, 2
    %v2087 = vadd.f32 %v2085, %v2086
    %v2088 = vrot.slane %v2087, 1
    %v2089 = vadd.f32 %v2087, %v2088
    %v2090 = vmul.f32 %v2089, %v231
    %v2091 = vadd.f32 %v2090, 1e-05
    %v2092 = vrsqrt.pop %v2091
    %v2093 = vmul.f32 %v2073, %v2092
    %v2094 = vmul.f32 %v2074, %v2092
    %v2095 = vmul.f32 %v2075, %v2092
    %v2096 = vmul.f32 %v2076, %v2092
    %2098 = vset.pattern.permute.xlu0 0
    %2099 = vperm.xlu0 %2098, %v2055
    %v2100 = vpop.permute.xlu0 %2099
    %2103 = vset.pattern.permute.xlu0 0
    %2104 = vperm.xlu0 %2103, %v2056
    %v2105 = vpop.permute.xlu0 %2104
    %2108 = vset.pattern.permute.xlu0 0
    %2109 = vperm.xlu0 %2108, %v2057
    %v2110 = vpop.permute.xlu0 %2109
    %2113 = vset.pattern.permute.xlu0 0
    %2114 = vperm.xlu0 %2113, %v2058
    %v2115 = vpop.permute.xlu0 %2114
    %v2117 = vmul.f32 %v2093, %v2100
    %v2118 = vmul.f32 %v2094, %v2105
    %v2119 = vmul.f32 %v2095, %v2110
    %v2120 = vmul.f32 %v2096, %v2115
    %2122 = vset.pattern.permute.xlu0 0
    %2123 = vperm.xlu0 %2122, %v2059
    %v2124 = vpop.permute.xlu0 %2123
    %2127 = vset.pattern.permute.xlu0 0
    %2128 = vperm.xlu0 %2127, %v2060
    %v2129 = vpop.permute.xlu0 %2128
    %2132 = vset.pattern.permute.xlu0 0
    %2133 = vperm.xlu0 %2132, %v2061
    %v2134 = vpop.permute.xlu0 %2133
    %2137 = vset.pattern.permute.xlu0 0
    %2138 = vperm.xlu0 %2137, %v2062
    %v2139 = vpop.permute.xlu0 %2138
    %v2141 = vadd.f32 %v2117, %v2124
    %v2142 = vadd.f32 %v2118, %v2129
    %v2143 = vadd.f32 %v2119, %v2134
    %v2144 = vadd.f32 %v2120, %v2139
    %v2145 = vld [vmem:[%s12] sm:$0xff]
    %v2146 = vld [vmem:[%s12 + $0x8] sm:$0xff]
    %v2147 = vld [vmem:[%s12 + $0x10] sm:$0xff]
    %v2148 = vld [vmem:[%s12 + $0x18] sm:$0xff]
    %v2149 = vld [vmem:[%s12 + $0x20] sm:$0xff]
    %v2150 = vld [vmem:[%s12 + $0x28] sm:$0xff]
    %v2151 = vld [vmem:[%s12 + $0x30] sm:$0xff]
    %v2152 = vld [vmem:[%s12 + $0x38] sm:$0xff]
    %v2153 = vld [vmem:[%s12 + $0x40] sm:$0xff]
    %v2154 = vld [vmem:[%s12 + $0x48] sm:$0xff]
    %v2155 = vld [vmem:[%s12 + $0x50] sm:$0xff]
    %v2156 = vld [vmem:[%s12 + $0x58] sm:$0xff]
    %v2157 = vld [vmem:[%s12 + $0x60] sm:$0xff]
    %v2158 = vld [vmem:[%s12 + $0x68] sm:$0xff]
    %v2159 = vld [vmem:[%s12 + $0x70] sm:$0xff]
    %v2160 = vld [vmem:[%s12 + $0x78] sm:$0xff]
    %v2161 = vpack.c.bf16 %v2146, %v2145
    %v2162 = vpack.c.bf16 %v2148, %v2147
    %v2163 = vpack.c.bf16 %v2150, %v2149
    %v2164 = vpack.c.bf16 %v2152, %v2151
    %v2165 = vpack.c.bf16 %v2154, %v2153
    %v2166 = vpack.c.bf16 %v2156, %v2155
    %v2167 = vpack.c.bf16 %v2158, %v2157
    %v2168 = vpack.c.bf16 %v2160, %v2159
    %v2169 = vpack.c.bf16 %v2142, %v2141
    %v2170 = vpack.c.bf16 %v2144, %v2143
    %v2171 = vld [vmem:[%s13] sm:$0xff]
    %v2172 = vld [vmem:[%s13 + $0x8] sm:$0xff]
    %v2173 = vld [vmem:[%s13 + $0x10] sm:$0xff]
    %v2174 = vld [vmem:[%s13 + $0x18] sm:$0xff]
    %v2175 = vld [vmem:[%s13 + $0x20] sm:$0xff]
    %v2176 = vld [vmem:[%s13 + $0x28] sm:$0xff]
    %v2177 = vld [vmem:[%s13 + $0x30] sm:$0xff]
    %v2178 = vld [vmem:[%s13 + $0x38] sm:$0xff]
    %v2179 = vld [vmem:[%s13 + $0x40] sm:$0xff]
    %v2180 = vld [vmem:[%s13 + $0x48] sm:$0xff]
    %v2181 = vld [vmem:[%s13 + $0x50] sm:$0xff]
    %v2182 = vld [vmem:[%s13 + $0x58] sm:$0xff]
    %v2183 = vld [vmem:[%s13 + $0x60] sm:$0xff]
    %v2184 = vld [vmem:[%s13 + $0x68] sm:$0xff]
    %v2185 = vld [vmem:[%s13 + $0x70] sm:$0xff]
    %v2186 = vld [vmem:[%s13 + $0x78] sm:$0xff]
    %2188 = vset.pattern.permute.xlu0 0
    %2189 = vperm.xlu0 %2188, %v2171
    %v2190 = vpop.permute.xlu0 %2189
    %2193 = vset.pattern.permute.xlu0 0
    %2194 = vperm.xlu0 %2193, %v2172
    %v2195 = vpop.permute.xlu0 %2194
    %2198 = vset.pattern.permute.xlu0 0
    %2199 = vperm.xlu0 %2198, %v2173
    %v2200 = vpop.permute.xlu0 %2199
    %2203 = vset.pattern.permute.xlu0 0
    %2204 = vperm.xlu0 %2203, %v2174
    %v2205 = vpop.permute.xlu0 %2204
    %2208 = vset.pattern.permute.xlu0 0
    %2209 = vperm.xlu0 %2208, %v2175
    %v2210 = vpop.permute.xlu0 %2209
    %2213 = vset.pattern.permute.xlu0 0
    %2214 = vperm.xlu0 %2213, %v2176
    %v2215 = vpop.permute.xlu0 %2214
    %2218 = vset.pattern.permute.xlu0 0
    %2219 = vperm.xlu0 %2218, %v2177
    %v2220 = vpop.permute.xlu0 %2219
    %2223 = vset.pattern.permute.xlu0 0
    %2224 = vperm.xlu0 %2223, %v2178
    %v2225 = vpop.permute.xlu0 %2224
    %2228 = vset.pattern.permute.xlu0 0
    %2229 = vperm.xlu0 %2228, %v2179
    %v2230 = vpop.permute.xlu0 %2229
    %2233 = vset.pattern.permute.xlu0 0
    %2234 = vperm.xlu0 %2233, %v2180
    %v2235 = vpop.permute.xlu0 %2234
    %2238 = vset.pattern.permute.xlu0 0
    %2239 = vperm.xlu0 %2238, %v2181
    %v2240 = vpop.permute.xlu0 %2239
    %2243 = vset.pattern.permute.xlu0 0
    %2244 = vperm.xlu0 %2243, %v2182
    %v2245 = vpop.permute.xlu0 %2244
    %2248 = vset.pattern.permute.xlu0 0
    %2249 = vperm.xlu0 %2248, %v2183
    %v2250 = vpop.permute.xlu0 %2249
    %2253 = vset.pattern.permute.xlu0 0
    %2254 = vperm.xlu0 %2253, %v2184
    %v2255 = vpop.permute.xlu0 %2254
    %2258 = vset.pattern.permute.xlu0 0
    %2259 = vperm.xlu0 %2258, %v2185
    %v2260 = vpop.permute.xlu0 %2259
    %2263 = vset.pattern.permute.xlu0 0
    %2264 = vperm.xlu0 %2263, %v2186
    %v2265 = vpop.permute.xlu0 %2264
    %v2268 = vsel %vm313, %v2161, 0
    %v2271 = vsel %vm313, %v2162, 0
    %v2274 = vsel %vm313, %v2163, 0
    %v2277 = vsel %vm313, %v2164, 0
    %v2280 = vsel %vm313, %v2165, 0
    %v2283 = vsel %vm313, %v2166, 0
    %v2286 = vsel %vm313, %v2167, 0
    %v2289 = vsel %vm313, %v2168, 0
    %2291 = vmatprep.subr.bf16.mxu0 0
    %2292 = vmatpush1.bf16.msra.mxu0 %v2169
    %2293 = vmatprep.subr.bf16.mxu0 0
    %2294 = vmatpush1.bf16.msra.mxu0 %v2170
    %2295 = vmatprep.subr.bf16.mxu0 0
    %2296 = vmatpush1.bf16.msra.mxu0 0
    %2297 = vmatprep.subr.bf16.mxu0 0
    %2298 = vmatpush1.bf16.msra.mxu0 0
    %2299 = vmatprep.subr.bf16.mxu0 0
    %2300 = vmatpush1.bf16.msra.mxu0 0
    %2301 = vmatprep.subr.bf16.mxu0 0
    %2302 = vmatpush1.bf16.msra.mxu0 0
    %2303 = vmatprep.subr.bf16.mxu0 0
    %2304 = vmatpush1.bf16.msra.mxu0 0
    %2305 = vmatprep.subr.bf16.mxu0 0
    %2306 = vmatpush1.bf16.msra.mxu0 0
    %2307 = vmatprep.subr.bf16.mxu0 0
    %2308 = vmatpush1.bf16.msra.mxu0 0
    %2309 = vmatprep.subr.bf16.mxu0 0
    %2310 = vmatpush1.bf16.msra.mxu0 0
    %2311 = vmatprep.subr.bf16.mxu0 0
    %2312 = vmatpush1.bf16.msra.mxu0 0
    %2313 = vmatprep.subr.bf16.mxu0 0
    %2314 = vmatpush1.bf16.msra.mxu0 0
    %2315 = vmatprep.subr.bf16.mxu0 0
    %2316 = vmatpush1.bf16.msra.mxu0 0
    %2317 = vmatprep.subr.bf16.mxu0 0
    %2318 = vmatpush1.bf16.msra.mxu0 0
    %2319 = vmatprep.subr.bf16.mxu0 0
    %2320 = vmatpush1.bf16.msra.mxu0 0
    %2321 = vmatprep.subr.bf16.mxu0 0
    %2322 = vmatpush1.bf16.msra.mxu0 0
    %2323 = vmatprep.mubr.bf16.mxu0 0
    %2324 = vmatmul.mubr.bf16.gmra.mrb[0].mxu0 %v2268
    %v2325 = vpop.f32.mrb[0].mxu0
    %v2326 = vadd.f32 %v2190, %v2325
    %v2327 = vpop.f32.mrb[0].mxu0
    %v2328 = vpop.f32.mrb[0].mxu0
    %v2329 = vadd.f32 %v2195, %v2328
    %v2330 = vpop.f32.mrb[0].mxu0
    %2331 = vmatprep.mubr.bf16.mxu0 0
    %2332 = vmatmul.mubr.bf16.gmra.mrb[0].mxu0 %v2271
    %v2333 = vpop.f32.mrb[0].mxu0
    %v2334 = vadd.f32 %v2200, %v2333
    %v2335 = vpop.f32.mrb[0].mxu0
    %v2336 = vpop.f32.mrb[0].mxu0
    %v2337 = vadd.f32 %v2205, %v2336
    %v2338 = vpop.f32.mrb[0].mxu0
    %2339 = vmatprep.mubr.bf16.mxu0 0
    %2340 = vmatmul.mubr.bf16.gmra.mrb[0].mxu0 %v2274
    %v2341 = vpop.f32.mrb[0].mxu0
    %v2342 = vadd.f32 %v2210, %v2341
    %v2343 = vpop.f32.mrb[0].mxu0
    %v2344 = vpop.f32.mrb[0].mxu0
    %v2345 = vadd.f32 %v2215, %v2344
    %v2346 = vpop.f32.mrb[0].mxu0
    %2347 = vmatprep.mubr.bf16.mxu0 0
    %2348 = vmatmul.mubr.bf16.gmra.mrb[0].mxu0 %v2277
    %v2349 = vpop.f32.mrb[0].mxu0
    %v2350 = vadd.f32 %v2220, %v2349
    %v2351 = vpop.f32.mrb[0].mxu0
    %v2352 = vpop.f32.mrb[0].mxu0
    %v2353 = vadd.f32 %v2225, %v2352
    %v2354 = vpop.f32.mrb[0].mxu0
    %2355 = vmatprep.mubr.bf16.mxu0 0
    %2356 = vmatmul.mubr.bf16.gmra.mrb[0].mxu0 %v2280
    %v2357 = vpop.f32.mrb[0].mxu0
    %v2358 = vadd.f32 %v2230, %v2357
    %v2359 = vpop.f32.mrb[0].mxu0
    %v2360 = vpop.f32.mrb[0].mxu0
    %v2361 = vadd.f32 %v2235, %v2360
    %v2362 = vpop.f32.mrb[0].mxu0
    %2363 = vmatprep.mubr.bf16.mxu0 0
    %2364 = vmatmul.mubr.bf16.gmra.mrb[0].mxu0 %v2283
    %v2365 = vpop.f32.mrb[0].mxu0
    %v2366 = vadd.f32 %v2240, %v2365
    %v2367 = vpop.f32.mrb[0].mxu0
    %v2368 = vpop.f32.mrb[0].mxu0
    %v2369 = vadd.f32 %v2245, %v2368
    %v2370 = vpop.f32.mrb[0].mxu0
    %2371 = vmatprep.mubr.bf16.mxu0 0
    %2372 = vmatmul.mubr.bf16.gmra.mrb[0].mxu0 %v2286
    %v2373 = vpop.f32.mrb[0].mxu0
    %v2374 = vadd.f32 %v2250, %v2373
    %v2375 = vpop.f32.mrb[0].mxu0
    %v2376 = vpop.f32.mrb[0].mxu0
    %v2377 = vadd.f32 %v2255, %v2376
    %v2378 = vpop.f32.mrb[0].mxu0
    %2379 = vmatprep.mubr.bf16.mxu0 0
    %2380 = vmatmul.mubr.bf16.gmra.mrb[0].mxu0 %v2289
    %v2381 = vpop.f32.mrb[0].mxu0
    %v2382 = vadd.f32 %v2260, %v2381
    %v2383 = vpop.f32.mrb[0].mxu0
    %v2384 = vpop.f32.mrb[0].mxu0
    %v2385 = vadd.f32 %v2265, %v2384
    %v2386 = vpop.f32.mrb[0].mxu0
    %2387 = vdwg.mxu0
    %2388 = vxpose.xlu0.b32.start [1/16] %v2326, 128
    %2389 = vxpose.xlu0.b32.cont [2/16] %v2329, 128
    %2390 = vxpose.xlu0.b32.cont [3/16] %v2334, 128
    %2391 = vxpose.xlu0.b32.cont [4/16] %v2337, 128
    %2392 = vxpose.xlu0.b32.cont [5/16] %v2342, 128
    %2393 = vxpose.xlu0.b32.cont [6/16] %v2345, 128
    %2394 = vxpose.xlu0.b32.cont [7/16] %v2350, 128
    %2395 = vxpose.xlu0.b32.cont [8/16] %v2353, 128
    %2396 = vxpose.xlu0.b32.cont [9/16] %v2358, 128
    %2397 = vxpose.xlu0.b32.cont [10/16] %v2361, 128
    %2398 = vxpose.xlu0.b32.cont [11/16] %v2366, 128
    %2399 = vxpose.xlu0.b32.cont [12/16] %v2369, 128
    %2400 = vxpose.xlu0.b32.cont [13/16] %v2374, 128
    %2401 = vxpose.xlu0.b32.cont [14/16] %v2377, 128
    %2402 = vxpose.xlu0.b32.cont [15/16] %v2382, 128
    %2403 = vxpose.xlu0.b32.end [16/16] %v2385, 128
    %v2404 = vpop.trf.xlu0
    %v2405 = vpop.trf.xlu0
    %v2406 = vpop.trf.xlu0
    %v2407 = vpop.trf.xlu0
    %v2408 = vpop.trf.xlu0
    %v2409 = vpop.trf.xlu0
    %v2410 = vpop.trf.xlu0
    %v2411 = vpop.trf.xlu0
    %v2412 = vpop.trf.xlu0
    %v2413 = vpop.trf.xlu0
    %v2414 = vpop.trf.xlu0
    %v2415 = vpop.trf.xlu0
    %v2416 = vpop.trf.xlu0
    %v2417 = vpop.trf.xlu0
    %v2418 = vpop.trf.xlu0
    %v2419 = vpop.trf.xlu0
    %v2436 = vrot.slane %v2404, 7
    %v2437 = vrot.slane %v2405, 7
    %v2438 = vrot.slane %v2406, 7
    %v2439 = vrot.slane %v2407, 7
    %v2440 = vrot.slane %v2408, 7
    %v2441 = vrot.slane %v2409, 7
    %v2442 = vrot.slane %v2410, 7
    %v2443 = vrot.slane %v2411, 7
    %v2444 = vrot.slane %v2412, 7
    %v2445 = vrot.slane %v2413, 7
    %v2446 = vrot.slane %v2414, 7
    %v2447 = vrot.slane %v2415, 7
    %v2448 = vrot.slane %v2416, 7
    %v2449 = vrot.slane %v2417, 7
    %v2450 = vrot.slane %v2418, 7
    %v2451 = vrot.slane %v2419, 7
    %vm2468 = vcmask 1040384
    %v2469 = vsel %vm2468, 0.0, %v2436
    %v2470 = vsel %vm2468, 0.0, %v2437
    %v2471 = vsel %vm2468, 0.0, %v2438
    %v2472 = vsel %vm2468, 0.0, %v2439
    %v2473 = vsel %vm2468, 0.0, %v2440
    %v2474 = vsel %vm2468, 0.0, %v2441
    %v2475 = vsel %vm2468, 0.0, %v2442
    %v2476 = vsel %vm2468, 0.0, %v2443
    %v2477 = vsel %vm2468, 0.0, %v2444
    %v2478 = vsel %vm2468, 0.0, %v2445
    %v2479 = vsel %vm2468, 0.0, %v2446
    %v2480 = vsel %vm2468, 0.0, %v2447
    %v2481 = vsel %vm2468, 0.0, %v2448
    %v2482 = vsel %vm2468, 0.0, %v2449
    %v2483 = vsel %vm2468, 0.0, %v2450
    %v2484 = vsel %vm2468, 0.0, %v2451
    %v2485 = vsel %vm2468, %v2436, 0.0
    %v2486 = vsel %vm2468, %v2437, 0.0
    %v2487 = vsel %vm2468, %v2438, 0.0
    %v2488 = vsel %vm2468, %v2439, 0.0
    %v2489 = vsel %vm2468, %v2440, 0.0
    %v2490 = vsel %vm2468, %v2441, 0.0
    %v2491 = vsel %vm2468, %v2442, 0.0
    %v2492 = vsel %vm2468, %v2443, 0.0
    %v2493 = vsel %vm2468, %v2444, 0.0
    %v2494 = vsel %vm2468, %v2445, 0.0
    %v2495 = vsel %vm2468, %v2446, 0.0
    %v2496 = vsel %vm2468, %v2447, 0.0
    %v2497 = vsel %vm2468, %v2448, 0.0
    %v2498 = vsel %vm2468, %v2449, 0.0
    %v2499 = vsel %vm2468, %v2450, 0.0
    %v2500 = vsel %vm2468, %v2451, 0.0
    %v2501 = vld [vmem:[%s14] sm:$0xff]
    %v2502 = vld [vmem:[%s14 + $0x8] sm:$0x1]
    %v2503 = vlaneseq
    %v2504 = vshrl.u32 %v2503, 7
    %v2505 = vsub.s32 0, %v2504
    %v2506 = vrot.slane %v2501, %v2505
    %v2507 = vmul.f32 %v2506, 0.0
    %v2508 = vmul.f32 %v2469, %v2506
    %v2509 = vmul.f32 %v2470, %v2506
    %v2510 = vmul.f32 %v2471, %v2506
    %v2511 = vmul.f32 %v2472, %v2506
    %v2512 = vmul.f32 %v2473, %v2506
    %v2513 = vmul.f32 %v2474, %v2506
    %v2514 = vmul.f32 %v2475, %v2506
    %v2515 = vmul.f32 %v2477, %v2506
    %v2516 = vmul.f32 %v2478, %v2506
    %v2517 = vmul.f32 %v2479, %v2506
    %v2518 = vmul.f32 %v2480, %v2506
    %v2519 = vmul.f32 %v2481, %v2506
    %v2520 = vmul.f32 %v2482, %v2506
    %v2521 = vmul.f32 %v2483, %v2506
    %v2522 = vadd.f32 %v2507, 0.0
    %v2523 = vadd.f32 %v2508, 0.0
    %v2524 = vadd.f32 %v2509, 0.0
    %v2525 = vadd.f32 %v2510, 0.0
    %v2526 = vadd.f32 %v2511, 0.0
    %v2527 = vadd.f32 %v2512, 0.0
    %v2528 = vadd.f32 %v2513, 0.0
    %v2529 = vadd.f32 %v2514, 0.0
    %v2530 = vadd.f32 %v2515, 0.0
    %v2531 = vadd.f32 %v2516, 0.0
    %v2532 = vadd.f32 %v2517, 0.0
    %v2533 = vadd.f32 %v2518, 0.0
    %v2534 = vadd.f32 %v2519, 0.0
    %v2535 = vadd.f32 %v2520, 0.0
    %v2536 = vadd.f32 %v2521, 0.0
    %v2537 = vlaneseq
    %v2538 = vshrl.u32 %v2537, 7
    %v2539 = vsub.s32 1, %v2538
    %v2540 = vrot.slane %v2501, %v2539
    %v2541 = vmul.f32 %v2540, 0.0
    %v2542 = vmul.f32 %v2469, %v2540
    %v2543 = vmul.f32 %v2485, %v2540
    %v2544 = vmul.f32 %v2470, %v2540
    %v2545 = vmul.f32 %v2486, %v2540
    %v2546 = vmul.f32 %v2471, %v2540
    %v2547 = vmul.f32 %v2487, %v2540
    %v2548 = vmul.f32 %v2472, %v2540
    %v2549 = vmul.f32 %v2488, %v2540
    %v2550 = vmul.f32 %v2473, %v2540
    %v2551 = vmul.f32 %v2489, %v2540
    %v2552 = vmul.f32 %v2474, %v2540
    %v2553 = vmul.f32 %v2490, %v2540
    %v2554 = vmul.f32 %v2475, %v2540
    %v2555 = vmul.f32 %v2491, %v2540
    %v2556 = vmul.f32 %v2477, %v2540
    %v2557 = vmul.f32 %v2493, %v2540
    %v2558 = vmul.f32 %v2478, %v2540
    %v2559 = vmul.f32 %v2494, %v2540
    %v2560 = vmul.f32 %v2479, %v2540
    %v2561 = vmul.f32 %v2495, %v2540
    %v2562 = vmul.f32 %v2480, %v2540
    %v2563 = vmul.f32 %v2496, %v2540
    %v2564 = vmul.f32 %v2481, %v2540
    %v2565 = vmul.f32 %v2497, %v2540
    %v2566 = vmul.f32 %v2482, %v2540
    %v2567 = vmul.f32 %v2498, %v2540
    %v2568 = vmul.f32 %v2483, %v2540
    %v2569 = vmul.f32 %v2499, %v2540
    %vm2599 = vcmask 1046528
    %v2600 = vrot.slane %v2541, 1
    %v2601 = vsel %vm2599, %v2600, %v2600
    %v2602 = vrot.slane %v2542, 1
    %v2603 = vrot.slane %v2543, 1
    %v2604 = vsel %vm2599, %v2602, %v2603
    %v2605 = vrot.slane %v2544, 1
    %v2606 = vrot.slane %v2545, 1
    %v2607 = vsel %vm2599, %v2605, %v2606
    %v2608 = vrot.slane %v2546, 1
    %v2609 = vrot.slane %v2547, 1
    %v2610 = vsel %vm2599, %v2608, %v2609
    %v2611 = vrot.slane %v2548, 1
    %v2612 = vrot.slane %v2549, 1
    %v2613 = vsel %vm2599, %v2611, %v2612
    %v2614 = vrot.slane %v2550, 1
    %v2615 = vrot.slane %v2551, 1
    %v2616 = vsel %vm2599, %v2614, %v2615
    %v2617 = vrot.slane %v2552, 1
    %v2618 = vrot.slane %v2553, 1
    %v2619 = vsel %vm2599, %v2617, %v2618
    %v2620 = vrot.slane %v2554, 1
    %v2621 = vrot.slane %v2555, 1
    %v2622 = vsel %vm2599, %v2620, %v2621
    %v2623 = vrot.slane %v2556, 1
    %v2624 = vrot.slane %v2557, 1
    %v2625 = vsel %vm2599, %v2623, %v2624
    %v2626 = vrot.slane %v2558, 1
    %v2627 = vrot.slane %v2559, 1
    %v2628 = vsel %vm2599, %v2626, %v2627
    %v2629 = vrot.slane %v2560, 1
    %v2630 = vrot.slane %v2561, 1
    %v2631 = vsel %vm2599, %v2629, %v2630
    %v2632 = vrot.slane %v2562, 1
    %v2633 = vrot.slane %v2563, 1
    %v2634 = vsel %vm2599, %v2632, %v2633
    %v2635 = vrot.slane %v2564, 1
    %v2636 = vrot.slane %v2565, 1
    %v2637 = vsel %vm2599, %v2635, %v2636
    %v2638 = vrot.slane %v2566, 1
    %v2639 = vrot.slane %v2567, 1
    %v2640 = vsel %vm2599, %v2638, %v2639
    %v2641 = vrot.slane %v2568, 1
    %v2642 = vrot.slane %v2569, 1
    %v2643 = vsel %vm2599, %v2641, %v2642
    %v2659 = vadd.f32 %v2522, %v2601
    %v2660 = vadd.f32 %v2523, %v2604
    %v2661 = vadd.f32 %v2524, %v2607
    %v2662 = vadd.f32 %v2525, %v2610
    %v2663 = vadd.f32 %v2526, %v2613
    %v2664 = vadd.f32 %v2527, %v2616
    %v2665 = vadd.f32 %v2528, %v2619
    %v2666 = vadd.f32 %v2529, %v2622
    %v2667 = vadd.f32 %v2530, %v2625
    %v2668 = vadd.f32 %v2531, %v2628
    %v2669 = vadd.f32 %v2532, %v2631
    %v2670 = vadd.f32 %v2533, %v2634
    %v2671 = vadd.f32 %v2534, %v2637
    %v2672 = vadd.f32 %v2535, %v2640
    %v2673 = vadd.f32 %v2536, %v2643
    %v2674 = vlaneseq
    %v2675 = vshrl.u32 %v2674, 7
    %v2676 = vsub.s32 2, %v2675
    %v2677 = vrot.slane %v2501, %v2676
    %v2678 = vmul.f32 %v2677, 0.0
    %v2679 = vmul.f32 %v2469, %v2677
    %v2680 = vmul.f32 %v2485, %v2677
    %v2681 = vmul.f32 %v2470, %v2677
    %v2682 = vmul.f32 %v2486, %v2677
    %v2683 = vmul.f32 %v2471, %v2677
    %v2684 = vmul.f32 %v2487, %v2677
    %v2685 = vmul.f32 %v2472, %v2677
    %v2686 = vmul.f32 %v2488, %v2677
    %v2687 = vmul.f32 %v2473, %v2677
    %v2688 = vmul.f32 %v2489, %v2677
    %v2689 = vmul.f32 %v2474, %v2677
    %v2690 = vmul.f32 %v2490, %v2677
    %v2691 = vmul.f32 %v2475, %v2677
    %v2692 = vmul.f32 %v2491, %v2677
    %v2693 = vmul.f32 %v2477, %v2677
    %v2694 = vmul.f32 %v2493, %v2677
    %v2695 = vmul.f32 %v2478, %v2677
    %v2696 = vmul.f32 %v2494, %v2677
    %v2697 = vmul.f32 %v2479, %v2677
    %v2698 = vmul.f32 %v2495, %v2677
    %v2699 = vmul.f32 %v2480, %v2677
    %v2700 = vmul.f32 %v2496, %v2677
    %v2701 = vmul.f32 %v2481, %v2677
    %v2702 = vmul.f32 %v2497, %v2677
    %v2703 = vmul.f32 %v2482, %v2677
    %v2704 = vmul.f32 %v2498, %v2677
    %v2705 = vmul.f32 %v2483, %v2677
    %v2706 = vmul.f32 %v2499, %v2677
    %vm2736 = vcmask 1045504
    %v2737 = vrot.slane %v2678, 2
    %v2738 = vsel %vm2736, %v2737, %v2737
    %v2739 = vrot.slane %v2679, 2
    %v2740 = vrot.slane %v2680, 2
    %v2741 = vsel %vm2736, %v2739, %v2740
    %v2742 = vrot.slane %v2681, 2
    %v2743 = vrot.slane %v2682, 2
    %v2744 = vsel %vm2736, %v2742, %v2743
    %v2745 = vrot.slane %v2683, 2
    %v2746 = vrot.slane %v2684, 2
    %v2747 = vsel %vm2736, %v2745, %v2746
    %v2748 = vrot.slane %v2685, 2
    %v2749 = vrot.slane %v2686, 2
    %v2750 = vsel %vm2736, %v2748, %v2749
    %v2751 = vrot.slane %v2687, 2
    %v2752 = vrot.slane %v2688, 2
    %v2753 = vsel %vm2736, %v2751, %v2752
    %v2754 = vrot.slane %v2689, 2
    %v2755 = vrot.slane %v2690, 2
    %v2756 = vsel %vm2736, %v2754, %v2755
    %v2757 = vrot.slane %v2691, 2
    %v2758 = vrot.slane %v2692, 2
    %v2759 = vsel %vm2736, %v2757, %v2758
    %v2760 = vrot.slane %v2693, 2
    %v2761 = vrot.slane %v2694, 2
    %v2762 = vsel %vm2736, %v2760, %v2761
    %v2763 = vrot.slane %v2695, 2
    %v2764 = vrot.slane %v2696, 2
    %v2765 = vsel %vm2736, %v2763, %v2764
    %v2766 = vrot.slane %v2697, 2
    %v2767 = vrot.slane %v2698, 2
    %v2768 = vsel %vm2736, %v2766, %v2767
    %v2769 = vrot.slane %v2699, 2
    %v2770 = vrot.slane %v2700, 2
    %v2771 = vsel %vm2736, %v2769, %v2770
    %v2772 = vrot.slane %v2701, 2
    %v2773 = vrot.slane %v2702, 2
    %v2774 = vsel %vm2736, %v2772, %v2773
    %v2775 = vrot.slane %v2703, 2
    %v2776 = vrot.slane %v2704, 2
    %v2777 = vsel %vm2736, %v2775, %v2776
    %v2778 = vrot.slane %v2705, 2
    %v2779 = vrot.slane %v2706, 2
    %v2780 = vsel %vm2736, %v2778, %v2779
    %v2796 = vadd.f32 %v2659, %v2738
    %v2797 = vadd.f32 %v2660, %v2741
    %v2798 = vadd.f32 %v2661, %v2744
    %v2799 = vadd.f32 %v2662, %v2747
    %v2800 = vadd.f32 %v2663, %v2750
    %v2801 = vadd.f32 %v2664, %v2753
    %v2802 = vadd.f32 %v2665, %v2756
    %v2803 = vadd.f32 %v2666, %v2759
    %v2804 = vadd.f32 %v2667, %v2762
    %v2805 = vadd.f32 %v2668, %v2765
    %v2806 = vadd.f32 %v2669, %v2768
    %v2807 = vadd.f32 %v2670, %v2771
    %v2808 = vadd.f32 %v2671, %v2774
    %v2809 = vadd.f32 %v2672, %v2777
    %v2810 = vadd.f32 %v2673, %v2780
    %v2811 = vlaneseq
    %v2812 = vshrl.u32 %v2811, 7
    %v2813 = vsub.s32 3, %v2812
    %v2814 = vrot.slane %v2501, %v2813
    %v2815 = vmul.f32 %v2469, %v2814
    %v2816 = vmul.f32 %v2470, %v2814
    %v2817 = vmul.f32 %v2471, %v2814
    %v2818 = vmul.f32 %v2472, %v2814
    %v2819 = vmul.f32 %v2473, %v2814
    %v2820 = vmul.f32 %v2474, %v2814
    %v2821 = vmul.f32 %v2475, %v2814
    %v2822 = vmul.f32 %v2476, %v2814
    %v2823 = vmul.f32 %v2477, %v2814
    %v2824 = vmul.f32 %v2478, %v2814
    %v2825 = vmul.f32 %v2479, %v2814
    %v2826 = vmul.f32 %v2480, %v2814
    %v2827 = vmul.f32 %v2481, %v2814
    %v2828 = vmul.f32 %v2482, %v2814
    %v2829 = vmul.f32 %v2483, %v2814
    %v2830 = vmul.f32 %v2484, %v2814
    %v2831 = vadd.f32 %v2796, %v2815
    %v2832 = vadd.f32 %v2797, %v2816
    %v2833 = vadd.f32 %v2798, %v2817
    %v2834 = vadd.f32 %v2799, %v2818
    %v2835 = vadd.f32 %v2800, %v2819
    %v2836 = vadd.f32 %v2801, %v2820
    %v2837 = vadd.f32 %v2802, %v2821
    %v2838 = vadd.f32 %v2803, %v2822
    %v2839 = vadd.f32 %v2796, %v2823
    %v2840 = vadd.f32 %v2804, %v2824
    %v2841 = vadd.f32 %v2805, %v2825
    %v2842 = vadd.f32 %v2806, %v2826
    %v2843 = vadd.f32 %v2807, %v2827
    %v2844 = vadd.f32 %v2808, %v2828
    %v2845 = vadd.f32 %v2809, %v2829
    %v2846 = vadd.f32 %v2810, %v2830
    %v2847 = vlaneseq
    %v2848 = vshrl.u32 %v2847, 7
    %v2849 = vsub.s32 4, %v2848
    %v2850 = vrot.slane %v2501, %v2849
    %v2851 = vmul.f32 %v2469, %v2850
    %v2852 = vmul.f32 %v2485, %v2850
    %v2853 = vmul.f32 %v2470, %v2850
    %v2854 = vmul.f32 %v2486, %v2850
    %v2855 = vmul.f32 %v2471, %v2850
    %v2856 = vmul.f32 %v2487, %v2850
    %v2857 = vmul.f32 %v2472, %v2850
    %v2858 = vmul.f32 %v2488, %v2850
    %v2859 = vmul.f32 %v2473, %v2850
    %v2860 = vmul.f32 %v2489, %v2850
    %v2861 = vmul.f32 %v2474, %v2850
    %v2862 = vmul.f32 %v2490, %v2850
    %v2863 = vmul.f32 %v2475, %v2850
    %v2864 = vmul.f32 %v2491, %v2850
    %v2865 = vmul.f32 %v2476, %v2850
    %v2866 = vmul.f32 %v2492, %v2850
    %v2867 = vmul.f32 %v2477, %v2850
    %v2868 = vmul.f32 %v2493, %v2850
    %v2869 = vmul.f32 %v2478, %v2850
    %v2870 = vmul.f32 %v2494, %v2850
    %v2871 = vmul.f32 %v2479, %v2850
    %v2872 = vmul.f32 %v2495, %v2850
    %v2873 = vmul.f32 %v2480, %v2850
    %v2874 = vmul.f32 %v2496, %v2850
    %v2875 = vmul.f32 %v2481, %v2850
    %v2876 = vmul.f32 %v2497, %v2850
    %v2877 = vmul.f32 %v2482, %v2850
    %v2878 = vmul.f32 %v2498, %v2850
    %v2879 = vmul.f32 %v2483, %v2850
    %v2880 = vmul.f32 %v2499, %v2850
    %v2881 = vmul.f32 %v2484, %v2850
    %v2882 = vmul.f32 %v2500, %v2850
    %v2915 = vrot.slane %v2851, 1
    %v2916 = vrot.slane %v2852, 1
    %v2917 = vsel %vm2599, %v2915, %v2916
    %v2918 = vrot.slane %v2853, 1
    %v2919 = vrot.slane %v2854, 1
    %v2920 = vsel %vm2599, %v2918, %v2919
    %v2921 = vrot.slane %v2855, 1
    %v2922 = vrot.slane %v2856, 1
    %v2923 = vsel %vm2599, %v2921, %v2922
    %v2924 = vrot.slane %v2857, 1
    %v2925 = vrot.slane %v2858, 1
    %v2926 = vsel %vm2599, %v2924, %v2925
    %v2927 = vrot.slane %v2859, 1
    %v2928 = vrot.slane %v2860, 1
    %v2929 = vsel %vm2599, %v2927, %v2928
    %v2930 = vrot.slane %v2861, 1
    %v2931 = vrot.slane %v2862, 1
    %v2932 = vsel %vm2599, %v2930, %v2931
    %v2933 = vrot.slane %v2863, 1
    %v2934 = vrot.slane %v2864, 1
    %v2935 = vsel %vm2599, %v2933, %v2934
    %v2936 = vrot.slane %v2865, 1
    %v2937 = vrot.slane %v2866, 1
    %v2938 = vsel %vm2599, %v2936, %v2937
    %v2939 = vrot.slane %v2867, 1
    %v2940 = vrot.slane %v2868, 1
    %v2941 = vsel %vm2599, %v2939, %v2940
    %v2942 = vrot.slane %v2869, 1
    %v2943 = vrot.slane %v2870, 1
    %v2944 = vsel %vm2599, %v2942, %v2943
    %v2945 = vrot.slane %v2871, 1
    %v2946 = vrot.slane %v2872, 1
    %v2947 = vsel %vm2599, %v2945, %v2946
    %v2948 = vrot.slane %v2873, 1
    %v2949 = vrot.slane %v2874, 1
    %v2950 = vsel %vm2599, %v2948, %v2949
    %v2951 = vrot.slane %v2875, 1
    %v2952 = vrot.slane %v2876, 1
    %v2953 = vsel %vm2599, %v2951, %v2952
    %v2954 = vrot.slane %v2877, 1
    %v2955 = vrot.slane %v2878, 1
    %v2956 = vsel %vm2599, %v2954, %v2955
    %v2957 = vrot.slane %v2879, 1
    %v2958 = vrot.slane %v2880, 1
    %v2959 = vsel %vm2599, %v2957, %v2958
    %v2960 = vrot.slane %v2881, 1
    %v2961 = vrot.slane %v2882, 1
    %v2962 = vsel %vm2599, %v2960, %v2961
    %v2979 = vadd.f32 %v2831, %v2917
    %v2980 = vadd.f32 %v2832, %v2920
    %v2981 = vadd.f32 %v2833, %v2923
    %v2982 = vadd.f32 %v2834, %v2926
    %v2983 = vadd.f32 %v2835, %v2929
    %v2984 = vadd.f32 %v2836, %v2932
    %v2985 = vadd.f32 %v2837, %v2935
    %v2986 = vadd.f32 %v2838, %v2938
    %v2987 = vadd.f32 %v2839, %v2941
    %v2988 = vadd.f32 %v2840, %v2944
    %v2989 = vadd.f32 %v2841, %v2947
    %v2990 = vadd.f32 %v2842, %v2950
    %v2991 = vadd.f32 %v2843, %v2953
    %v2992 = vadd.f32 %v2844, %v2956
    %v2993 = vadd.f32 %v2845, %v2959
    %v2994 = vadd.f32 %v2846, %v2962
    %v2995 = vlaneseq
    %v2996 = vshrl.u32 %v2995, 7
    %v2997 = vsub.s32 5, %v2996
    %v2998 = vrot.slane %v2501, %v2997
    %v2999 = vmul.f32 %v2469, %v2998
    %v3000 = vmul.f32 %v2485, %v2998
    %v3001 = vmul.f32 %v2470, %v2998
    %v3002 = vmul.f32 %v2486, %v2998
    %v3003 = vmul.f32 %v2471, %v2998
    %v3004 = vmul.f32 %v2487, %v2998
    %v3005 = vmul.f32 %v2472, %v2998
    %v3006 = vmul.f32 %v2488, %v2998
    %v3007 = vmul.f32 %v2473, %v2998
    %v3008 = vmul.f32 %v2489, %v2998
    %v3009 = vmul.f32 %v2474, %v2998
    %v3010 = vmul.f32 %v2490, %v2998
    %v3011 = vmul.f32 %v2475, %v2998
    %v3012 = vmul.f32 %v2491, %v2998
    %v3013 = vmul.f32 %v2476, %v2998
    %v3014 = vmul.f32 %v2492, %v2998
    %v3015 = vmul.f32 %v2477, %v2998
    %v3016 = vmul.f32 %v2493, %v2998
    %v3017 = vmul.f32 %v2478, %v2998
    %v3018 = vmul.f32 %v2494, %v2998
    %v3019 = vmul.f32 %v2479, %v2998
    %v3020 = vmul.f32 %v2495, %v2998
    %v3021 = vmul.f32 %v2480, %v2998
    %v3022 = vmul.f32 %v2496, %v2998
    %v3023 = vmul.f32 %v2481, %v2998
    %v3024 = vmul.f32 %v2497, %v2998
    %v3025 = vmul.f32 %v2482, %v2998
    %v3026 = vmul.f32 %v2498, %v2998
    %v3027 = vmul.f32 %v2483, %v2998
    %v3028 = vmul.f32 %v2499, %v2998
    %v3029 = vmul.f32 %v2484, %v2998
    %v3030 = vmul.f32 %v2500, %v2998
    %v3063 = vrot.slane %v2999, 2
    %v3064 = vrot.slane %v3000, 2
    %v3065 = vsel %vm2736, %v3063, %v3064
    %v3066 = vrot.slane %v3001, 2
    %v3067 = vrot.slane %v3002, 2
    %v3068 = vsel %vm2736, %v3066, %v3067
    %v3069 = vrot.slane %v3003, 2
    %v3070 = vrot.slane %v3004, 2
    %v3071 = vsel %vm2736, %v3069, %v3070
    %v3072 = vrot.slane %v3005, 2
    %v3073 = vrot.slane %v3006, 2
    %v3074 = vsel %vm2736, %v3072, %v3073
    %v3075 = vrot.slane %v3007, 2
    %v3076 = vrot.slane %v3008, 2
    %v3077 = vsel %vm2736, %v3075, %v3076
    %v3078 = vrot.slane %v3009, 2
    %v3079 = vrot.slane %v3010, 2
    %v3080 = vsel %vm2736, %v3078, %v3079
    %v3081 = vrot.slane %v3011, 2
    %v3082 = vrot.slane %v3012, 2
    %v3083 = vsel %vm2736, %v3081, %v3082
    %v3084 = vrot.slane %v3013, 2
    %v3085 = vrot.slane %v3014, 2
    %v3086 = vsel %vm2736, %v3084, %v3085
    %v3087 = vrot.slane %v3015, 2
    %v3088 = vrot.slane %v3016, 2
    %v3089 = vsel %vm2736, %v3087, %v3088
    %v3090 = vrot.slane %v3017, 2
    %v3091 = vrot.slane %v3018, 2
    %v3092 = vsel %vm2736, %v3090, %v3091
    %v3093 = vrot.slane %v3019, 2
    %v3094 = vrot.slane %v3020, 2
    %v3095 = vsel %vm2736, %v3093, %v3094
    %v3096 = vrot.slane %v3021, 2
    %v3097 = vrot.slane %v3022, 2
    %v3098 = vsel %vm2736, %v3096, %v3097
    %v3099 = vrot.slane %v3023, 2
    %v3100 = vrot.slane %v3024, 2
    %v3101 = vsel %vm2736, %v3099, %v3100
    %v3102 = vrot.slane %v3025, 2
    %v3103 = vrot.slane %v3026, 2
    %v3104 = vsel %vm2736, %v3102, %v3103
    %v3105 = vrot.slane %v3027, 2
    %v3106 = vrot.slane %v3028, 2
    %v3107 = vsel %vm2736, %v3105, %v3106
    %v3108 = vrot.slane %v3029, 2
    %v3109 = vrot.slane %v3030, 2
    %v3110 = vsel %vm2736, %v3108, %v3109
    %v3127 = vadd.f32 %v2979, %v3065
    %v3128 = vadd.f32 %v2980, %v3068
    %v3129 = vadd.f32 %v2981, %v3071
    %v3130 = vadd.f32 %v2982, %v3074
    %v3131 = vadd.f32 %v2983, %v3077
    %v3132 = vadd.f32 %v2984, %v3080
    %v3133 = vadd.f32 %v2985, %v3083
    %v3134 = vadd.f32 %v2986, %v3086
    %v3135 = vadd.f32 %v2987, %v3089
    %v3136 = vadd.f32 %v2988, %v3092
    %v3137 = vadd.f32 %v2989, %v3095
    %v3138 = vadd.f32 %v2990, %v3098
    %v3139 = vadd.f32 %v2991, %v3101
    %v3140 = vadd.f32 %v2992, %v3104
    %v3141 = vadd.f32 %v2993, %v3107
    %v3142 = vadd.f32 %v2994, %v3110
    %v3143 = vlaneseq
    %v3144 = vshrl.u32 %v3143, 7
    %v3145 = vsub.s32 6, %v3144
    %v3146 = vrot.slane %v2501, %v3145
    %v3147 = vmul.f32 %v2470, %v3146
    %v3148 = vmul.f32 %v2471, %v3146
    %v3149 = vmul.f32 %v2472, %v3146
    %v3150 = vmul.f32 %v2473, %v3146
    %v3151 = vmul.f32 %v2474, %v3146
    %v3152 = vmul.f32 %v2475, %v3146
    %v3153 = vmul.f32 %v2476, %v3146
    %v3154 = vmul.f32 %v3146, 0.0
    %v3155 = vmul.f32 %v2478, %v3146
    %v3156 = vmul.f32 %v2479, %v3146
    %v3157 = vmul.f32 %v2480, %v3146
    %v3158 = vmul.f32 %v2481, %v3146
    %v3159 = vmul.f32 %v2482, %v3146
    %v3160 = vmul.f32 %v2483, %v3146
    %v3161 = vmul.f32 %v2484, %v3146
    %v3162 = vadd.f32 %v3127, %v3147
    %v3163 = vadd.f32 %v3128, %v3148
    %v3164 = vadd.f32 %v3129, %v3149
    %v3165 = vadd.f32 %v3130, %v3150
    %v3166 = vadd.f32 %v3131, %v3151
    %v3167 = vadd.f32 %v3132, %v3152
    %v3168 = vadd.f32 %v3133, %v3153
    %v3169 = vadd.f32 %v3134, %v3154
    %v3170 = vadd.f32 %v3135, %v3155
    %v3171 = vadd.f32 %v3136, %v3156
    %v3172 = vadd.f32 %v3137, %v3157
    %v3173 = vadd.f32 %v3138, %v3158
    %v3174 = vadd.f32 %v3139, %v3159
    %v3175 = vadd.f32 %v3140, %v3160
    %v3176 = vadd.f32 %v3141, %v3161
    %v3177 = vadd.f32 %v3142, %v3154
    %v3178 = vlaneseq
    %v3179 = vshrl.u32 %v3178, 7
    %v3180 = vsub.s32 7, %v3179
    %v3181 = vrot.slane %v2501, %v3180
    %v3182 = vmul.f32 %v2470, %v3181
    %v3183 = vmul.f32 %v2486, %v3181
    %v3184 = vmul.f32 %v2471, %v3181
    %v3185 = vmul.f32 %v2487, %v3181
    %v3186 = vmul.f32 %v2472, %v3181
    %v3187 = vmul.f32 %v2488, %v3181
    %v3188 = vmul.f32 %v2473, %v3181
    %v3189 = vmul.f32 %v2489, %v3181
    %v3190 = vmul.f32 %v2474, %v3181
    %v3191 = vmul.f32 %v2490, %v3181
    %v3192 = vmul.f32 %v2475, %v3181
    %v3193 = vmul.f32 %v2491, %v3181
    %v3194 = vmul.f32 %v2476, %v3181
    %v3195 = vmul.f32 %v2492, %v3181
    %v3196 = vmul.f32 %v3181, 0.0
    %v3197 = vmul.f32 %v2478, %v3181
    %v3198 = vmul.f32 %v2494, %v3181
    %v3199 = vmul.f32 %v2479, %v3181
    %v3200 = vmul.f32 %v2495, %v3181
    %v3201 = vmul.f32 %v2480, %v3181
    %v3202 = vmul.f32 %v2496, %v3181
    %v3203 = vmul.f32 %v2481, %v3181
    %v3204 = vmul.f32 %v2497, %v3181
    %v3205 = vmul.f32 %v2482, %v3181
    %v3206 = vmul.f32 %v2498, %v3181
    %v3207 = vmul.f32 %v2483, %v3181
    %v3208 = vmul.f32 %v2499, %v3181
    %v3209 = vmul.f32 %v2484, %v3181
    %v3210 = vmul.f32 %v2500, %v3181
    %v3240 = vrot.slane %v3182, 1
    %v3241 = vrot.slane %v3183, 1
    %v3242 = vsel %vm2599, %v3240, %v3241
    %v3243 = vrot.slane %v3184, 1
    %v3244 = vrot.slane %v3185, 1
    %v3245 = vsel %vm2599, %v3243, %v3244
    %v3246 = vrot.slane %v3186, 1
    %v3247 = vrot.slane %v3187, 1
    %v3248 = vsel %vm2599, %v3246, %v3247
    %v3249 = vrot.slane %v3188, 1
    %v3250 = vrot.slane %v3189, 1
    %v3251 = vsel %vm2599, %v3249, %v3250
    %v3252 = vrot.slane %v3190, 1
    %v3253 = vrot.slane %v3191, 1
    %v3254 = vsel %vm2599, %v3252, %v3253
    %v3255 = vrot.slane %v3192, 1
    %v3256 = vrot.slane %v3193, 1
    %v3257 = vsel %vm2599, %v3255, %v3256
    %v3258 = vrot.slane %v3194, 1
    %v3259 = vrot.slane %v3195, 1
    %v3260 = vsel %vm2599, %v3258, %v3259
    %v3261 = vrot.slane %v3196, 1
    %v3262 = vsel %vm2599, %v3261, %v3261
    %v3263 = vrot.slane %v3197, 1
    %v3264 = vrot.slane %v3198, 1
    %v3265 = vsel %vm2599, %v3263, %v3264
    %v3266 = vrot.slane %v3199, 1
    %v3267 = vrot.slane %v3200, 1
    %v3268 = vsel %vm2599, %v3266, %v3267
    %v3269 = vrot.slane %v3201, 1
    %v3270 = vrot.slane %v3202, 1
    %v3271 = vsel %vm2599, %v3269, %v3270
    %v3272 = vrot.slane %v3203, 1
    %v3273 = vrot.slane %v3204, 1
    %v3274 = vsel %vm2599, %v3272, %v3273
    %v3275 = vrot.slane %v3205, 1
    %v3276 = vrot.slane %v3206, 1
    %v3277 = vsel %vm2599, %v3275, %v3276
    %v3278 = vrot.slane %v3207, 1
    %v3279 = vrot.slane %v3208, 1
    %v3280 = vsel %vm2599, %v3278, %v3279
    %v3281 = vrot.slane %v3209, 1
    %v3282 = vrot.slane %v3210, 1
    %v3283 = vsel %vm2599, %v3281, %v3282
    %v3299 = vadd.f32 %v3162, %v3242
    %v3300 = vadd.f32 %v3163, %v3245
    %v3301 = vadd.f32 %v3164, %v3248
    %v3302 = vadd.f32 %v3165, %v3251
    %v3303 = vadd.f32 %v3166, %v3254
    %v3304 = vadd.f32 %v3167, %v3257
    %v3305 = vadd.f32 %v3168, %v3260
    %v3306 = vadd.f32 %v3169, %v3262
    %v3307 = vadd.f32 %v3170, %v3265
    %v3308 = vadd.f32 %v3171, %v3268
    %v3309 = vadd.f32 %v3172, %v3271
    %v3310 = vadd.f32 %v3173, %v3274
    %v3311 = vadd.f32 %v3174, %v3277
    %v3312 = vadd.f32 %v3175, %v3280
    %v3313 = vadd.f32 %v3176, %v3283
    %v3314 = vadd.f32 %v3177, %v3262
    %v3315 = vlaneseq
    %v3316 = vshrl.u32 %v3315, 7
    %v3317 = vsub.s32 0, %v3316
    %v3318 = vrot.slane %v2502, %v3317
    %v3319 = vmul.f32 %v2470, %v3318
    %v3320 = vmul.f32 %v2486, %v3318
    %v3321 = vmul.f32 %v2471, %v3318
    %v3322 = vmul.f32 %v2487, %v3318
    %v3323 = vmul.f32 %v2472, %v3318
    %v3324 = vmul.f32 %v2488, %v3318
    %v3325 = vmul.f32 %v2473, %v3318
    %v3326 = vmul.f32 %v2489, %v3318
    %v3327 = vmul.f32 %v2474, %v3318
    %v3328 = vmul.f32 %v2490, %v3318
    %v3329 = vmul.f32 %v2475, %v3318
    %v3330 = vmul.f32 %v2491, %v3318
    %v3331 = vmul.f32 %v2476, %v3318
    %v3332 = vmul.f32 %v2492, %v3318
    %v3333 = vmul.f32 %v3318, 0.0
    %v3334 = vmul.f32 %v2478, %v3318
    %v3335 = vmul.f32 %v2494, %v3318
    %v3336 = vmul.f32 %v2479, %v3318
    %v3337 = vmul.f32 %v2495, %v3318
    %v3338 = vmul.f32 %v2480, %v3318
    %v3339 = vmul.f32 %v2496, %v3318
    %v3340 = vmul.f32 %v2481, %v3318
    %v3341 = vmul.f32 %v2497, %v3318
    %v3342 = vmul.f32 %v2482, %v3318
    %v3343 = vmul.f32 %v2498, %v3318
    %v3344 = vmul.f32 %v2483, %v3318
    %v3345 = vmul.f32 %v2499, %v3318
    %v3346 = vmul.f32 %v2484, %v3318
    %v3347 = vmul.f32 %v2500, %v3318
    %v3377 = vrot.slane %v3319, 2
    %v3378 = vrot.slane %v3320, 2
    %v3379 = vsel %vm2736, %v3377, %v3378
    %v3380 = vrot.slane %v3321, 2
    %v3381 = vrot.slane %v3322, 2
    %v3382 = vsel %vm2736, %v3380, %v3381
    %v3383 = vrot.slane %v3323, 2
    %v3384 = vrot.slane %v3324, 2
    %v3385 = vsel %vm2736, %v3383, %v3384
    %v3386 = vrot.slane %v3325, 2
    %v3387 = vrot.slane %v3326, 2
    %v3388 = vsel %vm2736, %v3386, %v3387
    %v3389 = vrot.slane %v3327, 2
    %v3390 = vrot.slane %v3328, 2
    %v3391 = vsel %vm2736, %v3389, %v3390
    %v3392 = vrot.slane %v3329, 2
    %v3393 = vrot.slane %v3330, 2
    %v3394 = vsel %vm2736, %v3392, %v3393
    %v3395 = vrot.slane %v3331, 2
    %v3396 = vrot.slane %v3332, 2
    %v3397 = vsel %vm2736, %v3395, %v3396
    %v3398 = vrot.slane %v3333, 2
    %v3399 = vsel %vm2736, %v3398, %v3398
    %v3400 = vrot.slane %v3334, 2
    %v3401 = vrot.slane %v3335, 2
    %v3402 = vsel %vm2736, %v3400, %v3401
    %v3403 = vrot.slane %v3336, 2
    %v3404 = vrot.slane %v3337, 2
    %v3405 = vsel %vm2736, %v3403, %v3404
    %v3406 = vrot.slane %v3338, 2
    %v3407 = vrot.slane %v3339, 2
    %v3408 = vsel %vm2736, %v3406, %v3407
    %v3409 = vrot.slane %v3340, 2
    %v3410 = vrot.slane %v3341, 2
    %v3411 = vsel %vm2736, %v3409, %v3410
    %v3412 = vrot.slane %v3342, 2
    %v3413 = vrot.slane %v3343, 2
    %v3414 = vsel %vm2736, %v3412, %v3413
    %v3415 = vrot.slane %v3344, 2
    %v3416 = vrot.slane %v3345, 2
    %v3417 = vsel %vm2736, %v3415, %v3416
    %v3418 = vrot.slane %v3346, 2
    %v3419 = vrot.slane %v3347, 2
    %v3420 = vsel %vm2736, %v3418, %v3419
    %v3436 = vadd.f32 %v3299, %v3379
    %v3437 = vadd.f32 %v3300, %v3382
    %v3438 = vadd.f32 %v3301, %v3385
    %v3439 = vadd.f32 %v3302, %v3388
    %v3440 = vadd.f32 %v3303, %v3391
    %v3441 = vadd.f32 %v3304, %v3394
    %v3442 = vadd.f32 %v3305, %v3397
    %v3443 = vadd.f32 %v3306, %v3399
    %v3444 = vadd.f32 %v3307, %v3402
    %v3445 = vadd.f32 %v3308, %v3405
    %v3446 = vadd.f32 %v3309, %v3408
    %v3447 = vadd.f32 %v3310, %v3411
    %v3448 = vadd.f32 %v3311, %v3414
    %v3449 = vadd.f32 %v3312, %v3417
    %v3450 = vadd.f32 %v3313, %v3420
    %v3451 = vadd.f32 %v3314, %v3399
    %v3452 = vld [vmem:[#allocation8] sm:$0x1]
    %v3454 = vlaneseq
    %v3455 = vshrl.u32 %v3454, 7
    %v3456 = vsub.s32 0, %v3455
    %v3457 = vrot.slane %v3452, %v3456
    %v3459 = vadd.f32 %v3436, %v3457
    %v3460 = vadd.f32 %v3437, %v3457
    %v3461 = vadd.f32 %v3438, %v3457
    %v3462 = vadd.f32 %v3439, %v3457
    %v3463 = vadd.f32 %v3440, %v3457
    %v3464 = vadd.f32 %v3441, %v3457
    %v3465 = vadd.f32 %v3442, %v3457
    %v3466 = vadd.f32 %v3443, %v3457
    %v3467 = vadd.f32 %v3444, %v3457
    %v3468 = vadd.f32 %v3445, %v3457
    %v3469 = vadd.f32 %v3446, %v3457
    %v3470 = vadd.f32 %v3447, %v3457
    %v3471 = vadd.f32 %v3448, %v3457
    %v3472 = vadd.f32 %v3449, %v3457
    %v3473 = vadd.f32 %v3450, %v3457
    %v3474 = vadd.f32 %v3451, %v3457
    %v3475 = vmul.f32 %v3459, %v3459
    %v3476 = vmul.f32 %v3460, %v3460
    %v3477 = vmul.f32 %v3461, %v3461
    %v3478 = vmul.f32 %v3462, %v3462
    %v3479 = vmul.f32 %v3463, %v3463
    %v3480 = vmul.f32 %v3464, %v3464
    %v3481 = vmul.f32 %v3465, %v3465
    %v3482 = vmul.f32 %v3466, %v3466
    %v3483 = vmul.f32 %v3467, %v3467
    %v3484 = vmul.f32 %v3468, %v3468
    %v3485 = vmul.f32 %v3469, %v3469
    %v3486 = vmul.f32 %v3470, %v3470
    %v3487 = vmul.f32 %v3471, %v3471
    %v3488 = vmul.f32 %v3472, %v3472
    %v3489 = vmul.f32 %v3473, %v3473
    %v3490 = vmul.f32 %v3474, %v3474
    %v3491 = vmul.f32 %v3459, %v3475
    %v3492 = vmul.f32 %v3460, %v3476
    %v3493 = vmul.f32 %v3461, %v3477
    %v3494 = vmul.f32 %v3462, %v3478
    %v3495 = vmul.f32 %v3463, %v3479
    %v3496 = vmul.f32 %v3464, %v3480
    %v3497 = vmul.f32 %v3465, %v3481
    %v3498 = vmul.f32 %v3466, %v3482
    %v3499 = vmul.f32 %v3467, %v3483
    %v3500 = vmul.f32 %v3468, %v3484
    %v3501 = vmul.f32 %v3469, %v3485
    %v3502 = vmul.f32 %v3470, %v3486
    %v3503 = vmul.f32 %v3471, %v3487
    %v3504 = vmul.f32 %v3472, %v3488
    %v3505 = vmul.f32 %v3473, %v3489
    %v3506 = vmul.f32 %v3474, %v3490
    %v3507 = vmul.f32 %v3491, 0.044715
    %v3508 = vmul.f32 %v3492, 0.044715
    %v3509 = vmul.f32 %v3493, 0.044715
    %v3510 = vmul.f32 %v3494, 0.044715
    %v3511 = vmul.f32 %v3495, 0.044715
    %v3512 = vmul.f32 %v3496, 0.044715
    %v3513 = vmul.f32 %v3497, 0.044715
    %v3514 = vmul.f32 %v3498, 0.044715
    %v3515 = vmul.f32 %v3499, 0.044715
    %v3516 = vmul.f32 %v3500, 0.044715
    %v3517 = vmul.f32 %v3501, 0.044715
    %v3518 = vmul.f32 %v3502, 0.044715
    %v3519 = vmul.f32 %v3503, 0.044715
    %v3520 = vmul.f32 %v3504, 0.044715
    %v3521 = vmul.f32 %v3505, 0.044715
    %v3522 = vmul.f32 %v3506, 0.044715
    %v3523 = vadd.f32 %v3459, %v3507
    %v3524 = vadd.f32 %v3460, %v3508
    %v3525 = vadd.f32 %v3461, %v3509
    %v3526 = vadd.f32 %v3462, %v3510
    %v3527 = vadd.f32 %v3463, %v3511
    %v3528 = vadd.f32 %v3464, %v3512
    %v3529 = vadd.f32 %v3465, %v3513
    %v3530 = vadd.f32 %v3466, %v3514
    %v3531 = vadd.f32 %v3467, %v3515
    %v3532 = vadd.f32 %v3468, %v3516
    %v3533 = vadd.f32 %v3469, %v3517
    %v3534 = vadd.f32 %v3470, %v3518
    %v3535 = vadd.f32 %v3471, %v3519
    %v3536 = vadd.f32 %v3472, %v3520
    %v3537 = vadd.f32 %v3473, %v3521
    %v3538 = vadd.f32 %v3474, %v3522
    %v3539 = vmul.f32 %v3523, 0.7978846
    %v3540 = vmul.f32 %v3524, 0.7978846
    %v3541 = vmul.f32 %v3525, 0.7978846
    %v3542 = vmul.f32 %v3526, 0.7978846
    %v3543 = vmul.f32 %v3527, 0.7978846
    %v3544 = vmul.f32 %v3528, 0.7978846
    %v3545 = vmul.f32 %v3529, 0.7978846
    %v3546 = vmul.f32 %v3530, 0.7978846
    %v3547 = vmul.f32 %v3531, 0.7978846
    %v3548 = vmul.f32 %v3532, 0.7978846
    %v3549 = vmul.f32 %v3533, 0.7978846
    %v3550 = vmul.f32 %v3534, 0.7978846
    %v3551 = vmul.f32 %v3535, 0.7978846
    %v3552 = vmul.f32 %v3536, 0.7978846
    %v3553 = vmul.f32 %v3537, 0.7978846
    %v3554 = vmul.f32 %v3538, 0.7978846
    %v3555 = vtanh.pop %v3539
    %v3556 = vtanh.pop %v3540
    %v3557 = vtanh.pop %v3541
    %v3558 = vtanh.pop %v3542
    %v3559 = vtanh.pop %v3543
    %v3560 = vtanh.pop %v3544
    %v3561 = vtanh.pop %v3545
    %v3562 = vtanh.pop %v3546
    %v3563 = vtanh.pop %v3547
    %v3564 = vtanh.pop %v3548
    %v3565 = vtanh.pop %v3549
    %v3566 = vtanh.pop %v3550
    %v3567 = vtanh.pop %v3551
    %v3568 = vtanh.pop %v3552
    %v3569 = vtanh.pop %v3553
    %v3570 = vtanh.pop %v3554
    %v3571 = vadd.f32 %v3555, 1.0
    %v3572 = vadd.f32 %v3556, 1.0
    %v3573 = vadd.f32 %v3557, 1.0
    %v3574 = vadd.f32 %v3558, 1.0
    %v3575 = vadd.f32 %v3559, 1.0
    %v3576 = vadd.f32 %v3560, 1.0
    %v3577 = vadd.f32 %v3561, 1.0
    %v3578 = vadd.f32 %v3562, 1.0
    %v3579 = vadd.f32 %v3563, 1.0
    %v3580 = vadd.f32 %v3564, 1.0
    %v3581 = vadd.f32 %v3565, 1.0
    %v3582 = vadd.f32 %v3566, 1.0
    %v3583 = vadd.f32 %v3567, 1.0
    %v3584 = vadd.f32 %v3568, 1.0
    %v3585 = vadd.f32 %v3569, 1.0
    %v3586 = vadd.f32 %v3570, 1.0
    %v3587 = vmul.f32 %v3571, 0.5
    %v3588 = vmul.f32 %v3572, 0.5
    %v3589 = vmul.f32 %v3573, 0.5
    %v3590 = vmul.f32 %v3574, 0.5
    %v3591 = vmul.f32 %v3575, 0.5
    %v3592 = vmul.f32 %v3576, 0.5
    %v3593 = vmul.f32 %v3577, 0.5
    %v3594 = vmul.f32 %v3578, 0.5
    %v3595 = vmul.f32 %v3579, 0.5
    %v3596 = vmul.f32 %v3580, 0.5
    %v3597 = vmul.f32 %v3581, 0.5
    %v3598 = vmul.f32 %v3582, 0.5
    %v3599 = vmul.f32 %v3583, 0.5
    %v3600 = vmul.f32 %v3584, 0.5
    %v3601 = vmul.f32 %v3585, 0.5
    %v3602 = vmul.f32 %v3586, 0.5
    %v3603 = vmul.f32 %v3459, %v3587
    %v3604 = vmul.f32 %v3460, %v3588
    %v3605 = vmul.f32 %v3461, %v3589
    %v3606 = vmul.f32 %v3462, %v3590
    %v3607 = vmul.f32 %v3463, %v3591
    %v3608 = vmul.f32 %v3464, %v3592
    %v3609 = vmul.f32 %v3465, %v3593
    %v3610 = vmul.f32 %v3466, %v3594
    %v3611 = vmul.f32 %v3467, %v3595
    %v3612 = vmul.f32 %v3468, %v3596
    %v3613 = vmul.f32 %v3469, %v3597
    %v3614 = vmul.f32 %v3470, %v3598
    %v3615 = vmul.f32 %v3471, %v3599
    %v3616 = vmul.f32 %v3472, %v3600
    %v3617 = vmul.f32 %v3473, %v3601
    %v3618 = vmul.f32 %v3474, %v3602
    %v3619 = vld [vmem:[%s16] sm:$0xff]
    %v3620 = vld [vmem:[%s16 + $0x8] sm:$0xff]
    %v3621 = vld [vmem:[%s16 + $0x10] sm:$0xff]
    %v3622 = vld [vmem:[%s16 + $0x18] sm:$0xff]
    %3623 = vxpose.xlu0.b32.start [1/16] %v3603, 128
    %3624 = vxpose.xlu0.b32.cont [2/16] %v3604, 128
    %3625 = vxpose.xlu0.b32.cont [3/16] %v3605, 128
    %3626 = vxpose.xlu0.b32.cont [4/16] %v3606, 128
    %3627 = vxpose.xlu0.b32.cont [5/16] %v3607, 128
    %3628 = vxpose.xlu0.b32.cont [6/16] %v3608, 128
    %3629 = vxpose.xlu0.b32.cont [7/16] %v3609, 128
    %3630 = vxpose.xlu0.b32.cont [8/16] %v3610, 128
    %3631 = vxpose.xlu0.b32.cont [9/16] %v3611, 128
    %3632 = vxpose.xlu0.b32.cont [10/16] %v3612, 128
    %3633 = vxpose.xlu0.b32.cont [11/16] %v3613, 128
    %3634 = vxpose.xlu0.b32.cont [12/16] %v3614, 128
    %3635 = vxpose.xlu0.b32.cont [13/16] %v3615, 128
    %3636 = vxpose.xlu0.b32.cont [14/16] %v3616, 128
    %3637 = vxpose.xlu0.b32.cont [15/16] %v3617, 128
    %3638 = vxpose.xlu0.b32.end [16/16] %v3618, 128
    %v3639 = vpop.trf.xlu0
    %v3640 = vpop.trf.xlu0
    %v3641 = vpop.trf.xlu0
    %v3642 = vpop.trf.xlu0
    %v3643 = vpop.trf.xlu0
    %v3644 = vpop.trf.xlu0
    %v3645 = vpop.trf.xlu0
    %v3646 = vpop.trf.xlu0
    %v3647 = vpop.trf.xlu0
    %v3648 = vpop.trf.xlu0
    %v3649 = vpop.trf.xlu0
    %v3650 = vpop.trf.xlu0
    %v3651 = vpop.trf.xlu0
    %v3652 = vpop.trf.xlu0
    %v3653 = vpop.trf.xlu0
    %v3654 = vpop.trf.xlu0
    %v3655 = vpack.c.bf16 %v3620, %v3619
    %v3656 = vpack.c.bf16 %v3622, %v3621
    %v3657 = vpack.c.bf16 %v3640, %v3639
    %v3658 = vpack.c.bf16 %v3642, %v3641
    %v3659 = vpack.c.bf16 %v3644, %v3643
    %v3660 = vpack.c.bf16 %v3646, %v3645
    %v3661 = vpack.c.bf16 %v3648, %v3647
    %v3662 = vpack.c.bf16 %v3650, %v3649
    %v3663 = vpack.c.bf16 %v3652, %v3651
    %v3664 = vpack.c.bf16 %v3654, %v3653
    %3665 = vmatprep.subr.bf16.mxu0 0
    %3666 = vmatpush1.bf16.msra.mxu0 %v3657
    %3667 = vmatprep.subr.bf16.mxu0 0
    %3668 = vmatpush1.bf16.msra.mxu0 %v3658
    %3669 = vmatprep.subr.bf16.mxu0 0
    %3670 = vmatpush1.bf16.msra.mxu0 %v3659
    %3671 = vmatprep.subr.bf16.mxu0 0
    %3672 = vmatpush1.bf16.msra.mxu0 %v3660
    %3673 = vmatprep.subr.bf16.mxu0 0
    %3674 = vmatpush1.bf16.msra.mxu0 %v3661
    %3675 = vmatprep.subr.bf16.mxu0 0
    %3676 = vmatpush1.bf16.msra.mxu0 %v3662
    %3677 = vmatprep.subr.bf16.mxu0 0
    %3678 = vmatpush1.bf16.msra.mxu0 %v3663
    %3679 = vmatprep.subr.bf16.mxu0 0
    %3680 = vmatpush1.bf16.msra.mxu0 %v3664
    %3681 = vmatprep.subr.bf16.mxu0 0
    %3682 = vmatpush1.bf16.msra.mxu0 0
    %3683 = vmatprep.subr.bf16.mxu0 0
    %3684 = vmatpush1.bf16.msra.mxu0 0
    %3685 = vmatprep.subr.bf16.mxu0 0
    %3686 = vmatpush1.bf16.msra.mxu0 0
    %3687 = vmatprep.subr.bf16.mxu0 0
    %3688 = vmatpush1.bf16.msra.mxu0 0
    %3689 = vmatprep.subr.bf16.mxu0 0
    %3690 = vmatpush1.bf16.msra.mxu0 0
    %3691 = vmatprep.subr.bf16.mxu0 0
    %3692 = vmatpush1.bf16.msra.mxu0 0
    %3693 = vmatprep.subr.bf16.mxu0 0
    %3694 = vmatpush1.bf16.msra.mxu0 0
    %3695 = vmatprep.subr.bf16.mxu0 0
    %3696 = vmatpush1.bf16.msra.mxu0 0
    %3697 = vmatprep.mubr.bf16.mxu0 0
    %3698 = vmatmul.mubr.bf16.gmra.mrb[0].mxu0 %v3655
    %v3699 = vpop.f32.mrb[0].mxu0
    %v3700 = vadd.f32 0.0, %v3699
    %v3701 = vpop.f32.mrb[0].mxu0
    %v3702 = vpop.f32.mrb[0].mxu0
    %v3703 = vadd.f32 0.0, %v3702
    %v3704 = vpop.f32.mrb[0].mxu0
    %3705 = vmatprep.mubr.bf16.mxu0 0
    %3706 = vmatmul.mubr.bf16.gmra.mrb[0].mxu0 %v3656
    %v3707 = vpop.f32.mrb[0].mxu0
    %v3708 = vadd.f32 0.0, %v3707
    %v3709 = vpop.f32.mrb[0].mxu0
    %v3710 = vpop.f32.mrb[0].mxu0
    %v3711 = vadd.f32 0.0, %v3710
    %v3712 = vpop.f32.mrb[0].mxu0
    %3713 = vdwg.mxu0
    %v3714 = vadd.f32 %v2051, %v3700
    %v3715 = vadd.f32 %v2052, %v3703
    %v3716 = vadd.f32 %v2053, %v3708
    %v3717 = vadd.f32 %v2054, %v3711
    %v3718 = vld [vmem:[%s17] sm:$0xff]
    %v3719 = vld [vmem:[%s17 + $0x8] sm:$0xff]
    %v3720 = vld [vmem:[%s17 + $0x10] sm:$0xff]
    %v3721 = vld [vmem:[%s17 + $0x18] sm:$0xff]
    %3723 = vset.pattern.permute.xlu0 0
    %3724 = vperm.xlu0 %3723, %v3718
    %v3725 = vpop.permute.xlu0 %3724
    %3728 = vset.pattern.permute.xlu0 0
    %3729 = vperm.xlu0 %3728, %v3719
    %v3730 = vpop.permute.xlu0 %3729
    %3733 = vset.pattern.permute.xlu0 0
    %3734 = vperm.xlu0 %3733, %v3720
    %v3735 = vpop.permute.xlu0 %3734
    %3738 = vset.pattern.permute.xlu0 0
    %3739 = vperm.xlu0 %3738, %v3721
    %v3740 = vpop.permute.xlu0 %3739
    %v3742 = vadd.f32 %v3714, %v3725
    %v3743 = vadd.f32 %v3715, %v3730
    %v3744 = vadd.f32 %v3716, %v3735
    %v3745 = vadd.f32 %v3717, %v3740
    %s3746 = scalar_lea.vmem %s4, 32
    %v3747 = vld [vmem:[%s3746] sm:$0xff]
    %v3748 = vld [vmem:[%s3746 + $0x8] sm:$0xff]
    %v3749 = vld [vmem:[%s3746 + $0x10] sm:$0xff]
    %v3750 = vld [vmem:[%s3746 + $0x18] sm:$0xff]
    %s3751 = scalar_lea.vmem %s5, 32
    %v3752 = vld [vmem:[%s3751] sm:$0xff]
    %v3753 = vld [vmem:[%s3751 + $0x8] sm:$0xff]
    %v3754 = vld [vmem:[%s3751 + $0x10] sm:$0xff]
    %v3755 = vld [vmem:[%s3751 + $0x18] sm:$0xff]
    %v3756 = vadd.f32 %v3742, %v3743
    %v3757 = vadd.f32 %v3756, %v3744
    %v3758 = vadd.f32 %v3757, %v3745
    %v3759 = vrot.slane %v3758, 4
    %v3760 = vadd.f32 %v3758, %v3759
    %v3761 = vrot.slane %v3760, 2
    %v3762 = vadd.f32 %v3760, %v3761
    %v3763 = vrot.slane %v3762, 1
    %v3764 = vadd.f32 %v3762, %v3763
    %v3765 = vmul.f32 %v3764, %v231
    %v3766 = vsub.f32 %v3742, %v3765
    %v3767 = vsub.f32 %v3743, %v3765
    %v3768 = vsub.f32 %v3744, %v3765
    %v3769 = vsub.f32 %v3745, %v3765
    %v3770 = vmul.f32 %v3766, %v3766
    %v3771 = vmul.f32 %v3767, %v3767
    %v3772 = vmul.f32 %v3768, %v3768
    %v3773 = vmul.f32 %v3769, %v3769
    %v3774 = vadd.f32 %v3770, %v3771
    %v3775 = vadd.f32 %v3774, %v3772
    %v3776 = vadd.f32 %v3775, %v3773
    %v3777 = vrot.slane %v3776, 4
    %v3778 = vadd.f32 %v3776, %v3777
    %v3779 = vrot.slane %v3778, 2
    %v3780 = vadd.f32 %v3778, %v3779
    %v3781 = vrot.slane %v3780, 1
    %v3782 = vadd.f32 %v3780, %v3781
    %v3783 = vmul.f32 %v3782, %v231
    %v3784 = vadd.f32 %v3783, 1e-05
    %v3785 = vrsqrt.pop %v3784
    %v3786 = vmul.f32 %v3766, %v3785
    %v3787 = vmul.f32 %v3767, %v3785
    %v3788 = vmul.f32 %v3768, %v3785
    %v3789 = vmul.f32 %v3769, %v3785
    %3791 = vset.pattern.permute.xlu0 0
    %3792 = vperm.xlu0 %3791, %v3747
    %v3793 = vpop.permute.xlu0 %3792
    %3796 = vset.pattern.permute.xlu0 0
    %3797 = vperm.xlu0 %3796, %v3748
    %v3798 = vpop.permute.xlu0 %3797
    %3801 = vset.pattern.permute.xlu0 0
    %3802 = vperm.xlu0 %3801, %v3749
    %v3803 = vpop.permute.xlu0 %3802
    %3806 = vset.pattern.permute.xlu0 0
    %3807 = vperm.xlu0 %3806, %v3750
    %v3808 = vpop.permute.xlu0 %3807
    %v3810 = vmul.f32 %v3786, %v3793
    %v3811 = vmul.f32 %v3787, %v3798
    %v3812 = vmul.f32 %v3788, %v3803
    %v3813 = vmul.f32 %v3789, %v3808
    %3815 = vset.pattern.permute.xlu0 0
    %3816 = vperm.xlu0 %3815, %v3752
    %v3817 = vpop.permute.xlu0 %3816
    %3820 = vset.pattern.permute.xlu0 0
    %3821 = vperm.xlu0 %3820, %v3753
    %v3822 = vpop.permute.xlu0 %3821
    %3825 = vset.pattern.permute.xlu0 0
    %3826 = vperm.xlu0 %3825, %v3754
    %v3827 = vpop.permute.xlu0 %3826
    %3830 = vset.pattern.permute.xlu0 0
    %3831 = vperm.xlu0 %3830, %v3755
    %v3832 = vpop.permute.xlu0 %3831
    %v3834 = vadd.f32 %v3810, %v3817
    %v3835 = vadd.f32 %v3811, %v3822
    %v3836 = vadd.f32 %v3812, %v3827
    %v3837 = vadd.f32 %v3813, %v3832
    %s3838 = scalar_lea.vmem [#allocation5], 32
    %v3839 = vld [vmem:[%s3838] sm:$0xff]
    %v3840 = vld [vmem:[%s3838 + $0x8] sm:$0xff]
    %v3841 = vld [vmem:[%s3838 + $0x10] sm:$0xff]
    %v3842 = vld [vmem:[%s3838 + $0x18] sm:$0xff]
    %v3843 = vpack.c.bf16 %v3840, %v3839
    %v3844 = vpack.c.bf16 %v3842, %v3841
    %v3845 = vpack.c.bf16 %v3835, %v3834
    %v3846 = vpack.c.bf16 %v3837, %v3836
    %v3848 = vsel %vm313, %v3843, 0
    %v3851 = vsel %vm313, %v3844, 0
    %3853 = vmatprep.subr.bf16.mxu0 0
    %3854 = vmatpush1.bf16.msra.mxu0 %v3845
    %3855 = vmatprep.subr.bf16.mxu0 0
    %3856 = vmatpush1.bf16.msra.mxu0 %v3846
    %3857 = vmatprep.subr.bf16.mxu0 0
    %3858 = vmatpush1.bf16.msra.mxu0 0
    %3859 = vmatprep.subr.bf16.mxu0 0
    %3860 = vmatpush1.bf16.msra.mxu0 0
    %3861 = vmatprep.subr.bf16.mxu0 0
    %3862 = vmatpush1.bf16.msra.mxu0 0
    %3863 = vmatprep.subr.bf16.mxu0 0
    %3864 = vmatpush1.bf16.msra.mxu0 0
    %3865 = vmatprep.subr.bf16.mxu0 0
    %3866 = vmatpush1.bf16.msra.mxu0 0
    %3867 = vmatprep.subr.bf16.mxu0 0
    %3868 = vmatpush1.bf16.msra.mxu0 0
    %3869 = vmatprep.subr.bf16.mxu0 0
    %3870 = vmatpush1.bf16.msra.mxu0 0
    %3871 = vmatprep.subr.bf16.mxu0 0
    %3872 = vmatpush1.bf16.msra.mxu0 0
    %3873 = vmatprep.subr.bf16.mxu0 0
    %3874 = vmatpush1.bf16.msra.mxu0 0
    %3875 = vmatprep.subr.bf16.mxu0 0
    %3876 = vmatpush1.bf16.msra.mxu0 0
    %3877 = vmatprep.subr.bf16.mxu0 0
    %3878 = vmatpush1.bf16.msra.mxu0 0
    %3879 = vmatprep.subr.bf16.mxu0 0
    %3880 = vmatpush1.bf16.msra.mxu0 0
    %3881 = vmatprep.subr.bf16.mxu0 0
    %3882 = vmatpush1.bf16.msra.mxu0 0
    %3883 = vmatprep.subr.bf16.mxu0 0
    %3884 = vmatpush1.bf16.msra.mxu0 0
    %3885 = vmatprep.mubr.bf16.mxu0 0
    %3886 = vmatmul.mubr.bf16.gmra.mrb[0].mxu0 %v3848
    %v3887 = vpop.f32.mrb[0].mxu0
    %v3888 = vadd.f32 0.0, %v3887
    %v3889 = vpop.f32.mrb[0].mxu0
    %v3890 = vpop.f32.mrb[0].mxu0
    %v3891 = vadd.f32 0.0, %v3890
    %v3892 = vpop.f32.mrb[0].mxu0
    %3893 = vmatprep.mubr.bf16.mxu0 0
    %3894 = vmatmul.mubr.bf16.gmra.mrb[0].mxu0 %v3851
    %v3895 = vpop.f32.mrb[0].mxu0
    %v3896 = vadd.f32 0.0, %v3895
    %v3897 = vpop.f32.mrb[0].mxu0
    %v3898 = vpop.f32.mrb[0].mxu0
    %v3899 = vadd.f32 0.0, %v3898
    %v3900 = vpop.f32.mrb[0].mxu0
    %3901 = vdwg.mxu0
    %v3902 = vmul.f32 %v3888, 0.35355338
    %v3903 = vmul.f32 %v3891, 0.35355338
    %v3904 = vmul.f32 %v3896, 0.35355338
    %v3905 = vmul.f32 %v3899, 0.35355338
    %s3906 = scalar_lea.vmem %s7, 64
    %v3907 = vld [vmem:[%s3906] sm:$0xff]
    %v3908 = vld [vmem:[%s3906 + $0x8] sm:$0xff]
    %v3909 = vld [vmem:[%s3906 + $0x10] sm:$0xff]
    %v3910 = vld [vmem:[%s3906 + $0x18] sm:$0xff]
    %v3911 = vld [vmem:[%s3906 + $0x20] sm:$0xff]
    %v3912 = vld [vmem:[%s3906 + $0x28] sm:$0xff]
    %v3913 = vld [vmem:[%s3906 + $0x30] sm:$0xff]
    %v3914 = vld [vmem:[%s3906 + $0x38] sm:$0xff]
    %v3915 = vpack.c.bf16 %v3908, %v3907
    %v3916 = vpack.c.bf16 %v3910, %v3909
    %v3917 = vpack.c.bf16 %v3912, %v3911
    %v3918 = vpack.c.bf16 %v3914, %v3913
    %v3920 = vsel %vm313, %v3915, 0
    %v3923 = vsel %vm313, %v3916, 0
    %v3926 = vsel %vm313, %v3917, 0
    %v3929 = vsel %vm313, %v3918, 0
    %3931 = vmatprep.subr.bf16.mxu0 0
    %3932 = vmatpush1.bf16.msra.mxu0 %v3845
    %3933 = vmatprep.subr.bf16.mxu0 0
    %3934 = vmatpush1.bf16.msra.mxu0 %v3846
    %3935 = vmatprep.subr.bf16.mxu0 0
    %3936 = vmatpush1.bf16.msra.mxu0 0
    %3937 = vmatprep.subr.bf16.mxu0 0
    %3938 = vmatpush1.bf16.msra.mxu0 0
    %3939 = vmatprep.subr.bf16.mxu0 0
    %3940 = vmatpush1.bf16.msra.mxu0 0
    %3941 = vmatprep.subr.bf16.mxu0 0
    %3942 = vmatpush1.bf16.msra.mxu0 0
    %3943 = vmatprep.subr.bf16.mxu0 0
    %3944 = vmatpush1.bf16.msra.mxu0 0
    %3945 = vmatprep.subr.bf16.mxu0 0
    %3946 = vmatpush1.bf16.msra.mxu0 0
    %3947 = vmatprep.subr.bf16.mxu0 0
    %3948 = vmatpush1.bf16.msra.mxu0 0
    %3949 = vmatprep.subr.bf16.mxu0 0
    %3950 = vmatpush1.bf16.msra.mxu0 0
    %3951 = vmatprep.subr.bf16.mxu0 0
    %3952 = vmatpush1.bf16.msra.mxu0 0
    %3953 = vmatprep.subr.bf16.mxu0 0
    %3954 = vmatpush1.bf16.msra.mxu0 0
    %3955 = vmatprep.subr.bf16.mxu0 0
    %3956 = vmatpush1.bf16.msra.mxu0 0
    %3957 = vmatprep.subr.bf16.mxu0 0
    %3958 = vmatpush1.bf16.msra.mxu0 0
    %3959 = vmatprep.subr.bf16.mxu0 0
    %3960 = vmatpush1.bf16.msra.mxu0 0
    %3961 = vmatprep.subr.bf16.mxu0 0
    %3962 = vmatpush1.bf16.msra.mxu0 0
    %3963 = vmatprep.mubr.bf16.mxu0 0
    %3964 = vmatmul.mubr.bf16.gmra.mrb[0].mxu0 %v3920
    %v3965 = vpop.f32.mrb[0].mxu0
    %v3966 = vadd.f32 0.0, %v3965
    %v3967 = vpop.f32.mrb[0].mxu0
    %v3968 = vpop.f32.mrb[0].mxu0
    %v3969 = vadd.f32 0.0, %v3968
    %v3970 = vpop.f32.mrb[0].mxu0
    %3971 = vmatprep.mubr.bf16.mxu0 0
    %3972 = vmatmul.mubr.bf16.gmra.mrb[0].mxu0 %v3923
    %v3973 = vpop.f32.mrb[0].mxu0
    %v3974 = vadd.f32 0.0, %v3973
    %v3975 = vpop.f32.mrb[0].mxu0
    %v3976 = vpop.f32.mrb[0].mxu0
    %v3977 = vadd.f32 0.0, %v3976
    %v3978 = vpop.f32.mrb[0].mxu0
    %3979 = vmatprep.mubr.bf16.mxu0 0
    %3980 = vmatmul.mubr.bf16.gmra.mrb[0].mxu0 %v3926
    %v3981 = vpop.f32.mrb[0].mxu0
    %v3982 = vadd.f32 0.0, %v3981
    %v3983 = vpop.f32.mrb[0].mxu0
    %v3984 = vpop.f32.mrb[0].mxu0
    %v3985 = vadd.f32 0.0, %v3984
    %v3986 = vpop.f32.mrb[0].mxu0
    %3987 = vmatprep.mubr.bf16.mxu0 0
    %3988 = vmatmul.mubr.bf16.gmra.mrb[0].mxu0 %v3929
    %v3989 = vpop.f32.mrb[0].mxu0
    %v3990 = vadd.f32 0.0, %v3989
    %v3991 = vpop.f32.mrb[0].mxu0
    %v3992 = vpop.f32.mrb[0].mxu0
    %v3993 = vadd.f32 0.0, %v3992
    %v3994 = vpop.f32.mrb[0].mxu0
    %3995 = vdwg.mxu0
    %3996 = vxpose.xlu0.b32.start [1/16] %v3902, 128
    %3997 = vxpose.xlu0.b32.cont [2/16] 0.0, 128
    %3998 = vxpose.xlu0.b32.cont [3/16] 0.0, 128
    %3999 = vxpose.xlu0.b32.cont [4/16] 0.0, 128
    %4000 = vxpose.xlu0.b32.cont [5/16] 0.0, 128
    %4001 = vxpose.xlu0.b32.cont [6/16] 0.0, 128
    %4002 = vxpose.xlu0.b32.cont [7/16] 0.0, 128
    %4003 = vxpose.xlu0.b32.cont [8/16] 0.0, 128
    %4004 = vxpose.xlu0.b32.cont [9/16] 0.0, 128
    %4005 = vxpose.xlu0.b32.cont [10/16] 0.0, 128
    %4006 = vxpose.xlu0.b32.cont [11/16] 0.0, 128
    %4007 = vxpose.xlu0.b32.cont [12/16] 0.0, 128
    %4008 = vxpose.xlu0.b32.cont [13/16] 0.0, 128
    %4009 = vxpose.xlu0.b32.cont [14/16] 0.0, 128
    %4010 = vxpose.xlu0.b32.cont [15/16] 0.0, 128
    %4011 = vxpose.xlu0.b32.end [16/16] 0.0, 128
    %v4012 = vpop.trf.xlu0
    %v4013 = vpop.trf.xlu0
    %v4014 = vpop.trf.xlu0
    %v4015 = vpop.trf.xlu0
    %v4016 = vpop.trf.xlu0
    %v4017 = vpop.trf.xlu0
    %v4018 = vpop.trf.xlu0
    %v4019 = vpop.trf.xlu0
    %v4020 = vpop.trf.xlu0
    %v4021 = vpop.trf.xlu0
    %v4022 = vpop.trf.xlu0
    %v4023 = vpop.trf.xlu0
    %v4024 = vpop.trf.xlu0
    %v4025 = vpop.trf.xlu0
    %v4026 = vpop.trf.xlu0
    %v4027 = vpop.trf.xlu0
    %4028 = vxpose.xlu0.b32.start [1/16] %v3903, 128
    %4029 = vxpose.xlu0.b32.cont [2/16] 0.0, 128
    %4030 = vxpose.xlu0.b32.cont [3/16] 0.0, 128
    %4031 = vxpose.xlu0.b32.cont [4/16] 0.0, 128
    %4032 = vxpose.xlu0.b32.cont [5/16] 0.0, 128
    %4033 = vxpose.xlu0.b32.cont [6/16] 0.0, 128
    %4034 = vxpose.xlu0.b32.cont [7/16] 0.0, 128
    %4035 = vxpose.xlu0.b32.cont [8/16] 0.0, 128
    %4036 = vxpose.xlu0.b32.cont [9/16] 0.0, 128
    %4037 = vxpose.xlu0.b32.cont [10/16] 0.0, 128
    %4038 = vxpose.xlu0.b32.cont [11/16] 0.0, 128
    %4039 = vxpose.xlu0.b32.cont [12/16] 0.0, 128
    %4040 = vxpose.xlu0.b32.cont [13/16] 0.0, 128
    %4041 = vxpose.xlu0.b32.cont [14/16] 0.0, 128
    %4042 = vxpose.xlu0.b32.cont [15/16] 0.0, 128
    %4043 = vxpose.xlu0.b32.end [16/16] 0.0, 128
    %v4044 = vpop.trf.xlu0
    %v4045 = vpop.trf.xlu0
    %v4046 = vpop.trf.xlu0
    %v4047 = vpop.trf.xlu0
    %v4048 = vpop.trf.xlu0
    %v4049 = vpop.trf.xlu0
    %v4050 = vpop.trf.xlu0
    %v4051 = vpop.trf.xlu0
    %v4052 = vpop.trf.xlu0
    %v4053 = vpop.trf.xlu0
    %v4054 = vpop.trf.xlu0
    %v4055 = vpop.trf.xlu0
    %v4056 = vpop.trf.xlu0
    %v4057 = vpop.trf.xlu0
    %v4058 = vpop.trf.xlu0
    %v4059 = vpop.trf.xlu0
    %4060 = vxpose.xlu0.b32.start [1/16] %v3904, 128
    %4061 = vxpose.xlu0.b32.cont [2/16] 0.0, 128
    %4062 = vxpose.xlu0.b32.cont [3/16] 0.0, 128
    %4063 = vxpose.xlu0.b32.cont [4/16] 0.0, 128
    %4064 = vxpose.xlu0.b32.cont [5/16] 0.0, 128
    %4065 = vxpose.xlu0.b32.cont [6/16] 0.0, 128
    %4066 = vxpose.xlu0.b32.cont [7/16] 0.0, 128
    %4067 = vxpose.xlu0.b32.cont [8/16] 0.0, 128
    %4068 = vxpose.xlu0.b32.cont [9/16] 0.0, 128
    %4069 = vxpose.xlu0.b32.cont [10/16] 0.0, 128
    %4070 = vxpose.xlu0.b32.cont [11/16] 0.0, 128
    %4071 = vxpose.xlu0.b32.cont [12/16] 0.0, 128
    %4072 = vxpose.xlu0.b32.cont [13/16] 0.0, 128
    %4073 = vxpose.xlu0.b32.cont [14/16] 0.0, 128
    %4074 = vxpose.xlu0.b32.cont [15/16] 0.0, 128
    %4075 = vxpose.xlu0.b32.end [16/16] 0.0, 128
    %v4076 = vpop.trf.xlu0
    %v4077 = vpop.trf.xlu0
    %v4078 = vpop.trf.xlu0
    %v4079 = vpop.trf.xlu0
    %v4080 = vpop.trf.xlu0
    %v4081 = vpop.trf.xlu0
    %v4082 = vpop.trf.xlu0
    %v4083 = vpop.trf.xlu0
    %v4084 = vpop.trf.xlu0
    %v4085 = vpop.trf.xlu0
    %v4086 = vpop.trf.xlu0
    %v4087 = vpop.trf.xlu0
    %v4088 = vpop.trf.xlu0
    %v4089 = vpop.trf.xlu0
    %v4090 = vpop.trf.xlu0
    %v4091 = vpop.trf.xlu0
    %4092 = vxpose.xlu0.b32.start [1/16] %v3905, 128
    %4093 = vxpose.xlu0.b32.cont [2/16] 0.0, 128
    %4094 = vxpose.xlu0.b32.cont [3/16] 0.0, 128
    %4095 = vxpose.xlu0.b32.cont [4/16] 0.0, 128
    %4096 = vxpose.xlu0.b32.cont [5/16] 0.0, 128
    %4097 = vxpose.xlu0.b32.cont [6/16] 0.0, 128
    %4098 = vxpose.xlu0.b32.cont [7/16] 0.0, 128
    %4099 = vxpose.xlu0.b32.cont [8/16] 0.0, 128
    %4100 = vxpose.xlu0.b32.cont [9/16] 0.0, 128
    %4101 = vxpose.xlu0.b32.cont [10/16] 0.0, 128
    %4102 = vxpose.xlu0.b32.cont [11/16] 0.0, 128
    %4103 = vxpose.xlu0.b32.cont [12/16] 0.0, 128
    %4104 = vxpose.xlu0.b32.cont [13/16] 0.0, 128
    %4105 = vxpose.xlu0.b32.cont [14/16] 0.0, 128
    %4106 = vxpose.xlu0.b32.cont [15/16] 0.0, 128
    %4107 = vxpose.xlu0.b32.end [16/16] 0.0, 128
    %v4108 = vpop.trf.xlu0
    %v4109 = vpop.trf.xlu0
    %v4110 = vpop.trf.xlu0
    %v4111 = vpop.trf.xlu0
    %v4112 = vpop.trf.xlu0
    %v4113 = vpop.trf.xlu0
    %v4114 = vpop.trf.xlu0
    %v4115 = vpop.trf.xlu0
    %v4116 = vpop.trf.xlu0
    %v4117 = vpop.trf.xlu0
    %v4118 = vpop.trf.xlu0
    %v4119 = vpop.trf.xlu0
    %v4120 = vpop.trf.xlu0
    %v4121 = vpop.trf.xlu0
    %v4122 = vpop.trf.xlu0
    %v4123 = vpop.trf.xlu0
    %v4124 = vpack.c.bf16 %v4013, %v4012
    %v4125 = vpack.c.bf16 %v4015, %v4014
    %v4126 = vpack.c.bf16 %v4017, %v4016
    %v4127 = vpack.c.bf16 %v4019, %v4018
    %v4128 = vpack.c.bf16 %v4021, %v4020
    %v4129 = vpack.c.bf16 %v4023, %v4022
    %v4130 = vpack.c.bf16 %v4025, %v4024
    %v4131 = vpack.c.bf16 %v4027, %v4026
    %v4132 = vpack.c.bf16 %v4045, %v4044
    %v4133 = vpack.c.bf16 %v4047, %v4046
    %v4134 = vpack.c.bf16 %v4049, %v4048
    %v4135 = vpack.c.bf16 %v4051, %v4050
    %v4136 = vpack.c.bf16 %v4053, %v4052
    %v4137 = vpack.c.bf16 %v4055, %v4054
    %v4138 = vpack.c.bf16 %v4057, %v4056
    %v4139 = vpack.c.bf16 %v4059, %v4058
    %v4140 = vpack.c.bf16 %v4077, %v4076
    %v4141 = vpack.c.bf16 %v4079, %v4078
    %v4142 = vpack.c.bf16 %v4081, %v4080
    %v4143 = vpack.c.bf16 %v4083, %v4082
    %v4144 = vpack.c.bf16 %v4085, %v4084
    %v4145 = vpack.c.bf16 %v4087, %v4086
    %v4146 = vpack.c.bf16 %v4089, %v4088
    %v4147 = vpack.c.bf16 %v4091, %v4090
    %v4148 = vpack.c.bf16 %v4109, %v4108
    %v4149 = vpack.c.bf16 %v4111, %v4110
    %v4150 = vpack.c.bf16 %v4113, %v4112
    %v4151 = vpack.c.bf16 %v4115, %v4114
    %v4152 = vpack.c.bf16 %v4117, %v4116
    %v4153 = vpack.c.bf16 %v4119, %v4118
    %v4154 = vpack.c.bf16 %v4121, %v4120
    %v4155 = vpack.c.bf16 %v4123, %v4122
    %v4156 = vpack.c.bf16 %v3966, %v3966
    %v4157 = vpack.c.bf16 %v3969, %v3969
    %v4158 = vpack.c.bf16 %v3974, %v3974
    %v4159 = vpack.c.bf16 %v3977, %v3977
    %s4160 = scalar_lea.vmem %s1, 512
    %v4161 = vld [vmem:[%s4160] sm:$0xff]
    %v4162 = vld [vmem:[%s4160 + $0x8] sm:$0xff]
    %v4163 = vld [vmem:[%s4160 + $0x10] sm:$0xff]
    %v4164 = vld [vmem:[%s4160 + $0x18] sm:$0xff]
    %v4165 = vld [vmem:[%s4160 + $0x20] sm:$0xff]
    %v4166 = vld [vmem:[%s4160 + $0x28] sm:$0xff]
    %v4167 = vld [vmem:[%s4160 + $0x30] sm:$0xff]
    %v4168 = vld [vmem:[%s4160 + $0x38] sm:$0xff]
    %v4169 = vld [vmem:[%s4160 + $0x40] sm:$0xff]
    %v4170 = vld [vmem:[%s4160 + $0x48] sm:$0xff]
    %v4171 = vld [vmem:[%s4160 + $0x50] sm:$0xff]
    %v4172 = vld [vmem:[%s4160 + $0x58] sm:$0xff]
    %v4173 = vld [vmem:[%s4160 + $0x60] sm:$0xff]
    %v4174 = vld [vmem:[%s4160 + $0x68] sm:$0xff]
    %v4175 = vld [vmem:[%s4160 + $0x70] sm:$0xff]
    %v4176 = vld [vmem:[%s4160 + $0x78] sm:$0xff]
    %v4177 = vld [vmem:[%s4160 + $0x80] sm:$0xff]
    %v4178 = vld [vmem:[%s4160 + $0x88] sm:$0xff]
    %v4179 = vld [vmem:[%s4160 + $0x90] sm:$0xff]
    %v4180 = vld [vmem:[%s4160 + $0x98] sm:$0xff]
    %v4181 = vld [vmem:[%s4160 + $0xa0] sm:$0xff]
    %v4182 = vld [vmem:[%s4160 + $0xa8] sm:$0xff]
    %v4183 = vld [vmem:[%s4160 + $0xb0] sm:$0xff]
    %v4184 = vld [vmem:[%s4160 + $0xb8] sm:$0xff]
    %v4185 = vld [vmem:[%s4160 + $0xc0] sm:$0xff]
    %v4186 = vld [vmem:[%s4160 + $0xc8] sm:$0xff]
    %v4187 = vld [vmem:[%s4160 + $0xd0] sm:$0xff]
    %v4188 = vld [vmem:[%s4160 + $0xd8] sm:$0xff]
    %v4189 = vld [vmem:[%s4160 + $0xe0] sm:$0xff]
    %v4190 = vld [vmem:[%s4160 + $0xe8] sm:$0xff]
    %v4191 = vld [vmem:[%s4160 + $0xf0] sm:$0xff]
    %v4192 = vld [vmem:[%s4160 + $0xf8] sm:$0xff]
    %v4193 = vld [vmem:[%s4160 + $0x100] sm:$0xff]
    %v4194 = vld [vmem:[%s4160 + $0x108] sm:$0xff]
    %v4195 = vld [vmem:[%s4160 + $0x110] sm:$0xff]
    %v4196 = vld [vmem:[%s4160 + $0x118] sm:$0xff]
    %v4197 = vld [vmem:[%s4160 + $0x120] sm:$0xff]
    %v4198 = vld [vmem:[%s4160 + $0x128] sm:$0xff]
    %v4199 = vld [vmem:[%s4160 + $0x130] sm:$0xff]
    %v4200 = vld [vmem:[%s4160 + $0x138] sm:$0xff]
    %v4201 = vld [vmem:[%s4160 + $0x140] sm:$0xff]
    %v4202 = vld [vmem:[%s4160 + $0x148] sm:$0xff]
    %v4203 = vld [vmem:[%s4160 + $0x150] sm:$0xff]
    %v4204 = vld [vmem:[%s4160 + $0x158] sm:$0xff]
    %v4205 = vld [vmem:[%s4160 + $0x160] sm:$0xff]
    %v4206 = vld [vmem:[%s4160 + $0x168] sm:$0xff]
    %v4207 = vld [vmem:[%s4160 + $0x170] sm:$0xff]
    %v4208 = vld [vmem:[%s4160 + $0x178] sm:$0xff]
    %v4209 = vld [vmem:[%s4160 + $0x180] sm:$0xff]
    %v4210 = vld [vmem:[%s4160 + $0x188] sm:$0xff]
    %v4211 = vld [vmem:[%s4160 + $0x190] sm:$0xff]
    %v4212 = vld [vmem:[%s4160 + $0x198] sm:$0xff]
    %v4213 = vld [vmem:[%s4160 + $0x1a0] sm:$0xff]
    %v4214 = vld [vmem:[%s4160 + $0x1a8] sm:$0xff]
    %v4215 = vld [vmem:[%s4160 + $0x1b0] sm:$0xff]
    %v4216 = vld [vmem:[%s4160 + $0x1b8] sm:$0xff]
    %v4217 = vld [vmem:[%s4160 + $0x1c0] sm:$0xff]
    %v4218 = vld [vmem:[%s4160 + $0x1c8] sm:$0xff]
    %v4219 = vld [vmem:[%s4160 + $0x1d0] sm:$0xff]
    %v4220 = vld [vmem:[%s4160 + $0x1d8] sm:$0xff]
    %v4221 = vld [vmem:[%s4160 + $0x1e0] sm:$0xff]
    %v4222 = vld [vmem:[%s4160 + $0x1e8] sm:$0xff]
    %v4223 = vld [vmem:[%s4160 + $0x1f0] sm:$0xff]
    %v4224 = vld [vmem:[%s4160 + $0x1f8] sm:$0xff]
    %v4226 = vsel %vm690, %v4124, 0
    %v4229 = vsel %vm690, %v4125, 0
    %v4232 = vsel %vm690, %v4126, 0
    %v4235 = vsel %vm690, %v4127, 0
    %v4238 = vsel %vm690, %v4128, 0
    %v4241 = vsel %vm690, %v4129, 0
    %v4244 = vsel %vm690, %v4130, 0
    %v4247 = vsel %vm690, %v4131, 0
    %v4250 = vsel %vm715, %v4156, 0
    %4252 = vmatprep.subr.bf16.mxu0 0
    %4253 = vmatpush1.bf16.msra.mxu0 %v4250
    %4254 = vmatprep.subr.bf16.mxu0 0
    %4255 = vmatpush1.bf16.msra.mxu0 0
    %4256 = vmatprep.subr.bf16.mxu0 0
    %4257 = vmatpush1.bf16.msra.mxu0 0
    %4258 = vmatprep.subr.bf16.mxu0 0
    %4259 = vmatpush1.bf16.msra.mxu0 0
    %4260 = vmatprep.subr.bf16.mxu0 0
    %4261 = vmatpush1.bf16.msra.mxu0 0
    %4262 = vmatprep.subr.bf16.mxu0 0
    %4263 = vmatpush1.bf16.msra.mxu0 0
    %4264 = vmatprep.subr.bf16.mxu0 0
    %4265 = vmatpush1.bf16.msra.mxu0 0
    %4266 = vmatprep.subr.bf16.mxu0 0
    %4267 = vmatpush1.bf16.msra.mxu0 0
    %4268 = vmatprep.subr.bf16.mxu0 0
    %4269 = vmatpush1.bf16.msra.mxu0 0
    %4270 = vmatprep.subr.bf16.mxu0 0
    %4271 = vmatpush1.bf16.msra.mxu0 0
    %4272 = vmatprep.subr.bf16.mxu0 0
    %4273 = vmatpush1.bf16.msra.mxu0 0
    %4274 = vmatprep.subr.bf16.mxu0 0
    %4275 = vmatpush1.bf16.msra.mxu0 0
    %4276 = vmatprep.subr.bf16.mxu0 0
    %4277 = vmatpush1.bf16.msra.mxu0 0
    %4278 = vmatprep.subr.bf16.mxu0 0
    %4279 = vmatpush1.bf16.msra.mxu0 0
    %4280 = vmatprep.subr.bf16.mxu0 0
    %4281 = vmatpush1.bf16.msra.mxu0 0
    %4282 = vmatprep.subr.bf16.mxu0 0
    %4283 = vmatpush1.bf16.msra.mxu0 0
    %4284 = vmatprep.mubr.bf16.mxu0 0
    %4285 = vmatmul.mubr.bf16.gmra.mrb[0].mxu0 %v4226
    %v4286 = vpop.f32.mrb[0].mxu0
    %v4287 = vadd.f32 %v4161, %v4286
    %v4288 = vpop.f32.mrb[0].mxu0
    %v4289 = vpop.f32.mrb[0].mxu0
    %v4290 = vadd.f32 %v4162, %v4289
    %v4291 = vpop.f32.mrb[0].mxu0
    %4292 = vmatprep.mubr.bf16.mxu0 0
    %4293 = vmatmul.mubr.bf16.gmra.mrb[0].mxu0 %v4229
    %v4294 = vpop.f32.mrb[0].mxu0
    %v4295 = vadd.f32 %v4163, %v4294
    %v4296 = vpop.f32.mrb[0].mxu0
    %v4297 = vpop.f32.mrb[0].mxu0
    %v4298 = vadd.f32 %v4164, %v4297
    %v4299 = vpop.f32.mrb[0].mxu0
    %4300 = vmatprep.mubr.bf16.mxu0 0
    %4301 = vmatmul.mubr.bf16.gmra.mrb[0].mxu0 %v4232
    %v4302 = vpop.f32.mrb[0].mxu0
    %v4303 = vadd.f32 %v4165, %v4302
    %v4304 = vpop.f32.mrb[0].mxu0
    %v4305 = vpop.f32.mrb[0].mxu0
    %v4306 = vadd.f32 %v4166, %v4305
    %v4307 = vpop.f32.mrb[0].mxu0
    %4308 = vmatprep.mubr.bf16.mxu0 0
    %4309 = vmatmul.mubr.bf16.gmra.mrb[0].mxu0 %v4235
    %v4310 = vpop.f32.mrb[0].mxu0
    %v4311 = vadd.f32 %v4167, %v4310
    %v4312 = vpop.f32.mrb[0].mxu0
    %v4313 = vpop.f32.mrb[0].mxu0
    %v4314 = vadd.f32 %v4168, %v4313
    %v4315 = vpop.f32.mrb[0].mxu0
    %4316 = vmatprep.mubr.bf16.mxu0 0
    %4317 = vmatmul.mubr.bf16.gmra.mrb[0].mxu0 %v4238
    %v4318 = vpop.f32.mrb[0].mxu0
    %v4319 = vadd.f32 %v4169, %v4318
    %v4320 = vpop.f32.mrb[0].mxu0
    %v4321 = vpop.f32.mrb[0].mxu0
    %v4322 = vadd.f32 %v4170, %v4321
    %v4323 = vpop.f32.mrb[0].mxu0
    %4324 = vmatprep.mubr.bf16.mxu0 0
    %4325 = vmatmul.mubr.bf16.gmra.mrb[0].mxu0 %v4241
    %v4326 = vpop.f32.mrb[0].mxu0
    %v4327 = vadd.f32 %v4171, %v4326
    %v4328 = vpop.f32.mrb[0].mxu0
    %v4329 = vpop.f32.mrb[0].mxu0
    %v4330 = vadd.f32 %v4172, %v4329
    %v4331 = vpop.f32.mrb[0].mxu0
    %4332 = vmatprep.mubr.bf16.mxu0 0
    %4333 = vmatmul.mubr.bf16.gmra.mrb[0].mxu0 %v4244
    %v4334 = vpop.f32.mrb[0].mxu0
    %v4335 = vadd.f32 %v4173, %v4334
    %v4336 = vpop.f32.mrb[0].mxu0
    %v4337 = vpop.f32.mrb[0].mxu0
    %v4338 = vadd.f32 %v4174, %v4337
    %v4339 = vpop.f32.mrb[0].mxu0
    %4340 = vmatprep.mubr.bf16.mxu0 0
    %4341 = vmatmul.mubr.bf16.gmra.mrb[0].mxu0 %v4247
    %v4342 = vpop.f32.mrb[0].mxu0
    %v4343 = vadd.f32 %v4175, %v4342
    %v4344 = vpop.f32.mrb[0].mxu0
    %v4345 = vpop.f32.mrb[0].mxu0
    %v4346 = vadd.f32 %v4176, %v4345
    %v4347 = vpop.f32.mrb[0].mxu0
    %4348 = vdwg.mxu0
    %v4350 = vsel %vm690, %v4132, 0
    %v4353 = vsel %vm690, %v4133, 0
    %v4356 = vsel %vm690, %v4134, 0
    %v4359 = vsel %vm690, %v4135, 0
    %v4362 = vsel %vm690, %v4136, 0
    %v4365 = vsel %vm690, %v4137, 0
    %v4368 = vsel %vm690, %v4138, 0
    %v4371 = vsel %vm690, %v4139, 0
    %v4374 = vsel %vm715, %v4157, 0
    %4376 = vmatprep.subr.bf16.mxu0 0
    %4377 = vmatpush1.bf16.msra.mxu0 %v4374
    %4378 = vmatprep.subr.bf16.mxu0 0
    %4379 = vmatpush1.bf16.msra.mxu0 0
    %4380 = vmatprep.subr.bf16.mxu0 0
    %4381 = vmatpush1.bf16.msra.mxu0 0
    %4382 = vmatprep.subr.bf16.mxu0 0
    %4383 = vmatpush1.bf16.msra.mxu0 0
    %4384 = vmatprep.subr.bf16.mxu0 0
    %4385 = vmatpush1.bf16.msra.mxu0 0
    %4386 = vmatprep.subr.bf16.mxu0 0
    %4387 = vmatpush1.bf16.msra.mxu0 0
    %4388 = vmatprep.subr.bf16.mxu0 0
    %4389 = vmatpush1.bf16.msra.mxu0 0
    %4390 = vmatprep.subr.bf16.mxu0 0
    %4391 = vmatpush1.bf16.msra.mxu0 0
    %4392 = vmatprep.subr.bf16.mxu0 0
    %4393 = vmatpush1.bf16.msra.mxu0 0
    %4394 = vmatprep.subr.bf16.mxu0 0
    %4395 = vmatpush1.bf16.msra.mxu0 0
    %4396 = vmatprep.subr.bf16.mxu0 0
    %4397 = vmatpush1.bf16.msra.mxu0 0
    %4398 = vmatprep.subr.bf16.mxu0 0
    %4399 = vmatpush1.bf16.msra.mxu0 0
    %4400 = vmatprep.subr.bf16.mxu0 0
    %4401 = vmatpush1.bf16.msra.mxu0 0
    %4402 = vmatprep.subr.bf16.mxu0 0
    %4403 = vmatpush1.bf16.msra.mxu0 0
    %4404 = vmatprep.subr.bf16.mxu0 0
    %4405 = vmatpush1.bf16.msra.mxu0 0
    %4406 = vmatprep.subr.bf16.mxu0 0
    %4407 = vmatpush1.bf16.msra.mxu0 0
    %4408 = vmatprep.mubr.bf16.mxu0 0
    %4409 = vmatmul.mubr.bf16.gmra.mrb[0].mxu0 %v4350
    %v4410 = vpop.f32.mrb[0].mxu0
    %v4411 = vadd.f32 %v4177, %v4410
    %v4412 = vpop.f32.mrb[0].mxu0
    %v4413 = vpop.f32.mrb[0].mxu0
    %v4414 = vadd.f32 %v4178, %v4413
    %v4415 = vpop.f32.mrb[0].mxu0
    %4416 = vmatprep.mubr.bf16.mxu0 0
    %4417 = vmatmul.mubr.bf16.gmra.mrb[0].mxu0 %v4353
    %v4418 = vpop.f32.mrb[0].mxu0
    %v4419 = vadd.f32 %v4179, %v4418
    %v4420 = vpop.f32.mrb[0].mxu0
    %v4421 = vpop.f32.mrb[0].mxu0
    %v4422 = vadd.f32 %v4180, %v4421
    %v4423 = vpop.f32.mrb[0].mxu0
    %4424 = vmatprep.mubr.bf16.mxu0 0
    %4425 = vmatmul.mubr.bf16.gmra.mrb[0].mxu0 %v4356
    %v4426 = vpop.f32.mrb[0].mxu0
    %v4427 = vadd.f32 %v4181, %v4426
    %v4428 = vpop.f32.mrb[0].mxu0
    %v4429 = vpop.f32.mrb[0].mxu0
    %v4430 = vadd.f32 %v4182, %v4429
    %v4431 = vpop.f32.mrb[0].mxu0
    %4432 = vmatprep.mubr.bf16.mxu0 0
    %4433 = vmatmul.mubr.bf16.gmra.mrb[0].mxu0 %v4359
    %v4434 = vpop.f32.mrb[0].mxu0
    %v4435 = vadd.f32 %v4183, %v4434
    %v4436 = vpop.f32.mrb[0].mxu0
    %v4437 = vpop.f32.mrb[0].mxu0
    %v4438 = vadd.f32 %v4184, %v4437
    %v4439 = vpop.f32.mrb[0].mxu0
    %4440 = vmatprep.mubr.bf16.mxu0 0
    %4441 = vmatmul.mubr.bf16.gmra.mrb[0].mxu0 %v4362
    %v4442 = vpop.f32.mrb[0].mxu0
    %v4443 = vadd.f32 %v4185, %v4442
    %v4444 = vpop.f32.mrb[0].mxu0
    %v4445 = vpop.f32.mrb[0].mxu0
    %v4446 = vadd.f32 %v4186, %v4445
    %v4447 = vpop.f32.mrb[0].mxu0
    %4448 = vmatprep.mubr.bf16.mxu0 0
    %4449 = vmatmul.mubr.bf16.gmra.mrb[0].mxu0 %v4365
    %v4450 = vpop.f32.mrb[0].mxu0
    %v4451 = vadd.f32 %v4187, %v4450
    %v4452 = vpop.f32.mrb[0].mxu0
    %v4453 = vpop.f32.mrb[0].mxu0
    %v4454 = vadd.f32 %v4188, %v4453
    %v4455 = vpop.f32.mrb[0].mxu0
    %4456 = vmatprep.mubr.bf16.mxu0 0
    %4457 = vmatmul.mubr.bf16.gmra.mrb[0].mxu0 %v4368
    %v4458 = vpop.f32.mrb[0].mxu0
    %v4459 = vadd.f32 %v4189, %v4458
    %v4460 = vpop.f32.mrb[0].mxu0
    %v4461 = vpop.f32.mrb[0].mxu0
    %v4462 = vadd.f32 %v4190, %v4461
    %v4463 = vpop.f32.mrb[0].mxu0
    %4464 = vmatprep.mubr.bf16.mxu0 0
    %4465 = vmatmul.mubr.bf16.gmra.mrb[0].mxu0 %v4371
    %v4466 = vpop.f32.mrb[0].mxu0
    %v4467 = vadd.f32 %v4191, %v4466
    %v4468 = vpop.f32.mrb[0].mxu0
    %v4469 = vpop.f32.mrb[0].mxu0
    %v4470 = vadd.f32 %v4192, %v4469
    %v4471 = vpop.f32.mrb[0].mxu0
    %4472 = vdwg.mxu0
    %v4474 = vsel %vm690, %v4140, 0
    %v4477 = vsel %vm690, %v4141, 0
    %v4480 = vsel %vm690, %v4142, 0
    %v4483 = vsel %vm690, %v4143, 0
    %v4486 = vsel %vm690, %v4144, 0
    %v4489 = vsel %vm690, %v4145, 0
    %v4492 = vsel %vm690, %v4146, 0
    %v4495 = vsel %vm690, %v4147, 0
    %v4498 = vsel %vm715, %v4158, 0
    %4500 = vmatprep.subr.bf16.mxu0 0
    %4501 = vmatpush1.bf16.msra.mxu0 %v4498
    %4502 = vmatprep.subr.bf16.mxu0 0
    %4503 = vmatpush1.bf16.msra.mxu0 0
    %4504 = vmatprep.subr.bf16.mxu0 0
    %4505 = vmatpush1.bf16.msra.mxu0 0
    %4506 = vmatprep.subr.bf16.mxu0 0
    %4507 = vmatpush1.bf16.msra.mxu0 0
    %4508 = vmatprep.subr.bf16.mxu0 0
    %4509 = vmatpush1.bf16.msra.mxu0 0
    %4510 = vmatprep.subr.bf16.mxu0 0
    %4511 = vmatpush1.bf16.msra.mxu0 0
    %4512 = vmatprep.subr.bf16.mxu0 0
    %4513 = vmatpush1.bf16.msra.mxu0 0
    %4514 = vmatprep.subr.bf16.mxu0 0
    %4515 = vmatpush1.bf16.msra.mxu0 0
    %4516 = vmatprep.subr.bf16.mxu0 0
    %4517 = vmatpush1.bf16.msra.mxu0 0
    %4518 = vmatprep.subr.bf16.mxu0 0
    %4519 = vmatpush1.bf16.msra.mxu0 0
    %4520 = vmatprep.subr.bf16.mxu0 0
    %4521 = vmatpush1.bf16.msra.mxu0 0
    %4522 = vmatprep.subr.bf16.mxu0 0
    %4523 = vmatpush1.bf16.msra.mxu0 0
    %4524 = vmatprep.subr.bf16.mxu0 0
    %4525 = vmatpush1.bf16.msra.mxu0 0
    %4526 = vmatprep.subr.bf16.mxu0 0
    %4527 = vmatpush1.bf16.msra.mxu0 0
    %4528 = vmatprep.subr.bf16.mxu0 0
    %4529 = vmatpush1.bf16.msra.mxu0 0
    %4530 = vmatprep.subr.bf16.mxu0 0
    %4531 = vmatpush1.bf16.msra.mxu0 0
    %4532 = vmatprep.mubr.bf16.mxu0 0
    %4533 = vmatmul.mubr.bf16.gmra.mrb[0].mxu0 %v4474
    %v4534 = vpop.f32.mrb[0].mxu0
    %v4535 = vadd.f32 %v4193, %v4534
    %v4536 = vpop.f32.mrb[0].mxu0
    %v4537 = vpop.f32.mrb[0].mxu0
    %v4538 = vadd.f32 %v4194, %v4537
    %v4539 = vpop.f32.mrb[0].mxu0
    %4540 = vmatprep.mubr.bf16.mxu0 0
    %4541 = vmatmul.mubr.bf16.gmra.mrb[0].mxu0 %v4477
    %v4542 = vpop.f32.mrb[0].mxu0
    %v4543 = vadd.f32 %v4195, %v4542
    %v4544 = vpop.f32.mrb[0].mxu0
    %v4545 = vpop.f32.mrb[0].mxu0
    %v4546 = vadd.f32 %v4196, %v4545
    %v4547 = vpop.f32.mrb[0].mxu0
    %4548 = vmatprep.mubr.bf16.mxu0 0
    %4549 = vmatmul.mubr.bf16.gmra.mrb[0].mxu0 %v4480
    %v4550 = vpop.f32.mrb[0].mxu0
    %v4551 = vadd.f32 %v4197, %v4550
    %v4552 = vpop.f32.mrb[0].mxu0
    %v4553 = vpop.f32.mrb[0].mxu0
    %v4554 = vadd.f32 %v4198, %v4553
    %v4555 = vpop.f32.mrb[0].mxu0
    %4556 = vmatprep.mubr.bf16.mxu0 0
    %4557 = vmatmul.mubr.bf16.gmra.mrb[0].mxu0 %v4483
    %v4558 = vpop.f32.mrb[0].mxu0
    %v4559 = vadd.f32 %v4199, %v4558
    %v4560 = vpop.f32.mrb[0].mxu0
    %v4561 = vpop.f32.mrb[0].mxu0
    %v4562 = vadd.f32 %v4200, %v4561
    %v4563 = vpop.f32.mrb[0].mxu0
    %4564 = vmatprep.mubr.bf16.mxu0 0
    %4565 = vmatmul.mubr.bf16.gmra.mrb[0].mxu0 %v4486
    %v4566 = vpop.f32.mrb[0].mxu0
    %v4567 = vadd.f32 %v4201, %v4566
    %v4568 = vpop.f32.mrb[0].mxu0
    %v4569 = vpop.f32.mrb[0].mxu0
    %v4570 = vadd.f32 %v4202, %v4569
    %v4571 = vpop.f32.mrb[0].mxu0
    %4572 = vmatprep.mubr.bf16.mxu0 0
    %4573 = vmatmul.mubr.bf16.gmra.mrb[0].mxu0 %v4489
    %v4574 = vpop.f32.mrb[0].mxu0
    %v4575 = vadd.f32 %v4203, %v4574
    %v4576 = vpop.f32.mrb[0].mxu0
    %v4577 = vpop.f32.mrb[0].mxu0
    %v4578 = vadd.f32 %v4204, %v4577
    %v4579 = vpop.f32.mrb[0].mxu0
    %4580 = vmatprep.mubr.bf16.mxu0 0
    %4581 = vmatmul.mubr.bf16.gmra.mrb[0].mxu0 %v4492
    %v4582 = vpop.f32.mrb[0].mxu0
    %v4583 = vadd.f32 %v4205, %v4582
    %v4584 = vpop.f32.mrb[0].mxu0
    %v4585 = vpop.f32.mrb[0].mxu0
    %v4586 = vadd.f32 %v4206, %v4585
    %v4587 = vpop.f32.mrb[0].mxu0
    %4588 = vmatprep.mubr.bf16.mxu0 0
    %4589 = vmatmul.mubr.bf16.gmra.mrb[0].mxu0 %v4495
    %v4590 = vpop.f32.mrb[0].mxu0
    %v4591 = vadd.f32 %v4207, %v4590
    %v4592 = vpop.f32.mrb[0].mxu0
    %v4593 = vpop.f32.mrb[0].mxu0
    %v4594 = vadd.f32 %v4208, %v4593
    %v4595 = vpop.f32.mrb[0].mxu0
    %4596 = vdwg.mxu0
    %v4598 = vsel %vm690, %v4148, 0
    %v4601 = vsel %vm690, %v4149, 0
    %v4604 = vsel %vm690, %v4150, 0
    %v4607 = vsel %vm690, %v4151, 0
    %v4610 = vsel %vm690, %v4152, 0
    %v4613 = vsel %vm690, %v4153, 0
    %v4616 = vsel %vm690, %v4154, 0
    %v4619 = vsel %vm690, %v4155, 0
    %v4622 = vsel %vm715, %v4159, 0
    %4624 = vmatprep.subr.bf16.mxu0 0
    %4625 = vmatpush1.bf16.msra.mxu0 %v4622
    %4626 = vmatprep.subr.bf16.mxu0 0
    %4627 = vmatpush1.bf16.msra.mxu0 0
    %4628 = vmatprep.subr.bf16.mxu0 0
    %4629 = vmatpush1.bf16.msra.mxu0 0
    %4630 = vmatprep.subr.bf16.mxu0 0
    %4631 = vmatpush1.bf16.msra.mxu0 0
    %4632 = vmatprep.subr.bf16.mxu0 0
    %4633 = vmatpush1.bf16.msra.mxu0 0
    %4634 = vmatprep.subr.bf16.mxu0 0
    %4635 = vmatpush1.bf16.msra.mxu0 0
    %4636 = vmatprep.subr.bf16.mxu0 0
    %4637 = vmatpush1.bf16.msra.mxu0 0
    %4638 = vmatprep.subr.bf16.mxu0 0
    %4639 = vmatpush1.bf16.msra.mxu0 0
    %4640 = vmatprep.subr.bf16.mxu0 0
    %4641 = vmatpush1.bf16.msra.mxu0 0
    %4642 = vmatprep.subr.bf16.mxu0 0
    %4643 = vmatpush1.bf16.msra.mxu0 0
    %4644 = vmatprep.subr.bf16.mxu0 0
    %4645 = vmatpush1.bf16.msra.mxu0 0
    %4646 = vmatprep.subr.bf16.mxu0 0
    %4647 = vmatpush1.bf16.msra.mxu0 0
    %4648 = vmatprep.subr.bf16.mxu0 0
    %4649 = vmatpush1.bf16.msra.mxu0 0
    %4650 = vmatprep.subr.bf16.mxu0 0
    %4651 = vmatpush1.bf16.msra.mxu0 0
    %4652 = vmatprep.subr.bf16.mxu0 0
    %4653 = vmatpush1.bf16.msra.mxu0 0
    %4654 = vmatprep.subr.bf16.mxu0 0
    %4655 = vmatpush1.bf16.msra.mxu0 0
    %4656 = vmatprep.mubr.bf16.mxu0 0
    %4657 = vmatmul.mubr.bf16.gmra.mrb[0].mxu0 %v4598
    %v4658 = vpop.f32.mrb[0].mxu0
    %v4659 = vadd.f32 %v4209, %v4658
    %v4660 = vpop.f32.mrb[0].mxu0
    %v4661 = vpop.f32.mrb[0].mxu0
    %v4662 = vadd.f32 %v4210, %v4661
    %v4663 = vpop.f32.mrb[0].mxu0
    %4664 = vmatprep.mubr.bf16.mxu0 0
    %4665 = vmatmul.mubr.bf16.gmra.mrb[0].mxu0 %v4601
    %v4666 = vpop.f32.mrb[0].mxu0
    %v4667 = vadd.f32 %v4211, %v4666
    %v4668 = vpop.f32.mrb[0].mxu0
    %v4669 = vpop.f32.mrb[0].mxu0
    %v4670 = vadd.f32 %v4212, %v4669
    %v4671 = vpop.f32.mrb[0].mxu0
    %4672 = vmatprep.mubr.bf16.mxu0 0
    %4673 = vmatmul.mubr.bf16.gmra.mrb[0].mxu0 %v4604
    %v4674 = vpop.f32.mrb[0].mxu0
    %v4675 = vadd.f32 %v4213, %v4674
    %v4676 = vpop.f32.mrb[0].mxu0
    %v4677 = vpop.f32.mrb[0].mxu0
    %v4678 = vadd.f32 %v4214, %v4677
    %v4679 = vpop.f32.mrb[0].mxu0
    %4680 = vmatprep.mubr.bf16.mxu0 0
    %4681 = vmatmul.mubr.bf16.gmra.mrb[0].mxu0 %v4607
    %v4682 = vpop.f32.mrb[0].mxu0
    %v4683 = vadd.f32 %v4215, %v4682
    %v4684 = vpop.f32.mrb[0].mxu0
    %v4685 = vpop.f32.mrb[0].mxu0
    %v4686 = vadd.f32 %v4216, %v4685
    %v4687 = vpop.f32.mrb[0].mxu0
    %4688 = vmatprep.mubr.bf16.mxu0 0
    %4689 = vmatmul.mubr.bf16.gmra.mrb[0].mxu0 %v4610
    %v4690 = vpop.f32.mrb[0].mxu0
    %v4691 = vadd.f32 %v4217, %v4690
    %v4692 = vpop.f32.mrb[0].mxu0
    %v4693 = vpop.f32.mrb[0].mxu0
    %v4694 = vadd.f32 %v4218, %v4693
    %v4695 = vpop.f32.mrb[0].mxu0
    %4696 = vmatprep.mubr.bf16.mxu0 0
    %4697 = vmatmul.mubr.bf16.gmra.mrb[0].mxu0 %v4613
    %v4698 = vpop.f32.mrb[0].mxu0
    %v4699 = vadd.f32 %v4219, %v4698
    %v4700 = vpop.f32.mrb[0].mxu0
    %v4701 = vpop.f32.mrb[0].mxu0
    %v4702 = vadd.f32 %v4220, %v4701
    %v4703 = vpop.f32.mrb[0].mxu0
    %4704 = vmatprep.mubr.bf16.mxu0 0
    %4705 = vmatmul.mubr.bf16.gmra.mrb[0].mxu0 %v4616
    %v4706 = vpop.f32.mrb[0].mxu0
    %v4707 = vadd.f32 %v4221, %v4706
    %v4708 = vpop.f32.mrb[0].mxu0
    %v4709 = vpop.f32.mrb[0].mxu0
    %v4710 = vadd.f32 %v4222, %v4709
    %v4711 = vpop.f32.mrb[0].mxu0
    %4712 = vmatprep.mubr.bf16.mxu0 0
    %4713 = vmatmul.mubr.bf16.gmra.mrb[0].mxu0 %v4619
    %v4714 = vpop.f32.mrb[0].mxu0
    %v4715 = vadd.f32 %v4223, %v4714
    %v4716 = vpop.f32.mrb[0].mxu0
    %v4717 = vpop.f32.mrb[0].mxu0
    %v4718 = vadd.f32 %v4224, %v4717
    %v4719 = vpop.f32.mrb[0].mxu0
    %4720 = vdwg.mxu0
    %4721 = vmax.xlane.f32.xlu0 %v4287
    %v4722 = vpop.xlane.xlu0 %4721
    %4723 = vmax.xlane.f32.xlu0 %v4290
    %v4724 = vpop.xlane.xlu0 %4723
    %4725 = vmax.xlane.f32.xlu0 %v4295
    %v4726 = vpop.xlane.xlu0 %4725
    %4727 = vmax.xlane.f32.xlu0 %v4298
    %v4728 = vpop.xlane.xlu0 %4727
    %4729 = vmax.xlane.f32.xlu0 %v4303
    %v4730 = vpop.xlane.xlu0 %4729
    %4731 = vmax.xlane.f32.xlu0 %v4306
    %v4732 = vpop.xlane.xlu0 %4731
    %4733 = vmax.xlane.f32.xlu0 %v4311
    %v4734 = vpop.xlane.xlu0 %4733
    %4735 = vmax.xlane.f32.xlu0 %v4314
    %v4736 = vpop.xlane.xlu0 %4735
    %4737 = vmax.xlane.f32.xlu0 %v4319
    %v4738 = vpop.xlane.xlu0 %4737
    %4739 = vmax.xlane.f32.xlu0 %v4322
    %v4740 = vpop.xlane.xlu0 %4739
    %4741 = vmax.xlane.f32.xlu0 %v4327
    %v4742 = vpop.xlane.xlu0 %4741
    %4743 = vmax.xlane.f32.xlu0 %v4330
    %v4744 = vpop.xlane.xlu0 %4743
    %4745 = vmax.xlane.f32.xlu0 %v4335
    %v4746 = vpop.xlane.xlu0 %4745
    %4747 = vmax.xlane.f32.xlu0 %v4338
    %v4748 = vpop.xlane.xlu0 %4747
    %4749 = vmax.xlane.f32.xlu0 %v4343
    %v4750 = vpop.xlane.xlu0 %4749
    %4751 = vmax.xlane.f32.xlu0 %v4346
    %v4752 = vpop.xlane.xlu0 %4751
    %4753 = vmax.xlane.f32.xlu0 %v4411
    %v4754 = vpop.xlane.xlu0 %4753
    %4755 = vmax.xlane.f32.xlu0 %v4414
    %v4756 = vpop.xlane.xlu0 %4755
    %4757 = vmax.xlane.f32.xlu0 %v4419
    %v4758 = vpop.xlane.xlu0 %4757
    %4759 = vmax.xlane.f32.xlu0 %v4422
    %v4760 = vpop.xlane.xlu0 %4759
    %4761 = vmax.xlane.f32.xlu0 %v4427
    %v4762 = vpop.xlane.xlu0 %4761
    %4763 = vmax.xlane.f32.xlu0 %v4430
    %v4764 = vpop.xlane.xlu0 %4763
    %4765 = vmax.xlane.f32.xlu0 %v4435
    %v4766 = vpop.xlane.xlu0 %4765
    %4767 = vmax.xlane.f32.xlu0 %v4438
    %v4768 = vpop.xlane.xlu0 %4767
    %4769 = vmax.xlane.f32.xlu0 %v4443
    %v4770 = vpop.xlane.xlu0 %4769
    %4771 = vmax.xlane.f32.xlu0 %v4446
    %v4772 = vpop.xlane.xlu0 %4771
    %4773 = vmax.xlane.f32.xlu0 %v4451
    %v4774 = vpop.xlane.xlu0 %4773
    %4775 = vmax.xlane.f32.xlu0 %v4454
    %v4776 = vpop.xlane.xlu0 %4775
    %4777 = vmax.xlane.f32.xlu0 %v4459
    %v4778 = vpop.xlane.xlu0 %4777
    %4779 = vmax.xlane.f32.xlu0 %v4462
    %v4780 = vpop.xlane.xlu0 %4779
    %4781 = vmax.xlane.f32.xlu0 %v4467
    %v4782 = vpop.xlane.xlu0 %4781
    %4783 = vmax.xlane.f32.xlu0 %v4470
    %v4784 = vpop.xlane.xlu0 %4783
    %4785 = vmax.xlane.f32.xlu0 %v4535
    %v4786 = vpop.xlane.xlu0 %4785
    %4787 = vmax.xlane.f32.xlu0 %v4538
    %v4788 = vpop.xlane.xlu0 %4787
    %4789 = vmax.xlane.f32.xlu0 %v4543
    %v4790 = vpop.xlane.xlu0 %4789
    %4791 = vmax.xlane.f32.xlu0 %v4546
    %v4792 = vpop.xlane.xlu0 %4791
    %4793 = vmax.xlane.f32.xlu0 %v4551
    %v4794 = vpop.xlane.xlu0 %4793
    %4795 = vmax.xlane.f32.xlu0 %v4554
    %v4796 = vpop.xlane.xlu0 %4795
    %4797 = vmax.xlane.f32.xlu0 %v4559
    %v4798 = vpop.xlane.xlu0 %4797
    %4799 = vmax.xlane.f32.xlu0 %v4562
    %v4800 = vpop.xlane.xlu0 %4799
    %4801 = vmax.xlane.f32.xlu0 %v4567
    %v4802 = vpop.xlane.xlu0 %4801
    %4803 = vmax.xlane.f32.xlu0 %v4570
    %v4804 = vpop.xlane.xlu0 %4803
    %4805 = vmax.xlane.f32.xlu0 %v4575
    %v4806 = vpop.xlane.xlu0 %4805
    %4807 = vmax.xlane.f32.xlu0 %v4578
    %v4808 = vpop.xlane.xlu0 %4807
    %4809 = vmax.xlane.f32.xlu0 %v4583
    %v4810 = vpop.xlane.xlu0 %4809
    %4811 = vmax.xlane.f32.xlu0 %v4586
    %v4812 = vpop.xlane.xlu0 %4811
    %4813 = vmax.xlane.f32.xlu0 %v4591
    %v4814 = vpop.xlane.xlu0 %4813
    %4815 = vmax.xlane.f32.xlu0 %v4594
    %v4816 = vpop.xlane.xlu0 %4815
    %4817 = vmax.xlane.f32.xlu0 %v4659
    %v4818 = vpop.xlane.xlu0 %4817
    %4819 = vmax.xlane.f32.xlu0 %v4662
    %v4820 = vpop.xlane.xlu0 %4819
    %4821 = vmax.xlane.f32.xlu0 %v4667
    %v4822 = vpop.xlane.xlu0 %4821
    %4823 = vmax.xlane.f32.xlu0 %v4670
    %v4824 = vpop.xlane.xlu0 %4823
    %4825 = vmax.xlane.f32.xlu0 %v4675
    %v4826 = vpop.xlane.xlu0 %4825
    %4827 = vmax.xlane.f32.xlu0 %v4678
    %v4828 = vpop.xlane.xlu0 %4827
    %4829 = vmax.xlane.f32.xlu0 %v4683
    %v4830 = vpop.xlane.xlu0 %4829
    %4831 = vmax.xlane.f32.xlu0 %v4686
    %v4832 = vpop.xlane.xlu0 %4831
    %4833 = vmax.xlane.f32.xlu0 %v4691
    %v4834 = vpop.xlane.xlu0 %4833
    %4835 = vmax.xlane.f32.xlu0 %v4694
    %v4836 = vpop.xlane.xlu0 %4835
    %4837 = vmax.xlane.f32.xlu0 %v4699
    %v4838 = vpop.xlane.xlu0 %4837
    %4839 = vmax.xlane.f32.xlu0 %v4702
    %v4840 = vpop.xlane.xlu0 %4839
    %4841 = vmax.xlane.f32.xlu0 %v4707
    %v4842 = vpop.xlane.xlu0 %4841
    %4843 = vmax.xlane.f32.xlu0 %v4710
    %v4844 = vpop.xlane.xlu0 %4843
    %4845 = vmax.xlane.f32.xlu0 %v4715
    %v4846 = vpop.xlane.xlu0 %4845
    %4847 = vmax.xlane.f32.xlu0 %v4718
    %v4848 = vpop.xlane.xlu0 %4847
    %v4849 = vsub.f32 %v4287, %v4722
    %v4850 = vsub.f32 %v4290, %v4724
    %v4851 = vsub.f32 %v4295, %v4726
    %v4852 = vsub.f32 %v4298, %v4728
    %v4853 = vsub.f32 %v4303, %v4730
    %v4854 = vsub.f32 %v4306, %v4732
    %v4855 = vsub.f32 %v4311, %v4734
    %v4856 = vsub.f32 %v4314, %v4736
    %v4857 = vsub.f32 %v4319, %v4738
    %v4858 = vsub.f32 %v4322, %v4740
    %v4859 = vsub.f32 %v4327, %v4742
    %v4860 = vsub.f32 %v4330, %v4744
    %v4861 = vsub.f32 %v4335, %v4746
    %v4862 = vsub.f32 %v4338, %v4748
    %v4863 = vsub.f32 %v4343, %v4750
    %v4864 = vsub.f32 %v4346, %v4752
    %v4865 = vsub.f32 %v4411, %v4754
    %v4866 = vsub.f32 %v4414, %v4756
    %v4867 = vsub.f32 %v4419, %v4758
    %v4868 = vsub.f32 %v4422, %v4760
    %v4869 = vsub.f32 %v4427, %v4762
    %v4870 = vsub.f32 %v4430, %v4764
    %v4871 = vsub.f32 %v4435, %v4766
    %v4872 = vsub.f32 %v4438, %v4768
    %v4873 = vsub.f32 %v4443, %v4770
    %v4874 = vsub.f32 %v4446, %v4772
    %v4875 = vsub.f32 %v4451, %v4774
    %v4876 = vsub.f32 %v4454, %v4776
    %v4877 = vsub.f32 %v4459, %v4778
    %v4878 = vsub.f32 %v4462, %v4780
    %v4879 = vsub.f32 %v4467, %v4782
    %v4880 = vsub.f32 %v4470, %v4784
    %v4881 = vsub.f32 %v4535, %v4786
    %v4882 = vsub.f32 %v4538, %v4788
    %v4883 = vsub.f32 %v4543, %v4790
    %v4884 = vsub.f32 %v4546, %v4792
    %v4885 = vsub.f32 %v4551, %v4794
    %v4886 = vsub.f32 %v4554, %v4796
    %v4887 = vsub.f32 %v4559, %v4798
    %v4888 = vsub.f32 %v4562, %v4800
    %v4889 = vsub.f32 %v4567, %v4802
    %v4890 = vsub.f32 %v4570, %v4804
    %v4891 = vsub.f32 %v4575, %v4806
    %v4892 = vsub.f32 %v4578, %v4808
    %v4893 = vsub.f32 %v4583, %v4810
    %v4894 = vsub.f32 %v4586, %v4812
    %v4895 = vsub.f32 %v4591, %v4814
    %v4896 = vsub.f32 %v4594, %v4816
    %v4897 = vsub.f32 %v4659, %v4818
    %v4898 = vsub.f32 %v4662, %v4820
    %v4899 = vsub.f32 %v4667, %v4822
    %v4900 = vsub.f32 %v4670, %v4824
    %v4901 = vsub.f32 %v4675, %v4826
    %v4902 = vsub.f32 %v4678, %v4828
    %v4903 = vsub.f32 %v4683, %v4830
    %v4904 = vsub.f32 %v4686, %v4832
    %v4905 = vsub.f32 %v4691, %v4834
    %v4906 = vsub.f32 %v4694, %v4836
    %v4907 = vsub.f32 %v4699, %v4838
    %v4908 = vsub.f32 %v4702, %v4840
    %v4909 = vsub.f32 %v4707, %v4842
    %v4910 = vsub.f32 %v4710, %v4844
    %v4911 = vsub.f32 %v4715, %v4846
    %v4912 = vsub.f32 %v4718, %v4848
    %v4913 = vmul.f32 %v4849, 1.442695
    %v4914 = vpow.pop %v4913
    %v4915 = vmul.f32 %v4850, 1.442695
    %v4916 = vpow.pop %v4915
    %v4917 = vmul.f32 %v4851, 1.442695
    %v4918 = vpow.pop %v4917
    %v4919 = vmul.f32 %v4852, 1.442695
    %v4920 = vpow.pop %v4919
    %v4921 = vmul.f32 %v4853, 1.442695
    %v4922 = vpow.pop %v4921
    %v4923 = vmul.f32 %v4854, 1.442695
    %v4924 = vpow.pop %v4923
    %v4925 = vmul.f32 %v4855, 1.442695
    %v4926 = vpow.pop %v4925
    %v4927 = vmul.f32 %v4856, 1.442695
    %v4928 = vpow.pop %v4927
    %v4929 = vmul.f32 %v4857, 1.442695
    %v4930 = vpow.pop %v4929
    %v4931 = vmul.f32 %v4858, 1.442695
    %v4932 = vpow.pop %v4931
    %v4933 = vmul.f32 %v4859, 1.442695
    %v4934 = vpow.pop %v4933
    %v4935 = vmul.f32 %v4860, 1.442695
    %v4936 = vpow.pop %v4935
    %v4937 = vmul.f32 %v4861, 1.442695
    %v4938 = vpow.pop %v4937
    %v4939 = vmul.f32 %v4862, 1.442695
    %v4940 = vpow.pop %v4939
    %v4941 = vmul.f32 %v4863, 1.442695
    %v4942 = vpow.pop %v4941
    %v4943 = vmul.f32 %v4864, 1.442695
    %v4944 = vpow.pop %v4943
    %v4945 = vmul.f32 %v4865, 1.442695
    %v4946 = vpow.pop %v4945
    %v4947 = vmul.f32 %v4866, 1.442695
    %v4948 = vpow.pop %v4947
    %v4949 = vmul.f32 %v4867, 1.442695
    %v4950 = vpow.pop %v4949
    %v4951 = vmul.f32 %v4868, 1.442695
    %v4952 = vpow.pop %v4951
    %v4953 = vmul.f32 %v4869, 1.442695
    %v4954 = vpow.pop %v4953
    %v4955 = vmul.f32 %v4870, 1.442695
    %v4956 = vpow.pop %v4955
    %v4957 = vmul.f32 %v4871, 1.442695
    %v4958 = vpow.pop %v4957
    %v4959 = vmul.f32 %v4872, 1.442695
    %v4960 = vpow.pop %v4959
    %v4961 = vmul.f32 %v4873, 1.442695
    %v4962 = vpow.pop %v4961
    %v4963 = vmul.f32 %v4874, 1.442695
    %v4964 = vpow.pop %v4963
    %v4965 = vmul.f32 %v4875, 1.442695
    %v4966 = vpow.pop %v4965
    %v4967 = vmul.f32 %v4876, 1.442695
    %v4968 = vpow.pop %v4967
    %v4969 = vmul.f32 %v4877, 1.442695
    %v4970 = vpow.pop %v4969
    %v4971 = vmul.f32 %v4878, 1.442695
    %v4972 = vpow.pop %v4971
    %v4973 = vmul.f32 %v4879, 1.442695
    %v4974 = vpow.pop %v4973
    %v4975 = vmul.f32 %v4880, 1.442695
    %v4976 = vpow.pop %v4975
    %v4977 = vmul.f32 %v4881, 1.442695
    %v4978 = vpow.pop %v4977
    %v4979 = vmul.f32 %v4882, 1.442695
    %v4980 = vpow.pop %v4979
    %v4981 = vmul.f32 %v4883, 1.442695
    %v4982 = vpow.pop %v4981
    %v4983 = vmul.f32 %v4884, 1.442695
    %v4984 = vpow.pop %v4983
    %v4985 = vmul.f32 %v4885, 1.442695
    %v4986 = vpow.pop %v4985
    %v4987 = vmul.f32 %v4886, 1.442695
    %v4988 = vpow.pop %v4987
    %v4989 = vmul.f32 %v4887, 1.442695
    %v4990 = vpow.pop %v4989
    %v4991 = vmul.f32 %v4888, 1.442695
    %v4992 = vpow.pop %v4991
    %v4993 = vmul.f32 %v4889, 1.442695
    %v4994 = vpow.pop %v4993
    %v4995 = vmul.f32 %v4890, 1.442695
    %v4996 = vpow.pop %v4995
    %v4997 = vmul.f32 %v4891, 1.442695
    %v4998 = vpow.pop %v4997
    %v4999 = vmul.f32 %v4892, 1.442695
    %v5000 = vpow.pop %v4999
    %v5001 = vmul.f32 %v4893, 1.442695
    %v5002 = vpow.pop %v5001
    %v5003 = vmul.f32 %v4894, 1.442695
    %v5004 = vpow.pop %v5003
    %v5005 = vmul.f32 %v4895, 1.442695
    %v5006 = vpow.pop %v5005
    %v5007 = vmul.f32 %v4896, 1.442695
    %v5008 = vpow.pop %v5007
    %v5009 = vmul.f32 %v4897, 1.442695
    %v5010 = vpow.pop %v5009
    %v5011 = vmul.f32 %v4898, 1.442695
    %v5012 = vpow.pop %v5011
    %v5013 = vmul.f32 %v4899, 1.442695
    %v5014 = vpow.pop %v5013
    %v5015 = vmul.f32 %v4900, 1.442695
    %v5016 = vpow.pop %v5015
    %v5017 = vmul.f32 %v4901, 1.442695
    %v5018 = vpow.pop %v5017
    %v5019 = vmul.f32 %v4902, 1.442695
    %v5020 = vpow.pop %v5019
    %v5021 = vmul.f32 %v4903, 1.442695
    %v5022 = vpow.pop %v5021
    %v5023 = vmul.f32 %v4904, 1.442695
    %v5024 = vpow.pop %v5023
    %v5025 = vmul.f32 %v4905, 1.442695
    %v5026 = vpow.pop %v5025
    %v5027 = vmul.f32 %v4906, 1.442695
    %v5028 = vpow.pop %v5027
    %v5029 = vmul.f32 %v4907, 1.442695
    %v5030 = vpow.pop %v5029
    %v5031 = vmul.f32 %v4908, 1.442695
    %v5032 = vpow.pop %v5031
    %v5033 = vmul.f32 %v4909, 1.442695
    %v5034 = vpow.pop %v5033
    %v5035 = vmul.f32 %v4910, 1.442695
    %v5036 = vpow.pop %v5035
    %v5037 = vmul.f32 %v4911, 1.442695
    %v5038 = vpow.pop %v5037
    %v5039 = vmul.f32 %v4912, 1.442695
    %v5040 = vpow.pop %v5039
    %5041 = vadd.xlane.f32.xlu0 %v4914
    %v5042 = vpop.xlane.xlu0 %5041
    %5043 = vadd.xlane.f32.xlu0 %v4916
    %v5044 = vpop.xlane.xlu0 %5043
    %5045 = vadd.xlane.f32.xlu0 %v4918
    %v5046 = vpop.xlane.xlu0 %5045
    %5047 = vadd.xlane.f32.xlu0 %v4920
    %v5048 = vpop.xlane.xlu0 %5047
    %5049 = vadd.xlane.f32.xlu0 %v4922
    %v5050 = vpop.xlane.xlu0 %5049
    %5051 = vadd.xlane.f32.xlu0 %v4924
    %v5052 = vpop.xlane.xlu0 %5051
    %5053 = vadd.xlane.f32.xlu0 %v4926
    %v5054 = vpop.xlane.xlu0 %5053
    %5055 = vadd.xlane.f32.xlu0 %v4928
    %v5056 = vpop.xlane.xlu0 %5055
    %5057 = vadd.xlane.f32.xlu0 %v4930
    %v5058 = vpop.xlane.xlu0 %5057
    %5059 = vadd.xlane.f32.xlu0 %v4932
    %v5060 = vpop.xlane.xlu0 %5059
    %5061 = vadd.xlane.f32.xlu0 %v4934
    %v5062 = vpop.xlane.xlu0 %5061
    %5063 = vadd.xlane.f32.xlu0 %v4936
    %v5064 = vpop.xlane.xlu0 %5063
    %5065 = vadd.xlane.f32.xlu0 %v4938
    %v5066 = vpop.xlane.xlu0 %5065
    %5067 = vadd.xlane.f32.xlu0 %v4940
    %v5068 = vpop.xlane.xlu0 %5067
    %5069 = vadd.xlane.f32.xlu0 %v4942
    %v5070 = vpop.xlane.xlu0 %5069
    %5071 = vadd.xlane.f32.xlu0 %v4944
    %v5072 = vpop.xlane.xlu0 %5071
    %5073 = vadd.xlane.f32.xlu0 %v4946
    %v5074 = vpop.xlane.xlu0 %5073
    %5075 = vadd.xlane.f32.xlu0 %v4948
    %v5076 = vpop.xlane.xlu0 %5075
    %5077 = vadd.xlane.f32.xlu0 %v4950
    %v5078 = vpop.xlane.xlu0 %5077
    %5079 = vadd.xlane.f32.xlu0 %v4952
    %v5080 = vpop.xlane.xlu0 %5079
    %5081 = vadd.xlane.f32.xlu0 %v4954
    %v5082 = vpop.xlane.xlu0 %5081
    %5083 = vadd.xlane.f32.xlu0 %v4956
    %v5084 = vpop.xlane.xlu0 %5083
    %5085 = vadd.xlane.f32.xlu0 %v4958
    %v5086 = vpop.xlane.xlu0 %5085
    %5087 = vadd.xlane.f32.xlu0 %v4960
    %v5088 = vpop.xlane.xlu0 %5087
    %5089 = vadd.xlane.f32.xlu0 %v4962
    %v5090 = vpop.xlane.xlu0 %5089
    %5091 = vadd.xlane.f32.xlu0 %v4964
    %v5092 = vpop.xlane.xlu0 %5091
    %5093 = vadd.xlane.f32.xlu0 %v4966
    %v5094 = vpop.xlane.xlu0 %5093
    %5095 = vadd.xlane.f32.xlu0 %v4968
    %v5096 = vpop.xlane.xlu0 %5095
    %5097 = vadd.xlane.f32.xlu0 %v4970
    %v5098 = vpop.xlane.xlu0 %5097
    %5099 = vadd.xlane.f32.xlu0 %v4972
    %v5100 = vpop.xlane.xlu0 %5099
    %5101 = vadd.xlane.f32.xlu0 %v4974
    %v5102 = vpop.xlane.xlu0 %5101
    %5103 = vadd.xlane.f32.xlu0 %v4976
    %v5104 = vpop.xlane.xlu0 %5103
    %5105 = vadd.xlane.f32.xlu0 %v4978
    %v5106 = vpop.xlane.xlu0 %5105
    %5107 = vadd.xlane.f32.xlu0 %v4980
    %v5108 = vpop.xlane.xlu0 %5107
    %5109 = vadd.xlane.f32.xlu0 %v4982
    %v5110 = vpop.xlane.xlu0 %5109
    %5111 = vadd.xlane.f32.xlu0 %v4984
    %v5112 = vpop.xlane.xlu0 %5111
    %5113 = vadd.xlane.f32.xlu0 %v4986
    %v5114 = vpop.xlane.xlu0 %5113
    %5115 = vadd.xlane.f32.xlu0 %v4988
    %v5116 = vpop.xlane.xlu0 %5115
    %5117 = vadd.xlane.f32.xlu0 %v4990
    %v5118 = vpop.xlane.xlu0 %5117
    %5119 = vadd.xlane.f32.xlu0 %v4992
    %v5120 = vpop.xlane.xlu0 %5119
    %5121 = vadd.xlane.f32.xlu0 %v4994
    %v5122 = vpop.xlane.xlu0 %5121
    %5123 = vadd.xlane.f32.xlu0 %v4996
    %v5124 = vpop.xlane.xlu0 %5123
    %5125 = vadd.xlane.f32.xlu0 %v4998
    %v5126 = vpop.xlane.xlu0 %5125
    %5127 = vadd.xlane.f32.xlu0 %v5000
    %v5128 = vpop.xlane.xlu0 %5127
    %5129 = vadd.xlane.f32.xlu0 %v5002
    %v5130 = vpop.xlane.xlu0 %5129
    %5131 = vadd.xlane.f32.xlu0 %v5004
    %v5132 = vpop.xlane.xlu0 %5131
    %5133 = vadd.xlane.f32.xlu0 %v5006
    %v5134 = vpop.xlane.xlu0 %5133
    %5135 = vadd.xlane.f32.xlu0 %v5008
    %v5136 = vpop.xlane.xlu0 %5135
    %5137 = vadd.xlane.f32.xlu0 %v5010
    %v5138 = vpop.xlane.xlu0 %5137
    %5139 = vadd.xlane.f32.xlu0 %v5012
    %v5140 = vpop.xlane.xlu0 %5139
    %5141 = vadd.xlane.f32.xlu0 %v5014
    %v5142 = vpop.xlane.xlu0 %5141
    %5143 = vadd.xlane.f32.xlu0 %v5016
    %v5144 = vpop.xlane.xlu0 %5143
    %5145 = vadd.xlane.f32.xlu0 %v5018
    %v5146 = vpop.xlane.xlu0 %5145
    %5147 = vadd.xlane.f32.xlu0 %v5020
    %v5148 = vpop.xlane.xlu0 %5147
    %5149 = vadd.xlane.f32.xlu0 %v5022
    %v5150 = vpop.xlane.xlu0 %5149
    %5151 = vadd.xlane.f32.xlu0 %v5024
    %v5152 = vpop.xlane.xlu0 %5151
    %5153 = vadd.xlane.f32.xlu0 %v5026
    %v5154 = vpop.xlane.xlu0 %5153
    %5155 = vadd.xlane.f32.xlu0 %v5028
    %v5156 = vpop.xlane.xlu0 %5155
    %5157 = vadd.xlane.f32.xlu0 %v5030
    %v5158 = vpop.xlane.xlu0 %5157
    %5159 = vadd.xlane.f32.xlu0 %v5032
    %v5160 = vpop.xlane.xlu0 %5159
    %5161 = vadd.xlane.f32.xlu0 %v5034
    %v5162 = vpop.xlane.xlu0 %5161
    %5163 = vadd.xlane.f32.xlu0 %v5036
    %v5164 = vpop.xlane.xlu0 %5163
    %5165 = vadd.xlane.f32.xlu0 %v5038
    %v5166 = vpop.xlane.xlu0 %5165
    %5167 = vadd.xlane.f32.xlu0 %v5040
    %v5168 = vpop.xlane.xlu0 %5167
    %v5169 = vrcp.pop %v5042
    %v5170 = vmul.f32 %v4914, %v5169
    %v5171 = vrcp.pop %v5044
    %v5172 = vmul.f32 %v4916, %v5171
    %v5173 = vrcp.pop %v5046
    %v5174 = vmul.f32 %v4918, %v5173
    %v5175 = vrcp.pop %v5048
    %v5176 = vmul.f32 %v4920, %v5175
    %v5177 = vrcp.pop %v5050
    %v5178 = vmul.f32 %v4922, %v5177
    %v5179 = vrcp.pop %v5052
    %v5180 = vmul.f32 %v4924, %v5179
    %v5181 = vrcp.pop %v5054
    %v5182 = vmul.f32 %v4926, %v5181
    %v5183 = vrcp.pop %v5056
    %v5184 = vmul.f32 %v4928, %v5183
    %v5185 = vrcp.pop %v5058
    %v5186 = vmul.f32 %v4930, %v5185
    %v5187 = vrcp.pop %v5060
    %v5188 = vmul.f32 %v4932, %v5187
    %v5189 = vrcp.pop %v5062
    %v5190 = vmul.f32 %v4934, %v5189
    %v5191 = vrcp.pop %v5064
    %v5192 = vmul.f32 %v4936, %v5191
    %v5193 = vrcp.pop %v5066
    %v5194 = vmul.f32 %v4938, %v5193
    %v5195 = vrcp.pop %v5068
    %v5196 = vmul.f32 %v4940, %v5195
    %v5197 = vrcp.pop %v5070
    %v5198 = vmul.f32 %v4942, %v5197
    %v5199 = vrcp.pop %v5072
    %v5200 = vmul.f32 %v4944, %v5199
    %v5201 = vrcp.pop %v5074
    %v5202 = vmul.f32 %v4946, %v5201
    %v5203 = vrcp.pop %v5076
    %v5204 = vmul.f32 %v4948, %v5203
    %v5205 = vrcp.pop %v5078
    %v5206 = vmul.f32 %v4950, %v5205
    %v5207 = vrcp.pop %v5080
    %v5208 = vmul.f32 %v4952, %v5207
    %v5209 = vrcp.pop %v5082
    %v5210 = vmul.f32 %v4954, %v5209
    %v5211 = vrcp.pop %v5084
    %v5212 = vmul.f32 %v4956, %v5211
    %v5213 = vrcp.pop %v5086
    %v5214 = vmul.f32 %v4958, %v5213
    %v5215 = vrcp.pop %v5088
    %v5216 = vmul.f32 %v4960, %v5215
    %v5217 = vrcp.pop %v5090
    %v5218 = vmul.f32 %v4962, %v5217
    %v5219 = vrcp.pop %v5092
    %v5220 = vmul.f32 %v4964, %v5219
    %v5221 = vrcp.pop %v5094
    %v5222 = vmul.f32 %v4966, %v5221
    %v5223 = vrcp.pop %v5096
    %v5224 = vmul.f32 %v4968, %v5223
    %v5225 = vrcp.pop %v5098
    %v5226 = vmul.f32 %v4970, %v5225
    %v5227 = vrcp.pop %v5100
    %v5228 = vmul.f32 %v4972, %v5227
    %v5229 = vrcp.pop %v5102
    %v5230 = vmul.f32 %v4974, %v5229
    %v5231 = vrcp.pop %v5104
    %v5232 = vmul.f32 %v4976, %v5231
    %v5233 = vrcp.pop %v5106
    %v5234 = vmul.f32 %v4978, %v5233
    %v5235 = vrcp.pop %v5108
    %v5236 = vmul.f32 %v4980, %v5235
    %v5237 = vrcp.pop %v5110
    %v5238 = vmul.f32 %v4982, %v5237
    %v5239 = vrcp.pop %v5112
    %v5240 = vmul.f32 %v4984, %v5239
    %v5241 = vrcp.pop %v5114
    %v5242 = vmul.f32 %v4986, %v5241
    %v5243 = vrcp.pop %v5116
    %v5244 = vmul.f32 %v4988, %v5243
    %v5245 = vrcp.pop %v5118
    %v5246 = vmul.f32 %v4990, %v5245
    %v5247 = vrcp.pop %v5120
    %v5248 = vmul.f32 %v4992, %v5247
    %v5249 = vrcp.pop %v5122
    %v5250 = vmul.f32 %v4994, %v5249
    %v5251 = vrcp.pop %v5124
    %v5252 = vmul.f32 %v4996, %v5251
    %v5253 = vrcp.pop %v5126
    %v5254 = vmul.f32 %v4998, %v5253
    %v5255 = vrcp.pop %v5128
    %v5256 = vmul.f32 %v5000, %v5255
    %v5257 = vrcp.pop %v5130
    %v5258 = vmul.f32 %v5002, %v5257
    %v5259 = vrcp.pop %v5132
    %v5260 = vmul.f32 %v5004, %v5259
    %v5261 = vrcp.pop %v5134
    %v5262 = vmul.f32 %v5006, %v5261
    %v5263 = vrcp.pop %v5136
    %v5264 = vmul.f32 %v5008, %v5263
    %v5265 = vrcp.pop %v5138
    %v5266 = vmul.f32 %v5010, %v5265
    %v5267 = vrcp.pop %v5140
    %v5268 = vmul.f32 %v5012, %v5267
    %v5269 = vrcp.pop %v5142
    %v5270 = vmul.f32 %v5014, %v5269
    %v5271 = vrcp.pop %v5144
    %v5272 = vmul.f32 %v5016, %v5271
    %v5273 = vrcp.pop %v5146
    %v5274 = vmul.f32 %v5018, %v5273
    %v5275 = vrcp.pop %v5148
    %v5276 = vmul.f32 %v5020, %v5275
    %v5277 = vrcp.pop %v5150
    %v5278 = vmul.f32 %v5022, %v5277
    %v5279 = vrcp.pop %v5152
    %v5280 = vmul.f32 %v5024, %v5279
    %v5281 = vrcp.pop %v5154
    %v5282 = vmul.f32 %v5026, %v5281
    %v5283 = vrcp.pop %v5156
    %v5284 = vmul.f32 %v5028, %v5283
    %v5285 = vrcp.pop %v5158
    %v5286 = vmul.f32 %v5030, %v5285
    %v5287 = vrcp.pop %v5160
    %v5288 = vmul.f32 %v5032, %v5287
    %v5289 = vrcp.pop %v5162
    %v5290 = vmul.f32 %v5034, %v5289
    %v5291 = vrcp.pop %v5164
    %v5292 = vmul.f32 %v5036, %v5291
    %v5293 = vrcp.pop %v5166
    %v5294 = vmul.f32 %v5038, %v5293
    %v5295 = vrcp.pop %v5168
    %v5296 = vmul.f32 %v5040, %v5295
    %v5297 = vpack.c.bf16 %v3982, %v3982
    %v5298 = vpack.c.bf16 %v3985, %v3985
    %v5299 = vpack.c.bf16 %v3990, %v3990
    %v5300 = vpack.c.bf16 %v3993, %v3993
    %v5301 = vpack.c.bf16 %v5172, %v5170
    %v5302 = vpack.c.bf16 %v5176, %v5174
    %v5303 = vpack.c.bf16 %v5180, %v5178
    %v5304 = vpack.c.bf16 %v5184, %v5182
    %v5305 = vpack.c.bf16 %v5188, %v5186
    %v5306 = vpack.c.bf16 %v5192, %v5190
    %v5307 = vpack.c.bf16 %v5196, %v5194
    %v5308 = vpack.c.bf16 %v5200, %v5198
    %v5309 = vpack.c.bf16 %v5204, %v5202
    %v5310 = vpack.c.bf16 %v5208, %v5206
    %v5311 = vpack.c.bf16 %v5212, %v5210
    %v5312 = vpack.c.bf16 %v5216, %v5214
    %v5313 = vpack.c.bf16 %v5220, %v5218
    %v5314 = vpack.c.bf16 %v5224, %v5222
    %v5315 = vpack.c.bf16 %v5228, %v5226
    %v5316 = vpack.c.bf16 %v5232, %v5230
    %v5317 = vpack.c.bf16 %v5236, %v5234
    %v5318 = vpack.c.bf16 %v5240, %v5238
    %v5319 = vpack.c.bf16 %v5244, %v5242
    %v5320 = vpack.c.bf16 %v5248, %v5246
    %v5321 = vpack.c.bf16 %v5252, %v5250
    %v5322 = vpack.c.bf16 %v5256, %v5254
    %v5323 = vpack.c.bf16 %v5260, %v5258
    %v5324 = vpack.c.bf16 %v5264, %v5262
    %v5325 = vpack.c.bf16 %v5268, %v5266
    %v5326 = vpack.c.bf16 %v5272, %v5270
    %v5327 = vpack.c.bf16 %v5276, %v5274
    %v5328 = vpack.c.bf16 %v5280, %v5278
    %v5329 = vpack.c.bf16 %v5284, %v5282
    %v5330 = vpack.c.bf16 %v5288, %v5286
    %v5331 = vpack.c.bf16 %v5292, %v5290
    %v5332 = vpack.c.bf16 %v5296, %v5294
    %5333 = vmatprep.subr.bf16.mxu0 0
    %5334 = vmatpush1.bf16.xpose.msra.mxu0 %v5301
    %5335 = vmatprep.subr.bf16.mxu0 0
    %5336 = vmatpush1.bf16.xpose.msra.mxu0 %v5302
    %5337 = vmatprep.subr.bf16.mxu0 0
    %5338 = vmatpush1.bf16.xpose.msra.mxu0 %v5303
    %5339 = vmatprep.subr.bf16.mxu0 0
    %5340 = vmatpush1.bf16.xpose.msra.mxu0 %v5304
    %5341 = vmatprep.subr.bf16.mxu0 0
    %5342 = vmatpush1.bf16.xpose.msra.mxu0 %v5305
    %5343 = vmatprep.subr.bf16.mxu0 0
    %5344 = vmatpush1.bf16.xpose.msra.mxu0 %v5306
    %5345 = vmatprep.subr.bf16.mxu0 0
    %5346 = vmatpush1.bf16.xpose.msra.mxu0 %v5307
    %5347 = vmatprep.subr.bf16.mxu0 0
    %5348 = vmatpush1.bf16.xpose.msra.mxu0 %v5308
    %5349 = vmatprep.subr.bf16.mxu0 0
    %5350 = vmatpush1.bf16.xpose.msra.mxu0 0
    %5351 = vmatprep.subr.bf16.mxu0 0
    %5352 = vmatpush1.bf16.xpose.msra.mxu0 0
    %5353 = vmatprep.subr.bf16.mxu0 0
    %5354 = vmatpush1.bf16.xpose.msra.mxu0 0
    %5355 = vmatprep.subr.bf16.mxu0 0
    %5356 = vmatpush1.bf16.xpose.msra.mxu0 0
    %5357 = vmatprep.subr.bf16.mxu0 0
    %5358 = vmatpush1.bf16.xpose.msra.mxu0 0
    %5359 = vmatprep.subr.bf16.mxu0 0
    %5360 = vmatpush1.bf16.xpose.msra.mxu0 0
    %5361 = vmatprep.subr.bf16.mxu0 0
    %5362 = vmatpush1.bf16.xpose.msra.mxu0 0
    %5363 = vmatprep.subr.bf16.mxu0 0
    %5364 = vmatpush1.bf16.xpose.msra.mxu0 0
    %5365 = vmatprep.mubr.bf16.mxu0 0
    %5366 = vmatmul.mubr.bf16.gmra.mrb[0].mxu0 %v5297
    %v5367 = vpop.f32.mrb[0].mxu0
    %v5368 = vadd.f32 0.0, %v5367
    %v5369 = vpop.f32.mrb[0].mxu0
    %v5370 = vpop.f32.mrb[0].mxu0
    %v5371 = vpop.f32.mrb[0].mxu0
    %5372 = vdwg.mxu0
    %5373 = vmatprep.subr.bf16.mxu0 0
    %5374 = vmatpush1.bf16.xpose.msra.mxu0 %v5309
    %5375 = vmatprep.subr.bf16.mxu0 0
    %5376 = vmatpush1.bf16.xpose.msra.mxu0 %v5310
    %5377 = vmatprep.subr.bf16.mxu0 0
    %5378 = vmatpush1.bf16.xpose.msra.mxu0 %v5311
    %5379 = vmatprep.subr.bf16.mxu0 0
    %5380 = vmatpush1.bf16.xpose.msra.mxu0 %v5312
    %5381 = vmatprep.subr.bf16.mxu0 0
    %5382 = vmatpush1.bf16.xpose.msra.mxu0 %v5313
    %5383 = vmatprep.subr.bf16.mxu0 0
    %5384 = vmatpush1.bf16.xpose.msra.mxu0 %v5314
    %5385 = vmatprep.subr.bf16.mxu0 0
    %5386 = vmatpush1.bf16.xpose.msra.mxu0 %v5315
    %5387 = vmatprep.subr.bf16.mxu0 0
    %5388 = vmatpush1.bf16.xpose.msra.mxu0 %v5316
    %5389 = vmatprep.subr.bf16.mxu0 0
    %5390 = vmatpush1.bf16.xpose.msra.mxu0 0
    %5391 = vmatprep.subr.bf16.mxu0 0
    %5392 = vmatpush1.bf16.xpose.msra.mxu0 0
    %5393 = vmatprep.subr.bf16.mxu0 0
    %5394 = vmatpush1.bf16.xpose.msra.mxu0 0
    %5395 = vmatprep.subr.bf16.mxu0 0
    %5396 = vmatpush1.bf16.xpose.msra.mxu0 0
    %5397 = vmatprep.subr.bf16.mxu0 0
    %5398 = vmatpush1.bf16.xpose.msra.mxu0 0
    %5399 = vmatprep.subr.bf16.mxu0 0
    %5400 = vmatpush1.bf16.xpose.msra.mxu0 0
    %5401 = vmatprep.subr.bf16.mxu0 0
    %5402 = vmatpush1.bf16.xpose.msra.mxu0 0
    %5403 = vmatprep.subr.bf16.mxu0 0
    %5404 = vmatpush1.bf16.xpose.msra.mxu0 0
    %5405 = vmatprep.mubr.bf16.mxu0 0
    %5406 = vmatmul.mubr.bf16.gmra.mrb[0].mxu0 %v5298
    %v5407 = vpop.f32.mrb[0].mxu0
    %v5408 = vadd.f32 0.0, %v5407
    %v5409 = vpop.f32.mrb[0].mxu0
    %v5410 = vpop.f32.mrb[0].mxu0
    %v5411 = vpop.f32.mrb[0].mxu0
    %5412 = vdwg.mxu0
    %5413 = vmatprep.subr.bf16.mxu0 0
    %5414 = vmatpush1.bf16.xpose.msra.mxu0 %v5317
    %5415 = vmatprep.subr.bf16.mxu0 0
    %5416 = vmatpush1.bf16.xpose.msra.mxu0 %v5318
    %5417 = vmatprep.subr.bf16.mxu0 0
    %5418 = vmatpush1.bf16.xpose.msra.mxu0 %v5319
    %5419 = vmatprep.subr.bf16.mxu0 0
    %5420 = vmatpush1.bf16.xpose.msra.mxu0 %v5320
    %5421 = vmatprep.subr.bf16.mxu0 0
    %5422 = vmatpush1.bf16.xpose.msra.mxu0 %v5321
    %5423 = vmatprep.subr.bf16.mxu0 0
    %5424 = vmatpush1.bf16.xpose.msra.mxu0 %v5322
    %5425 = vmatprep.subr.bf16.mxu0 0
    %5426 = vmatpush1.bf16.xpose.msra.mxu0 %v5323
    %5427 = vmatprep.subr.bf16.mxu0 0
    %5428 = vmatpush1.bf16.xpose.msra.mxu0 %v5324
    %5429 = vmatprep.subr.bf16.mxu0 0
    %5430 = vmatpush1.bf16.xpose.msra.mxu0 0
    %5431 = vmatprep.subr.bf16.mxu0 0
    %5432 = vmatpush1.bf16.xpose.msra.mxu0 0
    %5433 = vmatprep.subr.bf16.mxu0 0
    %5434 = vmatpush1.bf16.xpose.msra.mxu0 0
    %5435 = vmatprep.subr.bf16.mxu0 0
    %5436 = vmatpush1.bf16.xpose.msra.mxu0 0
    %5437 = vmatprep.subr.bf16.mxu0 0
    %5438 = vmatpush1.bf16.xpose.msra.mxu0 0
    %5439 = vmatprep.subr.bf16.mxu0 0
    %5440 = vmatpush1.bf16.xpose.msra.mxu0 0
    %5441 = vmatprep.subr.bf16.mxu0 0
    %5442 = vmatpush1.bf16.xpose.msra.mxu0 0
    %5443 = vmatprep.subr.bf16.mxu0 0
    %5444 = vmatpush1.bf16.xpose.msra.mxu0 0
    %5445 = vmatprep.mubr.bf16.mxu0 0
    %5446 = vmatmul.mubr.bf16.gmra.mrb[0].mxu0 %v5299
    %v5447 = vpop.f32.mrb[0].mxu0
    %v5448 = vadd.f32 0.0, %v5447
    %v5449 = vpop.f32.mrb[0].mxu0
    %v5450 = vpop.f32.mrb[0].mxu0
    %v5451 = vpop.f32.mrb[0].mxu0
    %5452 = vdwg.mxu0
    %5453 = vmatprep.subr.bf16.mxu0 0
    %5454 = vmatpush1.bf16.xpose.msra.mxu0 %v5325
    %5455 = vmatprep.subr.bf16.mxu0 0
    %5456 = vmatpush1.bf16.xpose.msra.mxu0 %v5326
    %5457 = vmatprep.subr.bf16.mxu0 0
    %5458 = vmatpush1.bf16.xpose.msra.mxu0 %v5327
    %5459 = vmatprep.subr.bf16.mxu0 0
    %5460 = vmatpush1.bf16.xpose.msra.mxu0 %v5328
    %5461 = vmatprep.subr.bf16.mxu0 0
    %5462 = vmatpush1.bf16.xpose.msra.mxu0 %v5329
    %5463 = vmatprep.subr.bf16.mxu0 0
    %5464 = vmatpush1.bf16.xpose.msra.mxu0 %v5330
    %5465 = vmatprep.subr.bf16.mxu0 0
    %5466 = vmatpush1.bf16.xpose.msra.mxu0 %v5331
    %5467 = vmatprep.subr.bf16.mxu0 0
    %5468 = vmatpush1.bf16.xpose.msra.mxu0 %v5332
    %5469 = vmatprep.subr.bf16.mxu0 0
    %5470 = vmatpush1.bf16.xpose.msra.mxu0 0
    %5471 = vmatprep.subr.bf16.mxu0 0
    %5472 = vmatpush1.bf16.xpose.msra.mxu0 0
    %5473 = vmatprep.subr.bf16.mxu0 0
    %5474 = vmatpush1.bf16.xpose.msra.mxu0 0
    %5475 = vmatprep.subr.bf16.mxu0 0
    %5476 = vmatpush1.bf16.xpose.msra.mxu0 0
    %5477 = vmatprep.subr.bf16.mxu0 0
    %5478 = vmatpush1.bf16.xpose.msra.mxu0 0
    %5479 = vmatprep.subr.bf16.mxu0 0
    %5480 = vmatpush1.bf16.xpose.msra.mxu0 0
    %5481 = vmatprep.subr.bf16.mxu0 0
    %5482 = vmatpush1.bf16.xpose.msra.mxu0 0
    %5483 = vmatprep.subr.bf16.mxu0 0
    %5484 = vmatpush1.bf16.xpose.msra.mxu0 0
    %5485 = vmatprep.mubr.bf16.mxu0 0
    %5486 = vmatmul.mubr.bf16.gmra.mrb[0].mxu0 %v5300
    %v5487 = vpop.f32.mrb[0].mxu0
    %v5488 = vadd.f32 0.0, %v5487
    %v5489 = vpop.f32.mrb[0].mxu0
    %v5490 = vpop.f32.mrb[0].mxu0
    %v5491 = vpop.f32.mrb[0].mxu0
    %5492 = vdwg.mxu0
    %s5493 = scalar_lea.vmem [#allocation7], 32
    %v5494 = vld [vmem:[%s5493] sm:$0xff]
    %v5495 = vld [vmem:[%s5493 + $0x8] sm:$0xff]
    %v5496 = vld [vmem:[%s5493 + $0x10] sm:$0xff]
    %v5497 = vld [vmem:[%s5493 + $0x18] sm:$0xff]
    %v5498 = vpack.c.bf16 %v5495, %v5494
    %v5499 = vpack.c.bf16 %v5497, %v5496
    %v5500 = vpack.c.bf16 %v5408, %v5368
    %v5501 = vpack.c.bf16 %v5488, %v5448
    %v5503 = vsel %vm313, %v5498, 0
    %v5506 = vsel %vm313, %v5499, 0
    %5508 = vmatprep.subr.bf16.mxu0 0
    %5509 = vmatpush1.bf16.msra.mxu0 %v5500
    %5510 = vmatprep.subr.bf16.mxu0 0
    %5511 = vmatpush1.bf16.msra.mxu0 %v5501
    %5512 = vmatprep.subr.bf16.mxu0 0
    %5513 = vmatpush1.bf16.msra.mxu0 0
    %5514 = vmatprep.subr.bf16.mxu0 0
    %5515 = vmatpush1.bf16.msra.mxu0 0
    %5516 = vmatprep.subr.bf16.mxu0 0
    %5517 = vmatpush1.bf16.msra.mxu0 0
    %5518 = vmatprep.subr.bf16.mxu0 0
    %5519 = vmatpush1.bf16.msra.mxu0 0
    %5520 = vmatprep.subr.bf16.mxu0 0
    %5521 = vmatpush1.bf16.msra.mxu0 0
    %5522 = vmatprep.subr.bf16.mxu0 0
    %5523 = vmatpush1.bf16.msra.mxu0 0
    %5524 = vmatprep.subr.bf16.mxu0 0
    %5525 = vmatpush1.bf16.msra.mxu0 0
    %5526 = vmatprep.subr.bf16.mxu0 0
    %5527 = vmatpush1.bf16.msra.mxu0 0
    %5528 = vmatprep.subr.bf16.mxu0 0
    %5529 = vmatpush1.bf16.msra.mxu0 0
    %5530 = vmatprep.subr.bf16.mxu0 0
    %5531 = vmatpush1.bf16.msra.mxu0 0
    %5532 = vmatprep.subr.bf16.mxu0 0
    %5533 = vmatpush1.bf16.msra.mxu0 0
    %5534 = vmatprep.subr.bf16.mxu0 0
    %5535 = vmatpush1.bf16.msra.mxu0 0
    %5536 = vmatprep.subr.bf16.mxu0 0
    %5537 = vmatpush1.bf16.msra.mxu0 0
    %5538 = vmatprep.subr.bf16.mxu0 0
    %5539 = vmatpush1.bf16.msra.mxu0 0
    %5540 = vmatprep.mubr.bf16.mxu0 0
    %5541 = vmatmul.mubr.bf16.gmra.mrb[0].mxu0 %v5503
    %v5542 = vpop.f32.mrb[0].mxu0
    %v5543 = vadd.f32 0.0, %v5542
    %v5544 = vpop.f32.mrb[0].mxu0
    %v5545 = vpop.f32.mrb[0].mxu0
    %v5546 = vadd.f32 0.0, %v5545
    %v5547 = vpop.f32.mrb[0].mxu0
    %5548 = vmatprep.mubr.bf16.mxu0 0
    %5549 = vmatmul.mubr.bf16.gmra.mrb[0].mxu0 %v5506
    %v5550 = vpop.f32.mrb[0].mxu0
    %v5551 = vadd.f32 0.0, %v5550
    %v5552 = vpop.f32.mrb[0].mxu0
    %v5553 = vpop.f32.mrb[0].mxu0
    %v5554 = vadd.f32 0.0, %v5553
    %v5555 = vpop.f32.mrb[0].mxu0
    %5556 = vdwg.mxu0
    %v5557 = vadd.f32 %v3742, %v5543
    %v5558 = vadd.f32 %v3743, %v5546
    %v5559 = vadd.f32 %v3744, %v5551
    %v5560 = vadd.f32 %v3745, %v5554
    %s5561 = scalar_lea.vmem %s9, 32
    %v5562 = vld [vmem:[%s5561] sm:$0xff]
    %v5563 = vld [vmem:[%s5561 + $0x8] sm:$0xff]
    %v5564 = vld [vmem:[%s5561 + $0x10] sm:$0xff]
    %v5565 = vld [vmem:[%s5561 + $0x18] sm:$0xff]
    %5567 = vset.pattern.permute.xlu0 0
    %5568 = vperm.xlu0 %5567, %v5562
    %v5569 = vpop.permute.xlu0 %5568
    %5572 = vset.pattern.permute.xlu0 0
    %5573 = vperm.xlu0 %5572, %v5563
    %v5574 = vpop.permute.xlu0 %5573
    %5577 = vset.pattern.permute.xlu0 0
    %5578 = vperm.xlu0 %5577, %v5564
    %v5579 = vpop.permute.xlu0 %5578
    %5582 = vset.pattern.permute.xlu0 0
    %5583 = vperm.xlu0 %5582, %v5565
    %v5584 = vpop.permute.xlu0 %5583
    %v5586 = vadd.f32 %v5557, %v5569
    %v5587 = vadd.f32 %v5558, %v5574
    %v5588 = vadd.f32 %v5559, %v5579
    %v5589 = vadd.f32 %v5560, %v5584
    %s5590 = scalar_lea.vmem %s10, 32
    %v5591 = vld [vmem:[%s5590] sm:$0xff]
    %v5592 = vld [vmem:[%s5590 + $0x8] sm:$0xff]
    %v5593 = vld [vmem:[%s5590 + $0x10] sm:$0xff]
    %v5594 = vld [vmem:[%s5590 + $0x18] sm:$0xff]
    %s5595 = scalar_lea.vmem %s11, 32
    %v5596 = vld [vmem:[%s5595] sm:$0xff]
    %v5597 = vld [vmem:[%s5595 + $0x8] sm:$0xff]
    %v5598 = vld [vmem:[%s5595 + $0x10] sm:$0xff]
    %v5599 = vld [vmem:[%s5595 + $0x18] sm:$0xff]
    %v5600 = vadd.f32 %v5586, %v5587
    %v5601 = vadd.f32 %v5600, %v5588
    %v5602 = vadd.f32 %v5601, %v5589
    %v5603 = vrot.slane %v5602, 4
    %v5604 = vadd.f32 %v5602, %v5603
    %v5605 = vrot.slane %v5604, 2
    %v5606 = vadd.f32 %v5604, %v5605
    %v5607 = vrot.slane %v5606, 1
    %v5608 = vadd.f32 %v5606, %v5607
    %v5609 = vmul.f32 %v5608, %v231
    %v5610 = vsub.f32 %v5586, %v5609
    %v5611 = vsub.f32 %v5587, %v5609
    %v5612 = vsub.f32 %v5588, %v5609
    %v5613 = vsub.f32 %v5589, %v5609
    %v5614 = vmul.f32 %v5610, %v5610
    %v5615 = vmul.f32 %v5611, %v5611
    %v5616 = vmul.f32 %v5612, %v5612
    %v5617 = vmul.f32 %v5613, %v5613
    %v5618 = vadd.f32 %v5614, %v5615
    %v5619 = vadd.f32 %v5618, %v5616
    %v5620 = vadd.f32 %v5619, %v5617
    %v5621 = vrot.slane %v5620, 4
    %v5622 = vadd.f32 %v5620, %v5621
    %v5623 = vrot.slane %v5622, 2
    %v5624 = vadd.f32 %v5622, %v5623
    %v5625 = vrot.slane %v5624, 1
    %v5626 = vadd.f32 %v5624, %v5625
    %v5627 = vmul.f32 %v5626, %v231
    %v5628 = vadd.f32 %v5627, 1e-05
    %v5629 = vrsqrt.pop %v5628
    %v5630 = vmul.f32 %v5610, %v5629
    %v5631 = vmul.f32 %v5611, %v5629
    %v5632 = vmul.f32 %v5612, %v5629
    %v5633 = vmul.f32 %v5613, %v5629
    %5635 = vset.pattern.permute.xlu0 0
    %5636 = vperm.xlu0 %5635, %v5591
    %v5637 = vpop.permute.xlu0 %5636
    %5640 = vset.pattern.permute.xlu0 0
    %5641 = vperm.xlu0 %5640, %v5592
    %v5642 = vpop.permute.xlu0 %5641
    %5645 = vset.pattern.permute.xlu0 0
    %5646 = vperm.xlu0 %5645, %v5593
    %v5647 = vpop.permute.xlu0 %5646
    %5650 = vset.pattern.permute.xlu0 0
    %5651 = vperm.xlu0 %5650, %v5594
    %v5652 = vpop.permute.xlu0 %5651
    %v5654 = vmul.f32 %v5630, %v5637
    %v5655 = vmul.f32 %v5631, %v5642
    %v5656 = vmul.f32 %v5632, %v5647
    %v5657 = vmul.f32 %v5633, %v5652
    %5659 = vset.pattern.permute.xlu0 0
    %5660 = vperm.xlu0 %5659, %v5596
    %v5661 = vpop.permute.xlu0 %5660
    %5664 = vset.pattern.permute.xlu0 0
    %5665 = vperm.xlu0 %5664, %v5597
    %v5666 = vpop.permute.xlu0 %5665
    %5669 = vset.pattern.permute.xlu0 0
    %5670 = vperm.xlu0 %5669, %v5598
    %v5671 = vpop.permute.xlu0 %5670
    %5674 = vset.pattern.permute.xlu0 0
    %5675 = vperm.xlu0 %5674, %v5599
    %v5676 = vpop.permute.xlu0 %5675
    %v5678 = vadd.f32 %v5654, %v5661
    %v5679 = vadd.f32 %v5655, %v5666
    %v5680 = vadd.f32 %v5656, %v5671
    %v5681 = vadd.f32 %v5657, %v5676
    %s5682 = scalar_lea.vmem %s12, 128
    %v5683 = vld [vmem:[%s5682] sm:$0xff]
    %v5684 = vld [vmem:[%s5682 + $0x8] sm:$0xff]
    %v5685 = vld [vmem:[%s5682 + $0x10] sm:$0xff]
    %v5686 = vld [vmem:[%s5682 + $0x18] sm:$0xff]
    %v5687 = vld [vmem:[%s5682 + $0x20] sm:$0xff]
    %v5688 = vld [vmem:[%s5682 + $0x28] sm:$0xff]
    %v5689 = vld [vmem:[%s5682 + $0x30] sm:$0xff]
    %v5690 = vld [vmem:[%s5682 + $0x38] sm:$0xff]
    %v5691 = vld [vmem:[%s5682 + $0x40] sm:$0xff]
    %v5692 = vld [vmem:[%s5682 + $0x48] sm:$0xff]
    %v5693 = vld [vmem:[%s5682 + $0x50] sm:$0xff]
    %v5694 = vld [vmem:[%s5682 + $0x58] sm:$0xff]
    %v5695 = vld [vmem:[%s5682 + $0x60] sm:$0xff]
    %v5696 = vld [vmem:[%s5682 + $0x68] sm:$0xff]
    %v5697 = vld [vmem:[%s5682 + $0x70] sm:$0xff]
    %v5698 = vld [vmem:[%s5682 + $0x78] sm:$0xff]
    %v5699 = vpack.c.bf16 %v5684, %v5683
    %v5700 = vpack.c.bf16 %v5686, %v5685
    %v5701 = vpack.c.bf16 %v5688, %v5687
    %v5702 = vpack.c.bf16 %v5690, %v5689
    %v5703 = vpack.c.bf16 %v5692, %v5691
    %v5704 = vpack.c.bf16 %v5694, %v5693
    %v5705 = vpack.c.bf16 %v5696, %v5695
    %v5706 = vpack.c.bf16 %v5698, %v5697
    %v5707 = vpack.c.bf16 %v5679, %v5678
    %v5708 = vpack.c.bf16 %v5681, %v5680
    %s5709 = scalar_lea.vmem %s13, 128
    %v5710 = vld [vmem:[%s5709] sm:$0xff]
    %v5711 = vld [vmem:[%s5709 + $0x8] sm:$0xff]
    %v5712 = vld [vmem:[%s5709 + $0x10] sm:$0xff]
    %v5713 = vld [vmem:[%s5709 + $0x18] sm:$0xff]
    %v5714 = vld [vmem:[%s5709 + $0x20] sm:$0xff]
    %v5715 = vld [vmem:[%s5709 + $0x28] sm:$0xff]
    %v5716 = vld [vmem:[%s5709 + $0x30] sm:$0xff]
    %v5717 = vld [vmem:[%s5709 + $0x38] sm:$0xff]
    %v5718 = vld [vmem:[%s5709 + $0x40] sm:$0xff]
    %v5719 = vld [vmem:[%s5709 + $0x48] sm:$0xff]
    %v5720 = vld [vmem:[%s5709 + $0x50] sm:$0xff]
    %v5721 = vld [vmem:[%s5709 + $0x58] sm:$0xff]
    %v5722 = vld [vmem:[%s5709 + $0x60] sm:$0xff]
    %v5723 = vld [vmem:[%s5709 + $0x68] sm:$0xff]
    %v5724 = vld [vmem:[%s5709 + $0x70] sm:$0xff]
    %v5725 = vld [vmem:[%s5709 + $0x78] sm:$0xff]
    %5727 = vset.pattern.permute.xlu0 0
    %5728 = vperm.xlu0 %5727, %v5710
    %v5729 = vpop.permute.xlu0 %5728
    %5732 = vset.pattern.permute.xlu0 0
    %5733 = vperm.xlu0 %5732, %v5711
    %v5734 = vpop.permute.xlu0 %5733
    %5737 = vset.pattern.permute.xlu0 0
    %5738 = vperm.xlu0 %5737, %v5712
    %v5739 = vpop.permute.xlu0 %5738
    %5742 = vset.pattern.permute.xlu0 0
    %5743 = vperm.xlu0 %5742, %v5713
    %v5744 = vpop.permute.xlu0 %5743
    %5747 = vset.pattern.permute.xlu0 0
    %5748 = vperm.xlu0 %5747, %v5714
    %v5749 = vpop.permute.xlu0 %5748
    %5752 = vset.pattern.permute.xlu0 0
    %5753 = vperm.xlu0 %5752, %v5715
    %v5754 = vpop.permute.xlu0 %5753
    %5757 = vset.pattern.permute.xlu0 0
    %5758 = vperm.xlu0 %5757, %v5716
    %v5759 = vpop.permute.xlu0 %5758
    %5762 = vset.pattern.permute.xlu0 0
    %5763 = vperm.xlu0 %5762, %v5717
    %v5764 = vpop.permute.xlu0 %5763
    %5767 = vset.pattern.permute.xlu0 0
    %5768 = vperm.xlu0 %5767, %v5718
    %v5769 = vpop.permute.xlu0 %5768
    %5772 = vset.pattern.permute.xlu0 0
    %5773 = vperm.xlu0 %5772, %v5719
    %v5774 = vpop.permute.xlu0 %5773
    %5777 = vset.pattern.permute.xlu0 0
    %5778 = vperm.xlu0 %5777, %v5720
    %v5779 = vpop.permute.xlu0 %5778
    %5782 = vset.pattern.permute.xlu0 0
    %5783 = vperm.xlu0 %5782, %v5721
    %v5784 = vpop.permute.xlu0 %5783
    %5787 = vset.pattern.permute.xlu0 0
    %5788 = vperm.xlu0 %5787, %v5722
    %v5789 = vpop.permute.xlu0 %5788
    %5792 = vset.pattern.permute.xlu0 0
    %5793 = vperm.xlu0 %5792, %v5723
    %v5794 = vpop.permute.xlu0 %5793
    %5797 = vset.pattern.permute.xlu0 0
    %5798 = vperm.xlu0 %5797, %v5724
    %v5799 = vpop.permute.xlu0 %5798
    %5802 = vset.pattern.permute.xlu0 0
    %5803 = vperm.xlu0 %5802, %v5725
    %v5804 = vpop.permute.xlu0 %5803
    %v5807 = vsel %vm313, %v5699, 0
    %v5810 = vsel %vm313, %v5700, 0
    %v5813 = vsel %vm313, %v5701, 0
    %v5816 = vsel %vm313, %v5702, 0
    %v5819 = vsel %vm313, %v5703, 0
    %v5822 = vsel %vm313, %v5704, 0
    %v5825 = vsel %vm313, %v5705, 0
    %v5828 = vsel %vm313, %v5706, 0
    %5830 = vmatprep.subr.bf16.mxu0 0
    %5831 = vmatpush1.bf16.msra.mxu0 %v5707
    %5832 = vmatprep.subr.bf16.mxu0 0
    %5833 = vmatpush1.bf16.msra.mxu0 %v5708
    %5834 = vmatprep.subr.bf16.mxu0 0
    %5835 = vmatpush1.bf16.msra.mxu0 0
    %5836 = vmatprep.subr.bf16.mxu0 0
    %5837 = vmatpush1.bf16.msra.mxu0 0
    %5838 = vmatprep.subr.bf16.mxu0 0
    %5839 = vmatpush1.bf16.msra.mxu0 0
    %5840 = vmatprep.subr.bf16.mxu0 0
    %5841 = vmatpush1.bf16.msra.mxu0 0
    %5842 = vmatprep.subr.bf16.mxu0 0
    %5843 = vmatpush1.bf16.msra.mxu0 0
    %5844 = vmatprep.subr.bf16.mxu0 0
    %5845 = vmatpush1.bf16.msra.mxu0 0
    %5846 = vmatprep.subr.bf16.mxu0 0
    %5847 = vmatpush1.bf16.msra.mxu0 0
    %5848 = vmatprep.subr.bf16.mxu0 0
    %5849 = vmatpush1.bf16.msra.mxu0 0
    %5850 = vmatprep.subr.bf16.mxu0 0
    %5851 = vmatpush1.bf16.msra.mxu0 0
    %5852 = vmatprep.subr.bf16.mxu0 0
    %5853 = vmatpush1.bf16.msra.mxu0 0
    %5854 = vmatprep.subr.bf16.mxu0 0
    %5855 = vmatpush1.bf16.msra.mxu0 0
    %5856 = vmatprep.subr.bf16.mxu0 0
    %5857 = vmatpush1.bf16.msra.mxu0 0
    %5858 = vmatprep.subr.bf16.mxu0 0
    %5859 = vmatpush1.bf16.msra.mxu0 0
    %5860 = vmatprep.subr.bf16.mxu0 0
    %5861 = vmatpush1.bf16.msra.mxu0 0
    %5862 = vmatprep.mubr.bf16.mxu0 0
    %5863 = vmatmul.mubr.bf16.gmra.mrb[0].mxu0 %v5807
    %v5864 = vpop.f32.mrb[0].mxu0
    %v5865 = vadd.f32 %v5729, %v5864
    %v5866 = vpop.f32.mrb[0].mxu0
    %v5867 = vpop.f32.mrb[0].mxu0
    %v5868 = vadd.f32 %v5734, %v5867
    %v5869 = vpop.f32.mrb[0].mxu0
    %5870 = vmatprep.mubr.bf16.mxu0 0
    %5871 = vmatmul.mubr.bf16.gmra.mrb[0].mxu0 %v5810
    %v5872 = vpop.f32.mrb[0].mxu0
    %v5873 = vadd.f32 %v5739, %v5872
    %v5874 = vpop.f32.mrb[0].mxu0
    %v5875 = vpop.f32.mrb[0].mxu0
    %v5876 = vadd.f32 %v5744, %v5875
    %v5877 = vpop.f32.mrb[0].mxu0
    %5878 = vmatprep.mubr.bf16.mxu0 0
    %5879 = vmatmul.mubr.bf16.gmra.mrb[0].mxu0 %v5813
    %v5880 = vpop.f32.mrb[0].mxu0
    %v5881 = vadd.f32 %v5749, %v5880
    %v5882 = vpop.f32.mrb[0].mxu0
    %v5883 = vpop.f32.mrb[0].mxu0
    %v5884 = vadd.f32 %v5754, %v5883
    %v5885 = vpop.f32.mrb[0].mxu0
    %5886 = vmatprep.mubr.bf16.mxu0 0
    %5887 = vmatmul.mubr.bf16.gmra.mrb[0].mxu0 %v5816
    %v5888 = vpop.f32.mrb[0].mxu0
    %v5889 = vadd.f32 %v5759, %v5888
    %v5890 = vpop.f32.mrb[0].mxu0
    %v5891 = vpop.f32.mrb[0].mxu0
    %v5892 = vadd.f32 %v5764, %v5891
    %v5893 = vpop.f32.mrb[0].mxu0
    %5894 = vmatprep.mubr.bf16.mxu0 0
    %5895 = vmatmul.mubr.bf16.gmra.mrb[0].mxu0 %v5819
    %v5896 = vpop.f32.mrb[0].mxu0
    %v5897 = vadd.f32 %v5769, %v5896
    %v5898 = vpop.f32.mrb[0].mxu0
    %v5899 = vpop.f32.mrb[0].mxu0
    %v5900 = vadd.f32 %v5774, %v5899
    %v5901 = vpop.f32.mrb[0].mxu0
    %5902 = vmatprep.mubr.bf16.mxu0 0
    %5903 = vmatmul.mubr.bf16.gmra.mrb[0].mxu0 %v5822
    %v5904 = vpop.f32.mrb[0].mxu0
    %v5905 = vadd.f32 %v5779, %v5904
    %v5906 = vpop.f32.mrb[0].mxu0
    %v5907 = vpop.f32.mrb[0].mxu0
    %v5908 = vadd.f32 %v5784, %v5907
    %v5909 = vpop.f32.mrb[0].mxu0
    %5910 = vmatprep.mubr.bf16.mxu0 0
    %5911 = vmatmul.mubr.bf16.gmra.mrb[0].mxu0 %v5825
    %v5912 = vpop.f32.mrb[0].mxu0
    %v5913 = vadd.f32 %v5789, %v5912
    %v5914 = vpop.f32.mrb[0].mxu0
    %v5915 = vpop.f32.mrb[0].mxu0
    %v5916 = vadd.f32 %v5794, %v5915
    %v5917 = vpop.f32.mrb[0].mxu0
    %5918 = vmatprep.mubr.bf16.mxu0 0
    %5919 = vmatmul.mubr.bf16.gmra.mrb[0].mxu0 %v5828
    %v5920 = vpop.f32.mrb[0].mxu0
    %v5921 = vadd.f32 %v5799, %v5920
    %v5922 = vpop.f32.mrb[0].mxu0
    %v5923 = vpop.f32.mrb[0].mxu0
    %v5924 = vadd.f32 %v5804, %v5923
    %v5925 = vpop.f32.mrb[0].mxu0
    %5926 = vdwg.mxu0
    %5927 = vxpose.xlu0.b32.start [1/16] %v5865, 128
    %5928 = vxpose.xlu0.b32.cont [2/16] %v5868, 128
    %5929 = vxpose.xlu0.b32.cont [3/16] %v5873, 128
    %5930 = vxpose.xlu0.b32.cont [4/16] %v5876, 128
    %5931 = vxpose.xlu0.b32.cont [5/16] %v5881, 128
    %5932 = vxpose.xlu0.b32.cont [6/16] %v5884, 128
    %5933 = vxpose.xlu0.b32.cont [7/16] %v5889, 128
    %5934 = vxpose.xlu0.b32.cont [8/16] %v5892, 128
    %5935 = vxpose.xlu0.b32.cont [9/16] %v5897, 128
    %5936 = vxpose.xlu0.b32.cont [10/16] %v5900, 128
    %5937 = vxpose.xlu0.b32.cont [11/16] %v5905, 128
    %5938 = vxpose.xlu0.b32.cont [12/16] %v5908, 128
    %5939 = vxpose.xlu0.b32.cont [13/16] %v5913, 128
    %5940 = vxpose.xlu0.b32.cont [14/16] %v5916, 128
    %5941 = vxpose.xlu0.b32.cont [15/16] %v5921, 128
    %5942 = vxpose.xlu0.b32.end [16/16] %v5924, 128
    %v5943 = vpop.trf.xlu0
    %v5944 = vpop.trf.xlu0
    %v5945 = vpop.trf.xlu0
    %v5946 = vpop.trf.xlu0
    %v5947 = vpop.trf.xlu0
    %v5948 = vpop.trf.xlu0
    %v5949 = vpop.trf.xlu0
    %v5950 = vpop.trf.xlu0
    %v5951 = vpop.trf.xlu0
    %v5952 = vpop.trf.xlu0
    %v5953 = vpop.trf.xlu0
    %v5954 = vpop.trf.xlu0
    %v5955 = vpop.trf.xlu0
    %v5956 = vpop.trf.xlu0
    %v5957 = vpop.trf.xlu0
    %v5958 = vpop.trf.xlu0
    %v5975 = vrot.slane %v5943, 7
    %v5976 = vrot.slane %v5944, 7
    %v5977 = vrot.slane %v5945, 7
    %v5978 = vrot.slane %v5946, 7
    %v5979 = vrot.slane %v5947, 7
    %v5980 = vrot.slane %v5948, 7
    %v5981 = vrot.slane %v5949, 7
    %v5982 = vrot.slane %v5950, 7
    %v5983 = vrot.slane %v5951, 7
    %v5984 = vrot.slane %v5952, 7
    %v5985 = vrot.slane %v5953, 7
    %v5986 = vrot.slane %v5954, 7
    %v5987 = vrot.slane %v5955, 7
    %v5988 = vrot.slane %v5956, 7
    %v5989 = vrot.slane %v5957, 7
    %v5990 = vrot.slane %v5958, 7
    %v6007 = vsel %vm2468, 0.0, %v5975
    %v6008 = vsel %vm2468, 0.0, %v5976
    %v6009 = vsel %vm2468, 0.0, %v5977
    %v6010 = vsel %vm2468, 0.0, %v5978
    %v6011 = vsel %vm2468, 0.0, %v5979
    %v6012 = vsel %vm2468, 0.0, %v5980
    %v6013 = vsel %vm2468, 0.0, %v5981
    %v6014 = vsel %vm2468, 0.0, %v5982
    %v6015 = vsel %vm2468, 0.0, %v5983
    %v6016 = vsel %vm2468, 0.0, %v5984
    %v6017 = vsel %vm2468, 0.0, %v5985
    %v6018 = vsel %vm2468, 0.0, %v5986
    %v6019 = vsel %vm2468, 0.0, %v5987
    %v6020 = vsel %vm2468, 0.0, %v5988
    %v6021 = vsel %vm2468, 0.0, %v5989
    %v6022 = vsel %vm2468, 0.0, %v5990
    %v6023 = vsel %vm2468, %v5975, 0.0
    %v6024 = vsel %vm2468, %v5976, 0.0
    %v6025 = vsel %vm2468, %v5977, 0.0
    %v6026 = vsel %vm2468, %v5978, 0.0
    %v6027 = vsel %vm2468, %v5979, 0.0
    %v6028 = vsel %vm2468, %v5980, 0.0
    %v6029 = vsel %vm2468, %v5981, 0.0
    %v6030 = vsel %vm2468, %v5982, 0.0
    %v6031 = vsel %vm2468, %v5983, 0.0
    %v6032 = vsel %vm2468, %v5984, 0.0
    %v6033 = vsel %vm2468, %v5985, 0.0
    %v6034 = vsel %vm2468, %v5986, 0.0
    %v6035 = vsel %vm2468, %v5987, 0.0
    %v6036 = vsel %vm2468, %v5988, 0.0
    %v6037 = vsel %vm2468, %v5989, 0.0
    %v6038 = vsel %vm2468, %v5990, 0.0
    %s6039 = scalar_lea.vmem %s14, 16
    %v6040 = vld [vmem:[%s6039] sm:$0xff]
    %v6041 = vld [vmem:[%s6039 + $0x8] sm:$0x1]
    %v6042 = vlaneseq
    %v6043 = vshrl.u32 %v6042, 7
    %v6044 = vsub.s32 0, %v6043
    %v6045 = vrot.slane %v6040, %v6044
    %v6046 = vmul.f32 %v6045, 0.0
    %v6047 = vmul.f32 %v6007, %v6045
    %v6048 = vmul.f32 %v6008, %v6045
    %v6049 = vmul.f32 %v6009, %v6045
    %v6050 = vmul.f32 %v6010, %v6045
    %v6051 = vmul.f32 %v6011, %v6045
    %v6052 = vmul.f32 %v6012, %v6045
    %v6053 = vmul.f32 %v6013, %v6045
    %v6054 = vmul.f32 %v6015, %v6045
    %v6055 = vmul.f32 %v6016, %v6045
    %v6056 = vmul.f32 %v6017, %v6045
    %v6057 = vmul.f32 %v6018, %v6045
    %v6058 = vmul.f32 %v6019, %v6045
    %v6059 = vmul.f32 %v6020, %v6045
    %v6060 = vmul.f32 %v6021, %v6045
    %v6061 = vadd.f32 %v6046, 0.0
    %v6062 = vadd.f32 %v6047, 0.0
    %v6063 = vadd.f32 %v6048, 0.0
    %v6064 = vadd.f32 %v6049, 0.0
    %v6065 = vadd.f32 %v6050, 0.0
    %v6066 = vadd.f32 %v6051, 0.0
    %v6067 = vadd.f32 %v6052, 0.0
    %v6068 = vadd.f32 %v6053, 0.0
    %v6069 = vadd.f32 %v6054, 0.0
    %v6070 = vadd.f32 %v6055, 0.0
    %v6071 = vadd.f32 %v6056, 0.0
    %v6072 = vadd.f32 %v6057, 0.0
    %v6073 = vadd.f32 %v6058, 0.0
    %v6074 = vadd.f32 %v6059, 0.0
    %v6075 = vadd.f32 %v6060, 0.0
    %v6076 = vlaneseq
    %v6077 = vshrl.u32 %v6076, 7
    %v6078 = vsub.s32 1, %v6077
    %v6079 = vrot.slane %v6040, %v6078
    %v6080 = vmul.f32 %v6079, 0.0
    %v6081 = vmul.f32 %v6007, %v6079
    %v6082 = vmul.f32 %v6023, %v6079
    %v6083 = vmul.f32 %v6008, %v6079
    %v6084 = vmul.f32 %v6024, %v6079
    %v6085 = vmul.f32 %v6009, %v6079
    %v6086 = vmul.f32 %v6025, %v6079
    %v6087 = vmul.f32 %v6010, %v6079
    %v6088 = vmul.f32 %v6026, %v6079
    %v6089 = vmul.f32 %v6011, %v6079
    %v6090 = vmul.f32 %v6027, %v6079
    %v6091 = vmul.f32 %v6012, %v6079
    %v6092 = vmul.f32 %v6028, %v6079
    %v6093 = vmul.f32 %v6013, %v6079
    %v6094 = vmul.f32 %v6029, %v6079
    %v6095 = vmul.f32 %v6015, %v6079
    %v6096 = vmul.f32 %v6031, %v6079
    %v6097 = vmul.f32 %v6016, %v6079
    %v6098 = vmul.f32 %v6032, %v6079
    %v6099 = vmul.f32 %v6017, %v6079
    %v6100 = vmul.f32 %v6033, %v6079
    %v6101 = vmul.f32 %v6018, %v6079
    %v6102 = vmul.f32 %v6034, %v6079
    %v6103 = vmul.f32 %v6019, %v6079
    %v6104 = vmul.f32 %v6035, %v6079
    %v6105 = vmul.f32 %v6020, %v6079
    %v6106 = vmul.f32 %v6036, %v6079
    %v6107 = vmul.f32 %v6021, %v6079
    %v6108 = vmul.f32 %v6037, %v6079
    %v6138 = vrot.slane %v6080, 1
    %v6139 = vsel %vm2599, %v6138, %v6138
    %v6140 = vrot.slane %v6081, 1
    %v6141 = vrot.slane %v6082, 1
    %v6142 = vsel %vm2599, %v6140, %v6141
    %v6143 = vrot.slane %v6083, 1
    %v6144 = vrot.slane %v6084, 1
    %v6145 = vsel %vm2599, %v6143, %v6144
    %v6146 = vrot.slane %v6085, 1
    %v6147 = vrot.slane %v6086, 1
    %v6148 = vsel %vm2599, %v6146, %v6147
    %v6149 = vrot.slane %v6087, 1
    %v6150 = vrot.slane %v6088, 1
    %v6151 = vsel %vm2599, %v6149, %v6150
    %v6152 = vrot.slane %v6089, 1
    %v6153 = vrot.slane %v6090, 1
    %v6154 = vsel %vm2599, %v6152, %v6153
    %v6155 = vrot.slane %v6091, 1
    %v6156 = vrot.slane %v6092, 1
    %v6157 = vsel %vm2599, %v6155, %v6156
    %v6158 = vrot.slane %v6093, 1
    %v6159 = vrot.slane %v6094, 1
    %v6160 = vsel %vm2599, %v6158, %v6159
    %v6161 = vrot.slane %v6095, 1
    %v6162 = vrot.slane %v6096, 1
    %v6163 = vsel %vm2599, %v6161, %v6162
    %v6164 = vrot.slane %v6097, 1
    %v6165 = vrot.slane %v6098, 1
    %v6166 = vsel %vm2599, %v6164, %v6165
    %v6167 = vrot.slane %v6099, 1
    %v6168 = vrot.slane %v6100, 1
    %v6169 = vsel %vm2599, %v6167, %v6168
    %v6170 = vrot.slane %v6101, 1
    %v6171 = vrot.slane %v6102, 1
    %v6172 = vsel %vm2599, %v6170, %v6171
    %v6173 = vrot.slane %v6103, 1
    %v6174 = vrot.slane %v6104, 1
    %v6175 = vsel %vm2599, %v6173, %v6174
    %v6176 = vrot.slane %v6105, 1
    %v6177 = vrot.slane %v6106, 1
    %v6178 = vsel %vm2599, %v6176, %v6177
    %v6179 = vrot.slane %v6107, 1
    %v6180 = vrot.slane %v6108, 1
    %v6181 = vsel %vm2599, %v6179, %v6180
    %v6197 = vadd.f32 %v6061, %v6139
    %v6198 = vadd.f32 %v6062, %v6142
    %v6199 = vadd.f32 %v6063, %v6145
    %v6200 = vadd.f32 %v6064, %v6148
    %v6201 = vadd.f32 %v6065, %v6151
    %v6202 = vadd.f32 %v6066, %v6154
    %v6203 = vadd.f32 %v6067, %v6157
    %v6204 = vadd.f32 %v6068, %v6160
    %v6205 = vadd.f32 %v6069, %v6163
    %v6206 = vadd.f32 %v6070, %v6166
    %v6207 = vadd.f32 %v6071, %v6169
    %v6208 = vadd.f32 %v6072, %v6172
    %v6209 = vadd.f32 %v6073, %v6175
    %v6210 = vadd.f32 %v6074, %v6178
    %v6211 = vadd.f32 %v6075, %v6181
    %v6212 = vlaneseq
    %v6213 = vshrl.u32 %v6212, 7
    %v6214 = vsub.s32 2, %v6213
    %v6215 = vrot.slane %v6040, %v6214
    %v6216 = vmul.f32 %v6215, 0.0
    %v6217 = vmul.f32 %v6007, %v6215
    %v6218 = vmul.f32 %v6023, %v6215
    %v6219 = vmul.f32 %v6008, %v6215
    %v6220 = vmul.f32 %v6024, %v6215
    %v6221 = vmul.f32 %v6009, %v6215
    %v6222 = vmul.f32 %v6025, %v6215
    %v6223 = vmul.f32 %v6010, %v6215
    %v6224 = vmul.f32 %v6026, %v6215
    %v6225 = vmul.f32 %v6011, %v6215
    %v6226 = vmul.f32 %v6027, %v6215
    %v6227 = vmul.f32 %v6012, %v6215
    %v6228 = vmul.f32 %v6028, %v6215
    %v6229 = vmul.f32 %v6013, %v6215
    %v6230 = vmul.f32 %v6029, %v6215
    %v6231 = vmul.f32 %v6015, %v6215
    %v6232 = vmul.f32 %v6031, %v6215
    %v6233 = vmul.f32 %v6016, %v6215
    %v6234 = vmul.f32 %v6032, %v6215
    %v6235 = vmul.f32 %v6017, %v6215
    %v6236 = vmul.f32 %v6033, %v6215
    %v6237 = vmul.f32 %v6018, %v6215
    %v6238 = vmul.f32 %v6034, %v6215
    %v6239 = vmul.f32 %v6019, %v6215
    %v6240 = vmul.f32 %v6035, %v6215
    %v6241 = vmul.f32 %v6020, %v6215
    %v6242 = vmul.f32 %v6036, %v6215
    %v6243 = vmul.f32 %v6021, %v6215
    %v6244 = vmul.f32 %v6037, %v6215
    %v6274 = vrot.slane %v6216, 2
    %v6275 = vsel %vm2736, %v6274, %v6274
    %v6276 = vrot.slane %v6217, 2
    %v6277 = vrot.slane %v6218, 2
    %v6278 = vsel %vm2736, %v6276, %v6277
    %v6279 = vrot.slane %v6219, 2
    %v6280 = vrot.slane %v6220, 2
    %v6281 = vsel %vm2736, %v6279, %v6280
    %v6282 = vrot.slane %v6221, 2
    %v6283 = vrot.slane %v6222, 2
    %v6284 = vsel %vm2736, %v6282, %v6283
    %v6285 = vrot.slane %v6223, 2
    %v6286 = vrot.slane %v6224, 2
    %v6287 = vsel %vm2736, %v6285, %v6286
    %v6288 = vrot.slane %v6225, 2
    %v6289 = vrot.slane %v6226, 2
    %v6290 = vsel %vm2736, %v6288, %v6289
    %v6291 = vrot.slane %v6227, 2
    %v6292 = vrot.slane %v6228, 2
    %v6293 = vsel %vm2736, %v6291, %v6292
    %v6294 = vrot.slane %v6229, 2
    %v6295 = vrot.slane %v6230, 2
    %v6296 = vsel %vm2736, %v6294, %v6295
    %v6297 = vrot.slane %v6231, 2
    %v6298 = vrot.slane %v6232, 2
    %v6299 = vsel %vm2736, %v6297, %v6298
    %v6300 = vrot.slane %v6233, 2
    %v6301 = vrot.slane %v6234, 2
    %v6302 = vsel %vm2736, %v6300, %v6301
    %v6303 = vrot.slane %v6235, 2
    %v6304 = vrot.slane %v6236, 2
    %v6305 = vsel %vm2736, %v6303, %v6304
    %v6306 = vrot.slane %v6237, 2
    %v6307 = vrot.slane %v6238, 2
    %v6308 = vsel %vm2736, %v6306, %v6307
    %v6309 = vrot.slane %v6239, 2
    %v6310 = vrot.slane %v6240, 2
    %v6311 = vsel %vm2736, %v6309, %v6310
    %v6312 = vrot.slane %v6241, 2
    %v6313 = vrot.slane %v6242, 2
    %v6314 = vsel %vm2736, %v6312, %v6313
    %v6315 = vrot.slane %v6243, 2
    %v6316 = vrot.slane %v6244, 2
    %v6317 = vsel %vm2736, %v6315, %v6316
    %v6333 = vadd.f32 %v6197, %v6275
    %v6334 = vadd.f32 %v6198, %v6278
    %v6335 = vadd.f32 %v6199, %v6281
    %v6336 = vadd.f32 %v6200, %v6284
    %v6337 = vadd.f32 %v6201, %v6287
    %v6338 = vadd.f32 %v6202, %v6290
    %v6339 = vadd.f32 %v6203, %v6293
    %v6340 = vadd.f32 %v6204, %v6296
    %v6341 = vadd.f32 %v6205, %v6299
    %v6342 = vadd.f32 %v6206, %v6302
    %v6343 = vadd.f32 %v6207, %v6305
    %v6344 = vadd.f32 %v6208, %v6308
    %v6345 = vadd.f32 %v6209, %v6311
    %v6346 = vadd.f32 %v6210, %v6314
    %v6347 = vadd.f32 %v6211, %v6317
    %v6348 = vlaneseq
    %v6349 = vshrl.u32 %v6348, 7
    %v6350 = vsub.s32 3, %v6349
    %v6351 = vrot.slane %v6040, %v6350
    %v6352 = vmul.f32 %v6007, %v6351
    %v6353 = vmul.f32 %v6008, %v6351
    %v6354 = vmul.f32 %v6009, %v6351
    %v6355 = vmul.f32 %v6010, %v6351
    %v6356 = vmul.f32 %v6011, %v6351
    %v6357 = vmul.f32 %v6012, %v6351
    %v6358 = vmul.f32 %v6013, %v6351
    %v6359 = vmul.f32 %v6014, %v6351
    %v6360 = vmul.f32 %v6015, %v6351
    %v6361 = vmul.f32 %v6016, %v6351
    %v6362 = vmul.f32 %v6017, %v6351
    %v6363 = vmul.f32 %v6018, %v6351
    %v6364 = vmul.f32 %v6019, %v6351
    %v6365 = vmul.f32 %v6020, %v6351
    %v6366 = vmul.f32 %v6021, %v6351
    %v6367 = vmul.f32 %v6022, %v6351
    %v6368 = vadd.f32 %v6333, %v6352
    %v6369 = vadd.f32 %v6334, %v6353
    %v6370 = vadd.f32 %v6335, %v6354
    %v6371 = vadd.f32 %v6336, %v6355
    %v6372 = vadd.f32 %v6337, %v6356
    %v6373 = vadd.f32 %v6338, %v6357
    %v6374 = vadd.f32 %v6339, %v6358
    %v6375 = vadd.f32 %v6340, %v6359
    %v6376 = vadd.f32 %v6333, %v6360
    %v6377 = vadd.f32 %v6341, %v6361
    %v6378 = vadd.f32 %v6342, %v6362
    %v6379 = vadd.f32 %v6343, %v6363
    %v6380 = vadd.f32 %v6344, %v6364
    %v6381 = vadd.f32 %v6345, %v6365
    %v6382 = vadd.f32 %v6346, %v6366
    %v6383 = vadd.f32 %v6347, %v6367
    %v6384 = vlaneseq
    %v6385 = vshrl.u32 %v6384, 7
    %v6386 = vsub.s32 4, %v6385
    %v6387 = vrot.slane %v6040, %v6386
    %v6388 = vmul.f32 %v6007, %v6387
    %v6389 = vmul.f32 %v6023, %v6387
    %v6390 = vmul.f32 %v6008, %v6387
    %v6391 = vmul.f32 %v6024, %v6387
    %v6392 = vmul.f32 %v6009, %v6387
    %v6393 = vmul.f32 %v6025, %v6387
    %v6394 = vmul.f32 %v6010, %v6387
    %v6395 = vmul.f32 %v6026, %v6387
    %v6396 = vmul.f32 %v6011, %v6387
    %v6397 = vmul.f32 %v6027, %v6387
    %v6398 = vmul.f32 %v6012, %v6387
    %v6399 = vmul.f32 %v6028, %v6387
    %v6400 = vmul.f32 %v6013, %v6387
    %v6401 = vmul.f32 %v6029, %v6387
    %v6402 = vmul.f32 %v6014, %v6387
    %v6403 = vmul.f32 %v6030, %v6387
    %v6404 = vmul.f32 %v6015, %v6387
    %v6405 = vmul.f32 %v6031, %v6387
    %v6406 = vmul.f32 %v6016, %v6387
    %v6407 = vmul.f32 %v6032, %v6387
    %v6408 = vmul.f32 %v6017, %v6387
    %v6409 = vmul.f32 %v6033, %v6387
    %v6410 = vmul.f32 %v6018, %v6387
    %v6411 = vmul.f32 %v6034, %v6387
    %v6412 = vmul.f32 %v6019, %v6387
    %v6413 = vmul.f32 %v6035, %v6387
    %v6414 = vmul.f32 %v6020, %v6387
    %v6415 = vmul.f32 %v6036, %v6387
    %v6416 = vmul.f32 %v6021, %v6387
    %v6417 = vmul.f32 %v6037, %v6387
    %v6418 = vmul.f32 %v6022, %v6387
    %v6419 = vmul.f32 %v6038, %v6387
    %v6452 = vrot.slane %v6388, 1
    %v6453 = vrot.slane %v6389, 1
    %v6454 = vsel %vm2599, %v6452, %v6453
    %v6455 = vrot.slane %v6390, 1
    %v6456 = vrot.slane %v6391, 1
    %v6457 = vsel %vm2599, %v6455, %v6456
    %v6458 = vrot.slane %v6392, 1
    %v6459 = vrot.slane %v6393, 1
    %v6460 = vsel %vm2599, %v6458, %v6459
    %v6461 = vrot.slane %v6394, 1
    %v6462 = vrot.slane %v6395, 1
    %v6463 = vsel %vm2599, %v6461, %v6462
    %v6464 = vrot.slane %v6396, 1
    %v6465 = vrot.slane %v6397, 1
    %v6466 = vsel %vm2599, %v6464, %v6465
    %v6467 = vrot.slane %v6398, 1
    %v6468 = vrot.slane %v6399, 1
    %v6469 = vsel %vm2599, %v6467, %v6468
    %v6470 = vrot.slane %v6400, 1
    %v6471 = vrot.slane %v6401, 1
    %v6472 = vsel %vm2599, %v6470, %v6471
    %v6473 = vrot.slane %v6402, 1
    %v6474 = vrot.slane %v6403, 1
    %v6475 = vsel %vm2599, %v6473, %v6474
    %v6476 = vrot.slane %v6404, 1
    %v6477 = vrot.slane %v6405, 1
    %v6478 = vsel %vm2599, %v6476, %v6477
    %v6479 = vrot.slane %v6406, 1
    %v6480 = vrot.slane %v6407, 1
    %v6481 = vsel %vm2599, %v6479, %v6480
    %v6482 = vrot.slane %v6408, 1
    %v6483 = vrot.slane %v6409, 1
    %v6484 = vsel %vm2599, %v6482, %v6483
    %v6485 = vrot.slane %v6410, 1
    %v6486 = vrot.slane %v6411, 1
    %v6487 = vsel %vm2599, %v6485, %v6486
    %v6488 = vrot.slane %v6412, 1
    %v6489 = vrot.slane %v6413, 1
    %v6490 = vsel %vm2599, %v6488, %v6489
    %v6491 = vrot.slane %v6414, 1
    %v6492 = vrot.slane %v6415, 1
    %v6493 = vsel %vm2599, %v6491, %v6492
    %v6494 = vrot.slane %v6416, 1
    %v6495 = vrot.slane %v6417, 1
    %v6496 = vsel %vm2599, %v6494, %v6495
    %v6497 = vrot.slane %v6418, 1
    %v6498 = vrot.slane %v6419, 1
    %v6499 = vsel %vm2599, %v6497, %v6498
    %v6516 = vadd.f32 %v6368, %v6454
    %v6517 = vadd.f32 %v6369, %v6457
    %v6518 = vadd.f32 %v6370, %v6460
    %v6519 = vadd.f32 %v6371, %v6463
    %v6520 = vadd.f32 %v6372, %v6466
    %v6521 = vadd.f32 %v6373, %v6469
    %v6522 = vadd.f32 %v6374, %v6472
    %v6523 = vadd.f32 %v6375, %v6475
    %v6524 = vadd.f32 %v6376, %v6478
    %v6525 = vadd.f32 %v6377, %v6481
    %v6526 = vadd.f32 %v6378, %v6484
    %v6527 = vadd.f32 %v6379, %v6487
    %v6528 = vadd.f32 %v6380, %v6490
    %v6529 = vadd.f32 %v6381, %v6493
    %v6530 = vadd.f32 %v6382, %v6496
    %v6531 = vadd.f32 %v6383, %v6499
    %v6532 = vlaneseq
    %v6533 = vshrl.u32 %v6532, 7
    %v6534 = vsub.s32 5, %v6533
    %v6535 = vrot.slane %v6040, %v6534
    %v6536 = vmul.f32 %v6007, %v6535
    %v6537 = vmul.f32 %v6023, %v6535
    %v6538 = vmul.f32 %v6008, %v6535
    %v6539 = vmul.f32 %v6024, %v6535
    %v6540 = vmul.f32 %v6009, %v6535
    %v6541 = vmul.f32 %v6025, %v6535
    %v6542 = vmul.f32 %v6010, %v6535
    %v6543 = vmul.f32 %v6026, %v6535
    %v6544 = vmul.f32 %v6011, %v6535
    %v6545 = vmul.f32 %v6027, %v6535
    %v6546 = vmul.f32 %v6012, %v6535
    %v6547 = vmul.f32 %v6028, %v6535
    %v6548 = vmul.f32 %v6013, %v6535
    %v6549 = vmul.f32 %v6029, %v6535
    %v6550 = vmul.f32 %v6014, %v6535
    %v6551 = vmul.f32 %v6030, %v6535
    %v6552 = vmul.f32 %v6015, %v6535
    %v6553 = vmul.f32 %v6031, %v6535
    %v6554 = vmul.f32 %v6016, %v6535
    %v6555 = vmul.f32 %v6032, %v6535
    %v6556 = vmul.f32 %v6017, %v6535
    %v6557 = vmul.f32 %v6033, %v6535
    %v6558 = vmul.f32 %v6018, %v6535
    %v6559 = vmul.f32 %v6034, %v6535
    %v6560 = vmul.f32 %v6019, %v6535
    %v6561 = vmul.f32 %v6035, %v6535
    %v6562 = vmul.f32 %v6020, %v6535
    %v6563 = vmul.f32 %v6036, %v6535
    %v6564 = vmul.f32 %v6021, %v6535
    %v6565 = vmul.f32 %v6037, %v6535
    %v6566 = vmul.f32 %v6022, %v6535
    %v6567 = vmul.f32 %v6038, %v6535
    %v6600 = vrot.slane %v6536, 2
    %v6601 = vrot.slane %v6537, 2
    %v6602 = vsel %vm2736, %v6600, %v6601
    %v6603 = vrot.slane %v6538, 2
    %v6604 = vrot.slane %v6539, 2
    %v6605 = vsel %vm2736, %v6603, %v6604
    %v6606 = vrot.slane %v6540, 2
    %v6607 = vrot.slane %v6541, 2
    %v6608 = vsel %vm2736, %v6606, %v6607
    %v6609 = vrot.slane %v6542, 2
    %v6610 = vrot.slane %v6543, 2
    %v6611 = vsel %vm2736, %v6609, %v6610
    %v6612 = vrot.slane %v6544, 2
    %v6613 = vrot.slane %v6545, 2
    %v6614 = vsel %vm2736, %v6612, %v6613
    %v6615 = vrot.slane %v6546, 2
    %v6616 = vrot.slane %v6547, 2
    %v6617 = vsel %vm2736, %v6615, %v6616
    %v6618 = vrot.slane %v6548, 2
    %v6619 = vrot.slane %v6549, 2
    %v6620 = vsel %vm2736, %v6618, %v6619
    %v6621 = vrot.slane %v6550, 2
    %v6622 = vrot.slane %v6551, 2
    %v6623 = vsel %vm2736, %v6621, %v6622
    %v6624 = vrot.slane %v6552, 2
    %v6625 = vrot.slane %v6553, 2
    %v6626 = vsel %vm2736, %v6624, %v6625
    %v6627 = vrot.slane %v6554, 2
    %v6628 = vrot.slane %v6555, 2
    %v6629 = vsel %vm2736, %v6627, %v6628
    %v6630 = vrot.slane %v6556, 2
    %v6631 = vrot.slane %v6557, 2
    %v6632 = vsel %vm2736, %v6630, %v6631
    %v6633 = vrot.slane %v6558, 2
    %v6634 = vrot.slane %v6559, 2
    %v6635 = vsel %vm2736, %v6633, %v6634
    %v6636 = vrot.slane %v6560, 2
    %v6637 = vrot.slane %v6561, 2
    %v6638 = vsel %vm2736, %v6636, %v6637
    %v6639 = vrot.slane %v6562, 2
    %v6640 = vrot.slane %v6563, 2
    %v6641 = vsel %vm2736, %v6639, %v6640
    %v6642 = vrot.slane %v6564, 2
    %v6643 = vrot.slane %v6565, 2
    %v6644 = vsel %vm2736, %v6642, %v6643
    %v6645 = vrot.slane %v6566, 2
    %v6646 = vrot.slane %v6567, 2
    %v6647 = vsel %vm2736, %v6645, %v6646
    %v6664 = vadd.f32 %v6516, %v6602
    %v6665 = vadd.f32 %v6517, %v6605
    %v6666 = vadd.f32 %v6518, %v6608
    %v6667 = vadd.f32 %v6519, %v6611
    %v6668 = vadd.f32 %v6520, %v6614
    %v6669 = vadd.f32 %v6521, %v6617
    %v6670 = vadd.f32 %v6522, %v6620
    %v6671 = vadd.f32 %v6523, %v6623
    %v6672 = vadd.f32 %v6524, %v6626
    %v6673 = vadd.f32 %v6525, %v6629
    %v6674 = vadd.f32 %v6526, %v6632
    %v6675 = vadd.f32 %v6527, %v6635
    %v6676 = vadd.f32 %v6528, %v6638
    %v6677 = vadd.f32 %v6529, %v6641
    %v6678 = vadd.f32 %v6530, %v6644
    %v6679 = vadd.f32 %v6531, %v6647
    %v6680 = vlaneseq
    %v6681 = vshrl.u32 %v6680, 7
    %v6682 = vsub.s32 6, %v6681
    %v6683 = vrot.slane %v6040, %v6682
    %v6684 = vmul.f32 %v6008, %v6683
    %v6685 = vmul.f32 %v6009, %v6683
    %v6686 = vmul.f32 %v6010, %v6683
    %v6687 = vmul.f32 %v6011, %v6683
    %v6688 = vmul.f32 %v6012, %v6683
    %v6689 = vmul.f32 %v6013, %v6683
    %v6690 = vmul.f32 %v6014, %v6683
    %v6691 = vmul.f32 %v6683, 0.0
    %v6692 = vmul.f32 %v6016, %v6683
    %v6693 = vmul.f32 %v6017, %v6683
    %v6694 = vmul.f32 %v6018, %v6683
    %v6695 = vmul.f32 %v6019, %v6683
    %v6696 = vmul.f32 %v6020, %v6683
    %v6697 = vmul.f32 %v6021, %v6683
    %v6698 = vmul.f32 %v6022, %v6683
    %v6699 = vadd.f32 %v6664, %v6684
    %v6700 = vadd.f32 %v6665, %v6685
    %v6701 = vadd.f32 %v6666, %v6686
    %v6702 = vadd.f32 %v6667, %v6687
    %v6703 = vadd.f32 %v6668, %v6688
    %v6704 = vadd.f32 %v6669, %v6689
    %v6705 = vadd.f32 %v6670, %v6690
    %v6706 = vadd.f32 %v6671, %v6691
    %v6707 = vadd.f32 %v6672, %v6692
    %v6708 = vadd.f32 %v6673, %v6693
    %v6709 = vadd.f32 %v6674, %v6694
    %v6710 = vadd.f32 %v6675, %v6695
    %v6711 = vadd.f32 %v6676, %v6696
    %v6712 = vadd.f32 %v6677, %v6697
    %v6713 = vadd.f32 %v6678, %v6698
    %v6714 = vadd.f32 %v6679, %v6691
    %v6715 = vlaneseq
    %v6716 = vshrl.u32 %v6715, 7
    %v6717 = vsub.s32 7, %v6716
    %v6718 = vrot.slane %v6040, %v6717
    %v6719 = vmul.f32 %v6008, %v6718
    %v6720 = vmul.f32 %v6024, %v6718
    %v6721 = vmul.f32 %v6009, %v6718
    %v6722 = vmul.f32 %v6025, %v6718
    %v6723 = vmul.f32 %v6010, %v6718
    %v6724 = vmul.f32 %v6026, %v6718
    %v6725 = vmul.f32 %v6011, %v6718
    %v6726 = vmul.f32 %v6027, %v6718
    %v6727 = vmul.f32 %v6012, %v6718
    %v6728 = vmul.f32 %v6028, %v6718
    %v6729 = vmul.f32 %v6013, %v6718
    %v6730 = vmul.f32 %v6029, %v6718
    %v6731 = vmul.f32 %v6014, %v6718
    %v6732 = vmul.f32 %v6030, %v6718
    %v6733 = vmul.f32 %v6718, 0.0
    %v6734 = vmul.f32 %v6016, %v6718
    %v6735 = vmul.f32 %v6032, %v6718
    %v6736 = vmul.f32 %v6017, %v6718
    %v6737 = vmul.f32 %v6033, %v6718
    %v6738 = vmul.f32 %v6018, %v6718
    %v6739 = vmul.f32 %v6034, %v6718
    %v6740 = vmul.f32 %v6019, %v6718
    %v6741 = vmul.f32 %v6035, %v6718
    %v6742 = vmul.f32 %v6020, %v6718
    %v6743 = vmul.f32 %v6036, %v6718
    %v6744 = vmul.f32 %v6021, %v6718
    %v6745 = vmul.f32 %v6037, %v6718
    %v6746 = vmul.f32 %v6022, %v6718
    %v6747 = vmul.f32 %v6038, %v6718
    %v6777 = vrot.slane %v6719, 1
    %v6778 = vrot.slane %v6720, 1
    %v6779 = vsel %vm2599, %v6777, %v6778
    %v6780 = vrot.slane %v6721, 1
    %v6781 = vrot.slane %v6722, 1
    %v6782 = vsel %vm2599, %v6780, %v6781
    %v6783 = vrot.slane %v6723, 1
    %v6784 = vrot.slane %v6724, 1
    %v6785 = vsel %vm2599, %v6783, %v6784
    %v6786 = vrot.slane %v6725, 1
    %v6787 = vrot.slane %v6726, 1
    %v6788 = vsel %vm2599, %v6786, %v6787
    %v6789 = vrot.slane %v6727, 1
    %v6790 = vrot.slane %v6728, 1
    %v6791 = vsel %vm2599, %v6789, %v6790
    %v6792 = vrot.slane %v6729, 1
    %v6793 = vrot.slane %v6730, 1
    %v6794 = vsel %vm2599, %v6792, %v6793
    %v6795 = vrot.slane %v6731, 1
    %v6796 = vrot.slane %v6732, 1
    %v6797 = vsel %vm2599, %v6795, %v6796
    %v6798 = vrot.slane %v6733, 1
    %v6799 = vsel %vm2599, %v6798, %v6798
    %v6800 = vrot.slane %v6734, 1
    %v6801 = vrot.slane %v6735, 1
    %v6802 = vsel %vm2599, %v6800, %v6801
    %v6803 = vrot.slane %v6736, 1
    %v6804 = vrot.slane %v6737, 1
    %v6805 = vsel %vm2599, %v6803, %v6804
    %v6806 = vrot.slane %v6738, 1
    %v6807 = vrot.slane %v6739, 1
    %v6808 = vsel %vm2599, %v6806, %v6807
    %v6809 = vrot.slane %v6740, 1
    %v6810 = vrot.slane %v6741, 1
    %v6811 = vsel %vm2599, %v6809, %v6810
    %v6812 = vrot.slane %v6742, 1
    %v6813 = vrot.slane %v6743, 1
    %v6814 = vsel %vm2599, %v6812, %v6813
    %v6815 = vrot.slane %v6744, 1
    %v6816 = vrot.slane %v6745, 1
    %v6817 = vsel %vm2599, %v6815, %v6816
    %v6818 = vrot.slane %v6746, 1
    %v6819 = vrot.slane %v6747, 1
    %v6820 = vsel %vm2599, %v6818, %v6819
    %v6836 = vadd.f32 %v6699, %v6779
    %v6837 = vadd.f32 %v6700, %v6782
    %v6838 = vadd.f32 %v6701, %v6785
    %v6839 = vadd.f32 %v6702, %v6788
    %v6840 = vadd.f32 %v6703, %v6791
    %v6841 = vadd.f32 %v6704, %v6794
    %v6842 = vadd.f32 %v6705, %v6797
    %v6843 = vadd.f32 %v6706, %v6799
    %v6844 = vadd.f32 %v6707, %v6802
    %v6845 = vadd.f32 %v6708, %v6805
    %v6846 = vadd.f32 %v6709, %v6808
    %v6847 = vadd.f32 %v6710, %v6811
    %v6848 = vadd.f32 %v6711, %v6814
    %v6849 = vadd.f32 %v6712, %v6817
    %v6850 = vadd.f32 %v6713, %v6820
    %v6851 = vadd.f32 %v6714, %v6799
    %v6852 = vlaneseq
    %v6853 = vshrl.u32 %v6852, 7
    %v6854 = vsub.s32 0, %v6853
    %v6855 = vrot.slane %v6041, %v6854
    %v6856 = vmul.f32 %v6008, %v6855
    %v6857 = vmul.f32 %v6024, %v6855
    %v6858 = vmul.f32 %v6009, %v6855
    %v6859 = vmul.f32 %v6025, %v6855
    %v6860 = vmul.f32 %v6010, %v6855
    %v6861 = vmul.f32 %v6026, %v6855
    %v6862 = vmul.f32 %v6011, %v6855
    %v6863 = vmul.f32 %v6027, %v6855
    %v6864 = vmul.f32 %v6012, %v6855
    %v6865 = vmul.f32 %v6028, %v6855
    %v6866 = vmul.f32 %v6013, %v6855
    %v6867 = vmul.f32 %v6029, %v6855
    %v6868 = vmul.f32 %v6014, %v6855
    %v6869 = vmul.f32 %v6030, %v6855
    %v6870 = vmul.f32 %v6855, 0.0
    %v6871 = vmul.f32 %v6016, %v6855
    %v6872 = vmul.f32 %v6032, %v6855
    %v6873 = vmul.f32 %v6017, %v6855
    %v6874 = vmul.f32 %v6033, %v6855
    %v6875 = vmul.f32 %v6018, %v6855
    %v6876 = vmul.f32 %v6034, %v6855
    %v6877 = vmul.f32 %v6019, %v6855
    %v6878 = vmul.f32 %v6035, %v6855
    %v6879 = vmul.f32 %v6020, %v6855
    %v6880 = vmul.f32 %v6036, %v6855
    %v6881 = vmul.f32 %v6021, %v6855
    %v6882 = vmul.f32 %v6037, %v6855
    %v6883 = vmul.f32 %v6022, %v6855
    %v6884 = vmul.f32 %v6038, %v6855
    %v6914 = vrot.slane %v6856, 2
    %v6915 = vrot.slane %v6857, 2
    %v6916 = vsel %vm2736, %v6914, %v6915
    %v6917 = vrot.slane %v6858, 2
    %v6918 = vrot.slane %v6859, 2
    %v6919 = vsel %vm2736, %v6917, %v6918
    %v6920 = vrot.slane %v6860, 2
    %v6921 = vrot.slane %v6861, 2
    %v6922 = vsel %vm2736, %v6920, %v6921
    %v6923 = vrot.slane %v6862, 2
    %v6924 = vrot.slane %v6863, 2
    %v6925 = vsel %vm2736, %v6923, %v6924
    %v6926 = vrot.slane %v6864, 2
    %v6927 = vrot.slane %v6865, 2
    %v6928 = vsel %vm2736, %v6926, %v6927
    %v6929 = vrot.slane %v6866, 2
    %v6930 = vrot.slane %v6867, 2
    %v6931 = vsel %vm2736, %v6929, %v6930
    %v6932 = vrot.slane %v6868, 2
    %v6933 = vrot.slane %v6869, 2
    %v6934 = vsel %vm2736, %v6932, %v6933
    %v6935 = vrot.slane %v6870, 2
    %v6936 = vsel %vm2736, %v6935, %v6935
    %v6937 = vrot.slane %v6871, 2
    %v6938 = vrot.slane %v6872, 2
    %v6939 = vsel %vm2736, %v6937, %v6938
    %v6940 = vrot.slane %v6873, 2
    %v6941 = vrot.slane %v6874, 2
    %v6942 = vsel %vm2736, %v6940, %v6941
    %v6943 = vrot.slane %v6875, 2
    %v6944 = vrot.slane %v6876, 2
    %v6945 = vsel %vm2736, %v6943, %v6944
    %v6946 = vrot.slane %v6877, 2
    %v6947 = vrot.slane %v6878, 2
    %v6948 = vsel %vm2736, %v6946, %v6947
    %v6949 = vrot.slane %v6879, 2
    %v6950 = vrot.slane %v6880, 2
    %v6951 = vsel %vm2736, %v6949, %v6950
    %v6952 = vrot.slane %v6881, 2
    %v6953 = vrot.slane %v6882, 2
    %v6954 = vsel %vm2736, %v6952, %v6953
    %v6955 = vrot.slane %v6883, 2
    %v6956 = vrot.slane %v6884, 2
    %v6957 = vsel %vm2736, %v6955, %v6956
    %v6973 = vadd.f32 %v6836, %v6916
    %v6974 = vadd.f32 %v6837, %v6919
    %v6975 = vadd.f32 %v6838, %v6922
    %v6976 = vadd.f32 %v6839, %v6925
    %v6977 = vadd.f32 %v6840, %v6928
    %v6978 = vadd.f32 %v6841, %v6931
    %v6979 = vadd.f32 %v6842, %v6934
    %v6980 = vadd.f32 %v6843, %v6936
    %v6981 = vadd.f32 %v6844, %v6939
    %v6982 = vadd.f32 %v6845, %v6942
    %v6983 = vadd.f32 %v6846, %v6945
    %v6984 = vadd.f32 %v6847, %v6948
    %v6985 = vadd.f32 %v6848, %v6951
    %v6986 = vadd.f32 %v6849, %v6954
    %v6987 = vadd.f32 %v6850, %v6957
    %v6988 = vadd.f32 %v6851, %v6936
    %s6989 = scalar_lea.vmem [#allocation8], 1
    %v6990 = vld [vmem:[%s6989] sm:$0x1]
    %v6992 = vlaneseq
    %v6993 = vshrl.u32 %v6992, 7
    %v6994 = vsub.s32 0, %v6993
    %v6995 = vrot.slane %v6990, %v6994
    %v6997 = vadd.f32 %v6973, %v6995
    %v6998 = vadd.f32 %v6974, %v6995
    %v6999 = vadd.f32 %v6975, %v6995
    %v7000 = vadd.f32 %v6976, %v6995
    %v7001 = vadd.f32 %v6977, %v6995
    %v7002 = vadd.f32 %v6978, %v6995
    %v7003 = vadd.f32 %v6979, %v6995
    %v7004 = vadd.f32 %v6980, %v6995
    %v7005 = vadd.f32 %v6981, %v6995
    %v7006 = vadd.f32 %v6982, %v6995
    %v7007 = vadd.f32 %v6983, %v6995
    %v7008 = vadd.f32 %v6984, %v6995
    %v7009 = vadd.f32 %v6985, %v6995
    %v7010 = vadd.f32 %v6986, %v6995
    %v7011 = vadd.f32 %v6987, %v6995
    %v7012 = vadd.f32 %v6988, %v6995
    %v7013 = vmul.f32 %v6997, %v6997
    %v7014 = vmul.f32 %v6998, %v6998
    %v7015 = vmul.f32 %v6999, %v6999
    %v7016 = vmul.f32 %v7000, %v7000
    %v7017 = vmul.f32 %v7001, %v7001
    %v7018 = vmul.f32 %v7002, %v7002
    %v7019 = vmul.f32 %v7003, %v7003
    %v7020 = vmul.f32 %v7004, %v7004
    %v7021 = vmul.f32 %v7005, %v7005
    %v7022 = vmul.f32 %v7006, %v7006
    %v7023 = vmul.f32 %v7007, %v7007
    %v7024 = vmul.f32 %v7008, %v7008
    %v7025 = vmul.f32 %v7009, %v7009
    %v7026 = vmul.f32 %v7010, %v7010
    %v7027 = vmul.f32 %v7011, %v7011
    %v7028 = vmul.f32 %v7012, %v7012
    %v7029 = vmul.f32 %v6997, %v7013
    %v7030 = vmul.f32 %v6998, %v7014
    %v7031 = vmul.f32 %v6999, %v7015
    %v7032 = vmul.f32 %v7000, %v7016
    %v7033 = vmul.f32 %v7001, %v7017
    %v7034 = vmul.f32 %v7002, %v7018
    %v7035 = vmul.f32 %v7003, %v7019
    %v7036 = vmul.f32 %v7004, %v7020
    %v7037 = vmul.f32 %v7005, %v7021
    %v7038 = vmul.f32 %v7006, %v7022
    %v7039 = vmul.f32 %v7007, %v7023
    %v7040 = vmul.f32 %v7008, %v7024
    %v7041 = vmul.f32 %v7009, %v7025
    %v7042 = vmul.f32 %v7010, %v7026
    %v7043 = vmul.f32 %v7011, %v7027
    %v7044 = vmul.f32 %v7012, %v7028
    %v7045 = vmul.f32 %v7029, 0.044715
    %v7046 = vmul.f32 %v7030, 0.044715
    %v7047 = vmul.f32 %v7031, 0.044715
    %v7048 = vmul.f32 %v7032, 0.044715
    %v7049 = vmul.f32 %v7033, 0.044715
    %v7050 = vmul.f32 %v7034, 0.044715
    %v7051 = vmul.f32 %v7035, 0.044715
    %v7052 = vmul.f32 %v7036, 0.044715
    %v7053 = vmul.f32 %v7037, 0.044715
    %v7054 = vmul.f32 %v7038, 0.044715
    %v7055 = vmul.f32 %v7039, 0.044715
    %v7056 = vmul.f32 %v7040, 0.044715
    %v7057 = vmul.f32 %v7041, 0.044715
    %v7058 = vmul.f32 %v7042, 0.044715
    %v7059 = vmul.f32 %v7043, 0.044715
    %v7060 = vmul.f32 %v7044, 0.044715
    %v7061 = vadd.f32 %v6997, %v7045
    %v7062 = vadd.f32 %v6998, %v7046
    %v7063 = vadd.f32 %v6999, %v7047
    %v7064 = vadd.f32 %v7000, %v7048
    %v7065 = vadd.f32 %v7001, %v7049
    %v7066 = vadd.f32 %v7002, %v7050
    %v7067 = vadd.f32 %v7003, %v7051
    %v7068 = vadd.f32 %v7004, %v7052
    %v7069 = vadd.f32 %v7005, %v7053
    %v7070 = vadd.f32 %v7006, %v7054
    %v7071 = vadd.f32 %v7007, %v7055
    %v7072 = vadd.f32 %v7008, %v7056
    %v7073 = vadd.f32 %v7009, %v7057
    %v7074 = vadd.f32 %v7010, %v7058
    %v7075 = vadd.f32 %v7011, %v7059
    %v7076 = vadd.f32 %v7012, %v7060
    %v7077 = vmul.f32 %v7061, 0.7978846
    %v7078 = vmul.f32 %v7062, 0.7978846
    %v7079 = vmul.f32 %v7063, 0.7978846
    %v7080 = vmul.f32 %v7064, 0.7978846
    %v7081 = vmul.f32 %v7065, 0.7978846
    %v7082 = vmul.f32 %v7066, 0.7978846
    %v7083 = vmul.f32 %v7067, 0.7978846
    %v7084 = vmul.f32 %v7068, 0.7978846
    %v7085 = vmul.f32 %v7069, 0.7978846
    %v7086 = vmul.f32 %v7070, 0.7978846
    %v7087 = vmul.f32 %v7071, 0.7978846
    %v7088 = vmul.f32 %v7072, 0.7978846
    %v7089 = vmul.f32 %v7073, 0.7978846
    %v7090 = vmul.f32 %v7074, 0.7978846
    %v7091 = vmul.f32 %v7075, 0.7978846
    %v7092 = vmul.f32 %v7076, 0.7978846
    %v7093 = vtanh.pop %v7077
    %v7094 = vtanh.pop %v7078
    %v7095 = vtanh.pop %v7079
    %v7096 = vtanh.pop %v7080
    %v7097 = vtanh.pop %v7081
    %v7098 = vtanh.pop %v7082
    %v7099 = vtanh.pop %v7083
    %v7100 = vtanh.pop %v7084
    %v7101 = vtanh.pop %v7085
    %v7102 = vtanh.pop %v7086
    %v7103 = vtanh.pop %v7087
    %v7104 = vtanh.pop %v7088
    %v7105 = vtanh.pop %v7089
    %v7106 = vtanh.pop %v7090
    %v7107 = vtanh.pop %v7091
    %v7108 = vtanh.pop %v7092
    %v7109 = vadd.f32 %v7093, 1.0
    %v7110 = vadd.f32 %v7094, 1.0
    %v7111 = vadd.f32 %v7095, 1.0
    %v7112 = vadd.f32 %v7096, 1.0
    %v7113 = vadd.f32 %v7097, 1.0
    %v7114 = vadd.f32 %v7098, 1.0
    %v7115 = vadd.f32 %v7099, 1.0
    %v7116 = vadd.f32 %v7100, 1.0
    %v7117 = vadd.f32 %v7101, 1.0
    %v7118 = vadd.f32 %v7102, 1.0
    %v7119 = vadd.f32 %v7103, 1.0
    %v7120 = vadd.f32 %v7104, 1.0
    %v7121 = vadd.f32 %v7105, 1.0
    %v7122 = vadd.f32 %v7106, 1.0
    %v7123 = vadd.f32 %v7107, 1.0
    %v7124 = vadd.f32 %v7108, 1.0
    %v7125 = vmul.f32 %v7109, 0.5
    %v7126 = vmul.f32 %v7110, 0.5
    %v7127 = vmul.f32 %v7111, 0.5
    %v7128 = vmul.f32 %v7112, 0.5
    %v7129 = vmul.f32 %v7113, 0.5
    %v7130 = vmul.f32 %v7114, 0.5
    %v7131 = vmul.f32 %v7115, 0.5
    %v7132 = vmul.f32 %v7116, 0.5
    %v7133 = vmul.f32 %v7117, 0.5
    %v7134 = vmul.f32 %v7118, 0.5
    %v7135 = vmul.f32 %v7119, 0.5
    %v7136 = vmul.f32 %v7120, 0.5
    %v7137 = vmul.f32 %v7121, 0.5
    %v7138 = vmul.f32 %v7122, 0.5
    %v7139 = vmul.f32 %v7123, 0.5
    %v7140 = vmul.f32 %v7124, 0.5
    %v7141 = vmul.f32 %v6997, %v7125
    %v7142 = vmul.f32 %v6998, %v7126
    %v7143 = vmul.f32 %v6999, %v7127
    %v7144 = vmul.f32 %v7000, %v7128
    %v7145 = vmul.f32 %v7001, %v7129
    %v7146 = vmul.f32 %v7002, %v7130
    %v7147 = vmul.f32 %v7003, %v7131
    %v7148 = vmul.f32 %v7004, %v7132
    %v7149 = vmul.f32 %v7005, %v7133
    %v7150 = vmul.f32 %v7006, %v7134
    %v7151 = vmul.f32 %v7007, %v7135
    %v7152 = vmul.f32 %v7008, %v7136
    %v7153 = vmul.f32 %v7009, %v7137
    %v7154 = vmul.f32 %v7010, %v7138
    %v7155 = vmul.f32 %v7011, %v7139
    %v7156 = vmul.f32 %v7012, %v7140
    %s7157 = scalar_lea.vmem %s16, 32
    %v7158 = vld [vmem:[%s7157] sm:$0xff]
    %v7159 = vld [vmem:[%s7157 + $0x8] sm:$0xff]
    %v7160 = vld [vmem:[%s7157 + $0x10] sm:$0xff]
    %v7161 = vld [vmem:[%s7157 + $0x18] sm:$0xff]
    %7162 = vxpose.xlu0.b32.start [1/16] %v7141, 128
    %7163 = vxpose.xlu0.b32.cont [2/16] %v7142, 128
    %7164 = vxpose.xlu0.b32.cont [3/16] %v7143, 128
    %7165 = vxpose.xlu0.b32.cont [4/16] %v7144, 128
    %7166 = vxpose.xlu0.b32.cont [5/16] %v7145, 128
    %7167 = vxpose.xlu0.b32.cont [6/16] %v7146, 128
    %7168 = vxpose.xlu0.b32.cont [7/16] %v7147, 128
    %7169 = vxpose.xlu0.b32.cont [8/16] %v7148, 128
    %7170 = vxpose.xlu0.b32.cont [9/16] %v7149, 128
    %7171 = vxpose.xlu0.b32.cont [10/16] %v7150, 128
    %7172 = vxpose.xlu0.b32.cont [11/16] %v7151, 128
    %7173 = vxpose.xlu0.b32.cont [12/16] %v7152, 128
    %7174 = vxpose.xlu0.b32.cont [13/16] %v7153, 128
    %7175 = vxpose.xlu0.b32.cont [14/16] %v7154, 128
    %7176 = vxpose.xlu0.b32.cont [15/16] %v7155, 128
    %7177 = vxpose.xlu0.b32.end [16/16] %v7156, 128
    %v7178 = vpop.trf.xlu0
    %v7179 = vpop.trf.xlu0
    %v7180 = vpop.trf.xlu0
    %v7181 = vpop.trf.xlu0
    %v7182 = vpop.trf.xlu0
    %v7183 = vpop.trf.xlu0
    %v7184 = vpop.trf.xlu0
    %v7185 = vpop.trf.xlu0
    %v7186 = vpop.trf.xlu0
    %v7187 = vpop.trf.xlu0
    %v7188 = vpop.trf.xlu0
    %v7189 = vpop.trf.xlu0
    %v7190 = vpop.trf.xlu0
    %v7191 = vpop.trf.xlu0
    %v7192 = vpop.trf.xlu0
    %v7193 = vpop.trf.xlu0
    %v7194 = vpack.c.bf16 %v7159, %v7158
    %v7195 = vpack.c.bf16 %v7161, %v7160
    %v7196 = vpack.c.bf16 %v7179, %v7178
    %v7197 = vpack.c.bf16 %v7181, %v7180
    %v7198 = vpack.c.bf16 %v7183, %v7182
    %v7199 = vpack.c.bf16 %v7185, %v7184
    %v7200 = vpack.c.bf16 %v7187, %v7186
    %v7201 = vpack.c.bf16 %v7189, %v7188
    %v7202 = vpack.c.bf16 %v7191, %v7190
    %v7203 = vpack.c.bf16 %v7193, %v7192
    %7204 = vmatprep.subr.bf16.mxu0 0
    %7205 = vmatpush1.bf16.msra.mxu0 %v7196
    %7206 = vmatprep.subr.bf16.mxu0 0
    %7207 = vmatpush1.bf16.msra.mxu0 %v7197
    %7208 = vmatprep.subr.bf16.mxu0 0
    %7209 = vmatpush1.bf16.msra.mxu0 %v7198
    %7210 = vmatprep.subr.bf16.mxu0 0
    %7211 = vmatpush1.bf16.msra.mxu0 %v7199
    %7212 = vmatprep.subr.bf16.mxu0 0
    %7213 = vmatpush1.bf16.msra.mxu0 %v7200
    %7214 = vmatprep.subr.bf16.mxu0 0
    %7215 = vmatpush1.bf16.msra.mxu0 %v7201
    %7216 = vmatprep.subr.bf16.mxu0 0
    %7217 = vmatpush1.bf16.msra.mxu0 %v7202
    %7218 = vmatprep.subr.bf16.mxu0 0
    %7219 = vmatpush1.bf16.msra.mxu0 %v7203
    %7220 = vmatprep.subr.bf16.mxu0 0
    %7221 = vmatpush1.bf16.msra.mxu0 0
    %7222 = vmatprep.subr.bf16.mxu0 0
    %7223 = vmatpush1.bf16.msra.mxu0 0
    %7224 = vmatprep.subr.bf16.mxu0 0
    %7225 = vmatpush1.bf16.msra.mxu0 0
    %7226 = vmatprep.subr.bf16.mxu0 0
    %7227 = vmatpush1.bf16.msra.mxu0 0
    %7228 = vmatprep.subr.bf16.mxu0 0
    %7229 = vmatpush1.bf16.msra.mxu0 0
    %7230 = vmatprep.subr.bf16.mxu0 0
    %7231 = vmatpush1.bf16.msra.mxu0 0
    %7232 = vmatprep.subr.bf16.mxu0 0
    %7233 = vmatpush1.bf16.msra.mxu0 0
    %7234 = vmatprep.subr.bf16.mxu0 0
    %7235 = vmatpush1.bf16.msra.mxu0 0
    %7236 = vmatprep.mubr.bf16.mxu0 0
    %7237 = vmatmul.mubr.bf16.gmra.mrb[0].mxu0 %v7194
    %v7238 = vpop.f32.mrb[0].mxu0
    %v7239 = vadd.f32 0.0, %v7238
    %v7240 = vpop.f32.mrb[0].mxu0
    %v7241 = vpop.f32.mrb[0].mxu0
    %v7242 = vadd.f32 0.0, %v7241
    %v7243 = vpop.f32.mrb[0].mxu0
    %7244 = vmatprep.mubr.bf16.mxu0 0
    %7245 = vmatmul.mubr.bf16.gmra.mrb[0].mxu0 %v7195
    %v7246 = vpop.f32.mrb[0].mxu0
    %v7247 = vadd.f32 0.0, %v7246
    %v7248 = vpop.f32.mrb[0].mxu0
    %v7249 = vpop.f32.mrb[0].mxu0
    %v7250 = vadd.f32 0.0, %v7249
    %v7251 = vpop.f32.mrb[0].mxu0
    %7252 = vdwg.mxu0
    %v7253 = vadd.f32 %v5586, %v7239
    %v7254 = vadd.f32 %v5587, %v7242
    %v7255 = vadd.f32 %v5588, %v7247
    %v7256 = vadd.f32 %v5589, %v7250
    %s7257 = scalar_lea.vmem %s17, 32
    %v7258 = vld [vmem:[%s7257] sm:$0xff]
    %v7259 = vld [vmem:[%s7257 + $0x8] sm:$0xff]
    %v7260 = vld [vmem:[%s7257 + $0x10] sm:$0xff]
    %v7261 = vld [vmem:[%s7257 + $0x18] sm:$0xff]
    %7263 = vset.pattern.permute.xlu0 0
    %7264 = vperm.xlu0 %7263, %v7258
    %v7265 = vpop.permute.xlu0 %7264
    %7268 = vset.pattern.permute.xlu0 0
    %7269 = vperm.xlu0 %7268, %v7259
    %v7270 = vpop.permute.xlu0 %7269
    %7273 = vset.pattern.permute.xlu0 0
    %7274 = vperm.xlu0 %7273, %v7260
    %v7275 = vpop.permute.xlu0 %7274
    %7278 = vset.pattern.permute.xlu0 0
    %7279 = vperm.xlu0 %7278, %v7261
    %v7280 = vpop.permute.xlu0 %7279
    %v7282 = vadd.f32 %v7253, %v7265
    %v7283 = vadd.f32 %v7254, %v7270
    %v7284 = vadd.f32 %v7255, %v7275
    %v7285 = vadd.f32 %v7256, %v7280
    %7286 = vst [vmem:[#allocation10] sm:$0xff] %v7282
    %7287 = vst [vmem:[#allocation10 + $0x8] sm:$0xff] %v7283
    %7288 = vst [vmem:[#allocation10 + $0x10] sm:$0xff] %v7284
    %7289 = vst [vmem:[#allocation10 + $0x18] sm:$0xff] %v7285
    // Predicated region
    $region90: #{tpu_custom_call.1} parent=1 // pred_check
      _
    $region91: #{tpu_custom_call.1} parent=1 // pred_check_branch
      %7291 = sbr.rel (0) target = $region93
    $region92: #{tpu_custom_call.1} parent=1 // pred_region
      %s7293 = ssub.s32 512, 512
      %7294 = vsyncadd [#allocation4], %s7293
      %s7295 = sshll.u32 [#allocation10], 4
      %s7296 = int_to_ptr.vmem [resolvable:$true] %s7295
      %7301 = dma.vmem_to_hbm [thread:$0]  %s7296, 512, %s18, [#allocation4], 128, 128, 8
    $region93: #{tpu_custom_call.1} parent=1 // pred_fallthru
      _
    // Predicated region
    $region94: #{tpu_custom_call.1} parent=1 // pred_check
      _
    $region95: #{tpu_custom_call.1} parent=1 // pred_check_branch
      %7303 = sbr.rel (0) target = $region97
    $region96: #{tpu_custom_call.1} parent=1 // pred_region
      %7304 = dma.done [#allocation4], 512
    $region97: #{tpu_custom_call.1} parent=1 // pred_fallthru
      _
    %7305 = vsyncpa [#allocation3], 1
    %7306 = vsyncpa [#allocation6], 1
    %7307 = vsyncpa [#allocation9], 1
    %7308 = vsyncpa [#allocation4], 1

</llo_original>
